<compile_context>
chip_gen: v6e
topology: v6e:2x2x1
jax: 0.10.0
libtpu: 0.0.40
codegen_flags: <defaults>
</compile_context>

<pallas_src>
import functools
import math

import jax
import jax.numpy as jnp
from jax.experimental import pallas as pl
from jax.experimental.pallas import tpu as pltpu


def _round_up(x, m):
    return (x + m - 1) // m * m


def _pick_k_tile(k, max_tile=4096):
    """Largest multiple of 128 that divides k and is <= max_tile (else k)."""
    if k <= max_tile:
        return k
    for t in range(max_tile - max_tile % 128, 0, -128):
        if k % t == 0:
            return t
    return k


# ---------------------------------------------------------------------------
# Pallas kernels
# ---------------------------------------------------------------------------
def _conv3x3_kernel(x_ref, w_ref, b_ref, o_ref, *, w_pad, n_rows):
    # x_ref: (1, (H+3)*(W+2), Cin)  spatially-flattened, zero-padded image (bf16)
    # w_ref: (9, Cin, tn)           one (Cin, tn) weight slab per 3x3 tap (bf16)
    # For tap (kh, kw) the patch rows of every output pixel form one contiguous
    # slice of the flattened padded image starting at kh*(W+2)+kw, so the conv
    # is 9 shifted matmuls accumulated in f32.  Two wrap-around columns per
    # output row are discarded by the wrapper.
    acc = None
    for kh in range(3):
        for kw in range(3):
            off = kh * w_pad + kw
            xs = x_ref[0, pl.ds(off, n_rows), :]            # (M, Cin) bf16
            wk = w_ref[kh * 3 + kw]                         # (Cin, tn) bf16
            d = jnp.dot(xs, wk, preferred_element_type=jnp.float32)
            acc = d if acc is None else acc + d
    acc = acc + b_ref[...]                                  # (1, tn) f32 bias
    o_ref[0] = jnp.maximum(acc, 0.0).astype(o_ref.dtype)    # fused ReLU, bf16 out


def _maxpool_kernel(x_ref, o_ref):
    # x_ref: (tr, 2, Wo, 2, C) -- 2x2 window dims exposed by a pure reshape.
    v = x_ref[...]
    o_ref[...] = jnp.max(jnp.max(v, axis=3), axis=1)        # (tr, Wo, C)


def _tail_kernel(x_ref, m_ref, w_ref, b_ref, g_ref, bt_ref, o_ref, acc_ref):
    # Fused dropout -> linear -> BatchNorm1d (train mode), K-tiled reduction.
    k = pl.program_id(0)

    @pl.when(k == 0)
    def _init():
        acc_ref[...] = jnp.zeros_like(acc_ref)

    xm = x_ref[...] * m_ref[...]                            # dropout (mask pre-scaled by 1/keep)
    acc_ref[...] += jnp.dot(xm, w_ref[...], preferred_element_type=jnp.float32)

    @pl.when(k == pl.num_programs(0) - 1)
    def _finalize():
        y = acc_ref[...] + b_ref[...]
        mean = jnp.mean(y, axis=0, keepdims=True)
        var = jnp.mean(jnp.square(y - mean), axis=0, keepdims=True)
        o_ref[...] = ((y - mean) * jax.lax.rsqrt(var + 1e-5)
                      * g_ref[...] + bt_ref[...]).astype(o_ref.dtype)


# ---------------------------------------------------------------------------
# Pallas-backed ops
# ---------------------------------------------------------------------------
def conv3x3_relu(x_nhwc, w9, b):
    """3x3 conv, stride 1, pad 1, fused bias + ReLU.  w9: (9, Cin, Cout) bf16."""
    N, H, W, Cin = x_nhwc.shape
    Cout = w9.shape[-1]
    Wp = W + 2
    # Pad: 1 top / 2 bottom / 1 left-right.  The extra bottom row only feeds the
    # discarded wrap-around columns of the last output row.
    xpad = jnp.pad(x_nhwc.astype(jnp.bfloat16), ((0, 0), (1, 2), (1, 1), (0, 0)))
    # Pad contraction (channel) dim to a multiple of 8 (first layer has Cin=3).
    Cin_p = _round_up(Cin, 8)
    if Cin_p != Cin:
        xpad = jnp.pad(xpad, ((0, 0), (0, 0), (0, 0), (0, Cin_p - Cin)))
        w9 = jnp.pad(w9, ((0, 0), (0, Cin_p - Cin), (0, 0)))
    S = (H + 3) * Wp
    P = xpad.reshape(N, S, Cin_p)            # pure reshape, no data movement
    M = H * Wp                               # output rows incl. 2 junk cols/row
    tn = Cout if Cout <= 256 else 256
    kern = functools.partial(_conv3x3_kernel, w_pad=Wp, n_rows=M)
    out_pad = pl.pallas_call(
        kern,
        out_shape=jax.ShapeDtypeStruct((N, M, Cout), jnp.bfloat16),
        grid=(Cout // tn, N),                # weight (largest operand) outermost
        in_specs=[
            pl.BlockSpec((1, S, Cin_p), lambda j, n: (n, 0, 0)),
            pl.BlockSpec((9, Cin_p, tn), lambda j, n: (0, 0, j)),
            pl.BlockSpec((1, tn), lambda j, n: (0, j)),
        ],
        out_specs=pl.BlockSpec((1, M, tn), lambda j, n: (n, 0, j)),
        compiler_params=pltpu.CompilerParams(
            dimension_semantics=("parallel", "parallel")),
    )(P, w9, b)
    # Drop the two wrap-around columns of every output row.
    return out_pad.reshape(N, H, Wp, Cout)[:, :, :W, :]


def maxpool2x2(x_nhwc):
    N, H, W, C = x_nhwc.shape
    Ho, Wo = H // 2, W // 2
    R = N * Ho
    x5 = x_nhwc.reshape(R, 2, Wo, 2, C)      # pure reshape exposes 2x2 windows
    tr = math.gcd(R, 8)
    out = pl.pallas_call(
        _maxpool_kernel,
        out_shape=jax.ShapeDtypeStruct((R, Wo, C), x_nhwc.dtype),
        grid=(R // tr,),
        in_specs=[pl.BlockSpec((tr, 2, Wo, 2, C), lambda i: (i, 0, 0, 0, 0))],
        out_specs=pl.BlockSpec((tr, Wo, C), lambda i: (i, 0, 0)),
        compiler_params=pltpu.CompilerParams(dimension_semantics=("parallel",)),
    )(x5)
    return out.reshape(N, Ho, Wo, C)


def adaptive_avg_pool_7x7(x_nhwc):
    # TODO(synk): AdaptiveAvgPool2d((7,7)) kept as tiny plain-JAX glue; for the
    # 1x1 feature map produced here it is a pure broadcast.
    N, H, W, C = x_nhwc.shape
    hs = [(i * H) // 7 for i in range(7)]
    he = [-(-((i + 1) * H) // 7) for i in range(7)]
    ws = [(j * W) // 7 for j in range(7)]
    we = [-(-((j + 1) * W) // 7) for j in range(7)]
    rows = []
    for i in range(7):
        cols = [jnp.mean(x_nhwc[:, hs[i]:he[i], ws[j]:we[j], :], axis=(1, 2))
                for j in range(7)]
        rows.append(jnp.stack(cols, axis=1))
    return jnp.stack(rows, axis=1)


def dropout_linear_bn(feats, mask, w, b, gamma, beta, embed_size):
    """Fused dropout -> linear -> BatchNorm1d (train-mode batch stats)."""
    B, K = feats.shape
    Ep = w.shape[1]                          # embed dim lane-padded to 128
    tk = _pick_k_tile(K)
    out = pl.pallas_call(
        _tail_kernel,
        out_shape=jax.ShapeDtypeStruct((B, Ep), jnp.float32),
        grid=(K // tk,),
        in_specs=[
            pl.BlockSpec((B, tk), lambda k: (0, k)),
            pl.BlockSpec((B, tk), lambda k: (0, k)),
            pl.BlockSpec((tk, Ep), lambda k: (k, 0)),
            pl.BlockSpec((1, Ep), lambda k: (0, 0)),
            pl.BlockSpec((1, Ep), lambda k: (0, 0)),
            pl.BlockSpec((1, Ep), lambda k: (0, 0)),
        ],
        out_specs=pl.BlockSpec((B, Ep), lambda k: (0, 0)),
        scratch_shapes=[pltpu.VMEM((B, Ep), jnp.float32)],
        compiler_params=pltpu.CompilerParams(dimension_semantics=("arbitrary",)),
    )(feats, mask, w, b, gamma, beta)
    return out[:, :embed_size]


# ---------------------------------------------------------------------------
# EncoderCNN model
# ---------------------------------------------------------------------------
VGG_CFG = [64, 64, "M", 128, 128, "M", 256, 256, 256, "M",
           512, 512, 512, "M", 512, 512, 512, "M"]


def init_params(key, embed_size):
    # TODO(synk): pretrained VGG16 weights cannot be loaded here; deterministic
    # synthetic init is used instead (conv weights stored as (9, Cin, Cout) bf16).
    params = {"convs": [], "embed_size": embed_size}
    cin = 3
    for v in VGG_CFG:
        if v == "M":
            continue
        key, k1 = jax.random.split(key)
        std = (2.0 / (9 * cin)) ** 0.5
        w = jax.random.normal(k1, (3, 3, cin, v), jnp.float32) * std
        params["convs"].append((w.reshape(9, cin, v).astype(jnp.bfloat16),
                                jnp.zeros((1, v), jnp.float32)))
        cin = v
    fin = 512 * 7 * 7
    ep = _round_up(embed_size, 128)          # lane-pad the embed dim to 128
    key, k1 = jax.random.split(key)
    lw = jax.random.normal(k1, (fin, embed_size), jnp.float32) * (fin ** -0.5)
    params["linear_w"] = jnp.pad(lw, ((0, 0), (0, ep - embed_size))).astype(jnp.bfloat16)
    params["linear_b"] = jnp.zeros((1, ep), jnp.float32)
    params["bn_gamma"] = jnp.pad(jnp.ones((1, embed_size), jnp.float32),
                                 ((0, 0), (0, ep - embed_size)))
    params["bn_beta"] = jnp.zeros((1, ep), jnp.float32)
    return params


def encoder_cnn_forward(params, images_nchw, dropout_seed=0):
    x = jnp.transpose(images_nchw, (0, 2, 3, 1)).astype(jnp.bfloat16)  # NCHW -> NHWC
    ci = 0
    for v in VGG_CFG:
        if v == "M":
            x = maxpool2x2(x)
        else:
            w, b = params["convs"][ci]
            ci += 1
            x = conv3x3_relu(x, w, b)
    x = adaptive_avg_pool_7x7(x)                 # (N, 7, 7, 512)
    x = jnp.transpose(x, (0, 3, 1, 2))           # torch flatten order (NCHW)
    n = x.shape[0]
    feats = x.reshape(n, 512 * 7 * 7)            # features.reshape(N, -1)
    # Dropout(p=0.5) mask with inverted scaling (train-mode), generated with
    # jax.random so it also runs outside real TPU hardware.
    # TODO(synk): PyTorch's RNG stream cannot be reproduced bit-for-bit.
    keep = jax.random.bernoulli(jax.random.PRNGKey(dropout_seed), 0.5, feats.shape)
    mask = keep.astype(jnp.bfloat16) * 2.0
    # TODO(synk): BatchNorm1d running_mean/var (momentum=0.01) are not tracked;
    # this applies train-mode batch statistics only.
    return dropout_linear_bn(feats, mask, params["linear_w"], params["linear_b"],
                             params["bn_gamma"], params["bn_beta"],
                             params["embed_size"])


if __name__ == "__main__":
    key = jax.random.PRNGKey(0)
    k_img, k_par = jax.random.split(key)
    embed_size = 32
    # 32x32 input so the five 2x2 maxpools reach a 1x1 feature map.
    images = jax.random.normal(k_img, (2, 3, 32, 32), jnp.float32)  # NCHW like torch
    params = init_params(k_par, embed_size)
    out = encoder_cnn_forward(params, images, dropout_seed=0)
    jax.block_until_ready(out)
    assert out.shape == (2, embed_size) and out.dtype == jnp.float32
    assert bool(jnp.all(jnp.isfinite(out)))
    print("KERNEL_OK")
</pallas_src>

<mosaic_0001>
module attributes {stable_mosaic.version = 11 : i64} {
  func.func @_conv3x3_kernel(%arg0: i32, %arg1: i32, %arg2: memref<1x1190x8xbf16, #tpu.memory_space<vmem>>, %arg3: memref<9x8x64xbf16, #tpu.memory_space<vmem>>, %arg4: memref<1x64xf32, #tpu.memory_space<vmem>>, %arg5: memref<1x1088x64xbf16, #tpu.memory_space<vmem>>) attributes {dimension_semantics = [#tpu.dimension_semantics<parallel>, #tpu.dimension_semantics<parallel>], iteration_bounds = array<i64: 1, 2>, scalar_prefetch = 0 : i64, scratch_operands = 0 : i64, tpu.core_type = #tpu.core_type<tc>, window_params = [{transform_indices = @transform_0, window_bounds = array<i64: 1, 1190, 8>}, {transform_indices = @transform_1, window_bounds = array<i64: 9, 8, 64>}, {transform_indices = @transform_2, window_bounds = array<i64: 1, 64>}, {transform_indices = @transform_3, window_bounds = array<i64: 1, 1088, 64>}]} {
    %c0 = arith.constant 0 : index
    %c0_0 = arith.constant 0 : index
    %c0_1 = arith.constant 0 : index
    %0 = vector.load %arg2[%c0, %c0_0, %c0_1] : memref<1x1190x8xbf16, #tpu.memory_space<vmem>>, vector<1x1088x8xbf16>
    %1 = vector.shape_cast %0 : vector<1x1088x8xbf16> to vector<1088x8xbf16>
    %c0_2 = arith.constant 0 : index
    %c0_3 = arith.constant 0 : index
    %c0_4 = arith.constant 0 : index
    %2 = vector.load %arg3[%c0_2, %c0_3, %c0_4] : memref<9x8x64xbf16, #tpu.memory_space<vmem>>, vector<1x8x64xbf16>
    %3 = vector.shape_cast %2 : vector<1x8x64xbf16> to vector<8x64xbf16>
    %cst = arith.constant dense<0.000000e+00> : vector<1088x64xf32>
    %4 = tpu.matmul %1, %3, %cst {dimension_numbers = #tpu.dot_dimension_numbers<[1], [0], [0], [1], [0, 0, 1, 1], [], []>} : vector<1088x8xbf16>, vector<8x64xbf16>, vector<1088x64xf32> -> vector<1088x64xf32>
    %c0_5 = arith.constant 0 : index
    %c1 = arith.constant 1 : index
    %c0_6 = arith.constant 0 : index
    %5 = vector.load %arg2[%c0_5, %c1, %c0_6] : memref<1x1190x8xbf16, #tpu.memory_space<vmem>>, vector<1x1088x8xbf16>
    %6 = vector.shape_cast %5 : vector<1x1088x8xbf16> to vector<1088x8xbf16>
    %c1_7 = arith.constant 1 : index
    %c0_8 = arith.constant 0 : index
    %c0_9 = arith.constant 0 : index
    %7 = vector.load %arg3[%c1_7, %c0_8, %c0_9] : memref<9x8x64xbf16, #tpu.memory_space<vmem>>, vector<1x8x64xbf16>
    %8 = vector.shape_cast %7 : vector<1x8x64xbf16> to vector<8x64xbf16>
    %cst_10 = arith.constant dense<0.000000e+00> : vector<1088x64xf32>
    %9 = tpu.matmul %6, %8, %cst_10 {dimension_numbers = #tpu.dot_dimension_numbers<[1], [0], [0], [1], [0, 0, 1, 1], [], []>} : vector<1088x8xbf16>, vector<8x64xbf16>, vector<1088x64xf32> -> vector<1088x64xf32>
    %10 = arith.addf %4, %9 : vector<1088x64xf32>
    %c0_11 = arith.constant 0 : index
    %c2 = arith.constant 2 : index
    %c0_12 = arith.constant 0 : index
    %11 = vector.load %arg2[%c0_11, %c2, %c0_12] : memref<1x1190x8xbf16, #tpu.memory_space<vmem>>, vector<1x1088x8xbf16>
    %12 = vector.shape_cast %11 : vector<1x1088x8xbf16> to vector<1088x8xbf16>
    %c2_13 = arith.constant 2 : index
    %c0_14 = arith.constant 0 : index
    %c0_15 = arith.constant 0 : index
    %13 = vector.load %arg3[%c2_13, %c0_14, %c0_15] : memref<9x8x64xbf16, #tpu.memory_space<vmem>>, vector<1x8x64xbf16>
    %14 = vector.shape_cast %13 : vector<1x8x64xbf16> to vector<8x64xbf16>
    %cst_16 = arith.constant dense<0.000000e+00> : vector<1088x64xf32>
    %15 = tpu.matmul %12, %14, %cst_16 {dimension_numbers = #tpu.dot_dimension_numbers<[1], [0], [0], [1], [0, 0, 1, 1], [], []>} : vector<1088x8xbf16>, vector<8x64xbf16>, vector<1088x64xf32> -> vector<1088x64xf32>
    %16 = arith.addf %10, %15 : vector<1088x64xf32>
    %c0_17 = arith.constant 0 : index
    %c34 = arith.constant 34 : index
    %c0_18 = arith.constant 0 : index
    %17 = vector.load %arg2[%c0_17, %c34, %c0_18] : memref<1x1190x8xbf16, #tpu.memory_space<vmem>>, vector<1x1088x8xbf16>
    %18 = vector.shape_cast %17 : vector<1x1088x8xbf16> to vector<1088x8xbf16>
    %c3 = arith.constant 3 : index
    %c0_19 = arith.constant 0 : index
    %c0_20 = arith.constant 0 : index
    %19 = vector.load %arg3[%c3, %c0_19, %c0_20] : memref<9x8x64xbf16, #tpu.memory_space<vmem>>, vector<1x8x64xbf16>
    %20 = vector.shape_cast %19 : vector<1x8x64xbf16> to vector<8x64xbf16>
    %cst_21 = arith.constant dense<0.000000e+00> : vector<1088x64xf32>
    %21 = tpu.matmul %18, %20, %cst_21 {dimension_numbers = #tpu.dot_dimension_numbers<[1], [0], [0], [1], [0, 0, 1, 1], [], []>} : vector<1088x8xbf16>, vector<8x64xbf16>, vector<1088x64xf32> -> vector<1088x64xf32>
    %22 = arith.addf %16, %21 : vector<1088x64xf32>
    %c0_22 = arith.constant 0 : index
    %c35 = arith.constant 35 : index
    %c0_23 = arith.constant 0 : index
    %23 = vector.load %arg2[%c0_22, %c35, %c0_23] : memref<1x1190x8xbf16, #tpu.memory_space<vmem>>, vector<1x1088x8xbf16>
    %24 = vector.shape_cast %23 : vector<1x1088x8xbf16> to vector<1088x8xbf16>
    %c4 = arith.constant 4 : index
    %c0_24 = arith.constant 0 : index
    %c0_25 = arith.constant 0 : index
    %25 = vector.load %arg3[%c4, %c0_24, %c0_25] : memref<9x8x64xbf16, #tpu.memory_space<vmem>>, vector<1x8x64xbf16>
    %26 = vector.shape_cast %25 : vector<1x8x64xbf16> to vector<8x64xbf16>
    %cst_26 = arith.constant dense<0.000000e+00> : vector<1088x64xf32>
    %27 = tpu.matmul %24, %26, %cst_26 {dimension_numbers = #tpu.dot_dimension_numbers<[1], [0], [0], [1], [0, 0, 1, 1], [], []>} : vector<1088x8xbf16>, vector<8x64xbf16>, vector<1088x64xf32> -> vector<1088x64xf32>
    %28 = arith.addf %22, %27 : vector<1088x64xf32>
    %c0_27 = arith.constant 0 : index
    %c36 = arith.constant 36 : index
    %c0_28 = arith.constant 0 : index
    %29 = vector.load %arg2[%c0_27, %c36, %c0_28] : memref<1x1190x8xbf16, #tpu.memory_space<vmem>>, vector<1x1088x8xbf16>
    %30 = vector.shape_cast %29 : vector<1x1088x8xbf16> to vector<1088x8xbf16>
    %c5 = arith.constant 5 : index
    %c0_29 = arith.constant 0 : index
    %c0_30 = arith.constant 0 : index
    %31 = vector.load %arg3[%c5, %c0_29, %c0_30] : memref<9x8x64xbf16, #tpu.memory_space<vmem>>, vector<1x8x64xbf16>
    %32 = vector.shape_cast %31 : vector<1x8x64xbf16> to vector<8x64xbf16>
    %cst_31 = arith.constant dense<0.000000e+00> : vector<1088x64xf32>
    %33 = tpu.matmul %30, %32, %cst_31 {dimension_numbers = #tpu.dot_dimension_numbers<[1], [0], [0], [1], [0, 0, 1, 1], [], []>} : vector<1088x8xbf16>, vector<8x64xbf16>, vector<1088x64xf32> -> vector<1088x64xf32>
    %34 = arith.addf %28, %33 : vector<1088x64xf32>
    %c0_32 = arith.constant 0 : index
    %c68 = arith.constant 68 : index
    %c0_33 = arith.constant 0 : index
    %35 = vector.load %arg2[%c0_32, %c68, %c0_33] : memref<1x1190x8xbf16, #tpu.memory_space<vmem>>, vector<1x1088x8xbf16>
    %36 = vector.shape_cast %35 : vector<1x1088x8xbf16> to vector<1088x8xbf16>
    %c6 = arith.constant 6 : index
    %c0_34 = arith.constant 0 : index
    %c0_35 = arith.constant 0 : index
    %37 = vector.load %arg3[%c6, %c0_34, %c0_35] : memref<9x8x64xbf16, #tpu.memory_space<vmem>>, vector<1x8x64xbf16>
    %38 = vector.shape_cast %37 : vector<1x8x64xbf16> to vector<8x64xbf16>
    %cst_36 = arith.constant dense<0.000000e+00> : vector<1088x64xf32>
    %39 = tpu.matmul %36, %38, %cst_36 {dimension_numbers = #tpu.dot_dimension_numbers<[1], [0], [0], [1], [0, 0, 1, 1], [], []>} : vector<1088x8xbf16>, vector<8x64xbf16>, vector<1088x64xf32> -> vector<1088x64xf32>
    %40 = arith.addf %34, %39 : vector<1088x64xf32>
    %c0_37 = arith.constant 0 : index
    %c69 = arith.constant 69 : index
    %c0_38 = arith.constant 0 : index
    %41 = vector.load %arg2[%c0_37, %c69, %c0_38] : memref<1x1190x8xbf16, #tpu.memory_space<vmem>>, vector<1x1088x8xbf16>
    %42 = vector.shape_cast %41 : vector<1x1088x8xbf16> to vector<1088x8xbf16>
    %c7 = arith.constant 7 : index
    %c0_39 = arith.constant 0 : index
    %c0_40 = arith.constant 0 : index
    %43 = vector.load %arg3[%c7, %c0_39, %c0_40] : memref<9x8x64xbf16, #tpu.memory_space<vmem>>, vector<1x8x64xbf16>
    %44 = vector.shape_cast %43 : vector<1x8x64xbf16> to vector<8x64xbf16>
    %cst_41 = arith.constant dense<0.000000e+00> : vector<1088x64xf32>
    %45 = tpu.matmul %42, %44, %cst_41 {dimension_numbers = #tpu.dot_dimension_numbers<[1], [0], [0], [1], [0, 0, 1, 1], [], []>} : vector<1088x8xbf16>, vector<8x64xbf16>, vector<1088x64xf32> -> vector<1088x64xf32>
    %46 = arith.addf %40, %45 : vector<1088x64xf32>
    %c0_42 = arith.constant 0 : index
    %c70 = arith.constant 70 : index
    %c0_43 = arith.constant 0 : index
    %47 = vector.load %arg2[%c0_42, %c70, %c0_43] : memref<1x1190x8xbf16, #tpu.memory_space<vmem>>, vector<1x1088x8xbf16>
    %48 = vector.shape_cast %47 : vector<1x1088x8xbf16> to vector<1088x8xbf16>
    %c8 = arith.constant 8 : index
    %c0_44 = arith.constant 0 : index
    %c0_45 = arith.constant 0 : index
    %49 = vector.load %arg3[%c8, %c0_44, %c0_45] : memref<9x8x64xbf16, #tpu.memory_space<vmem>>, vector<1x8x64xbf16>
    %50 = vector.shape_cast %49 : vector<1x8x64xbf16> to vector<8x64xbf16>
    %cst_46 = arith.constant dense<0.000000e+00> : vector<1088x64xf32>
    %51 = tpu.matmul %48, %50, %cst_46 {dimension_numbers = #tpu.dot_dimension_numbers<[1], [0], [0], [1], [0, 0, 1, 1], [], []>} : vector<1088x8xbf16>, vector<8x64xbf16>, vector<1088x64xf32> -> vector<1088x64xf32>
    %52 = arith.addf %46, %51 : vector<1088x64xf32>
    %c0_47 = arith.constant 0 : index
    %c0_48 = arith.constant 0 : index
    %53 = vector.load %arg4[%c0_47, %c0_48] : memref<1x64xf32, #tpu.memory_space<vmem>>, vector<1x64xf32>
    %54 = vector.broadcast %53 : vector<1x64xf32> to vector<1088x64xf32>
    %55 = arith.addf %52, %54 : vector<1088x64xf32>
    %cst_49 = arith.constant 0.000000e+00 : f32
    %56 = vector.broadcast %cst_49 : f32 to vector<1088x64xf32>
    %57 = arith.maximumf %55, %56 : vector<1088x64xf32>
    %58 = arith.truncf %57 : vector<1088x64xf32> to vector<1088x64xbf16>
    %c0_50 = arith.constant 0 : index
    %c0_51 = arith.constant 0 : index
    %c0_52 = arith.constant 0 : index
    %59 = vector.load %arg5[%c0_50, %c0_51, %c0_52] : memref<1x1088x64xbf16, #tpu.memory_space<vmem>>, vector<1x1088x64xbf16>
    %60 = vector.shape_cast %59 : vector<1x1088x64xbf16> to vector<1088x64xbf16>
    %61 = vector.shape_cast %58 : vector<1088x64xbf16> to vector<1x1088x64xbf16>
    tpu.vector_store %arg5[%c0_50, %c0_51, %c0_52], %61 {strides = array<i32>} : memref<1x1088x64xbf16, #tpu.memory_space<vmem>>, vector<1x1088x64xbf16>,
    return
  }
  func.func @transform_0(%arg0: i32, %arg1: i32) -> (i32, i32, i32) {
    %c0_i32 = arith.constant 0 : i32
    %c0_i32_0 = arith.constant 0 : i32
    %c0_i32_1 = arith.constant 0 : i32
    return %arg1, %c0_i32, %c0_i32_0 : i32, i32, i32
  }
  func.func @transform_1(%arg0: i32, %arg1: i32) -> (i32, i32, i32) {
    %c0_i32 = arith.constant 0 : i32
    %c0_i32_0 = arith.constant 0 : i32
    %c0_i32_1 = arith.constant 0 : i32
    return %c0_i32, %c0_i32_0, %arg0 : i32, i32, i32
  }
  func.func @transform_2(%arg0: i32, %arg1: i32) -> (i32, i32) {
    %c0_i32 = arith.constant 0 : i32
    %c0_i32_0 = arith.constant 0 : i32
    return %c0_i32, %arg0 : i32, i32
  }
  func.func @transform_3(%arg0: i32, %arg1: i32) -> (i32, i32, i32) {
    %c0_i32 = arith.constant 0 : i32
    %c0_i32_0 = arith.constant 0 : i32
    return %arg1, %c0_i32, %arg0 : i32, i32, i32
  }
}

</mosaic_0001>

<llo_original>
// kernel: tpu_custom_call.1
$region0: #{tpu_custom_call.1}
  #allocation0 [shape = 'u32[]', space=smem, size = 0x4, offset = 0x4, fixed_abs, tag = 'smem constant byte address 0x4 - core index']
  #allocation1 [shape = 'u32[144,128]{1,0:T(1,128)}', space=vmem, size = 0x12000, scoped, tag = 'internal scratch']
  %s0 = inlined_call_operand.vmem [shape: bf16[2,1190,8], index: 0, kind: input, shape index: {}]
  %s1 = inlined_call_operand.vmem [shape: bf16[9,8,64], index: 1, kind: input, shape index: {}]
  %s2 = inlined_call_operand.vmem [shape: f32[1,64], index: 2, kind: input, shape index: {}]
  %s3 = inlined_call_operand.vmem [shape: bf16[2,1088,64], index: 3, kind: output, shape index: {}]
  %s4 = sld [smem:[#allocation0]]
  $region45: #{tpu_custom_call.1} parent=0
    _
  %s6 = ssub.s32 1, %s4
  %s7 = scalar_select 0, %s6, %s4
  loop: start=0, step=1, limit=4
  $region2: #{tpu_custom_call.1} parent=0 // loop_pre_header
    _
  $region3: #{tpu_custom_call.1} parent=0 // loop_header
    %s9 = sphi 0, %s13
    %p10 = scmp.ge.s32.totalorder %s9, 4
    %s16 = sphi 0, %s28
    %s17 = sphi 0, %s24
    %s18 = sphi 0, %s16
    %s19 = sphi 0, %s17
    %s20 = sphi 0, %s18
    %s21 = sphi 0, %s19
    %s31 = sphi 0, %s33
    %s34 = sphi 0, %s31
    %s35 = sphi 0, %s34
    %s51 = sphi 0, %s35
    %s57 = sphi 0, %s59
    %s60 = sphi 0, %s57
    %s61 = sphi 0, %s60
    %s77 = sphi 0, %s61
    %s83 = sphi 0, %s85
    %s86 = sphi 0, %s83
    %s87 = sphi 0, %s86
    %s103 = sphi 0, %s87
    %s111 = sphi 0, %s113
    %s114 = sphi 0, %s111
    %s115 = sphi 0, %s114
    %s131 = sphi 0, %s115
  $region4: #{tpu_custom_call.1} parent=0 // loop_header_branch
    %12 = sbr.rel (%p10) target = $region8
  $region5: #{tpu_custom_call.1} parent=0 // loop_body
    %s14 = ssub.s32 %s9, 1
    %s15 = ssub.s32 %s9, 2
    %s22 = sadd.s32 1, %s17
    %p23 = scmp.ge.s32.totalorder %s22, 2
    %s24 = scalar_select %p23, 0, %s22
    %s25 = sadd.s32 1, %s16
    %s26 = scalar_select %p23, %s25, %s16
    %p27 = scmp.ge.s32.totalorder %s26, 1
    %s28 = scalar_select %p27, 0, %s26
    %s29 = ssub.s32 %s17, %s24
    %p30 = scmp.eq.s32.totalorder %s29, 0
    %s32 = sadd.s32 %s31, 1
    %s33 = scalar_select %p30, %s31, %s32
    %p36 = pneg %p30
    %p37 = scmp.eq.s32.totalorder %s9, 1
    %p38 = por %p36, %p37
    %p39 = scmp.ne.s32.totalorder %s31, %s34
    %p40 = scmp.eq.s32.totalorder %s9, 0
    %p41 = por %p39, %p40
    %p42 = scmp.ne.s32.totalorder %s31, %s34
    %p43 = scmp.eq.s32.totalorder %s14, 1
    %p44 = por %p42, %p43
    %p45 = scmp.ne.s32.totalorder %s34, %s35
    %p46 = scmp.eq.s32.totalorder %s14, 0
    %p47 = por %p45, %p46
    %p48 = scmp.ne.s32.totalorder %s34, %s35
    %p49 = scmp.eq.s32.totalorder %s15, 1
    %p50 = por %p48, %p49
    %p52 = scmp.ne.s32.totalorder %s35, %s51
    %p53 = scmp.eq.s32.totalorder %s15, 0
    %p54 = por %p52, %p53
    %s55 = ssub.s32 %s16, %s28
    %p56 = scmp.eq.s32.totalorder %s55, 0
    %s58 = sadd.s32 %s57, 1
    %s59 = scalar_select %p56, %s57, %s58
    %p62 = pneg %p56
    %p63 = scmp.eq.s32.totalorder %s9, 1
    %p64 = por %p62, %p63
    %p65 = scmp.ne.s32.totalorder %s57, %s60
    %p66 = scmp.eq.s32.totalorder %s9, 0
    %p67 = por %p65, %p66
    %p68 = scmp.ne.s32.totalorder %s57, %s60
    %p69 = scmp.eq.s32.totalorder %s14, 1
    %p70 = por %p68, %p69
    %p71 = scmp.ne.s32.totalorder %s60, %s61
    %p72 = scmp.eq.s32.totalorder %s14, 0
    %p73 = por %p71, %p72
    %p74 = scmp.ne.s32.totalorder %s60, %s61
    %p75 = scmp.eq.s32.totalorder %s15, 1
    %p76 = por %p74, %p75
    %p78 = scmp.ne.s32.totalorder %s61, %s77
    %p79 = scmp.eq.s32.totalorder %s15, 0
    %p80 = por %p78, %p79
    %s81 = ssub.s32 %s16, %s28
    %p82 = scmp.eq.s32.totalorder %s81, 0
    %s84 = sadd.s32 %s83, 1
    %s85 = scalar_select %p82, %s83, %s84
    %p88 = pneg %p82
    %p89 = scmp.eq.s32.totalorder %s9, 1
    %p90 = por %p88, %p89
    %p91 = scmp.ne.s32.totalorder %s83, %s86
    %p92 = scmp.eq.s32.totalorder %s9, 0
    %p93 = por %p91, %p92
    %p94 = scmp.ne.s32.totalorder %s83, %s86
    %p95 = scmp.eq.s32.totalorder %s14, 1
    %p96 = por %p94, %p95
    %p97 = scmp.ne.s32.totalorder %s86, %s87
    %p98 = scmp.eq.s32.totalorder %s14, 0
    %p99 = por %p97, %p98
    %p100 = scmp.ne.s32.totalorder %s86, %s87
    %p101 = scmp.eq.s32.totalorder %s15, 1
    %p102 = por %p100, %p101
    %p104 = scmp.ne.s32.totalorder %s87, %s103
    %p105 = scmp.eq.s32.totalorder %s15, 0
    %p106 = por %p104, %p105
    %s107 = ssub.s32 %s17, %s24
    %s108 = ssub.s32 %s16, %s28
    %s109 = sor.u32 %s107, %s108
    %p110 = scmp.eq.s32.totalorder %s109, 0
    %s112 = sadd.s32 %s111, 1
    %s113 = scalar_select %p110, %s111, %s112
    %p116 = pneg %p110
    %p117 = scmp.eq.s32.totalorder %s9, 1
    %p118 = por %p116, %p117
    %p119 = scmp.ne.s32.totalorder %s111, %s114
    %p120 = scmp.eq.s32.totalorder %s9, 0
    %p121 = por %p119, %p120
    %p122 = scmp.ne.s32.totalorder %s111, %s114
    %p123 = scmp.eq.s32.totalorder %s14, 1
    %p124 = por %p122, %p123
    %p125 = scmp.ne.s32.totalorder %s114, %s115
    %p126 = scmp.eq.s32.totalorder %s14, 0
    %p127 = por %p125, %p126
    %p128 = scmp.ne.s32.totalorder %s114, %s115
    %p129 = scmp.eq.s32.totalorder %s15, 1
    %p130 = por %p128, %p129
    %p132 = scmp.ne.s32.totalorder %s115, %s131
    %p133 = scmp.eq.s32.totalorder %s15, 0
    %p134 = por %p132, %p133
    %p135 = scmp.le.s32.totalorder 1, %s9
    %p136 = scmp.lt.s32.totalorder %s9, 3
    %p137 = pnand %p135, %p136
    %p138 = pneg %p137
    // Predicated region
    $region9: #{tpu_custom_call.1} parent=5 // pred_check
      _
    $region10: #{tpu_custom_call.1} parent=5 // pred_check_branch
      %140 = sbr.rel (%p137) target = $region12
    $region11: #{tpu_custom_call.1} parent=5 // pred_region
      %s141 = ssub.s32 %s9, 1
      // Predicated region
      $region13: #{tpu_custom_call.1} parent=11 // pred_check
        %p142 = pneg %p73
      $region14: #{tpu_custom_call.1} parent=11 // pred_check_branch
        %144 = sbr.rel (%p142) target = $region16
      $region15: #{tpu_custom_call.1} parent=11 // pred_region
        %p145 = scmp.lt.s32.totalorder %s18, 0
        %s146 = scalar_select %p145, %s18, 0
        %s147 = smul.addr %s146, 4
        %s148 = scalar_lea.vmem %s1, %s147
      $region16: #{tpu_custom_call.1} parent=11 // pred_fallthru
        _
      // Predicated region
      $region17: #{tpu_custom_call.1} parent=11 // pred_check
        %p149 = pneg %p99
      $region18: #{tpu_custom_call.1} parent=11 // pred_check_branch
        %151 = sbr.rel (%p149) target = $region20
      $region19: #{tpu_custom_call.1} parent=11 // pred_region
        %p152 = scmp.lt.s32.totalorder %s18, 0
        %s153 = scalar_select %p152, %s18, 0
        %s154 = scalar_lea.vmem %s2, %s153
      $region20: #{tpu_custom_call.1} parent=11 // pred_fallthru
        _
    $region12: #{tpu_custom_call.1} parent=5 // pred_fallthru
      _
    %p155 = scmp.lt.s32.totalorder %s9, 2
    // Predicated region
    $region21: #{tpu_custom_call.1} parent=5 // pred_check
      %p156 = pneg %p155
    $region22: #{tpu_custom_call.1} parent=5 // pred_check_branch
      %158 = sbr.rel (%p156) target = $region24
    $region23: #{tpu_custom_call.1} parent=5 // pred_region
      // Predicated region
      $region25: #{tpu_custom_call.1} parent=23 // pred_check
        %p159 = pneg %p41
      $region26: #{tpu_custom_call.1} parent=23 // pred_check_branch
        %161 = sbr.rel (%p159) target = $region28
      $region27: #{tpu_custom_call.1} parent=23 // pred_region
        %p162 = scmp.lt.s32.totalorder %s17, 1
        %s163 = scalar_select %p162, %s17, 1
        %s164 = smul.addr %s163, 149
        %s165 = smul.addr %s164, 4
        %s166 = scalar_lea.vmem %s0, %s165
      $region28: #{tpu_custom_call.1} parent=23 // pred_fallthru
        _
    $region24: #{tpu_custom_call.1} parent=5 // pred_fallthru
      _
    %p167 = scmp.le.s32.totalorder 1, %s9
    %p168 = scmp.lt.s32.totalorder %s9, 3
    %p169 = pnand %p167, %p168
    %p170 = pneg %p169
    // Predicated region
    $region29: #{tpu_custom_call.1} parent=5 // pred_check
      _
    $region30: #{tpu_custom_call.1} parent=5 // pred_check_branch
      %172 = sbr.rel (%p169) target = $region32
    $region31: #{tpu_custom_call.1} parent=5 // pred_region
      %s173 = ssub.s32 %s9, 1
      %p174 = scmp.lt.s32.totalorder %s19, 1
      %s175 = scalar_select %p174, %s19, 1
      %s176 = smul.addr %s175, 149
      %s177 = smul.addr %s176, 4
      %s178 = scalar_lea.vmem %s0, %s177
      %p179 = pneg %p47
      %p180 = pneg %p44
      %p181 = scmp.lt.s32.totalorder %s18, 0
      %s182 = scalar_select %p181, %s18, 0
      %s183 = smul.addr %s182, 4
      %s184 = scalar_lea.vmem %s1, %s183
      %p185 = pneg %p73
      %p186 = pneg %p70
      %p187 = scmp.lt.s32.totalorder %s18, 0
      %s188 = scalar_select %p187, %s18, 0
      %s189 = scalar_lea.vmem %s2, %s188
      %p190 = pneg %p99
      %p191 = pneg %p96
      %p192 = pneg %p127
      %p193 = pneg %p124
      %p194 = scmp.lt.s32.totalorder %s19, 1
      %s195 = scalar_select %p194, %s19, 1
      %p196 = scmp.lt.s32.totalorder %s18, 0
      %s197 = scalar_select %p196, %s18, 0
      %s198 = smul.addr %s195, 136
      %s199 = sadd.s32 %s197, %s198
      %s200 = smul.addr %s199, 4
      %s201 = scalar_lea.vmem %s3, %s200
      %p202 = scmp.lt.s32.totalorder %s19, 1
      %s203 = scalar_select %p202, %s19, 1
      %s204 = smul.addr %s203, 149
      %s205 = smul.addr %s204, 4
      %s206 = scalar_lea.vmem %s0, %s205
      %p207 = scmp.lt.s32.totalorder %s18, 0
      %s208 = scalar_select %p207, %s18, 0
      %s209 = smul.addr %s208, 4
      %s210 = scalar_lea.vmem %s1, %s209
      %p211 = scmp.lt.s32.totalorder %s18, 0
      %s212 = scalar_select %p211, %s18, 0
      %s213 = scalar_lea.vmem %s2, %s212
      %p214 = scmp.lt.s32.totalorder %s19, 1
      %s215 = scalar_select %p214, %s19, 1
      %p216 = scmp.lt.s32.totalorder %s18, 0
      %s217 = scalar_select %p216, %s18, 0
      %s218 = smul.addr %s215, 136
      %s219 = sadd.s32 %s217, %s218
      %s220 = smul.addr %s219, 4
      %s221 = scalar_lea.vmem %s3, %s220
      %v223 = vld [vmem:[%s206] sm:$0xf]
      %v224 = vld [vmem:[%s206 + $0x4] sm:$0xf]
      %v225 = vld [vmem:[%s206 + $0x8] sm:$0xf]
      %v226 = vld [vmem:[%s206 + $0xc] sm:$0xf]
      %v227 = vld [vmem:[%s206 + $0x10] sm:$0xf]
      %v228 = vld [vmem:[%s206 + $0x14] sm:$0xf]
      %v229 = vld [vmem:[%s206 + $0x18] sm:$0xf]
      %v230 = vld [vmem:[%s206 + $0x1c] sm:$0xf]
      %v231 = vld [vmem:[%s206 + $0x20] sm:$0xf]
      %v232 = vld [vmem:[%s206 + $0x24] sm:$0xf]
      %v233 = vld [vmem:[%s206 + $0x28] sm:$0xf]
      %v234 = vld [vmem:[%s206 + $0x2c] sm:$0xf]
      %v235 = vld [vmem:[%s206 + $0x30] sm:$0xf]
      %v236 = vld [vmem:[%s206 + $0x34] sm:$0xf]
      %v237 = vld [vmem:[%s206 + $0x38] sm:$0xf]
      %v238 = vld [vmem:[%s206 + $0x3c] sm:$0xf]
      %v239 = vld [vmem:[%s206 + $0x40] sm:$0xf]
      %v240 = vld [vmem:[%s206 + $0x44] sm:$0xf]
      %v241 = vld [vmem:[%s206 + $0x48] sm:$0xf]
      %v242 = vld [vmem:[%s206 + $0x4c] sm:$0xf]
      %v243 = vld [vmem:[%s206 + $0x50] sm:$0xf]
      %v244 = vld [vmem:[%s206 + $0x54] sm:$0xf]
      %v245 = vld [vmem:[%s206 + $0x58] sm:$0xf]
      %v246 = vld [vmem:[%s206 + $0x5c] sm:$0xf]
      %v247 = vld [vmem:[%s206 + $0x60] sm:$0xf]
      %v248 = vld [vmem:[%s206 + $0x64] sm:$0xf]
      %v249 = vld [vmem:[%s206 + $0x68] sm:$0xf]
      %v250 = vld [vmem:[%s206 + $0x6c] sm:$0xf]
      %v251 = vld [vmem:[%s206 + $0x70] sm:$0xf]
      %v252 = vld [vmem:[%s206 + $0x74] sm:$0xf]
      %v253 = vld [vmem:[%s206 + $0x78] sm:$0xf]
      %v254 = vld [vmem:[%s206 + $0x7c] sm:$0xf]
      %v255 = vld [vmem:[%s206 + $0x80] sm:$0xf]
      %v256 = vld [vmem:[%s206 + $0x84] sm:$0xf]
      %v257 = vld [vmem:[%s206 + $0x88] sm:$0xf]
      %v258 = vld [vmem:[%s206 + $0x8c] sm:$0xf]
      %v259 = vld [vmem:[%s206 + $0x90] sm:$0xf]
      %v260 = vld [vmem:[%s206 + $0x94] sm:$0xf]
      %v261 = vld [vmem:[%s206 + $0x98] sm:$0xf]
      %v262 = vld [vmem:[%s206 + $0x9c] sm:$0xf]
      %v263 = vld [vmem:[%s206 + $0xa0] sm:$0xf]
      %v264 = vld [vmem:[%s206 + $0xa4] sm:$0xf]
      %v265 = vld [vmem:[%s206 + $0xa8] sm:$0xf]
      %v266 = vld [vmem:[%s206 + $0xac] sm:$0xf]
      %v267 = vld [vmem:[%s206 + $0xb0] sm:$0xf]
      %v268 = vld [vmem:[%s206 + $0xb4] sm:$0xf]
      %v269 = vld [vmem:[%s206 + $0xb8] sm:$0xf]
      %v270 = vld [vmem:[%s206 + $0xbc] sm:$0xf]
      %v271 = vld [vmem:[%s206 + $0xc0] sm:$0xf]
      %v272 = vld [vmem:[%s206 + $0xc4] sm:$0xf]
      %v273 = vld [vmem:[%s206 + $0xc8] sm:$0xf]
      %v274 = vld [vmem:[%s206 + $0xcc] sm:$0xf]
      %v275 = vld [vmem:[%s206 + $0xd0] sm:$0xf]
      %v276 = vld [vmem:[%s206 + $0xd4] sm:$0xf]
      %v277 = vld [vmem:[%s206 + $0xd8] sm:$0xf]
      %v278 = vld [vmem:[%s206 + $0xdc] sm:$0xf]
      %v279 = vld [vmem:[%s206 + $0xe0] sm:$0xf]
      %v280 = vld [vmem:[%s206 + $0xe4] sm:$0xf]
      %v281 = vld [vmem:[%s206 + $0xe8] sm:$0xf]
      %v282 = vld [vmem:[%s206 + $0xec] sm:$0xf]
      %v283 = vld [vmem:[%s206 + $0xf0] sm:$0xf]
      %v284 = vld [vmem:[%s206 + $0xf4] sm:$0xf]
      %v285 = vld [vmem:[%s206 + $0xf8] sm:$0xf]
      %v286 = vld [vmem:[%s206 + $0xfc] sm:$0xf]
      %v287 = vld [vmem:[%s206 + $0x100] sm:$0xf]
      %v288 = vld [vmem:[%s206 + $0x104] sm:$0xf]
      %v289 = vld [vmem:[%s206 + $0x108] sm:$0xf]
      %v290 = vld [vmem:[%s206 + $0x10c] sm:$0xf]
      %v291 = vld [vmem:[%s206 + $0x110] sm:$0xf]
      %v292 = vld [vmem:[%s206 + $0x114] sm:$0xf]
      %v293 = vld [vmem:[%s206 + $0x118] sm:$0xf]
      %v294 = vld [vmem:[%s206 + $0x11c] sm:$0xf]
      %v295 = vld [vmem:[%s206 + $0x120] sm:$0xf]
      %v296 = vld [vmem:[%s206 + $0x124] sm:$0xf]
      %v297 = vld [vmem:[%s206 + $0x128] sm:$0xf]
      %v298 = vld [vmem:[%s206 + $0x12c] sm:$0xf]
      %v299 = vld [vmem:[%s206 + $0x130] sm:$0xf]
      %v300 = vld [vmem:[%s206 + $0x134] sm:$0xf]
      %v301 = vld [vmem:[%s206 + $0x138] sm:$0xf]
      %v302 = vld [vmem:[%s206 + $0x13c] sm:$0xf]
      %v303 = vld [vmem:[%s206 + $0x140] sm:$0xf]
      %v304 = vld [vmem:[%s206 + $0x144] sm:$0xf]
      %v305 = vld [vmem:[%s206 + $0x148] sm:$0xf]
      %v306 = vld [vmem:[%s206 + $0x14c] sm:$0xf]
      %v307 = vld [vmem:[%s206 + $0x150] sm:$0xf]
      %v308 = vld [vmem:[%s206 + $0x154] sm:$0xf]
      %v309 = vld [vmem:[%s206 + $0x158] sm:$0xf]
      %v310 = vld [vmem:[%s206 + $0x15c] sm:$0xf]
      %v311 = vld [vmem:[%s206 + $0x160] sm:$0xf]
      %v312 = vld [vmem:[%s206 + $0x164] sm:$0xf]
      %v313 = vld [vmem:[%s206 + $0x168] sm:$0xf]
      %v314 = vld [vmem:[%s206 + $0x16c] sm:$0xf]
      %v315 = vld [vmem:[%s206 + $0x170] sm:$0xf]
      %v316 = vld [vmem:[%s206 + $0x174] sm:$0xf]
      %v317 = vld [vmem:[%s206 + $0x178] sm:$0xf]
      %v318 = vld [vmem:[%s206 + $0x17c] sm:$0xf]
      %v319 = vld [vmem:[%s206 + $0x180] sm:$0xf]
      %v320 = vld [vmem:[%s206 + $0x184] sm:$0xf]
      %v321 = vld [vmem:[%s206 + $0x188] sm:$0xf]
      %v322 = vld [vmem:[%s206 + $0x18c] sm:$0xf]
      %v323 = vld [vmem:[%s206 + $0x190] sm:$0xf]
      %v324 = vld [vmem:[%s206 + $0x194] sm:$0xf]
      %v325 = vld [vmem:[%s206 + $0x198] sm:$0xf]
      %v326 = vld [vmem:[%s206 + $0x19c] sm:$0xf]
      %v327 = vld [vmem:[%s206 + $0x1a0] sm:$0xf]
      %v328 = vld [vmem:[%s206 + $0x1a4] sm:$0xf]
      %v329 = vld [vmem:[%s206 + $0x1a8] sm:$0xf]
      %v330 = vld [vmem:[%s206 + $0x1ac] sm:$0xf]
      %v331 = vld [vmem:[%s206 + $0x1b0] sm:$0xf]
      %v332 = vld [vmem:[%s206 + $0x1b4] sm:$0xf]
      %v333 = vld [vmem:[%s206 + $0x1b8] sm:$0xf]
      %v334 = vld [vmem:[%s206 + $0x1bc] sm:$0xf]
      %v335 = vld [vmem:[%s206 + $0x1c0] sm:$0xf]
      %v336 = vld [vmem:[%s206 + $0x1c4] sm:$0xf]
      %v337 = vld [vmem:[%s206 + $0x1c8] sm:$0xf]
      %v338 = vld [vmem:[%s206 + $0x1cc] sm:$0xf]
      %v339 = vld [vmem:[%s206 + $0x1d0] sm:$0xf]
      %v340 = vld [vmem:[%s206 + $0x1d4] sm:$0xf]
      %v341 = vld [vmem:[%s206 + $0x1d8] sm:$0xf]
      %v342 = vld [vmem:[%s206 + $0x1dc] sm:$0xf]
      %v343 = vld [vmem:[%s206 + $0x1e0] sm:$0xf]
      %v344 = vld [vmem:[%s206 + $0x1e4] sm:$0xf]
      %v345 = vld [vmem:[%s206 + $0x1e8] sm:$0xf]
      %v346 = vld [vmem:[%s206 + $0x1ec] sm:$0xf]
      %v347 = vld [vmem:[%s206 + $0x1f0] sm:$0xf]
      %v348 = vld [vmem:[%s206 + $0x1f4] sm:$0xf]
      %v349 = vld [vmem:[%s206 + $0x1f8] sm:$0xf]
      %v350 = vld [vmem:[%s206 + $0x1fc] sm:$0xf]
      %v351 = vld [vmem:[%s206 + $0x200] sm:$0xf]
      %v352 = vld [vmem:[%s206 + $0x204] sm:$0xf]
      %v353 = vld [vmem:[%s206 + $0x208] sm:$0xf]
      %v354 = vld [vmem:[%s206 + $0x20c] sm:$0xf]
      %v355 = vld [vmem:[%s206 + $0x210] sm:$0xf]
      %v356 = vld [vmem:[%s206 + $0x214] sm:$0xf]
      %v357 = vld [vmem:[%s206 + $0x218] sm:$0xf]
      %v358 = vld [vmem:[%s206 + $0x21c] sm:$0xf]
      %v359 = vld [vmem:[%s210] sm:$0xf]
      %v360 = vld [vmem:[%s206 + $0x220] sm:$0x1]
      %s361 = scalar_lea.vmem %s210, 4
      %v362 = vld [vmem:[%s361] sm:$0xf]
      %v500 = vunpack.c.l.b16 %v223
      %v501 = vunpack.c.l.b16 %v224
      %v502 = vunpack.c.l.b16 %v225
      %v503 = vunpack.c.l.b16 %v226
      %v504 = vunpack.c.l.b16 %v227
      %v505 = vunpack.c.l.b16 %v228
      %v506 = vunpack.c.l.b16 %v229
      %v507 = vunpack.c.l.b16 %v230
      %v508 = vunpack.c.l.b16 %v231
      %v509 = vunpack.c.l.b16 %v232
      %v510 = vunpack.c.l.b16 %v233
      %v511 = vunpack.c.l.b16 %v234
      %v512 = vunpack.c.l.b16 %v235
      %v513 = vunpack.c.l.b16 %v236
      %v514 = vunpack.c.l.b16 %v237
      %v515 = vunpack.c.l.b16 %v238
      %v516 = vunpack.c.l.b16 %v239
      %v517 = vunpack.c.l.b16 %v240
      %v518 = vunpack.c.l.b16 %v241
      %v519 = vunpack.c.l.b16 %v242
      %v520 = vunpack.c.l.b16 %v243
      %v521 = vunpack.c.l.b16 %v244
      %v522 = vunpack.c.l.b16 %v245
      %v523 = vunpack.c.l.b16 %v246
      %v524 = vunpack.c.l.b16 %v247
      %v525 = vunpack.c.l.b16 %v248
      %v526 = vunpack.c.l.b16 %v249
      %v527 = vunpack.c.l.b16 %v250
      %v528 = vunpack.c.l.b16 %v251
      %v529 = vunpack.c.l.b16 %v252
      %v530 = vunpack.c.l.b16 %v253
      %v531 = vunpack.c.l.b16 %v254
      %v532 = vunpack.c.l.b16 %v255
      %v533 = vunpack.c.l.b16 %v256
      %v534 = vunpack.c.l.b16 %v257
      %v535 = vunpack.c.l.b16 %v258
      %v536 = vunpack.c.l.b16 %v259
      %v537 = vunpack.c.l.b16 %v260
      %v538 = vunpack.c.l.b16 %v261
      %v539 = vunpack.c.l.b16 %v262
      %v540 = vunpack.c.l.b16 %v263
      %v541 = vunpack.c.l.b16 %v264
      %v542 = vunpack.c.l.b16 %v265
      %v543 = vunpack.c.l.b16 %v266
      %v544 = vunpack.c.l.b16 %v267
      %v545 = vunpack.c.l.b16 %v268
      %v546 = vunpack.c.l.b16 %v269
      %v547 = vunpack.c.l.b16 %v270
      %v548 = vunpack.c.l.b16 %v271
      %v549 = vunpack.c.l.b16 %v272
      %v550 = vunpack.c.l.b16 %v273
      %v551 = vunpack.c.l.b16 %v274
      %v552 = vunpack.c.l.b16 %v275
      %v553 = vunpack.c.l.b16 %v276
      %v554 = vunpack.c.l.b16 %v277
      %v555 = vunpack.c.l.b16 %v278
      %v556 = vunpack.c.l.b16 %v279
      %v557 = vunpack.c.l.b16 %v280
      %v558 = vunpack.c.l.b16 %v281
      %v559 = vunpack.c.l.b16 %v282
      %v560 = vunpack.c.l.b16 %v283
      %v561 = vunpack.c.l.b16 %v284
      %v562 = vunpack.c.l.b16 %v285
      %v563 = vunpack.c.l.b16 %v286
      %v564 = vunpack.c.l.b16 %v287
      %v565 = vunpack.c.l.b16 %v288
      %v566 = vunpack.c.l.b16 %v289
      %v567 = vunpack.c.l.b16 %v290
      %v568 = vunpack.c.l.b16 %v291
      %v569 = vunpack.c.l.b16 %v292
      %v570 = vunpack.c.l.b16 %v293
      %v571 = vunpack.c.l.b16 %v294
      %v572 = vunpack.c.l.b16 %v295
      %v573 = vunpack.c.l.b16 %v296
      %v574 = vunpack.c.l.b16 %v297
      %v575 = vunpack.c.l.b16 %v298
      %v576 = vunpack.c.l.b16 %v299
      %v577 = vunpack.c.l.b16 %v300
      %v578 = vunpack.c.l.b16 %v301
      %v579 = vunpack.c.l.b16 %v302
      %v580 = vunpack.c.l.b16 %v303
      %v581 = vunpack.c.l.b16 %v304
      %v582 = vunpack.c.l.b16 %v305
      %v583 = vunpack.c.l.b16 %v306
      %v584 = vunpack.c.l.b16 %v307
      %v585 = vunpack.c.l.b16 %v308
      %v586 = vunpack.c.l.b16 %v309
      %v587 = vunpack.c.l.b16 %v310
      %v588 = vunpack.c.l.b16 %v311
      %v589 = vunpack.c.l.b16 %v312
      %v590 = vunpack.c.l.b16 %v313
      %v591 = vunpack.c.l.b16 %v314
      %v592 = vunpack.c.l.b16 %v315
      %v593 = vunpack.c.l.b16 %v316
      %v594 = vunpack.c.l.b16 %v317
      %v595 = vunpack.c.l.b16 %v318
      %v596 = vunpack.c.l.b16 %v319
      %v597 = vunpack.c.l.b16 %v320
      %v598 = vunpack.c.l.b16 %v321
      %v599 = vunpack.c.l.b16 %v322
      %v600 = vunpack.c.l.b16 %v323
      %v601 = vunpack.c.l.b16 %v324
      %v602 = vunpack.c.l.b16 %v325
      %v603 = vunpack.c.l.b16 %v326
      %v604 = vunpack.c.l.b16 %v327
      %v605 = vunpack.c.l.b16 %v328
      %v606 = vunpack.c.l.b16 %v329
      %v607 = vunpack.c.l.b16 %v330
      %v608 = vunpack.c.l.b16 %v331
      %v609 = vunpack.c.l.b16 %v332
      %v610 = vunpack.c.l.b16 %v333
      %v611 = vunpack.c.l.b16 %v334
      %v612 = vunpack.c.l.b16 %v335
      %v613 = vunpack.c.l.b16 %v336
      %v614 = vunpack.c.l.b16 %v337
      %v615 = vunpack.c.l.b16 %v338
      %v616 = vunpack.c.l.b16 %v339
      %v617 = vunpack.c.l.b16 %v340
      %v618 = vunpack.c.l.b16 %v341
      %v619 = vunpack.c.l.b16 %v342
      %v620 = vunpack.c.l.b16 %v343
      %v621 = vunpack.c.l.b16 %v344
      %v622 = vunpack.c.l.b16 %v345
      %v623 = vunpack.c.l.b16 %v346
      %v624 = vunpack.c.l.b16 %v347
      %v625 = vunpack.c.l.b16 %v348
      %v626 = vunpack.c.l.b16 %v349
      %v627 = vunpack.c.l.b16 %v350
      %v628 = vunpack.c.l.b16 %v351
      %v629 = vunpack.c.l.b16 %v352
      %v630 = vunpack.c.l.b16 %v353
      %v631 = vunpack.c.l.b16 %v354
      %v632 = vunpack.c.l.b16 %v355
      %v633 = vunpack.c.l.b16 %v356
      %v634 = vunpack.c.l.b16 %v357
      %v635 = vunpack.c.l.b16 %v358
      %v636 = vunpack.c.l.b16 %v360
      %v637 = vpack.c.b16 %v501, %v500
      %v638 = vpack.c.b16 %v503, %v502
      %v639 = vpack.c.b16 %v505, %v504
      %v640 = vpack.c.b16 %v507, %v506
      %v641 = vpack.c.b16 %v509, %v508
      %v642 = vpack.c.b16 %v511, %v510
      %v643 = vpack.c.b16 %v513, %v512
      %v644 = vpack.c.b16 %v515, %v514
      %v645 = vpack.c.b16 %v517, %v516
      %v646 = vpack.c.b16 %v519, %v518
      %v647 = vpack.c.b16 %v521, %v520
      %v648 = vpack.c.b16 %v523, %v522
      %v649 = vpack.c.b16 %v525, %v524
      %v650 = vpack.c.b16 %v527, %v526
      %v651 = vpack.c.b16 %v529, %v528
      %v652 = vpack.c.b16 %v531, %v530
      %v653 = vpack.c.b16 %v533, %v532
      %v654 = vpack.c.b16 %v535, %v534
      %v655 = vpack.c.b16 %v537, %v536
      %v656 = vpack.c.b16 %v539, %v538
      %v657 = vpack.c.b16 %v541, %v540
      %v658 = vpack.c.b16 %v543, %v542
      %v659 = vpack.c.b16 %v545, %v544
      %v660 = vpack.c.b16 %v547, %v546
      %v661 = vpack.c.b16 %v549, %v548
      %v662 = vpack.c.b16 %v551, %v550
      %v663 = vpack.c.b16 %v553, %v552
      %v664 = vpack.c.b16 %v555, %v554
      %v665 = vpack.c.b16 %v557, %v556
      %v666 = vpack.c.b16 %v559, %v558
      %v667 = vpack.c.b16 %v561, %v560
      %v668 = vpack.c.b16 %v563, %v562
      %v669 = vpack.c.b16 %v565, %v564
      %v670 = vpack.c.b16 %v567, %v566
      %v671 = vpack.c.b16 %v569, %v568
      %v672 = vpack.c.b16 %v571, %v570
      %v673 = vpack.c.b16 %v573, %v572
      %v674 = vpack.c.b16 %v575, %v574
      %v675 = vpack.c.b16 %v577, %v576
      %v676 = vpack.c.b16 %v579, %v578
      %v677 = vpack.c.b16 %v581, %v580
      %v678 = vpack.c.b16 %v583, %v582
      %v679 = vpack.c.b16 %v585, %v584
      %v680 = vpack.c.b16 %v587, %v586
      %v681 = vpack.c.b16 %v589, %v588
      %v682 = vpack.c.b16 %v591, %v590
      %v683 = vpack.c.b16 %v593, %v592
      %v684 = vpack.c.b16 %v595, %v594
      %v685 = vpack.c.b16 %v597, %v596
      %v686 = vpack.c.b16 %v599, %v598
      %v687 = vpack.c.b16 %v601, %v600
      %v688 = vpack.c.b16 %v603, %v602
      %v689 = vpack.c.b16 %v605, %v604
      %v690 = vpack.c.b16 %v607, %v606
      %v691 = vpack.c.b16 %v609, %v608
      %v692 = vpack.c.b16 %v611, %v610
      %v693 = vpack.c.b16 %v613, %v612
      %v694 = vpack.c.b16 %v615, %v614
      %v695 = vpack.c.b16 %v617, %v616
      %v696 = vpack.c.b16 %v619, %v618
      %v697 = vpack.c.b16 %v621, %v620
      %v698 = vpack.c.b16 %v623, %v622
      %v699 = vpack.c.b16 %v625, %v624
      %v700 = vpack.c.b16 %v627, %v626
      %v701 = vpack.c.b16 %v629, %v628
      %v702 = vpack.c.b16 %v631, %v630
      %v703 = vpack.c.b16 %v633, %v632
      %v704 = vpack.c.b16 %v635, %v634
      %v705 = vpack.c.b16 %v636, %v636
      %vm706 = vsmask.f32 7424
      %v708 = vshrl.u32 %v637, 16
      %v710 = vshll.u32 %v637, 16
      %v712 = vrot.slane %v710, 1
      %v713 = vor.u32 %v708, %v712
      %v715 = vshll.u32 %v638, 16
      %v717 = vrot.slane %v715, 1
      %v718 = vsel %vm706, %v713, %v717
      %v719 = vshrl.u32 %v638, 16
      %v721 = vor.u32 %v719, %v717
      %v723 = vshll.u32 %v639, 16
      %v725 = vrot.slane %v723, 1
      %v726 = vsel %vm706, %v721, %v725
      %v727 = vshrl.u32 %v639, 16
      %v729 = vor.u32 %v727, %v725
      %v731 = vshll.u32 %v640, 16
      %v733 = vrot.slane %v731, 1
      %v734 = vsel %vm706, %v729, %v733
      %v735 = vshrl.u32 %v640, 16
      %v737 = vor.u32 %v735, %v733
      %v739 = vshll.u32 %v641, 16
      %v741 = vrot.slane %v739, 1
      %v742 = vsel %vm706, %v737, %v741
      %v743 = vshrl.u32 %v641, 16
      %v745 = vor.u32 %v743, %v741
      %v747 = vshll.u32 %v642, 16
      %v749 = vrot.slane %v747, 1
      %v750 = vsel %vm706, %v745, %v749
      %v751 = vshrl.u32 %v642, 16
      %v753 = vor.u32 %v751, %v749
      %v755 = vshll.u32 %v643, 16
      %v757 = vrot.slane %v755, 1
      %v758 = vsel %vm706, %v753, %v757
      %v759 = vshrl.u32 %v643, 16
      %v761 = vor.u32 %v759, %v757
      %v763 = vshll.u32 %v644, 16
      %v765 = vrot.slane %v763, 1
      %v766 = vsel %vm706, %v761, %v765
      %v767 = vshrl.u32 %v644, 16
      %v769 = vor.u32 %v767, %v765
      %v771 = vshll.u32 %v645, 16
      %v773 = vrot.slane %v771, 1
      %v774 = vsel %vm706, %v769, %v773
      %v775 = vshrl.u32 %v645, 16
      %v777 = vor.u32 %v775, %v773
      %v779 = vshll.u32 %v646, 16
      %v781 = vrot.slane %v779, 1
      %v782 = vsel %vm706, %v777, %v781
      %v783 = vshrl.u32 %v646, 16
      %v785 = vor.u32 %v783, %v781
      %v787 = vshll.u32 %v647, 16
      %v789 = vrot.slane %v787, 1
      %v790 = vsel %vm706, %v785, %v789
      %v791 = vshrl.u32 %v647, 16
      %v793 = vor.u32 %v791, %v789
      %v795 = vshll.u32 %v648, 16
      %v797 = vrot.slane %v795, 1
      %v798 = vsel %vm706, %v793, %v797
      %v799 = vshrl.u32 %v648, 16
      %v801 = vor.u32 %v799, %v797
      %v803 = vshll.u32 %v649, 16
      %v805 = vrot.slane %v803, 1
      %v806 = vsel %vm706, %v801, %v805
      %v807 = vshrl.u32 %v649, 16
      %v809 = vor.u32 %v807, %v805
      %v811 = vshll.u32 %v650, 16
      %v813 = vrot.slane %v811, 1
      %v814 = vsel %vm706, %v809, %v813
      %v815 = vshrl.u32 %v650, 16
      %v817 = vor.u32 %v815, %v813
      %v819 = vshll.u32 %v651, 16
      %v821 = vrot.slane %v819, 1
      %v822 = vsel %vm706, %v817, %v821
      %v823 = vshrl.u32 %v651, 16
      %v825 = vor.u32 %v823, %v821
      %v827 = vshll.u32 %v652, 16
      %v829 = vrot.slane %v827, 1
      %v830 = vsel %vm706, %v825, %v829
      %v831 = vshrl.u32 %v652, 16
      %v833 = vor.u32 %v831, %v829
      %v835 = vshll.u32 %v653, 16
      %v837 = vrot.slane %v835, 1
      %v838 = vsel %vm706, %v833, %v837
      %v839 = vshrl.u32 %v653, 16
      %v841 = vor.u32 %v839, %v837
      %v843 = vshll.u32 %v654, 16
      %v845 = vrot.slane %v843, 1
      %v846 = vsel %vm706, %v841, %v845
      %v847 = vshrl.u32 %v654, 16
      %v849 = vor.u32 %v847, %v845
      %v851 = vshll.u32 %v655, 16
      %v853 = vrot.slane %v851, 1
      %v854 = vsel %vm706, %v849, %v853
      %v855 = vshrl.u32 %v655, 16
      %v857 = vor.u32 %v855, %v853
      %v859 = vshll.u32 %v656, 16
      %v861 = vrot.slane %v859, 1
      %v862 = vsel %vm706, %v857, %v861
      %v863 = vshrl.u32 %v656, 16
      %v865 = vor.u32 %v863, %v861
      %v867 = vshll.u32 %v657, 16
      %v869 = vrot.slane %v867, 1
      %v870 = vsel %vm706, %v865, %v869
      %v871 = vshrl.u32 %v657, 16
      %v873 = vor.u32 %v871, %v869
      %v875 = vshll.u32 %v658, 16
      %v877 = vrot.slane %v875, 1
      %v878 = vsel %vm706, %v873, %v877
      %v879 = vshrl.u32 %v658, 16
      %v881 = vor.u32 %v879, %v877
      %v883 = vshll.u32 %v659, 16
      %v885 = vrot.slane %v883, 1
      %v886 = vsel %vm706, %v881, %v885
      %v887 = vshrl.u32 %v659, 16
      %v889 = vor.u32 %v887, %v885
      %v891 = vshll.u32 %v660, 16
      %v893 = vrot.slane %v891, 1
      %v894 = vsel %vm706, %v889, %v893
      %v895 = vshrl.u32 %v660, 16
      %v897 = vor.u32 %v895, %v893
      %v899 = vshll.u32 %v661, 16
      %v901 = vrot.slane %v899, 1
      %v902 = vsel %vm706, %v897, %v901
      %v903 = vshrl.u32 %v661, 16
      %v905 = vor.u32 %v903, %v901
      %v907 = vshll.u32 %v662, 16
      %v909 = vrot.slane %v907, 1
      %v910 = vsel %vm706, %v905, %v909
      %v911 = vshrl.u32 %v662, 16
      %v913 = vor.u32 %v911, %v909
      %v915 = vshll.u32 %v663, 16
      %v917 = vrot.slane %v915, 1
      %v918 = vsel %vm706, %v913, %v917
      %v919 = vshrl.u32 %v663, 16
      %v921 = vor.u32 %v919, %v917
      %v923 = vshll.u32 %v664, 16
      %v925 = vrot.slane %v923, 1
      %v926 = vsel %vm706, %v921, %v925
      %v927 = vshrl.u32 %v664, 16
      %v929 = vor.u32 %v927, %v925
      %v931 = vshll.u32 %v665, 16
      %v933 = vrot.slane %v931, 1
      %v934 = vsel %vm706, %v929, %v933
      %v935 = vshrl.u32 %v665, 16
      %v937 = vor.u32 %v935, %v933
      %v939 = vshll.u32 %v666, 16
      %v941 = vrot.slane %v939, 1
      %v942 = vsel %vm706, %v937, %v941
      %v943 = vshrl.u32 %v666, 16
      %v945 = vor.u32 %v943, %v941
      %v947 = vshll.u32 %v667, 16
      %v949 = vrot.slane %v947, 1
      %v950 = vsel %vm706, %v945, %v949
      %v951 = vshrl.u32 %v667, 16
      %v953 = vor.u32 %v951, %v949
      %v955 = vshll.u32 %v668, 16
      %v957 = vrot.slane %v955, 1
      %v958 = vsel %vm706, %v953, %v957
      %v959 = vshrl.u32 %v668, 16
      %v961 = vor.u32 %v959, %v957
      %v963 = vshll.u32 %v669, 16
      %v965 = vrot.slane %v963, 1
      %v966 = vsel %vm706, %v961, %v965
      %v967 = vshrl.u32 %v669, 16
      %v969 = vor.u32 %v967, %v965
      %v971 = vshll.u32 %v670, 16
      %v973 = vrot.slane %v971, 1
      %v974 = vsel %vm706, %v969, %v973
      %v975 = vshrl.u32 %v670, 16
      %v977 = vor.u32 %v975, %v973
      %v979 = vshll.u32 %v671, 16
      %v981 = vrot.slane %v979, 1
      %v982 = vsel %vm706, %v977, %v981
      %v983 = vshrl.u32 %v671, 16
      %v985 = vor.u32 %v983, %v981
      %v987 = vshll.u32 %v672, 16
      %v989 = vrot.slane %v987, 1
      %v990 = vsel %vm706, %v985, %v989
      %v991 = vshrl.u32 %v672, 16
      %v993 = vor.u32 %v991, %v989
      %v995 = vshll.u32 %v673, 16
      %v997 = vrot.slane %v995, 1
      %v998 = vsel %vm706, %v993, %v997
      %v999 = vshrl.u32 %v673, 16
      %v1001 = vor.u32 %v999, %v997
      %v1003 = vshll.u32 %v674, 16
      %v1005 = vrot.slane %v1003, 1
      %v1006 = vsel %vm706, %v1001, %v1005
      %v1007 = vshrl.u32 %v674, 16
      %v1009 = vor.u32 %v1007, %v1005
      %v1011 = vshll.u32 %v675, 16
      %v1013 = vrot.slane %v1011, 1
      %v1014 = vsel %vm706, %v1009, %v1013
      %v1015 = vshrl.u32 %v675, 16
      %v1017 = vor.u32 %v1015, %v1013
      %v1019 = vshll.u32 %v676, 16
      %v1021 = vrot.slane %v1019, 1
      %v1022 = vsel %vm706, %v1017, %v1021
      %v1023 = vshrl.u32 %v676, 16
      %v1025 = vor.u32 %v1023, %v1021
      %v1027 = vshll.u32 %v677, 16
      %v1029 = vrot.slane %v1027, 1
      %v1030 = vsel %vm706, %v1025, %v1029
      %v1031 = vshrl.u32 %v677, 16
      %v1033 = vor.u32 %v1031, %v1029
      %v1035 = vshll.u32 %v678, 16
      %v1037 = vrot.slane %v1035, 1
      %v1038 = vsel %vm706, %v1033, %v1037
      %v1039 = vshrl.u32 %v678, 16
      %v1041 = vor.u32 %v1039, %v1037
      %v1043 = vshll.u32 %v679, 16
      %v1045 = vrot.slane %v1043, 1
      %v1046 = vsel %vm706, %v1041, %v1045
      %v1047 = vshrl.u32 %v679, 16
      %v1049 = vor.u32 %v1047, %v1045
      %v1051 = vshll.u32 %v680, 16
      %v1053 = vrot.slane %v1051, 1
      %v1054 = vsel %vm706, %v1049, %v1053
      %v1055 = vshrl.u32 %v680, 16
      %v1057 = vor.u32 %v1055, %v1053
      %v1059 = vshll.u32 %v681, 16
      %v1061 = vrot.slane %v1059, 1
      %v1062 = vsel %vm706, %v1057, %v1061
      %v1063 = vshrl.u32 %v681, 16
      %v1065 = vor.u32 %v1063, %v1061
      %v1067 = vshll.u32 %v682, 16
      %v1069 = vrot.slane %v1067, 1
      %v1070 = vsel %vm706, %v1065, %v1069
      %v1071 = vshrl.u32 %v682, 16
      %v1073 = vor.u32 %v1071, %v1069
      %v1075 = vshll.u32 %v683, 16
      %v1077 = vrot.slane %v1075, 1
      %v1078 = vsel %vm706, %v1073, %v1077
      %v1079 = vshrl.u32 %v683, 16
      %v1081 = vor.u32 %v1079, %v1077
      %v1083 = vshll.u32 %v684, 16
      %v1085 = vrot.slane %v1083, 1
      %v1086 = vsel %vm706, %v1081, %v1085
      %v1087 = vshrl.u32 %v684, 16
      %v1089 = vor.u32 %v1087, %v1085
      %v1091 = vshll.u32 %v685, 16
      %v1093 = vrot.slane %v1091, 1
      %v1094 = vsel %vm706, %v1089, %v1093
      %v1095 = vshrl.u32 %v685, 16
      %v1097 = vor.u32 %v1095, %v1093
      %v1099 = vshll.u32 %v686, 16
      %v1101 = vrot.slane %v1099, 1
      %v1102 = vsel %vm706, %v1097, %v1101
      %v1103 = vshrl.u32 %v686, 16
      %v1105 = vor.u32 %v1103, %v1101
      %v1107 = vshll.u32 %v687, 16
      %v1109 = vrot.slane %v1107, 1
      %v1110 = vsel %vm706, %v1105, %v1109
      %v1111 = vshrl.u32 %v687, 16
      %v1113 = vor.u32 %v1111, %v1109
      %v1115 = vshll.u32 %v688, 16
      %v1117 = vrot.slane %v1115, 1
      %v1118 = vsel %vm706, %v1113, %v1117
      %v1119 = vshrl.u32 %v688, 16
      %v1121 = vor.u32 %v1119, %v1117
      %v1123 = vshll.u32 %v689, 16
      %v1125 = vrot.slane %v1123, 1
      %v1126 = vsel %vm706, %v1121, %v1125
      %v1127 = vshrl.u32 %v689, 16
      %v1129 = vor.u32 %v1127, %v1125
      %v1131 = vshll.u32 %v690, 16
      %v1133 = vrot.slane %v1131, 1
      %v1134 = vsel %vm706, %v1129, %v1133
      %v1135 = vshrl.u32 %v690, 16
      %v1137 = vor.u32 %v1135, %v1133
      %v1139 = vshll.u32 %v691, 16
      %v1141 = vrot.slane %v1139, 1
      %v1142 = vsel %vm706, %v1137, %v1141
      %v1143 = vshrl.u32 %v691, 16
      %v1145 = vor.u32 %v1143, %v1141
      %v1147 = vshll.u32 %v692, 16
      %v1149 = vrot.slane %v1147, 1
      %v1150 = vsel %vm706, %v1145, %v1149
      %v1151 = vshrl.u32 %v692, 16
      %v1153 = vor.u32 %v1151, %v1149
      %v1155 = vshll.u32 %v693, 16
      %v1157 = vrot.slane %v1155, 1
      %v1158 = vsel %vm706, %v1153, %v1157
      %v1159 = vshrl.u32 %v693, 16
      %v1161 = vor.u32 %v1159, %v1157
      %v1163 = vshll.u32 %v694, 16
      %v1165 = vrot.slane %v1163, 1
      %v1166 = vsel %vm706, %v1161, %v1165
      %v1167 = vshrl.u32 %v694, 16
      %v1169 = vor.u32 %v1167, %v1165
      %v1171 = vshll.u32 %v695, 16
      %v1173 = vrot.slane %v1171, 1
      %v1174 = vsel %vm706, %v1169, %v1173
      %v1175 = vshrl.u32 %v695, 16
      %v1177 = vor.u32 %v1175, %v1173
      %v1179 = vshll.u32 %v696, 16
      %v1181 = vrot.slane %v1179, 1
      %v1182 = vsel %vm706, %v1177, %v1181
      %v1183 = vshrl.u32 %v696, 16
      %v1185 = vor.u32 %v1183, %v1181
      %v1187 = vshll.u32 %v697, 16
      %v1189 = vrot.slane %v1187, 1
      %v1190 = vsel %vm706, %v1185, %v1189
      %v1191 = vshrl.u32 %v697, 16
      %v1193 = vor.u32 %v1191, %v1189
      %v1195 = vshll.u32 %v698, 16
      %v1197 = vrot.slane %v1195, 1
      %v1198 = vsel %vm706, %v1193, %v1197
      %v1199 = vshrl.u32 %v698, 16
      %v1201 = vor.u32 %v1199, %v1197
      %v1203 = vshll.u32 %v699, 16
      %v1205 = vrot.slane %v1203, 1
      %v1206 = vsel %vm706, %v1201, %v1205
      %v1207 = vshrl.u32 %v699, 16
      %v1209 = vor.u32 %v1207, %v1205
      %v1211 = vshll.u32 %v700, 16
      %v1213 = vrot.slane %v1211, 1
      %v1214 = vsel %vm706, %v1209, %v1213
      %v1215 = vshrl.u32 %v700, 16
      %v1217 = vor.u32 %v1215, %v1213
      %v1219 = vshll.u32 %v701, 16
      %v1221 = vrot.slane %v1219, 1
      %v1222 = vsel %vm706, %v1217, %v1221
      %v1223 = vshrl.u32 %v701, 16
      %v1225 = vor.u32 %v1223, %v1221
      %v1227 = vshll.u32 %v702, 16
      %v1229 = vrot.slane %v1227, 1
      %v1230 = vsel %vm706, %v1225, %v1229
      %v1231 = vshrl.u32 %v702, 16
      %v1233 = vor.u32 %v1231, %v1229
      %v1235 = vshll.u32 %v703, 16
      %v1237 = vrot.slane %v1235, 1
      %v1238 = vsel %vm706, %v1233, %v1237
      %v1239 = vshrl.u32 %v703, 16
      %v1241 = vor.u32 %v1239, %v1237
      %v1243 = vshll.u32 %v704, 16
      %v1245 = vrot.slane %v1243, 1
      %v1246 = vsel %vm706, %v1241, %v1245
      %v1247 = vshrl.u32 %v704, 16
      %v1249 = vor.u32 %v1247, %v1245
      %v1251 = vshll.u32 %v705, 16
      %v1253 = vrot.slane %v1251, 1
      %v1254 = vsel %vm706, %v1249, %v1253
      %vm1255 = vcmask 64512
      %v1257 = vsel %vm1255, %v718, 0
      %v1260 = vsel %vm1255, %v726, 0
      %v1263 = vsel %vm1255, %v734, 0
      %v1266 = vsel %vm1255, %v742, 0
      %v1269 = vsel %vm1255, %v750, 0
      %v1272 = vsel %vm1255, %v758, 0
      %v1275 = vsel %vm1255, %v766, 0
      %v1278 = vsel %vm1255, %v774, 0
      %v1281 = vsel %vm1255, %v782, 0
      %v1284 = vsel %vm1255, %v790, 0
      %v1287 = vsel %vm1255, %v798, 0
      %v1290 = vsel %vm1255, %v806, 0
      %v1293 = vsel %vm1255, %v814, 0
      %v1296 = vsel %vm1255, %v822, 0
      %v1299 = vsel %vm1255, %v830, 0
      %v1302 = vsel %vm1255, %v838, 0
      %v1305 = vsel %vm1255, %v846, 0
      %v1308 = vsel %vm1255, %v854, 0
      %v1311 = vsel %vm1255, %v862, 0
      %v1314 = vsel %vm1255, %v870, 0
      %v1317 = vsel %vm1255, %v878, 0
      %v1320 = vsel %vm1255, %v886, 0
      %v1323 = vsel %vm1255, %v894, 0
      %v1326 = vsel %vm1255, %v902, 0
      %v1329 = vsel %vm1255, %v910, 0
      %v1332 = vsel %vm1255, %v918, 0
      %v1335 = vsel %vm1255, %v926, 0
      %v1338 = vsel %vm1255, %v934, 0
      %v1341 = vsel %vm1255, %v942, 0
      %v1344 = vsel %vm1255, %v950, 0
      %v1347 = vsel %vm1255, %v958, 0
      %v1350 = vsel %vm1255, %v966, 0
      %v1353 = vsel %vm1255, %v974, 0
      %v1356 = vsel %vm1255, %v982, 0
      %v1359 = vsel %vm1255, %v990, 0
      %v1362 = vsel %vm1255, %v998, 0
      %v1365 = vsel %vm1255, %v1006, 0
      %v1368 = vsel %vm1255, %v1014, 0
      %v1371 = vsel %vm1255, %v1022, 0
      %v1374 = vsel %vm1255, %v1030, 0
      %v1377 = vsel %vm1255, %v1038, 0
      %v1380 = vsel %vm1255, %v1046, 0
      %v1383 = vsel %vm1255, %v1054, 0
      %v1386 = vsel %vm1255, %v1062, 0
      %v1389 = vsel %vm1255, %v1070, 0
      %v1392 = vsel %vm1255, %v1078, 0
      %v1395 = vsel %vm1255, %v1086, 0
      %v1398 = vsel %vm1255, %v1094, 0
      %v1401 = vsel %vm1255, %v1102, 0
      %v1404 = vsel %vm1255, %v1110, 0
      %v1407 = vsel %vm1255, %v1118, 0
      %v1410 = vsel %vm1255, %v1126, 0
      %v1413 = vsel %vm1255, %v1134, 0
      %v1416 = vsel %vm1255, %v1142, 0
      %v1419 = vsel %vm1255, %v1150, 0
      %v1422 = vsel %vm1255, %v1158, 0
      %v1425 = vsel %vm1255, %v1166, 0
      %v1428 = vsel %vm1255, %v1174, 0
      %v1431 = vsel %vm1255, %v1182, 0
      %v1434 = vsel %vm1255, %v1190, 0
      %v1437 = vsel %vm1255, %v1198, 0
      %v1440 = vsel %vm1255, %v1206, 0
      %v1443 = vsel %vm1255, %v1214, 0
      %v1446 = vsel %vm1255, %v1222, 0
      %v1449 = vsel %vm1255, %v1230, 0
      %v1452 = vsel %vm1255, %v1238, 0
      %v1455 = vsel %vm1255, %v1246, 0
      %v1458 = vsel %vm1255, %v1254, 0
      %vm1460 = vcmask 1043456
      %v1462 = vsel %vm1460, %v362, 0
      %1464 = vmatprep.subr.bf16.mxu0 0
      %1465 = vmatpush1.bf16.msra.mxu0 0
      %1466 = vmatprep.subr.bf16.mxu0 0
      %1467 = vmatpush1.bf16.msra.mxu0 0
      %1468 = vmatprep.subr.bf16.mxu0 0
      %1469 = vmatpush1.bf16.msra.mxu0 0
      %1470 = vmatprep.subr.bf16.mxu0 0
      %1471 = vmatpush1.bf16.msra.mxu0 0
      %1472 = vmatprep.subr.bf16.mxu0 0
      %1473 = vmatpush1.bf16.msra.mxu0 0
      %1474 = vmatprep.subr.bf16.mxu0 0
      %1475 = vmatpush1.bf16.msra.mxu0 0
      %1476 = vmatprep.subr.bf16.mxu0 0
      %1477 = vmatpush1.bf16.msra.mxu0 0
      %1478 = vmatprep.subr.bf16.mxu0 0
      %1479 = vmatpush1.bf16.msra.mxu0 %v1462
      %1480 = vmatprep.subr.bf16.mxu0 0
      %1481 = vmatpush2.bf16.msra.mxu0 0
      %1482 = vmatprep.subr.bf16.mxu0 0
      %1483 = vmatpush2.bf16.msra.mxu0 0
      %1484 = vmatprep.subr.bf16.mxu0 0
      %1485 = vmatpush2.bf16.msra.mxu0 0
      %1486 = vmatprep.subr.bf16.mxu0 0
      %1487 = vmatpush2.bf16.msra.mxu0 0
      %1488 = vmatprep.subr.bf16.mxu0 0
      %1489 = vmatpush2.bf16.msra.mxu0 0
      %1490 = vmatprep.subr.bf16.mxu0 0
      %1491 = vmatpush2.bf16.msra.mxu0 0
      %1492 = vmatprep.subr.bf16.mxu0 0
      %1493 = vmatpush2.bf16.msra.mxu0 0
      %1494 = vmatprep.subr.bf16.mxu0 0
      %1495 = vmatpush2.bf16.msra.mxu0 0
      %1496 = vmatprep.mubr.bf16.mxu0 0
      %1497 = vmatmul.mubr.bf16.gmra.mxu0 %v1257
      %v1498 = vpop.f32.mrf.mxu0
      %v1499 = vadd.f32 0.0, %v1498
      %v1500 = vpop.f32.mrf.mxu0
      %v1501 = vpop.f32.mrf.mxu0
      %v1502 = vadd.f32 0.0, %v1501
      %v1503 = vpop.f32.mrf.mxu0
      %1504 = vmatprep.mubr.bf16.mxu0 0
      %1505 = vmatmul.mubr.bf16.gmra.mxu0 %v1260
      %v1506 = vpop.f32.mrf.mxu0
      %v1507 = vadd.f32 0.0, %v1506
      %v1508 = vpop.f32.mrf.mxu0
      %v1509 = vpop.f32.mrf.mxu0
      %v1510 = vadd.f32 0.0, %v1509
      %v1511 = vpop.f32.mrf.mxu0
      %1512 = vmatprep.mubr.bf16.mxu0 0
      %1513 = vmatmul.mubr.bf16.gmra.mxu0 %v1263
      %v1514 = vpop.f32.mrf.mxu0
      %v1515 = vadd.f32 0.0, %v1514
      %v1516 = vpop.f32.mrf.mxu0
      %v1517 = vpop.f32.mrf.mxu0
      %v1518 = vadd.f32 0.0, %v1517
      %v1519 = vpop.f32.mrf.mxu0
      %1520 = vmatprep.mubr.bf16.mxu0 0
      %1521 = vmatmul.mubr.bf16.gmra.mxu0 %v1266
      %v1522 = vpop.f32.mrf.mxu0
      %v1523 = vadd.f32 0.0, %v1522
      %v1524 = vpop.f32.mrf.mxu0
      %v1525 = vpop.f32.mrf.mxu0
      %v1526 = vadd.f32 0.0, %v1525
      %v1527 = vpop.f32.mrf.mxu0
      %1528 = vmatprep.mubr.bf16.mxu0 0
      %1529 = vmatmul.mubr.bf16.gmra.mxu0 %v1269
      %v1530 = vpop.f32.mrf.mxu0
      %v1531 = vadd.f32 0.0, %v1530
      %v1532 = vpop.f32.mrf.mxu0
      %v1533 = vpop.f32.mrf.mxu0
      %v1534 = vadd.f32 0.0, %v1533
      %v1535 = vpop.f32.mrf.mxu0
      %1536 = vmatprep.mubr.bf16.mxu0 0
      %1537 = vmatmul.mubr.bf16.gmra.mxu0 %v1272
      %v1538 = vpop.f32.mrf.mxu0
      %v1539 = vadd.f32 0.0, %v1538
      %v1540 = vpop.f32.mrf.mxu0
      %v1541 = vpop.f32.mrf.mxu0
      %v1542 = vadd.f32 0.0, %v1541
      %v1543 = vpop.f32.mrf.mxu0
      %1544 = vmatprep.mubr.bf16.mxu0 0
      %1545 = vmatmul.mubr.bf16.gmra.mxu0 %v1275
      %v1546 = vpop.f32.mrf.mxu0
      %v1547 = vadd.f32 0.0, %v1546
      %v1548 = vpop.f32.mrf.mxu0
      %v1549 = vpop.f32.mrf.mxu0
      %v1550 = vadd.f32 0.0, %v1549
      %v1551 = vpop.f32.mrf.mxu0
      %1552 = vmatprep.mubr.bf16.mxu0 0
      %1553 = vmatmul.mubr.bf16.gmra.mxu0 %v1278
      %v1554 = vpop.f32.mrf.mxu0
      %v1555 = vadd.f32 0.0, %v1554
      %v1556 = vpop.f32.mrf.mxu0
      %v1557 = vpop.f32.mrf.mxu0
      %v1558 = vadd.f32 0.0, %v1557
      %v1559 = vpop.f32.mrf.mxu0
      %1560 = vmatprep.mubr.bf16.mxu0 0
      %1561 = vmatmul.mubr.bf16.gmra.mxu0 %v1281
      %v1562 = vpop.f32.mrf.mxu0
      %v1563 = vadd.f32 0.0, %v1562
      %v1564 = vpop.f32.mrf.mxu0
      %v1565 = vpop.f32.mrf.mxu0
      %v1566 = vadd.f32 0.0, %v1565
      %v1567 = vpop.f32.mrf.mxu0
      %1568 = vmatprep.mubr.bf16.mxu0 0
      %1569 = vmatmul.mubr.bf16.gmra.mxu0 %v1284
      %v1570 = vpop.f32.mrf.mxu0
      %v1571 = vadd.f32 0.0, %v1570
      %v1572 = vpop.f32.mrf.mxu0
      %v1573 = vpop.f32.mrf.mxu0
      %v1574 = vadd.f32 0.0, %v1573
      %v1575 = vpop.f32.mrf.mxu0
      %1576 = vmatprep.mubr.bf16.mxu0 0
      %1577 = vmatmul.mubr.bf16.gmra.mxu0 %v1287
      %v1578 = vpop.f32.mrf.mxu0
      %v1579 = vadd.f32 0.0, %v1578
      %v1580 = vpop.f32.mrf.mxu0
      %v1581 = vpop.f32.mrf.mxu0
      %v1582 = vadd.f32 0.0, %v1581
      %v1583 = vpop.f32.mrf.mxu0
      %1584 = vmatprep.mubr.bf16.mxu0 0
      %1585 = vmatmul.mubr.bf16.gmra.mxu0 %v1290
      %v1586 = vpop.f32.mrf.mxu0
      %v1587 = vadd.f32 0.0, %v1586
      %v1588 = vpop.f32.mrf.mxu0
      %v1589 = vpop.f32.mrf.mxu0
      %v1590 = vadd.f32 0.0, %v1589
      %v1591 = vpop.f32.mrf.mxu0
      %1592 = vmatprep.mubr.bf16.mxu0 0
      %1593 = vmatmul.mubr.bf16.gmra.mxu0 %v1293
      %v1594 = vpop.f32.mrf.mxu0
      %v1595 = vadd.f32 0.0, %v1594
      %v1596 = vpop.f32.mrf.mxu0
      %v1597 = vpop.f32.mrf.mxu0
      %v1598 = vadd.f32 0.0, %v1597
      %v1599 = vpop.f32.mrf.mxu0
      %1600 = vmatprep.mubr.bf16.mxu0 0
      %1601 = vmatmul.mubr.bf16.gmra.mxu0 %v1296
      %v1602 = vpop.f32.mrf.mxu0
      %v1603 = vadd.f32 0.0, %v1602
      %v1604 = vpop.f32.mrf.mxu0
      %v1605 = vpop.f32.mrf.mxu0
      %v1606 = vadd.f32 0.0, %v1605
      %v1607 = vpop.f32.mrf.mxu0
      %1608 = vmatprep.mubr.bf16.mxu0 0
      %1609 = vmatmul.mubr.bf16.gmra.mxu0 %v1299
      %v1610 = vpop.f32.mrf.mxu0
      %v1611 = vadd.f32 0.0, %v1610
      %v1612 = vpop.f32.mrf.mxu0
      %v1613 = vpop.f32.mrf.mxu0
      %v1614 = vadd.f32 0.0, %v1613
      %v1615 = vpop.f32.mrf.mxu0
      %1616 = vmatprep.mubr.bf16.mxu0 0
      %1617 = vmatmul.mubr.bf16.gmra.mxu0 %v1302
      %v1618 = vpop.f32.mrf.mxu0
      %v1619 = vadd.f32 0.0, %v1618
      %v1620 = vpop.f32.mrf.mxu0
      %v1621 = vpop.f32.mrf.mxu0
      %v1622 = vadd.f32 0.0, %v1621
      %v1623 = vpop.f32.mrf.mxu0
      %1624 = vmatprep.mubr.bf16.mxu0 0
      %1625 = vmatmul.mubr.bf16.gmra.mxu0 %v1305
      %v1626 = vpop.f32.mrf.mxu0
      %v1627 = vadd.f32 0.0, %v1626
      %v1628 = vpop.f32.mrf.mxu0
      %v1629 = vpop.f32.mrf.mxu0
      %v1630 = vadd.f32 0.0, %v1629
      %v1631 = vpop.f32.mrf.mxu0
      %1632 = vmatprep.mubr.bf16.mxu0 0
      %1633 = vmatmul.mubr.bf16.gmra.mxu0 %v1308
      %v1634 = vpop.f32.mrf.mxu0
      %v1635 = vadd.f32 0.0, %v1634
      %v1636 = vpop.f32.mrf.mxu0
      %v1637 = vpop.f32.mrf.mxu0
      %v1638 = vadd.f32 0.0, %v1637
      %v1639 = vpop.f32.mrf.mxu0
      %1640 = vmatprep.mubr.bf16.mxu0 0
      %1641 = vmatmul.mubr.bf16.gmra.mxu0 %v1311
      %v1642 = vpop.f32.mrf.mxu0
      %v1643 = vadd.f32 0.0, %v1642
      %v1644 = vpop.f32.mrf.mxu0
      %v1645 = vpop.f32.mrf.mxu0
      %v1646 = vadd.f32 0.0, %v1645
      %v1647 = vpop.f32.mrf.mxu0
      %1648 = vmatprep.mubr.bf16.mxu0 0
      %1649 = vmatmul.mubr.bf16.gmra.mxu0 %v1314
      %v1650 = vpop.f32.mrf.mxu0
      %v1651 = vadd.f32 0.0, %v1650
      %v1652 = vpop.f32.mrf.mxu0
      %v1653 = vpop.f32.mrf.mxu0
      %v1654 = vadd.f32 0.0, %v1653
      %v1655 = vpop.f32.mrf.mxu0
      %1656 = vmatprep.mubr.bf16.mxu0 0
      %1657 = vmatmul.mubr.bf16.gmra.mxu0 %v1317
      %v1658 = vpop.f32.mrf.mxu0
      %v1659 = vadd.f32 0.0, %v1658
      %v1660 = vpop.f32.mrf.mxu0
      %v1661 = vpop.f32.mrf.mxu0
      %v1662 = vadd.f32 0.0, %v1661
      %v1663 = vpop.f32.mrf.mxu0
      %1664 = vmatprep.mubr.bf16.mxu0 0
      %1665 = vmatmul.mubr.bf16.gmra.mxu0 %v1320
      %v1666 = vpop.f32.mrf.mxu0
      %v1667 = vadd.f32 0.0, %v1666
      %v1668 = vpop.f32.mrf.mxu0
      %v1669 = vpop.f32.mrf.mxu0
      %v1670 = vadd.f32 0.0, %v1669
      %v1671 = vpop.f32.mrf.mxu0
      %1672 = vmatprep.mubr.bf16.mxu0 0
      %1673 = vmatmul.mubr.bf16.gmra.mxu0 %v1323
      %v1674 = vpop.f32.mrf.mxu0
      %v1675 = vadd.f32 0.0, %v1674
      %v1676 = vpop.f32.mrf.mxu0
      %v1677 = vpop.f32.mrf.mxu0
      %v1678 = vadd.f32 0.0, %v1677
      %v1679 = vpop.f32.mrf.mxu0
      %1680 = vmatprep.mubr.bf16.mxu0 0
      %1681 = vmatmul.mubr.bf16.gmra.mxu0 %v1326
      %v1682 = vpop.f32.mrf.mxu0
      %v1683 = vadd.f32 0.0, %v1682
      %v1684 = vpop.f32.mrf.mxu0
      %v1685 = vpop.f32.mrf.mxu0
      %v1686 = vadd.f32 0.0, %v1685
      %v1687 = vpop.f32.mrf.mxu0
      %1688 = vmatprep.mubr.bf16.mxu0 0
      %1689 = vmatmul.mubr.bf16.gmra.mxu0 %v1329
      %v1690 = vpop.f32.mrf.mxu0
      %v1691 = vadd.f32 0.0, %v1690
      %v1692 = vpop.f32.mrf.mxu0
      %v1693 = vpop.f32.mrf.mxu0
      %v1694 = vadd.f32 0.0, %v1693
      %v1695 = vpop.f32.mrf.mxu0
      %1696 = vmatprep.mubr.bf16.mxu0 0
      %1697 = vmatmul.mubr.bf16.gmra.mxu0 %v1332
      %v1698 = vpop.f32.mrf.mxu0
      %v1699 = vadd.f32 0.0, %v1698
      %v1700 = vpop.f32.mrf.mxu0
      %v1701 = vpop.f32.mrf.mxu0
      %v1702 = vadd.f32 0.0, %v1701
      %v1703 = vpop.f32.mrf.mxu0
      %1704 = vmatprep.mubr.bf16.mxu0 0
      %1705 = vmatmul.mubr.bf16.gmra.mxu0 %v1335
      %v1706 = vpop.f32.mrf.mxu0
      %v1707 = vadd.f32 0.0, %v1706
      %v1708 = vpop.f32.mrf.mxu0
      %v1709 = vpop.f32.mrf.mxu0
      %v1710 = vadd.f32 0.0, %v1709
      %v1711 = vpop.f32.mrf.mxu0
      %1712 = vmatprep.mubr.bf16.mxu0 0
      %1713 = vmatmul.mubr.bf16.gmra.mxu0 %v1338
      %v1714 = vpop.f32.mrf.mxu0
      %v1715 = vadd.f32 0.0, %v1714
      %v1716 = vpop.f32.mrf.mxu0
      %v1717 = vpop.f32.mrf.mxu0
      %v1718 = vadd.f32 0.0, %v1717
      %v1719 = vpop.f32.mrf.mxu0
      %1720 = vmatprep.mubr.bf16.mxu0 0
      %1721 = vmatmul.mubr.bf16.gmra.mxu0 %v1341
      %v1722 = vpop.f32.mrf.mxu0
      %v1723 = vadd.f32 0.0, %v1722
      %v1724 = vpop.f32.mrf.mxu0
      %v1725 = vpop.f32.mrf.mxu0
      %v1726 = vadd.f32 0.0, %v1725
      %v1727 = vpop.f32.mrf.mxu0
      %1728 = vmatprep.mubr.bf16.mxu0 0
      %1729 = vmatmul.mubr.bf16.gmra.mxu0 %v1344
      %v1730 = vpop.f32.mrf.mxu0
      %v1731 = vadd.f32 0.0, %v1730
      %v1732 = vpop.f32.mrf.mxu0
      %v1733 = vpop.f32.mrf.mxu0
      %v1734 = vadd.f32 0.0, %v1733
      %v1735 = vpop.f32.mrf.mxu0
      %1736 = vmatprep.mubr.bf16.mxu0 0
      %1737 = vmatmul.mubr.bf16.gmra.mxu0 %v1347
      %v1738 = vpop.f32.mrf.mxu0
      %v1739 = vadd.f32 0.0, %v1738
      %v1740 = vpop.f32.mrf.mxu0
      %v1741 = vpop.f32.mrf.mxu0
      %v1742 = vadd.f32 0.0, %v1741
      %v1743 = vpop.f32.mrf.mxu0
      %1744 = vmatprep.mubr.bf16.mxu0 0
      %1745 = vmatmul.mubr.bf16.gmra.mxu0 %v1350
      %v1746 = vpop.f32.mrf.mxu0
      %v1747 = vadd.f32 0.0, %v1746
      %v1748 = vpop.f32.mrf.mxu0
      %v1749 = vpop.f32.mrf.mxu0
      %v1750 = vadd.f32 0.0, %v1749
      %v1751 = vpop.f32.mrf.mxu0
      %1752 = vmatprep.mubr.bf16.mxu0 0
      %1753 = vmatmul.mubr.bf16.gmra.mxu0 %v1353
      %v1754 = vpop.f32.mrf.mxu0
      %v1755 = vadd.f32 0.0, %v1754
      %v1756 = vpop.f32.mrf.mxu0
      %v1757 = vpop.f32.mrf.mxu0
      %v1758 = vadd.f32 0.0, %v1757
      %v1759 = vpop.f32.mrf.mxu0
      %1760 = vmatprep.mubr.bf16.mxu0 0
      %1761 = vmatmul.mubr.bf16.gmra.mxu0 %v1356
      %v1762 = vpop.f32.mrf.mxu0
      %v1763 = vadd.f32 0.0, %v1762
      %v1764 = vpop.f32.mrf.mxu0
      %v1765 = vpop.f32.mrf.mxu0
      %v1766 = vadd.f32 0.0, %v1765
      %v1767 = vpop.f32.mrf.mxu0
      %1768 = vmatprep.mubr.bf16.mxu0 0
      %1769 = vmatmul.mubr.bf16.gmra.mxu0 %v1359
      %v1770 = vpop.f32.mrf.mxu0
      %v1771 = vadd.f32 0.0, %v1770
      %v1772 = vpop.f32.mrf.mxu0
      %v1773 = vpop.f32.mrf.mxu0
      %v1774 = vadd.f32 0.0, %v1773
      %v1775 = vpop.f32.mrf.mxu0
      %1776 = vmatprep.mubr.bf16.mxu0 0
      %1777 = vmatmul.mubr.bf16.gmra.mxu0 %v1362
      %v1778 = vpop.f32.mrf.mxu0
      %v1779 = vadd.f32 0.0, %v1778
      %v1780 = vpop.f32.mrf.mxu0
      %v1781 = vpop.f32.mrf.mxu0
      %v1782 = vadd.f32 0.0, %v1781
      %v1783 = vpop.f32.mrf.mxu0
      %1784 = vmatprep.mubr.bf16.mxu0 0
      %1785 = vmatmul.mubr.bf16.gmra.mxu0 %v1365
      %v1786 = vpop.f32.mrf.mxu0
      %v1787 = vadd.f32 0.0, %v1786
      %v1788 = vpop.f32.mrf.mxu0
      %v1789 = vpop.f32.mrf.mxu0
      %v1790 = vadd.f32 0.0, %v1789
      %v1791 = vpop.f32.mrf.mxu0
      %1792 = vmatprep.mubr.bf16.mxu0 0
      %1793 = vmatmul.mubr.bf16.gmra.mxu0 %v1368
      %v1794 = vpop.f32.mrf.mxu0
      %v1795 = vadd.f32 0.0, %v1794
      %v1796 = vpop.f32.mrf.mxu0
      %v1797 = vpop.f32.mrf.mxu0
      %v1798 = vadd.f32 0.0, %v1797
      %v1799 = vpop.f32.mrf.mxu0
      %1800 = vmatprep.mubr.bf16.mxu0 0
      %1801 = vmatmul.mubr.bf16.gmra.mxu0 %v1371
      %v1802 = vpop.f32.mrf.mxu0
      %v1803 = vadd.f32 0.0, %v1802
      %v1804 = vpop.f32.mrf.mxu0
      %v1805 = vpop.f32.mrf.mxu0
      %v1806 = vadd.f32 0.0, %v1805
      %v1807 = vpop.f32.mrf.mxu0
      %1808 = vmatprep.mubr.bf16.mxu0 0
      %1809 = vmatmul.mubr.bf16.gmra.mxu0 %v1374
      %v1810 = vpop.f32.mrf.mxu0
      %v1811 = vadd.f32 0.0, %v1810
      %v1812 = vpop.f32.mrf.mxu0
      %v1813 = vpop.f32.mrf.mxu0
      %v1814 = vadd.f32 0.0, %v1813
      %v1815 = vpop.f32.mrf.mxu0
      %1816 = vmatprep.mubr.bf16.mxu0 0
      %1817 = vmatmul.mubr.bf16.gmra.mxu0 %v1377
      %v1818 = vpop.f32.mrf.mxu0
      %v1819 = vadd.f32 0.0, %v1818
      %v1820 = vpop.f32.mrf.mxu0
      %v1821 = vpop.f32.mrf.mxu0
      %v1822 = vadd.f32 0.0, %v1821
      %v1823 = vpop.f32.mrf.mxu0
      %1824 = vmatprep.mubr.bf16.mxu0 0
      %1825 = vmatmul.mubr.bf16.gmra.mxu0 %v1380
      %v1826 = vpop.f32.mrf.mxu0
      %v1827 = vadd.f32 0.0, %v1826
      %v1828 = vpop.f32.mrf.mxu0
      %v1829 = vpop.f32.mrf.mxu0
      %v1830 = vadd.f32 0.0, %v1829
      %v1831 = vpop.f32.mrf.mxu0
      %1832 = vmatprep.mubr.bf16.mxu0 0
      %1833 = vmatmul.mubr.bf16.gmra.mxu0 %v1383
      %v1834 = vpop.f32.mrf.mxu0
      %v1835 = vadd.f32 0.0, %v1834
      %v1836 = vpop.f32.mrf.mxu0
      %v1837 = vpop.f32.mrf.mxu0
      %v1838 = vadd.f32 0.0, %v1837
      %v1839 = vpop.f32.mrf.mxu0
      %1840 = vmatprep.mubr.bf16.mxu0 0
      %1841 = vmatmul.mubr.bf16.gmra.mxu0 %v1386
      %v1842 = vpop.f32.mrf.mxu0
      %v1843 = vadd.f32 0.0, %v1842
      %v1844 = vpop.f32.mrf.mxu0
      %v1845 = vpop.f32.mrf.mxu0
      %v1846 = vadd.f32 0.0, %v1845
      %v1847 = vpop.f32.mrf.mxu0
      %1848 = vmatprep.mubr.bf16.mxu0 0
      %1849 = vmatmul.mubr.bf16.gmra.mxu0 %v1389
      %v1850 = vpop.f32.mrf.mxu0
      %v1851 = vadd.f32 0.0, %v1850
      %v1852 = vpop.f32.mrf.mxu0
      %v1853 = vpop.f32.mrf.mxu0
      %v1854 = vadd.f32 0.0, %v1853
      %v1855 = vpop.f32.mrf.mxu0
      %1856 = vmatprep.mubr.bf16.mxu0 0
      %1857 = vmatmul.mubr.bf16.gmra.mxu0 %v1392
      %v1858 = vpop.f32.mrf.mxu0
      %v1859 = vadd.f32 0.0, %v1858
      %v1860 = vpop.f32.mrf.mxu0
      %v1861 = vpop.f32.mrf.mxu0
      %v1862 = vadd.f32 0.0, %v1861
      %v1863 = vpop.f32.mrf.mxu0
      %1864 = vmatprep.mubr.bf16.mxu0 0
      %1865 = vmatmul.mubr.bf16.gmra.mxu0 %v1395
      %v1866 = vpop.f32.mrf.mxu0
      %v1867 = vadd.f32 0.0, %v1866
      %v1868 = vpop.f32.mrf.mxu0
      %v1869 = vpop.f32.mrf.mxu0
      %v1870 = vadd.f32 0.0, %v1869
      %v1871 = vpop.f32.mrf.mxu0
      %1872 = vmatprep.mubr.bf16.mxu0 0
      %1873 = vmatmul.mubr.bf16.gmra.mxu0 %v1398
      %v1874 = vpop.f32.mrf.mxu0
      %v1875 = vadd.f32 0.0, %v1874
      %v1876 = vpop.f32.mrf.mxu0
      %v1877 = vpop.f32.mrf.mxu0
      %v1878 = vadd.f32 0.0, %v1877
      %v1879 = vpop.f32.mrf.mxu0
      %1880 = vmatprep.mubr.bf16.mxu0 0
      %1881 = vmatmul.mubr.bf16.gmra.mxu0 %v1401
      %v1882 = vpop.f32.mrf.mxu0
      %v1883 = vadd.f32 0.0, %v1882
      %v1884 = vpop.f32.mrf.mxu0
      %v1885 = vpop.f32.mrf.mxu0
      %v1886 = vadd.f32 0.0, %v1885
      %v1887 = vpop.f32.mrf.mxu0
      %1888 = vmatprep.mubr.bf16.mxu0 0
      %1889 = vmatmul.mubr.bf16.gmra.mxu0 %v1404
      %v1890 = vpop.f32.mrf.mxu0
      %v1891 = vadd.f32 0.0, %v1890
      %v1892 = vpop.f32.mrf.mxu0
      %v1893 = vpop.f32.mrf.mxu0
      %v1894 = vadd.f32 0.0, %v1893
      %v1895 = vpop.f32.mrf.mxu0
      %1896 = vmatprep.mubr.bf16.mxu0 0
      %1897 = vmatmul.mubr.bf16.gmra.mxu0 %v1407
      %v1898 = vpop.f32.mrf.mxu0
      %v1899 = vadd.f32 0.0, %v1898
      %v1900 = vpop.f32.mrf.mxu0
      %v1901 = vpop.f32.mrf.mxu0
      %v1902 = vadd.f32 0.0, %v1901
      %v1903 = vpop.f32.mrf.mxu0
      %1904 = vmatprep.mubr.bf16.mxu0 0
      %1905 = vmatmul.mubr.bf16.gmra.mxu0 %v1410
      %v1906 = vpop.f32.mrf.mxu0
      %v1907 = vadd.f32 0.0, %v1906
      %v1908 = vpop.f32.mrf.mxu0
      %v1909 = vpop.f32.mrf.mxu0
      %v1910 = vadd.f32 0.0, %v1909
      %v1911 = vpop.f32.mrf.mxu0
      %1912 = vmatprep.mubr.bf16.mxu0 0
      %1913 = vmatmul.mubr.bf16.gmra.mxu0 %v1413
      %v1914 = vpop.f32.mrf.mxu0
      %v1915 = vadd.f32 0.0, %v1914
      %v1916 = vpop.f32.mrf.mxu0
      %v1917 = vpop.f32.mrf.mxu0
      %v1918 = vadd.f32 0.0, %v1917
      %v1919 = vpop.f32.mrf.mxu0
      %1920 = vmatprep.mubr.bf16.mxu0 0
      %1921 = vmatmul.mubr.bf16.gmra.mxu0 %v1416
      %v1922 = vpop.f32.mrf.mxu0
      %v1923 = vadd.f32 0.0, %v1922
      %v1924 = vpop.f32.mrf.mxu0
      %v1925 = vpop.f32.mrf.mxu0
      %v1926 = vadd.f32 0.0, %v1925
      %v1927 = vpop.f32.mrf.mxu0
      %1928 = vmatprep.mubr.bf16.mxu0 0
      %1929 = vmatmul.mubr.bf16.gmra.mxu0 %v1419
      %v1930 = vpop.f32.mrf.mxu0
      %v1931 = vadd.f32 0.0, %v1930
      %v1932 = vpop.f32.mrf.mxu0
      %v1933 = vpop.f32.mrf.mxu0
      %v1934 = vadd.f32 0.0, %v1933
      %v1935 = vpop.f32.mrf.mxu0
      %1936 = vmatprep.mubr.bf16.mxu0 0
      %1937 = vmatmul.mubr.bf16.gmra.mxu0 %v1422
      %v1938 = vpop.f32.mrf.mxu0
      %v1939 = vadd.f32 0.0, %v1938
      %v1940 = vpop.f32.mrf.mxu0
      %v1941 = vpop.f32.mrf.mxu0
      %v1942 = vadd.f32 0.0, %v1941
      %v1943 = vpop.f32.mrf.mxu0
      %1944 = vmatprep.mubr.bf16.mxu0 0
      %1945 = vmatmul.mubr.bf16.gmra.mxu0 %v1425
      %v1946 = vpop.f32.mrf.mxu0
      %v1947 = vadd.f32 0.0, %v1946
      %v1948 = vpop.f32.mrf.mxu0
      %v1949 = vpop.f32.mrf.mxu0
      %v1950 = vadd.f32 0.0, %v1949
      %v1951 = vpop.f32.mrf.mxu0
      %1952 = vmatprep.mubr.bf16.mxu0 0
      %1953 = vmatmul.mubr.bf16.gmra.mxu0 %v1428
      %v1954 = vpop.f32.mrf.mxu0
      %v1955 = vadd.f32 0.0, %v1954
      %v1956 = vpop.f32.mrf.mxu0
      %v1957 = vpop.f32.mrf.mxu0
      %v1958 = vadd.f32 0.0, %v1957
      %v1959 = vpop.f32.mrf.mxu0
      %1960 = vmatprep.mubr.bf16.mxu0 0
      %1961 = vmatmul.mubr.bf16.gmra.mxu0 %v1431
      %v1962 = vpop.f32.mrf.mxu0
      %v1963 = vadd.f32 0.0, %v1962
      %v1964 = vpop.f32.mrf.mxu0
      %v1965 = vpop.f32.mrf.mxu0
      %v1966 = vadd.f32 0.0, %v1965
      %v1967 = vpop.f32.mrf.mxu0
      %1968 = vmatprep.mubr.bf16.mxu0 0
      %1969 = vmatmul.mubr.bf16.gmra.mxu0 %v1434
      %v1970 = vpop.f32.mrf.mxu0
      %v1971 = vadd.f32 0.0, %v1970
      %v1972 = vpop.f32.mrf.mxu0
      %v1973 = vpop.f32.mrf.mxu0
      %v1974 = vadd.f32 0.0, %v1973
      %v1975 = vpop.f32.mrf.mxu0
      %1976 = vmatprep.mubr.bf16.mxu0 0
      %1977 = vmatmul.mubr.bf16.gmra.mxu0 %v1437
      %v1978 = vpop.f32.mrf.mxu0
      %v1979 = vadd.f32 0.0, %v1978
      %v1980 = vpop.f32.mrf.mxu0
      %v1981 = vpop.f32.mrf.mxu0
      %v1982 = vadd.f32 0.0, %v1981
      %v1983 = vpop.f32.mrf.mxu0
      %1984 = vmatprep.mubr.bf16.mxu0 0
      %1985 = vmatmul.mubr.bf16.gmra.mxu0 %v1440
      %v1986 = vpop.f32.mrf.mxu0
      %v1987 = vadd.f32 0.0, %v1986
      %v1988 = vpop.f32.mrf.mxu0
      %v1989 = vpop.f32.mrf.mxu0
      %v1990 = vadd.f32 0.0, %v1989
      %v1991 = vpop.f32.mrf.mxu0
      %1992 = vmatprep.mubr.bf16.mxu0 0
      %1993 = vmatmul.mubr.bf16.gmra.mxu0 %v1443
      %v1994 = vpop.f32.mrf.mxu0
      %v1995 = vadd.f32 0.0, %v1994
      %v1996 = vpop.f32.mrf.mxu0
      %v1997 = vpop.f32.mrf.mxu0
      %v1998 = vadd.f32 0.0, %v1997
      %v1999 = vpop.f32.mrf.mxu0
      %2000 = vmatprep.mubr.bf16.mxu0 0
      %2001 = vmatmul.mubr.bf16.gmra.mxu0 %v1446
      %v2002 = vpop.f32.mrf.mxu0
      %v2003 = vadd.f32 0.0, %v2002
      %v2004 = vpop.f32.mrf.mxu0
      %v2005 = vpop.f32.mrf.mxu0
      %v2006 = vadd.f32 0.0, %v2005
      %v2007 = vpop.f32.mrf.mxu0
      %2008 = vmatprep.mubr.bf16.mxu0 0
      %2009 = vmatmul.mubr.bf16.gmra.mxu0 %v1449
      %v2010 = vpop.f32.mrf.mxu0
      %v2011 = vadd.f32 0.0, %v2010
      %v2012 = vpop.f32.mrf.mxu0
      %v2013 = vpop.f32.mrf.mxu0
      %v2014 = vadd.f32 0.0, %v2013
      %v2015 = vpop.f32.mrf.mxu0
      %2016 = vmatprep.mubr.bf16.mxu0 0
      %2017 = vmatmul.mubr.bf16.gmra.mxu0 %v1452
      %v2018 = vpop.f32.mrf.mxu0
      %v2019 = vadd.f32 0.0, %v2018
      %v2020 = vpop.f32.mrf.mxu0
      %v2021 = vpop.f32.mrf.mxu0
      %v2022 = vadd.f32 0.0, %v2021
      %v2023 = vpop.f32.mrf.mxu0
      %2024 = vmatprep.mubr.bf16.mxu0 0
      %2025 = vmatmul.mubr.bf16.gmra.mxu0 %v1455
      %v2026 = vpop.f32.mrf.mxu0
      %v2027 = vadd.f32 0.0, %v2026
      %v2028 = vpop.f32.mrf.mxu0
      %v2029 = vpop.f32.mrf.mxu0
      %v2030 = vadd.f32 0.0, %v2029
      %v2031 = vpop.f32.mrf.mxu0
      %2032 = vmatprep.mubr.bf16.mxu0 0
      %2033 = vmatmul.mubr.bf16.gmra.mxu0 %v1458
      %v2034 = vpop.f32.mrf.mxu0
      %v2035 = vadd.f32 0.0, %v2034
      %v2036 = vpop.f32.mrf.mxu0
      %v2037 = vpop.f32.mrf.mxu0
      %v2038 = vadd.f32 0.0, %v2037
      %v2039 = vpop.f32.mrf.mxu0
      %2040 = vdwg.mxu0
      %v2041 = vsel %vm1255, %v637, 0
      %v2043 = vsel %vm1255, %v638, 0
      %v2045 = vsel %vm1255, %v639, 0
      %v2047 = vsel %vm1255, %v640, 0
      %v2049 = vsel %vm1255, %v641, 0
      %v2051 = vsel %vm1255, %v642, 0
      %v2053 = vsel %vm1255, %v643, 0
      %v2055 = vsel %vm1255, %v644, 0
      %v2057 = vsel %vm1255, %v645, 0
      %v2059 = vsel %vm1255, %v646, 0
      %v2061 = vsel %vm1255, %v647, 0
      %v2063 = vsel %vm1255, %v648, 0
      %v2065 = vsel %vm1255, %v649, 0
      %v2067 = vsel %vm1255, %v650, 0
      %v2069 = vsel %vm1255, %v651, 0
      %v2071 = vsel %vm1255, %v652, 0
      %v2073 = vsel %vm1255, %v653, 0
      %v2075 = vsel %vm1255, %v654, 0
      %v2077 = vsel %vm1255, %v655, 0
      %v2079 = vsel %vm1255, %v656, 0
      %v2081 = vsel %vm1255, %v657, 0
      %v2083 = vsel %vm1255, %v658, 0
      %v2085 = vsel %vm1255, %v659, 0
      %v2087 = vsel %vm1255, %v660, 0
      %v2089 = vsel %vm1255, %v661, 0
      %v2091 = vsel %vm1255, %v662, 0
      %v2093 = vsel %vm1255, %v663, 0
      %v2095 = vsel %vm1255, %v664, 0
      %v2097 = vsel %vm1255, %v665, 0
      %v2099 = vsel %vm1255, %v666, 0
      %v2101 = vsel %vm1255, %v667, 0
      %v2103 = vsel %vm1255, %v668, 0
      %v2105 = vsel %vm1255, %v669, 0
      %v2107 = vsel %vm1255, %v670, 0
      %v2109 = vsel %vm1255, %v671, 0
      %v2111 = vsel %vm1255, %v672, 0
      %v2113 = vsel %vm1255, %v673, 0
      %v2115 = vsel %vm1255, %v674, 0
      %v2117 = vsel %vm1255, %v675, 0
      %v2119 = vsel %vm1255, %v676, 0
      %v2121 = vsel %vm1255, %v677, 0
      %v2123 = vsel %vm1255, %v678, 0
      %v2125 = vsel %vm1255, %v679, 0
      %v2127 = vsel %vm1255, %v680, 0
      %v2129 = vsel %vm1255, %v681, 0
      %v2131 = vsel %vm1255, %v682, 0
      %v2133 = vsel %vm1255, %v683, 0
      %v2135 = vsel %vm1255, %v684, 0
      %v2137 = vsel %vm1255, %v685, 0
      %v2139 = vsel %vm1255, %v686, 0
      %v2141 = vsel %vm1255, %v687, 0
      %v2143 = vsel %vm1255, %v688, 0
      %v2145 = vsel %vm1255, %v689, 0
      %v2147 = vsel %vm1255, %v690, 0
      %v2149 = vsel %vm1255, %v691, 0
      %v2151 = vsel %vm1255, %v692, 0
      %v2153 = vsel %vm1255, %v693, 0
      %v2155 = vsel %vm1255, %v694, 0
      %v2157 = vsel %vm1255, %v695, 0
      %v2159 = vsel %vm1255, %v696, 0
      %v2161 = vsel %vm1255, %v697, 0
      %v2163 = vsel %vm1255, %v698, 0
      %v2165 = vsel %vm1255, %v699, 0
      %v2167 = vsel %vm1255, %v700, 0
      %v2169 = vsel %vm1255, %v701, 0
      %v2171 = vsel %vm1255, %v702, 0
      %v2173 = vsel %vm1255, %v703, 0
      %v2175 = vsel %vm1255, %v704, 0
      %v2178 = vsel %vm1460, %v359, 0
      %2180 = vmatprep.subr.bf16.mxu0 0
      %2181 = vmatpush1.bf16.msra.mxu0 0
      %2182 = vmatprep.subr.bf16.mxu0 0
      %2183 = vmatpush1.bf16.msra.mxu0 0
      %2184 = vmatprep.subr.bf16.mxu0 0
      %2185 = vmatpush1.bf16.msra.mxu0 0
      %2186 = vmatprep.subr.bf16.mxu0 0
      %2187 = vmatpush1.bf16.msra.mxu0 0
      %2188 = vmatprep.subr.bf16.mxu0 0
      %2189 = vmatpush1.bf16.msra.mxu0 0
      %2190 = vmatprep.subr.bf16.mxu0 0
      %2191 = vmatpush1.bf16.msra.mxu0 0
      %2192 = vmatprep.subr.bf16.mxu0 0
      %2193 = vmatpush1.bf16.msra.mxu0 0
      %2194 = vmatprep.subr.bf16.mxu0 0
      %2195 = vmatpush1.bf16.msra.mxu0 %v2178
      %2196 = vmatprep.subr.bf16.mxu0 0
      %2197 = vmatpush2.bf16.msra.mxu0 0
      %2198 = vmatprep.subr.bf16.mxu0 0
      %2199 = vmatpush2.bf16.msra.mxu0 0
      %2200 = vmatprep.subr.bf16.mxu0 0
      %2201 = vmatpush2.bf16.msra.mxu0 0
      %2202 = vmatprep.subr.bf16.mxu0 0
      %2203 = vmatpush2.bf16.msra.mxu0 0
      %2204 = vmatprep.subr.bf16.mxu0 0
      %2205 = vmatpush2.bf16.msra.mxu0 0
      %2206 = vmatprep.subr.bf16.mxu0 0
      %2207 = vmatpush2.bf16.msra.mxu0 0
      %2208 = vmatprep.subr.bf16.mxu0 0
      %2209 = vmatpush2.bf16.msra.mxu0 0
      %2210 = vmatprep.subr.bf16.mxu0 0
      %2211 = vmatpush2.bf16.msra.mxu0 0
      %2212 = vmatprep.mubr.bf16.mxu0 0
      %2213 = vmatmul.mubr.bf16.gmra.mxu0 %v2041
      %v2214 = vpop.f32.mrf.mxu0
      %v2215 = vadd.f32 %v1499, %v2214
      %v2216 = vpop.f32.mrf.mxu0
      %v2217 = vpop.f32.mrf.mxu0
      %v2218 = vadd.f32 %v1502, %v2217
      %v2219 = vpop.f32.mrf.mxu0
      %2220 = vmatprep.mubr.bf16.mxu0 0
      %2221 = vmatmul.mubr.bf16.gmra.mxu0 %v2043
      %v2222 = vpop.f32.mrf.mxu0
      %v2223 = vadd.f32 %v1507, %v2222
      %v2224 = vpop.f32.mrf.mxu0
      %v2225 = vpop.f32.mrf.mxu0
      %v2226 = vadd.f32 %v1510, %v2225
      %v2227 = vpop.f32.mrf.mxu0
      %2228 = vmatprep.mubr.bf16.mxu0 0
      %2229 = vmatmul.mubr.bf16.gmra.mxu0 %v2045
      %v2230 = vpop.f32.mrf.mxu0
      %v2231 = vadd.f32 %v1515, %v2230
      %v2232 = vpop.f32.mrf.mxu0
      %v2233 = vpop.f32.mrf.mxu0
      %v2234 = vadd.f32 %v1518, %v2233
      %v2235 = vpop.f32.mrf.mxu0
      %2236 = vmatprep.mubr.bf16.mxu0 0
      %2237 = vmatmul.mubr.bf16.gmra.mxu0 %v2047
      %v2238 = vpop.f32.mrf.mxu0
      %v2239 = vadd.f32 %v1523, %v2238
      %v2240 = vpop.f32.mrf.mxu0
      %v2241 = vpop.f32.mrf.mxu0
      %v2242 = vadd.f32 %v1526, %v2241
      %v2243 = vpop.f32.mrf.mxu0
      %2244 = vmatprep.mubr.bf16.mxu0 0
      %2245 = vmatmul.mubr.bf16.gmra.mxu0 %v2049
      %v2246 = vpop.f32.mrf.mxu0
      %v2247 = vadd.f32 %v1531, %v2246
      %v2248 = vpop.f32.mrf.mxu0
      %v2249 = vpop.f32.mrf.mxu0
      %v2250 = vadd.f32 %v1534, %v2249
      %v2251 = vpop.f32.mrf.mxu0
      %2252 = vmatprep.mubr.bf16.mxu0 0
      %2253 = vmatmul.mubr.bf16.gmra.mxu0 %v2051
      %v2254 = vpop.f32.mrf.mxu0
      %v2255 = vadd.f32 %v1539, %v2254
      %v2256 = vpop.f32.mrf.mxu0
      %v2257 = vpop.f32.mrf.mxu0
      %v2258 = vadd.f32 %v1542, %v2257
      %v2259 = vpop.f32.mrf.mxu0
      %2260 = vmatprep.mubr.bf16.mxu0 0
      %2261 = vmatmul.mubr.bf16.gmra.mxu0 %v2053
      %v2262 = vpop.f32.mrf.mxu0
      %v2263 = vadd.f32 %v1547, %v2262
      %v2264 = vpop.f32.mrf.mxu0
      %v2265 = vpop.f32.mrf.mxu0
      %v2266 = vadd.f32 %v1550, %v2265
      %v2267 = vpop.f32.mrf.mxu0
      %2268 = vmatprep.mubr.bf16.mxu0 0
      %2269 = vmatmul.mubr.bf16.gmra.mxu0 %v2055
      %v2270 = vpop.f32.mrf.mxu0
      %v2271 = vadd.f32 %v1555, %v2270
      %v2272 = vpop.f32.mrf.mxu0
      %v2273 = vpop.f32.mrf.mxu0
      %v2274 = vadd.f32 %v1558, %v2273
      %v2275 = vpop.f32.mrf.mxu0
      %2276 = vmatprep.mubr.bf16.mxu0 0
      %2277 = vmatmul.mubr.bf16.gmra.mxu0 %v2057
      %v2278 = vpop.f32.mrf.mxu0
      %v2279 = vadd.f32 %v1563, %v2278
      %v2280 = vpop.f32.mrf.mxu0
      %v2281 = vpop.f32.mrf.mxu0
      %v2282 = vadd.f32 %v1566, %v2281
      %v2283 = vpop.f32.mrf.mxu0
      %2284 = vmatprep.mubr.bf16.mxu0 0
      %2285 = vmatmul.mubr.bf16.gmra.mxu0 %v2059
      %v2286 = vpop.f32.mrf.mxu0
      %v2287 = vadd.f32 %v1571, %v2286
      %v2288 = vpop.f32.mrf.mxu0
      %v2289 = vpop.f32.mrf.mxu0
      %v2290 = vadd.f32 %v1574, %v2289
      %v2291 = vpop.f32.mrf.mxu0
      %2292 = vmatprep.mubr.bf16.mxu0 0
      %2293 = vmatmul.mubr.bf16.gmra.mxu0 %v2061
      %v2294 = vpop.f32.mrf.mxu0
      %v2295 = vadd.f32 %v1579, %v2294
      %v2296 = vpop.f32.mrf.mxu0
      %v2297 = vpop.f32.mrf.mxu0
      %v2298 = vadd.f32 %v1582, %v2297
      %v2299 = vpop.f32.mrf.mxu0
      %2300 = vmatprep.mubr.bf16.mxu0 0
      %2301 = vmatmul.mubr.bf16.gmra.mxu0 %v2063
      %v2302 = vpop.f32.mrf.mxu0
      %v2303 = vadd.f32 %v1587, %v2302
      %v2304 = vpop.f32.mrf.mxu0
      %v2305 = vpop.f32.mrf.mxu0
      %v2306 = vadd.f32 %v1590, %v2305
      %v2307 = vpop.f32.mrf.mxu0
      %2308 = vmatprep.mubr.bf16.mxu0 0
      %2309 = vmatmul.mubr.bf16.gmra.mxu0 %v2065
      %v2310 = vpop.f32.mrf.mxu0
      %v2311 = vadd.f32 %v1595, %v2310
      %v2312 = vpop.f32.mrf.mxu0
      %v2313 = vpop.f32.mrf.mxu0
      %v2314 = vadd.f32 %v1598, %v2313
      %v2315 = vpop.f32.mrf.mxu0
      %2316 = vmatprep.mubr.bf16.mxu0 0
      %2317 = vmatmul.mubr.bf16.gmra.mxu0 %v2067
      %v2318 = vpop.f32.mrf.mxu0
      %v2319 = vadd.f32 %v1603, %v2318
      %v2320 = vpop.f32.mrf.mxu0
      %v2321 = vpop.f32.mrf.mxu0
      %v2322 = vadd.f32 %v1606, %v2321
      %v2323 = vpop.f32.mrf.mxu0
      %2324 = vmatprep.mubr.bf16.mxu0 0
      %2325 = vmatmul.mubr.bf16.gmra.mxu0 %v2069
      %v2326 = vpop.f32.mrf.mxu0
      %v2327 = vadd.f32 %v1611, %v2326
      %v2328 = vpop.f32.mrf.mxu0
      %v2329 = vpop.f32.mrf.mxu0
      %v2330 = vadd.f32 %v1614, %v2329
      %v2331 = vpop.f32.mrf.mxu0
      %2332 = vmatprep.mubr.bf16.mxu0 0
      %2333 = vmatmul.mubr.bf16.gmra.mxu0 %v2071
      %v2334 = vpop.f32.mrf.mxu0
      %v2335 = vadd.f32 %v1619, %v2334
      %v2336 = vpop.f32.mrf.mxu0
      %v2337 = vpop.f32.mrf.mxu0
      %v2338 = vadd.f32 %v1622, %v2337
      %v2339 = vpop.f32.mrf.mxu0
      %2340 = vmatprep.mubr.bf16.mxu0 0
      %2341 = vmatmul.mubr.bf16.gmra.mxu0 %v2073
      %v2342 = vpop.f32.mrf.mxu0
      %v2343 = vadd.f32 %v1627, %v2342
      %v2344 = vpop.f32.mrf.mxu0
      %v2345 = vpop.f32.mrf.mxu0
      %v2346 = vadd.f32 %v1630, %v2345
      %v2347 = vpop.f32.mrf.mxu0
      %2348 = vmatprep.mubr.bf16.mxu0 0
      %2349 = vmatmul.mubr.bf16.gmra.mxu0 %v2075
      %v2350 = vpop.f32.mrf.mxu0
      %v2351 = vadd.f32 %v1635, %v2350
      %v2352 = vpop.f32.mrf.mxu0
      %v2353 = vpop.f32.mrf.mxu0
      %v2354 = vadd.f32 %v1638, %v2353
      %v2355 = vpop.f32.mrf.mxu0
      %2356 = vmatprep.mubr.bf16.mxu0 0
      %2357 = vmatmul.mubr.bf16.gmra.mxu0 %v2077
      %v2358 = vpop.f32.mrf.mxu0
      %v2359 = vadd.f32 %v1643, %v2358
      %v2360 = vpop.f32.mrf.mxu0
      %v2361 = vpop.f32.mrf.mxu0
      %v2362 = vadd.f32 %v1646, %v2361
      %v2363 = vpop.f32.mrf.mxu0
      %2364 = vmatprep.mubr.bf16.mxu0 0
      %2365 = vmatmul.mubr.bf16.gmra.mxu0 %v2079
      %v2366 = vpop.f32.mrf.mxu0
      %v2367 = vadd.f32 %v1651, %v2366
      %v2368 = vpop.f32.mrf.mxu0
      %v2369 = vpop.f32.mrf.mxu0
      %v2370 = vadd.f32 %v1654, %v2369
      %v2371 = vpop.f32.mrf.mxu0
      %2372 = vmatprep.mubr.bf16.mxu0 0
      %2373 = vmatmul.mubr.bf16.gmra.mxu0 %v2081
      %v2374 = vpop.f32.mrf.mxu0
      %v2375 = vadd.f32 %v1659, %v2374
      %v2376 = vpop.f32.mrf.mxu0
      %v2377 = vpop.f32.mrf.mxu0
      %v2378 = vadd.f32 %v1662, %v2377
      %v2379 = vpop.f32.mrf.mxu0
      %2380 = vmatprep.mubr.bf16.mxu0 0
      %2381 = vmatmul.mubr.bf16.gmra.mxu0 %v2083
      %v2382 = vpop.f32.mrf.mxu0
      %v2383 = vadd.f32 %v1667, %v2382
      %v2384 = vpop.f32.mrf.mxu0
      %v2385 = vpop.f32.mrf.mxu0
      %v2386 = vadd.f32 %v1670, %v2385
      %v2387 = vpop.f32.mrf.mxu0
      %2388 = vmatprep.mubr.bf16.mxu0 0
      %2389 = vmatmul.mubr.bf16.gmra.mxu0 %v2085
      %v2390 = vpop.f32.mrf.mxu0
      %v2391 = vadd.f32 %v1675, %v2390
      %v2392 = vpop.f32.mrf.mxu0
      %v2393 = vpop.f32.mrf.mxu0
      %v2394 = vadd.f32 %v1678, %v2393
      %v2395 = vpop.f32.mrf.mxu0
      %2396 = vmatprep.mubr.bf16.mxu0 0
      %2397 = vmatmul.mubr.bf16.gmra.mxu0 %v2087
      %v2398 = vpop.f32.mrf.mxu0
      %v2399 = vadd.f32 %v1683, %v2398
      %v2400 = vpop.f32.mrf.mxu0
      %v2401 = vpop.f32.mrf.mxu0
      %v2402 = vadd.f32 %v1686, %v2401
      %v2403 = vpop.f32.mrf.mxu0
      %2404 = vmatprep.mubr.bf16.mxu0 0
      %2405 = vmatmul.mubr.bf16.gmra.mxu0 %v2089
      %v2406 = vpop.f32.mrf.mxu0
      %v2407 = vadd.f32 %v1691, %v2406
      %v2408 = vpop.f32.mrf.mxu0
      %v2409 = vpop.f32.mrf.mxu0
      %v2410 = vadd.f32 %v1694, %v2409
      %v2411 = vpop.f32.mrf.mxu0
      %2412 = vmatprep.mubr.bf16.mxu0 0
      %2413 = vmatmul.mubr.bf16.gmra.mxu0 %v2091
      %v2414 = vpop.f32.mrf.mxu0
      %v2415 = vadd.f32 %v1699, %v2414
      %v2416 = vpop.f32.mrf.mxu0
      %v2417 = vpop.f32.mrf.mxu0
      %v2418 = vadd.f32 %v1702, %v2417
      %v2419 = vpop.f32.mrf.mxu0
      %2420 = vmatprep.mubr.bf16.mxu0 0
      %2421 = vmatmul.mubr.bf16.gmra.mxu0 %v2093
      %v2422 = vpop.f32.mrf.mxu0
      %v2423 = vadd.f32 %v1707, %v2422
      %v2424 = vpop.f32.mrf.mxu0
      %v2425 = vpop.f32.mrf.mxu0
      %v2426 = vadd.f32 %v1710, %v2425
      %v2427 = vpop.f32.mrf.mxu0
      %2428 = vmatprep.mubr.bf16.mxu0 0
      %2429 = vmatmul.mubr.bf16.gmra.mxu0 %v2095
      %v2430 = vpop.f32.mrf.mxu0
      %v2431 = vadd.f32 %v1715, %v2430
      %v2432 = vpop.f32.mrf.mxu0
      %v2433 = vpop.f32.mrf.mxu0
      %v2434 = vadd.f32 %v1718, %v2433
      %v2435 = vpop.f32.mrf.mxu0
      %2436 = vmatprep.mubr.bf16.mxu0 0
      %2437 = vmatmul.mubr.bf16.gmra.mxu0 %v2097
      %v2438 = vpop.f32.mrf.mxu0
      %v2439 = vadd.f32 %v1723, %v2438
      %v2440 = vpop.f32.mrf.mxu0
      %v2441 = vpop.f32.mrf.mxu0
      %v2442 = vadd.f32 %v1726, %v2441
      %v2443 = vpop.f32.mrf.mxu0
      %2444 = vmatprep.mubr.bf16.mxu0 0
      %2445 = vmatmul.mubr.bf16.gmra.mxu0 %v2099
      %v2446 = vpop.f32.mrf.mxu0
      %v2447 = vadd.f32 %v1731, %v2446
      %v2448 = vpop.f32.mrf.mxu0
      %v2449 = vpop.f32.mrf.mxu0
      %v2450 = vadd.f32 %v1734, %v2449
      %v2451 = vpop.f32.mrf.mxu0
      %2452 = vmatprep.mubr.bf16.mxu0 0
      %2453 = vmatmul.mubr.bf16.gmra.mxu0 %v2101
      %v2454 = vpop.f32.mrf.mxu0
      %v2455 = vadd.f32 %v1739, %v2454
      %v2456 = vpop.f32.mrf.mxu0
      %v2457 = vpop.f32.mrf.mxu0
      %v2458 = vadd.f32 %v1742, %v2457
      %v2459 = vpop.f32.mrf.mxu0
      %2460 = vmatprep.mubr.bf16.mxu0 0
      %2461 = vmatmul.mubr.bf16.gmra.mxu0 %v2103
      %v2462 = vpop.f32.mrf.mxu0
      %v2463 = vadd.f32 %v1747, %v2462
      %v2464 = vpop.f32.mrf.mxu0
      %v2465 = vpop.f32.mrf.mxu0
      %v2466 = vadd.f32 %v1750, %v2465
      %v2467 = vpop.f32.mrf.mxu0
      %2468 = vmatprep.mubr.bf16.mxu0 0
      %2469 = vmatmul.mubr.bf16.gmra.mxu0 %v2105
      %v2470 = vpop.f32.mrf.mxu0
      %v2471 = vadd.f32 %v1755, %v2470
      %v2472 = vpop.f32.mrf.mxu0
      %v2473 = vpop.f32.mrf.mxu0
      %v2474 = vadd.f32 %v1758, %v2473
      %v2475 = vpop.f32.mrf.mxu0
      %2476 = vmatprep.mubr.bf16.mxu0 0
      %2477 = vmatmul.mubr.bf16.gmra.mxu0 %v2107
      %v2478 = vpop.f32.mrf.mxu0
      %v2479 = vadd.f32 %v1763, %v2478
      %v2480 = vpop.f32.mrf.mxu0
      %v2481 = vpop.f32.mrf.mxu0
      %v2482 = vadd.f32 %v1766, %v2481
      %v2483 = vpop.f32.mrf.mxu0
      %2484 = vmatprep.mubr.bf16.mxu0 0
      %2485 = vmatmul.mubr.bf16.gmra.mxu0 %v2109
      %v2486 = vpop.f32.mrf.mxu0
      %v2487 = vadd.f32 %v1771, %v2486
      %v2488 = vpop.f32.mrf.mxu0
      %v2489 = vpop.f32.mrf.mxu0
      %v2490 = vadd.f32 %v1774, %v2489
      %v2491 = vpop.f32.mrf.mxu0
      %2492 = vmatprep.mubr.bf16.mxu0 0
      %2493 = vmatmul.mubr.bf16.gmra.mxu0 %v2111
      %v2494 = vpop.f32.mrf.mxu0
      %v2495 = vadd.f32 %v1779, %v2494
      %v2496 = vpop.f32.mrf.mxu0
      %v2497 = vpop.f32.mrf.mxu0
      %v2498 = vadd.f32 %v1782, %v2497
      %v2499 = vpop.f32.mrf.mxu0
      %2500 = vmatprep.mubr.bf16.mxu0 0
      %2501 = vmatmul.mubr.bf16.gmra.mxu0 %v2113
      %v2502 = vpop.f32.mrf.mxu0
      %v2503 = vadd.f32 %v1787, %v2502
      %v2504 = vpop.f32.mrf.mxu0
      %v2505 = vpop.f32.mrf.mxu0
      %v2506 = vadd.f32 %v1790, %v2505
      %v2507 = vpop.f32.mrf.mxu0
      %2508 = vmatprep.mubr.bf16.mxu0 0
      %2509 = vmatmul.mubr.bf16.gmra.mxu0 %v2115
      %v2510 = vpop.f32.mrf.mxu0
      %v2511 = vadd.f32 %v1795, %v2510
      %v2512 = vpop.f32.mrf.mxu0
      %v2513 = vpop.f32.mrf.mxu0
      %v2514 = vadd.f32 %v1798, %v2513
      %v2515 = vpop.f32.mrf.mxu0
      %2516 = vmatprep.mubr.bf16.mxu0 0
      %2517 = vmatmul.mubr.bf16.gmra.mxu0 %v2117
      %v2518 = vpop.f32.mrf.mxu0
      %v2519 = vadd.f32 %v1803, %v2518
      %v2520 = vpop.f32.mrf.mxu0
      %v2521 = vpop.f32.mrf.mxu0
      %v2522 = vadd.f32 %v1806, %v2521
      %v2523 = vpop.f32.mrf.mxu0
      %2524 = vmatprep.mubr.bf16.mxu0 0
      %2525 = vmatmul.mubr.bf16.gmra.mxu0 %v2119
      %v2526 = vpop.f32.mrf.mxu0
      %v2527 = vadd.f32 %v1811, %v2526
      %v2528 = vpop.f32.mrf.mxu0
      %v2529 = vpop.f32.mrf.mxu0
      %v2530 = vadd.f32 %v1814, %v2529
      %v2531 = vpop.f32.mrf.mxu0
      %2532 = vmatprep.mubr.bf16.mxu0 0
      %2533 = vmatmul.mubr.bf16.gmra.mxu0 %v2121
      %v2534 = vpop.f32.mrf.mxu0
      %v2535 = vadd.f32 %v1819, %v2534
      %v2536 = vpop.f32.mrf.mxu0
      %v2537 = vpop.f32.mrf.mxu0
      %v2538 = vadd.f32 %v1822, %v2537
      %v2539 = vpop.f32.mrf.mxu0
      %2540 = vmatprep.mubr.bf16.mxu0 0
      %2541 = vmatmul.mubr.bf16.gmra.mxu0 %v2123
      %v2542 = vpop.f32.mrf.mxu0
      %v2543 = vadd.f32 %v1827, %v2542
      %v2544 = vpop.f32.mrf.mxu0
      %v2545 = vpop.f32.mrf.mxu0
      %v2546 = vadd.f32 %v1830, %v2545
      %v2547 = vpop.f32.mrf.mxu0
      %2548 = vmatprep.mubr.bf16.mxu0 0
      %2549 = vmatmul.mubr.bf16.gmra.mxu0 %v2125
      %v2550 = vpop.f32.mrf.mxu0
      %v2551 = vadd.f32 %v1835, %v2550
      %v2552 = vpop.f32.mrf.mxu0
      %v2553 = vpop.f32.mrf.mxu0
      %v2554 = vadd.f32 %v1838, %v2553
      %v2555 = vpop.f32.mrf.mxu0
      %2556 = vmatprep.mubr.bf16.mxu0 0
      %2557 = vmatmul.mubr.bf16.gmra.mxu0 %v2127
      %v2558 = vpop.f32.mrf.mxu0
      %v2559 = vadd.f32 %v1843, %v2558
      %v2560 = vpop.f32.mrf.mxu0
      %v2561 = vpop.f32.mrf.mxu0
      %v2562 = vadd.f32 %v1846, %v2561
      %v2563 = vpop.f32.mrf.mxu0
      %2564 = vmatprep.mubr.bf16.mxu0 0
      %2565 = vmatmul.mubr.bf16.gmra.mxu0 %v2129
      %v2566 = vpop.f32.mrf.mxu0
      %v2567 = vadd.f32 %v1851, %v2566
      %v2568 = vpop.f32.mrf.mxu0
      %v2569 = vpop.f32.mrf.mxu0
      %v2570 = vadd.f32 %v1854, %v2569
      %v2571 = vpop.f32.mrf.mxu0
      %2572 = vmatprep.mubr.bf16.mxu0 0
      %2573 = vmatmul.mubr.bf16.gmra.mxu0 %v2131
      %v2574 = vpop.f32.mrf.mxu0
      %v2575 = vadd.f32 %v1859, %v2574
      %v2576 = vpop.f32.mrf.mxu0
      %v2577 = vpop.f32.mrf.mxu0
      %v2578 = vadd.f32 %v1862, %v2577
      %v2579 = vpop.f32.mrf.mxu0
      %2580 = vmatprep.mubr.bf16.mxu0 0
      %2581 = vmatmul.mubr.bf16.gmra.mxu0 %v2133
      %v2582 = vpop.f32.mrf.mxu0
      %v2583 = vadd.f32 %v1867, %v2582
      %v2584 = vpop.f32.mrf.mxu0
      %v2585 = vpop.f32.mrf.mxu0
      %v2586 = vadd.f32 %v1870, %v2585
      %v2587 = vpop.f32.mrf.mxu0
      %2588 = vmatprep.mubr.bf16.mxu0 0
      %2589 = vmatmul.mubr.bf16.gmra.mxu0 %v2135
      %v2590 = vpop.f32.mrf.mxu0
      %v2591 = vadd.f32 %v1875, %v2590
      %v2592 = vpop.f32.mrf.mxu0
      %v2593 = vpop.f32.mrf.mxu0
      %v2594 = vadd.f32 %v1878, %v2593
      %v2595 = vpop.f32.mrf.mxu0
      %2596 = vmatprep.mubr.bf16.mxu0 0
      %2597 = vmatmul.mubr.bf16.gmra.mxu0 %v2137
      %v2598 = vpop.f32.mrf.mxu0
      %v2599 = vadd.f32 %v1883, %v2598
      %v2600 = vpop.f32.mrf.mxu0
      %v2601 = vpop.f32.mrf.mxu0
      %v2602 = vadd.f32 %v1886, %v2601
      %v2603 = vpop.f32.mrf.mxu0
      %2604 = vmatprep.mubr.bf16.mxu0 0
      %2605 = vmatmul.mubr.bf16.gmra.mxu0 %v2139
      %v2606 = vpop.f32.mrf.mxu0
      %v2607 = vadd.f32 %v1891, %v2606
      %v2608 = vpop.f32.mrf.mxu0
      %v2609 = vpop.f32.mrf.mxu0
      %v2610 = vadd.f32 %v1894, %v2609
      %v2611 = vpop.f32.mrf.mxu0
      %2612 = vmatprep.mubr.bf16.mxu0 0
      %2613 = vmatmul.mubr.bf16.gmra.mxu0 %v2141
      %v2614 = vpop.f32.mrf.mxu0
      %v2615 = vadd.f32 %v1899, %v2614
      %v2616 = vpop.f32.mrf.mxu0
      %v2617 = vpop.f32.mrf.mxu0
      %v2618 = vadd.f32 %v1902, %v2617
      %v2619 = vpop.f32.mrf.mxu0
      %2620 = vmatprep.mubr.bf16.mxu0 0
      %2621 = vmatmul.mubr.bf16.gmra.mxu0 %v2143
      %v2622 = vpop.f32.mrf.mxu0
      %v2623 = vadd.f32 %v1907, %v2622
      %v2624 = vpop.f32.mrf.mxu0
      %v2625 = vpop.f32.mrf.mxu0
      %v2626 = vadd.f32 %v1910, %v2625
      %v2627 = vpop.f32.mrf.mxu0
      %2628 = vmatprep.mubr.bf16.mxu0 0
      %2629 = vmatmul.mubr.bf16.gmra.mxu0 %v2145
      %v2630 = vpop.f32.mrf.mxu0
      %v2631 = vadd.f32 %v1915, %v2630
      %v2632 = vpop.f32.mrf.mxu0
      %v2633 = vpop.f32.mrf.mxu0
      %v2634 = vadd.f32 %v1918, %v2633
      %v2635 = vpop.f32.mrf.mxu0
      %2636 = vmatprep.mubr.bf16.mxu0 0
      %2637 = vmatmul.mubr.bf16.gmra.mxu0 %v2147
      %v2638 = vpop.f32.mrf.mxu0
      %v2639 = vadd.f32 %v1923, %v2638
      %v2640 = vpop.f32.mrf.mxu0
      %v2641 = vpop.f32.mrf.mxu0
      %v2642 = vadd.f32 %v1926, %v2641
      %v2643 = vpop.f32.mrf.mxu0
      %2644 = vmatprep.mubr.bf16.mxu0 0
      %2645 = vmatmul.mubr.bf16.gmra.mxu0 %v2149
      %v2646 = vpop.f32.mrf.mxu0
      %v2647 = vadd.f32 %v1931, %v2646
      %v2648 = vpop.f32.mrf.mxu0
      %v2649 = vpop.f32.mrf.mxu0
      %v2650 = vadd.f32 %v1934, %v2649
      %v2651 = vpop.f32.mrf.mxu0
      %2652 = vmatprep.mubr.bf16.mxu0 0
      %2653 = vmatmul.mubr.bf16.gmra.mxu0 %v2151
      %v2654 = vpop.f32.mrf.mxu0
      %v2655 = vadd.f32 %v1939, %v2654
      %v2656 = vpop.f32.mrf.mxu0
      %v2657 = vpop.f32.mrf.mxu0
      %v2658 = vadd.f32 %v1942, %v2657
      %v2659 = vpop.f32.mrf.mxu0
      %2660 = vmatprep.mubr.bf16.mxu0 0
      %2661 = vmatmul.mubr.bf16.gmra.mxu0 %v2153
      %v2662 = vpop.f32.mrf.mxu0
      %v2663 = vadd.f32 %v1947, %v2662
      %v2664 = vpop.f32.mrf.mxu0
      %v2665 = vpop.f32.mrf.mxu0
      %v2666 = vadd.f32 %v1950, %v2665
      %v2667 = vpop.f32.mrf.mxu0
      %2668 = vmatprep.mubr.bf16.mxu0 0
      %2669 = vmatmul.mubr.bf16.gmra.mxu0 %v2155
      %v2670 = vpop.f32.mrf.mxu0
      %v2671 = vadd.f32 %v1955, %v2670
      %v2672 = vpop.f32.mrf.mxu0
      %v2673 = vpop.f32.mrf.mxu0
      %v2674 = vadd.f32 %v1958, %v2673
      %v2675 = vpop.f32.mrf.mxu0
      %2676 = vmatprep.mubr.bf16.mxu0 0
      %2677 = vmatmul.mubr.bf16.gmra.mxu0 %v2157
      %v2678 = vpop.f32.mrf.mxu0
      %v2679 = vadd.f32 %v1963, %v2678
      %v2680 = vpop.f32.mrf.mxu0
      %v2681 = vpop.f32.mrf.mxu0
      %v2682 = vadd.f32 %v1966, %v2681
      %v2683 = vpop.f32.mrf.mxu0
      %2684 = vmatprep.mubr.bf16.mxu0 0
      %2685 = vmatmul.mubr.bf16.gmra.mxu0 %v2159
      %v2686 = vpop.f32.mrf.mxu0
      %v2687 = vadd.f32 %v1971, %v2686
      %v2688 = vpop.f32.mrf.mxu0
      %v2689 = vpop.f32.mrf.mxu0
      %v2690 = vadd.f32 %v1974, %v2689
      %v2691 = vpop.f32.mrf.mxu0
      %2692 = vmatprep.mubr.bf16.mxu0 0
      %2693 = vmatmul.mubr.bf16.gmra.mxu0 %v2161
      %v2694 = vpop.f32.mrf.mxu0
      %v2695 = vadd.f32 %v1979, %v2694
      %v2696 = vpop.f32.mrf.mxu0
      %v2697 = vpop.f32.mrf.mxu0
      %v2698 = vadd.f32 %v1982, %v2697
      %v2699 = vpop.f32.mrf.mxu0
      %2700 = vmatprep.mubr.bf16.mxu0 0
      %2701 = vmatmul.mubr.bf16.gmra.mxu0 %v2163
      %v2702 = vpop.f32.mrf.mxu0
      %v2703 = vadd.f32 %v1987, %v2702
      %v2704 = vpop.f32.mrf.mxu0
      %v2705 = vpop.f32.mrf.mxu0
      %v2706 = vadd.f32 %v1990, %v2705
      %v2707 = vpop.f32.mrf.mxu0
      %2708 = vmatprep.mubr.bf16.mxu0 0
      %2709 = vmatmul.mubr.bf16.gmra.mxu0 %v2165
      %v2710 = vpop.f32.mrf.mxu0
      %v2711 = vadd.f32 %v1995, %v2710
      %v2712 = vpop.f32.mrf.mxu0
      %v2713 = vpop.f32.mrf.mxu0
      %v2714 = vadd.f32 %v1998, %v2713
      %v2715 = vpop.f32.mrf.mxu0
      %2716 = vmatprep.mubr.bf16.mxu0 0
      %2717 = vmatmul.mubr.bf16.gmra.mxu0 %v2167
      %v2718 = vpop.f32.mrf.mxu0
      %v2719 = vadd.f32 %v2003, %v2718
      %v2720 = vpop.f32.mrf.mxu0
      %v2721 = vpop.f32.mrf.mxu0
      %v2722 = vadd.f32 %v2006, %v2721
      %v2723 = vpop.f32.mrf.mxu0
      %2724 = vmatprep.mubr.bf16.mxu0 0
      %2725 = vmatmul.mubr.bf16.gmra.mxu0 %v2169
      %v2726 = vpop.f32.mrf.mxu0
      %v2727 = vadd.f32 %v2011, %v2726
      %v2728 = vpop.f32.mrf.mxu0
      %v2729 = vpop.f32.mrf.mxu0
      %v2730 = vadd.f32 %v2014, %v2729
      %v2731 = vpop.f32.mrf.mxu0
      %2732 = vmatprep.mubr.bf16.mxu0 0
      %2733 = vmatmul.mubr.bf16.gmra.mxu0 %v2171
      %v2734 = vpop.f32.mrf.mxu0
      %v2735 = vadd.f32 %v2019, %v2734
      %v2736 = vpop.f32.mrf.mxu0
      %v2737 = vpop.f32.mrf.mxu0
      %v2738 = vadd.f32 %v2022, %v2737
      %v2739 = vpop.f32.mrf.mxu0
      %2740 = vmatprep.mubr.bf16.mxu0 0
      %2741 = vmatmul.mubr.bf16.gmra.mxu0 %v2173
      %v2742 = vpop.f32.mrf.mxu0
      %v2743 = vadd.f32 %v2027, %v2742
      %v2744 = vpop.f32.mrf.mxu0
      %v2745 = vpop.f32.mrf.mxu0
      %v2746 = vadd.f32 %v2030, %v2745
      %v2747 = vpop.f32.mrf.mxu0
      %2748 = vmatprep.mubr.bf16.mxu0 0
      %2749 = vmatmul.mubr.bf16.gmra.mxu0 %v2175
      %v2750 = vpop.f32.mrf.mxu0
      %v2751 = vadd.f32 %v2035, %v2750
      %v2752 = vpop.f32.mrf.mxu0
      %v2753 = vpop.f32.mrf.mxu0
      %v2754 = vadd.f32 %v2038, %v2753
      %v2755 = vpop.f32.mrf.mxu0
      %2756 = vdwg.mxu0
      %v2757 = vld [vmem:[%s206] sm:$0xe]
      %s2758 = scalar_lea.vmem %s210, 8
      %v2759 = vld [vmem:[%s2758] sm:$0xf]
      %v2761 = vunpack.c.l.b16 %v2757
      %v2762 = vpack.c.b16 %v501, %v2761
      %vm2763 = vcmask 1046528
      %v2764 = vrot.slane %v2762, 1
      %v2765 = vrot.slane %v638, 1
      %v2766 = vsel %vm2763, %v2764, %v2765
      %v2767 = vrot.slane %v639, 1
      %v2768 = vsel %vm2763, %v2765, %v2767
      %v2769 = vrot.slane %v640, 1
      %v2770 = vsel %vm2763, %v2767, %v2769
      %v2771 = vrot.slane %v641, 1
      %v2772 = vsel %vm2763, %v2769, %v2771
      %v2773 = vrot.slane %v642, 1
      %v2774 = vsel %vm2763, %v2771, %v2773
      %v2775 = vrot.slane %v643, 1
      %v2776 = vsel %vm2763, %v2773, %v2775
      %v2777 = vrot.slane %v644, 1
      %v2778 = vsel %vm2763, %v2775, %v2777
      %v2779 = vrot.slane %v645, 1
      %v2780 = vsel %vm2763, %v2777, %v2779
      %v2781 = vrot.slane %v646, 1
      %v2782 = vsel %vm2763, %v2779, %v2781
      %v2783 = vrot.slane %v647, 1
      %v2784 = vsel %vm2763, %v2781, %v2783
      %v2785 = vrot.slane %v648, 1
      %v2786 = vsel %vm2763, %v2783, %v2785
      %v2787 = vrot.slane %v649, 1
      %v2788 = vsel %vm2763, %v2785, %v2787
      %v2789 = vrot.slane %v650, 1
      %v2790 = vsel %vm2763, %v2787, %v2789
      %v2791 = vrot.slane %v651, 1
      %v2792 = vsel %vm2763, %v2789, %v2791
      %v2793 = vrot.slane %v652, 1
      %v2794 = vsel %vm2763, %v2791, %v2793
      %v2795 = vrot.slane %v653, 1
      %v2796 = vsel %vm2763, %v2793, %v2795
      %v2797 = vrot.slane %v654, 1
      %v2798 = vsel %vm2763, %v2795, %v2797
      %v2799 = vrot.slane %v655, 1
      %v2800 = vsel %vm2763, %v2797, %v2799
      %v2801 = vrot.slane %v656, 1
      %v2802 = vsel %vm2763, %v2799, %v2801
      %v2803 = vrot.slane %v657, 1
      %v2804 = vsel %vm2763, %v2801, %v2803
      %v2805 = vrot.slane %v658, 1
      %v2806 = vsel %vm2763, %v2803, %v2805
      %v2807 = vrot.slane %v659, 1
      %v2808 = vsel %vm2763, %v2805, %v2807
      %v2809 = vrot.slane %v660, 1
      %v2810 = vsel %vm2763, %v2807, %v2809
      %v2811 = vrot.slane %v661, 1
      %v2812 = vsel %vm2763, %v2809, %v2811
      %v2813 = vrot.slane %v662, 1
      %v2814 = vsel %vm2763, %v2811, %v2813
      %v2815 = vrot.slane %v663, 1
      %v2816 = vsel %vm2763, %v2813, %v2815
      %v2817 = vrot.slane %v664, 1
      %v2818 = vsel %vm2763, %v2815, %v2817
      %v2819 = vrot.slane %v665, 1
      %v2820 = vsel %vm2763, %v2817, %v2819
      %v2821 = vrot.slane %v666, 1
      %v2822 = vsel %vm2763, %v2819, %v2821
      %v2823 = vrot.slane %v667, 1
      %v2824 = vsel %vm2763, %v2821, %v2823
      %v2825 = vrot.slane %v668, 1
      %v2826 = vsel %vm2763, %v2823, %v2825
      %v2827 = vrot.slane %v669, 1
      %v2828 = vsel %vm2763, %v2825, %v2827
      %v2829 = vrot.slane %v670, 1
      %v2830 = vsel %vm2763, %v2827, %v2829
      %v2831 = vrot.slane %v671, 1
      %v2832 = vsel %vm2763, %v2829, %v2831
      %v2833 = vrot.slane %v672, 1
      %v2834 = vsel %vm2763, %v2831, %v2833
      %v2835 = vrot.slane %v673, 1
      %v2836 = vsel %vm2763, %v2833, %v2835
      %v2837 = vrot.slane %v674, 1
      %v2838 = vsel %vm2763, %v2835, %v2837
      %v2839 = vrot.slane %v675, 1
      %v2840 = vsel %vm2763, %v2837, %v2839
      %v2841 = vrot.slane %v676, 1
      %v2842 = vsel %vm2763, %v2839, %v2841
      %v2843 = vrot.slane %v677, 1
      %v2844 = vsel %vm2763, %v2841, %v2843
      %v2845 = vrot.slane %v678, 1
      %v2846 = vsel %vm2763, %v2843, %v2845
      %v2847 = vrot.slane %v679, 1
      %v2848 = vsel %vm2763, %v2845, %v2847
      %v2849 = vrot.slane %v680, 1
      %v2850 = vsel %vm2763, %v2847, %v2849
      %v2851 = vrot.slane %v681, 1
      %v2852 = vsel %vm2763, %v2849, %v2851
      %v2853 = vrot.slane %v682, 1
      %v2854 = vsel %vm2763, %v2851, %v2853
      %v2855 = vrot.slane %v683, 1
      %v2856 = vsel %vm2763, %v2853, %v2855
      %v2857 = vrot.slane %v684, 1
      %v2858 = vsel %vm2763, %v2855, %v2857
      %v2859 = vrot.slane %v685, 1
      %v2860 = vsel %vm2763, %v2857, %v2859
      %v2861 = vrot.slane %v686, 1
      %v2862 = vsel %vm2763, %v2859, %v2861
      %v2863 = vrot.slane %v687, 1
      %v2864 = vsel %vm2763, %v2861, %v2863
      %v2865 = vrot.slane %v688, 1
      %v2866 = vsel %vm2763, %v2863, %v2865
      %v2867 = vrot.slane %v689, 1
      %v2868 = vsel %vm2763, %v2865, %v2867
      %v2869 = vrot.slane %v690, 1
      %v2870 = vsel %vm2763, %v2867, %v2869
      %v2871 = vrot.slane %v691, 1
      %v2872 = vsel %vm2763, %v2869, %v2871
      %v2873 = vrot.slane %v692, 1
      %v2874 = vsel %vm2763, %v2871, %v2873
      %v2875 = vrot.slane %v693, 1
      %v2876 = vsel %vm2763, %v2873, %v2875
      %v2877 = vrot.slane %v694, 1
      %v2878 = vsel %vm2763, %v2875, %v2877
      %v2879 = vrot.slane %v695, 1
      %v2880 = vsel %vm2763, %v2877, %v2879
      %v2881 = vrot.slane %v696, 1
      %v2882 = vsel %vm2763, %v2879, %v2881
      %v2883 = vrot.slane %v697, 1
      %v2884 = vsel %vm2763, %v2881, %v2883
      %v2885 = vrot.slane %v698, 1
      %v2886 = vsel %vm2763, %v2883, %v2885
      %v2887 = vrot.slane %v699, 1
      %v2888 = vsel %vm2763, %v2885, %v2887
      %v2889 = vrot.slane %v700, 1
      %v2890 = vsel %vm2763, %v2887, %v2889
      %v2891 = vrot.slane %v701, 1
      %v2892 = vsel %vm2763, %v2889, %v2891
      %v2893 = vrot.slane %v702, 1
      %v2894 = vsel %vm2763, %v2891, %v2893
      %v2895 = vrot.slane %v703, 1
      %v2896 = vsel %vm2763, %v2893, %v2895
      %v2897 = vrot.slane %v704, 1
      %v2898 = vsel %vm2763, %v2895, %v2897
      %v2899 = vrot.slane %v705, 1
      %v2900 = vsel %vm2763, %v2897, %v2899
      %v2902 = vsel %vm1255, %v2766, 0
      %v2905 = vsel %vm1255, %v2768, 0
      %v2908 = vsel %vm1255, %v2770, 0
      %v2911 = vsel %vm1255, %v2772, 0
      %v2914 = vsel %vm1255, %v2774, 0
      %v2917 = vsel %vm1255, %v2776, 0
      %v2920 = vsel %vm1255, %v2778, 0
      %v2923 = vsel %vm1255, %v2780, 0
      %v2926 = vsel %vm1255, %v2782, 0
      %v2929 = vsel %vm1255, %v2784, 0
      %v2932 = vsel %vm1255, %v2786, 0
      %v2935 = vsel %vm1255, %v2788, 0
      %v2938 = vsel %vm1255, %v2790, 0
      %v2941 = vsel %vm1255, %v2792, 0
      %v2944 = vsel %vm1255, %v2794, 0
      %v2947 = vsel %vm1255, %v2796, 0
      %v2950 = vsel %vm1255, %v2798, 0
      %v2953 = vsel %vm1255, %v2800, 0
      %v2956 = vsel %vm1255, %v2802, 0
      %v2959 = vsel %vm1255, %v2804, 0
      %v2962 = vsel %vm1255, %v2806, 0
      %v2965 = vsel %vm1255, %v2808, 0
      %v2968 = vsel %vm1255, %v2810, 0
      %v2971 = vsel %vm1255, %v2812, 0
      %v2974 = vsel %vm1255, %v2814, 0
      %v2977 = vsel %vm1255, %v2816, 0
      %v2980 = vsel %vm1255, %v2818, 0
      %v2983 = vsel %vm1255, %v2820, 0
      %v2986 = vsel %vm1255, %v2822, 0
      %v2989 = vsel %vm1255, %v2824, 0
      %v2992 = vsel %vm1255, %v2826, 0
      %v2995 = vsel %vm1255, %v2828, 0
      %v2998 = vsel %vm1255, %v2830, 0
      %v3001 = vsel %vm1255, %v2832, 0
      %v3004 = vsel %vm1255, %v2834, 0
      %v3007 = vsel %vm1255, %v2836, 0
      %v3010 = vsel %vm1255, %v2838, 0
      %v3013 = vsel %vm1255, %v2840, 0
      %v3016 = vsel %vm1255, %v2842, 0
      %v3019 = vsel %vm1255, %v2844, 0
      %v3022 = vsel %vm1255, %v2846, 0
      %v3025 = vsel %vm1255, %v2848, 0
      %v3028 = vsel %vm1255, %v2850, 0
      %v3031 = vsel %vm1255, %v2852, 0
      %v3034 = vsel %vm1255, %v2854, 0
      %v3037 = vsel %vm1255, %v2856, 0
      %v3040 = vsel %vm1255, %v2858, 0
      %v3043 = vsel %vm1255, %v2860, 0
      %v3046 = vsel %vm1255, %v2862, 0
      %v3049 = vsel %vm1255, %v2864, 0
      %v3052 = vsel %vm1255, %v2866, 0
      %v3055 = vsel %vm1255, %v2868, 0
      %v3058 = vsel %vm1255, %v2870, 0
      %v3061 = vsel %vm1255, %v2872, 0
      %v3064 = vsel %vm1255, %v2874, 0
      %v3067 = vsel %vm1255, %v2876, 0
      %v3070 = vsel %vm1255, %v2878, 0
      %v3073 = vsel %vm1255, %v2880, 0
      %v3076 = vsel %vm1255, %v2882, 0
      %v3079 = vsel %vm1255, %v2884, 0
      %v3082 = vsel %vm1255, %v2886, 0
      %v3085 = vsel %vm1255, %v2888, 0
      %v3088 = vsel %vm1255, %v2890, 0
      %v3091 = vsel %vm1255, %v2892, 0
      %v3094 = vsel %vm1255, %v2894, 0
      %v3097 = vsel %vm1255, %v2896, 0
      %v3100 = vsel %vm1255, %v2898, 0
      %v3103 = vsel %vm1255, %v2900, 0
      %v3106 = vsel %vm1460, %v2759, 0
      %3108 = vmatprep.subr.bf16.mxu0 0
      %3109 = vmatpush1.bf16.msra.mxu0 0
      %3110 = vmatprep.subr.bf16.mxu0 0
      %3111 = vmatpush1.bf16.msra.mxu0 0
      %3112 = vmatprep.subr.bf16.mxu0 0
      %3113 = vmatpush1.bf16.msra.mxu0 0
      %3114 = vmatprep.subr.bf16.mxu0 0
      %3115 = vmatpush1.bf16.msra.mxu0 0
      %3116 = vmatprep.subr.bf16.mxu0 0
      %3117 = vmatpush1.bf16.msra.mxu0 0
      %3118 = vmatprep.subr.bf16.mxu0 0
      %3119 = vmatpush1.bf16.msra.mxu0 0
      %3120 = vmatprep.subr.bf16.mxu0 0
      %3121 = vmatpush1.bf16.msra.mxu0 0
      %3122 = vmatprep.subr.bf16.mxu0 0
      %3123 = vmatpush1.bf16.msra.mxu0 %v3106
      %3124 = vmatprep.subr.bf16.mxu0 0
      %3125 = vmatpush2.bf16.msra.mxu0 0
      %3126 = vmatprep.subr.bf16.mxu0 0
      %3127 = vmatpush2.bf16.msra.mxu0 0
      %3128 = vmatprep.subr.bf16.mxu0 0
      %3129 = vmatpush2.bf16.msra.mxu0 0
      %3130 = vmatprep.subr.bf16.mxu0 0
      %3131 = vmatpush2.bf16.msra.mxu0 0
      %3132 = vmatprep.subr.bf16.mxu0 0
      %3133 = vmatpush2.bf16.msra.mxu0 0
      %3134 = vmatprep.subr.bf16.mxu0 0
      %3135 = vmatpush2.bf16.msra.mxu0 0
      %3136 = vmatprep.subr.bf16.mxu0 0
      %3137 = vmatpush2.bf16.msra.mxu0 0
      %3138 = vmatprep.subr.bf16.mxu0 0
      %3139 = vmatpush2.bf16.msra.mxu0 0
      %3140 = vmatprep.mubr.bf16.mxu0 0
      %3141 = vmatmul.mubr.bf16.gmra.mxu0 %v2902
      %v3142 = vpop.f32.mrf.mxu0
      %v3143 = vadd.f32 0.0, %v3142
      %v3144 = vpop.f32.mrf.mxu0
      %v3145 = vpop.f32.mrf.mxu0
      %v3146 = vadd.f32 0.0, %v3145
      %v3147 = vpop.f32.mrf.mxu0
      %3148 = vmatprep.mubr.bf16.mxu0 0
      %3149 = vmatmul.mubr.bf16.gmra.mxu0 %v2905
      %v3150 = vpop.f32.mrf.mxu0
      %v3151 = vadd.f32 0.0, %v3150
      %v3152 = vpop.f32.mrf.mxu0
      %v3153 = vpop.f32.mrf.mxu0
      %v3154 = vadd.f32 0.0, %v3153
      %v3155 = vpop.f32.mrf.mxu0
      %3156 = vmatprep.mubr.bf16.mxu0 0
      %3157 = vmatmul.mubr.bf16.gmra.mxu0 %v2908
      %v3158 = vpop.f32.mrf.mxu0
      %v3159 = vadd.f32 0.0, %v3158
      %v3160 = vpop.f32.mrf.mxu0
      %v3161 = vpop.f32.mrf.mxu0
      %v3162 = vadd.f32 0.0, %v3161
      %v3163 = vpop.f32.mrf.mxu0
      %3164 = vmatprep.mubr.bf16.mxu0 0
      %3165 = vmatmul.mubr.bf16.gmra.mxu0 %v2911
      %v3166 = vpop.f32.mrf.mxu0
      %v3167 = vadd.f32 0.0, %v3166
      %v3168 = vpop.f32.mrf.mxu0
      %v3169 = vpop.f32.mrf.mxu0
      %v3170 = vadd.f32 0.0, %v3169
      %v3171 = vpop.f32.mrf.mxu0
      %3172 = vmatprep.mubr.bf16.mxu0 0
      %3173 = vmatmul.mubr.bf16.gmra.mxu0 %v2914
      %v3174 = vpop.f32.mrf.mxu0
      %v3175 = vadd.f32 0.0, %v3174
      %v3176 = vpop.f32.mrf.mxu0
      %v3177 = vpop.f32.mrf.mxu0
      %v3178 = vadd.f32 0.0, %v3177
      %v3179 = vpop.f32.mrf.mxu0
      %3180 = vmatprep.mubr.bf16.mxu0 0
      %3181 = vmatmul.mubr.bf16.gmra.mxu0 %v2917
      %v3182 = vpop.f32.mrf.mxu0
      %v3183 = vadd.f32 0.0, %v3182
      %v3184 = vpop.f32.mrf.mxu0
      %v3185 = vpop.f32.mrf.mxu0
      %v3186 = vadd.f32 0.0, %v3185
      %v3187 = vpop.f32.mrf.mxu0
      %3188 = vmatprep.mubr.bf16.mxu0 0
      %3189 = vmatmul.mubr.bf16.gmra.mxu0 %v2920
      %v3190 = vpop.f32.mrf.mxu0
      %v3191 = vadd.f32 0.0, %v3190
      %v3192 = vpop.f32.mrf.mxu0
      %v3193 = vpop.f32.mrf.mxu0
      %v3194 = vadd.f32 0.0, %v3193
      %v3195 = vpop.f32.mrf.mxu0
      %3196 = vmatprep.mubr.bf16.mxu0 0
      %3197 = vmatmul.mubr.bf16.gmra.mxu0 %v2923
      %v3198 = vpop.f32.mrf.mxu0
      %v3199 = vadd.f32 0.0, %v3198
      %v3200 = vpop.f32.mrf.mxu0
      %v3201 = vpop.f32.mrf.mxu0
      %v3202 = vadd.f32 0.0, %v3201
      %v3203 = vpop.f32.mrf.mxu0
      %3204 = vmatprep.mubr.bf16.mxu0 0
      %3205 = vmatmul.mubr.bf16.gmra.mxu0 %v2926
      %v3206 = vpop.f32.mrf.mxu0
      %v3207 = vadd.f32 0.0, %v3206
      %v3208 = vpop.f32.mrf.mxu0
      %v3209 = vpop.f32.mrf.mxu0
      %v3210 = vadd.f32 0.0, %v3209
      %v3211 = vpop.f32.mrf.mxu0
      %3212 = vmatprep.mubr.bf16.mxu0 0
      %3213 = vmatmul.mubr.bf16.gmra.mxu0 %v2929
      %v3214 = vpop.f32.mrf.mxu0
      %v3215 = vadd.f32 0.0, %v3214
      %v3216 = vpop.f32.mrf.mxu0
      %v3217 = vpop.f32.mrf.mxu0
      %v3218 = vadd.f32 0.0, %v3217
      %v3219 = vpop.f32.mrf.mxu0
      %3220 = vmatprep.mubr.bf16.mxu0 0
      %3221 = vmatmul.mubr.bf16.gmra.mxu0 %v2932
      %v3222 = vpop.f32.mrf.mxu0
      %v3223 = vadd.f32 0.0, %v3222
      %v3224 = vpop.f32.mrf.mxu0
      %v3225 = vpop.f32.mrf.mxu0
      %v3226 = vadd.f32 0.0, %v3225
      %v3227 = vpop.f32.mrf.mxu0
      %3228 = vmatprep.mubr.bf16.mxu0 0
      %3229 = vmatmul.mubr.bf16.gmra.mxu0 %v2935
      %v3230 = vpop.f32.mrf.mxu0
      %v3231 = vadd.f32 0.0, %v3230
      %v3232 = vpop.f32.mrf.mxu0
      %v3233 = vpop.f32.mrf.mxu0
      %v3234 = vadd.f32 0.0, %v3233
      %v3235 = vpop.f32.mrf.mxu0
      %3236 = vmatprep.mubr.bf16.mxu0 0
      %3237 = vmatmul.mubr.bf16.gmra.mxu0 %v2938
      %v3238 = vpop.f32.mrf.mxu0
      %v3239 = vadd.f32 0.0, %v3238
      %v3240 = vpop.f32.mrf.mxu0
      %v3241 = vpop.f32.mrf.mxu0
      %v3242 = vadd.f32 0.0, %v3241
      %v3243 = vpop.f32.mrf.mxu0
      %3244 = vmatprep.mubr.bf16.mxu0 0
      %3245 = vmatmul.mubr.bf16.gmra.mxu0 %v2941
      %v3246 = vpop.f32.mrf.mxu0
      %v3247 = vadd.f32 0.0, %v3246
      %v3248 = vpop.f32.mrf.mxu0
      %v3249 = vpop.f32.mrf.mxu0
      %v3250 = vadd.f32 0.0, %v3249
      %v3251 = vpop.f32.mrf.mxu0
      %3252 = vmatprep.mubr.bf16.mxu0 0
      %3253 = vmatmul.mubr.bf16.gmra.mxu0 %v2944
      %v3254 = vpop.f32.mrf.mxu0
      %v3255 = vadd.f32 0.0, %v3254
      %v3256 = vpop.f32.mrf.mxu0
      %v3257 = vpop.f32.mrf.mxu0
      %v3258 = vadd.f32 0.0, %v3257
      %v3259 = vpop.f32.mrf.mxu0
      %3260 = vmatprep.mubr.bf16.mxu0 0
      %3261 = vmatmul.mubr.bf16.gmra.mxu0 %v2947
      %v3262 = vpop.f32.mrf.mxu0
      %v3263 = vadd.f32 0.0, %v3262
      %v3264 = vpop.f32.mrf.mxu0
      %v3265 = vpop.f32.mrf.mxu0
      %v3266 = vadd.f32 0.0, %v3265
      %v3267 = vpop.f32.mrf.mxu0
      %3268 = vmatprep.mubr.bf16.mxu0 0
      %3269 = vmatmul.mubr.bf16.gmra.mxu0 %v2950
      %v3270 = vpop.f32.mrf.mxu0
      %v3271 = vadd.f32 0.0, %v3270
      %v3272 = vpop.f32.mrf.mxu0
      %v3273 = vpop.f32.mrf.mxu0
      %v3274 = vadd.f32 0.0, %v3273
      %v3275 = vpop.f32.mrf.mxu0
      %3276 = vmatprep.mubr.bf16.mxu0 0
      %3277 = vmatmul.mubr.bf16.gmra.mxu0 %v2953
      %v3278 = vpop.f32.mrf.mxu0
      %v3279 = vadd.f32 0.0, %v3278
      %v3280 = vpop.f32.mrf.mxu0
      %v3281 = vpop.f32.mrf.mxu0
      %v3282 = vadd.f32 0.0, %v3281
      %v3283 = vpop.f32.mrf.mxu0
      %3284 = vmatprep.mubr.bf16.mxu0 0
      %3285 = vmatmul.mubr.bf16.gmra.mxu0 %v2956
      %v3286 = vpop.f32.mrf.mxu0
      %v3287 = vadd.f32 0.0, %v3286
      %v3288 = vpop.f32.mrf.mxu0
      %v3289 = vpop.f32.mrf.mxu0
      %v3290 = vadd.f32 0.0, %v3289
      %v3291 = vpop.f32.mrf.mxu0
      %3292 = vmatprep.mubr.bf16.mxu0 0
      %3293 = vmatmul.mubr.bf16.gmra.mxu0 %v2959
      %v3294 = vpop.f32.mrf.mxu0
      %v3295 = vadd.f32 0.0, %v3294
      %v3296 = vpop.f32.mrf.mxu0
      %v3297 = vpop.f32.mrf.mxu0
      %v3298 = vadd.f32 0.0, %v3297
      %v3299 = vpop.f32.mrf.mxu0
      %3300 = vmatprep.mubr.bf16.mxu0 0
      %3301 = vmatmul.mubr.bf16.gmra.mxu0 %v2962
      %v3302 = vpop.f32.mrf.mxu0
      %v3303 = vadd.f32 0.0, %v3302
      %v3304 = vpop.f32.mrf.mxu0
      %v3305 = vpop.f32.mrf.mxu0
      %v3306 = vadd.f32 0.0, %v3305
      %v3307 = vpop.f32.mrf.mxu0
      %3308 = vmatprep.mubr.bf16.mxu0 0
      %3309 = vmatmul.mubr.bf16.gmra.mxu0 %v2965
      %v3310 = vpop.f32.mrf.mxu0
      %v3311 = vadd.f32 0.0, %v3310
      %v3312 = vpop.f32.mrf.mxu0
      %v3313 = vpop.f32.mrf.mxu0
      %v3314 = vadd.f32 0.0, %v3313
      %v3315 = vpop.f32.mrf.mxu0
      %3316 = vmatprep.mubr.bf16.mxu0 0
      %3317 = vmatmul.mubr.bf16.gmra.mxu0 %v2968
      %v3318 = vpop.f32.mrf.mxu0
      %v3319 = vadd.f32 0.0, %v3318
      %v3320 = vpop.f32.mrf.mxu0
      %v3321 = vpop.f32.mrf.mxu0
      %v3322 = vadd.f32 0.0, %v3321
      %v3323 = vpop.f32.mrf.mxu0
      %3324 = vmatprep.mubr.bf16.mxu0 0
      %3325 = vmatmul.mubr.bf16.gmra.mxu0 %v2971
      %v3326 = vpop.f32.mrf.mxu0
      %v3327 = vadd.f32 0.0, %v3326
      %v3328 = vpop.f32.mrf.mxu0
      %v3329 = vpop.f32.mrf.mxu0
      %v3330 = vadd.f32 0.0, %v3329
      %v3331 = vpop.f32.mrf.mxu0
      %3332 = vmatprep.mubr.bf16.mxu0 0
      %3333 = vmatmul.mubr.bf16.gmra.mxu0 %v2974
      %v3334 = vpop.f32.mrf.mxu0
      %v3335 = vadd.f32 0.0, %v3334
      %v3336 = vpop.f32.mrf.mxu0
      %v3337 = vpop.f32.mrf.mxu0
      %v3338 = vadd.f32 0.0, %v3337
      %v3339 = vpop.f32.mrf.mxu0
      %3340 = vmatprep.mubr.bf16.mxu0 0
      %3341 = vmatmul.mubr.bf16.gmra.mxu0 %v2977
      %v3342 = vpop.f32.mrf.mxu0
      %v3343 = vadd.f32 0.0, %v3342
      %v3344 = vpop.f32.mrf.mxu0
      %v3345 = vpop.f32.mrf.mxu0
      %v3346 = vadd.f32 0.0, %v3345
      %v3347 = vpop.f32.mrf.mxu0
      %3348 = vmatprep.mubr.bf16.mxu0 0
      %3349 = vmatmul.mubr.bf16.gmra.mxu0 %v2980
      %v3350 = vpop.f32.mrf.mxu0
      %v3351 = vadd.f32 0.0, %v3350
      %v3352 = vpop.f32.mrf.mxu0
      %v3353 = vpop.f32.mrf.mxu0
      %v3354 = vadd.f32 0.0, %v3353
      %v3355 = vpop.f32.mrf.mxu0
      %3356 = vmatprep.mubr.bf16.mxu0 0
      %3357 = vmatmul.mubr.bf16.gmra.mxu0 %v2983
      %v3358 = vpop.f32.mrf.mxu0
      %v3359 = vadd.f32 0.0, %v3358
      %v3360 = vpop.f32.mrf.mxu0
      %v3361 = vpop.f32.mrf.mxu0
      %v3362 = vadd.f32 0.0, %v3361
      %v3363 = vpop.f32.mrf.mxu0
      %3364 = vmatprep.mubr.bf16.mxu0 0
      %3365 = vmatmul.mubr.bf16.gmra.mxu0 %v2986
      %v3366 = vpop.f32.mrf.mxu0
      %v3367 = vadd.f32 0.0, %v3366
      %v3368 = vpop.f32.mrf.mxu0
      %v3369 = vpop.f32.mrf.mxu0
      %v3370 = vadd.f32 0.0, %v3369
      %v3371 = vpop.f32.mrf.mxu0
      %3372 = vmatprep.mubr.bf16.mxu0 0
      %3373 = vmatmul.mubr.bf16.gmra.mxu0 %v2989
      %v3374 = vpop.f32.mrf.mxu0
      %v3375 = vadd.f32 0.0, %v3374
      %v3376 = vpop.f32.mrf.mxu0
      %v3377 = vpop.f32.mrf.mxu0
      %v3378 = vadd.f32 0.0, %v3377
      %v3379 = vpop.f32.mrf.mxu0
      %3380 = vmatprep.mubr.bf16.mxu0 0
      %3381 = vmatmul.mubr.bf16.gmra.mxu0 %v2992
      %v3382 = vpop.f32.mrf.mxu0
      %v3383 = vadd.f32 0.0, %v3382
      %v3384 = vpop.f32.mrf.mxu0
      %v3385 = vpop.f32.mrf.mxu0
      %v3386 = vadd.f32 0.0, %v3385
      %v3387 = vpop.f32.mrf.mxu0
      %3388 = vmatprep.mubr.bf16.mxu0 0
      %3389 = vmatmul.mubr.bf16.gmra.mxu0 %v2995
      %v3390 = vpop.f32.mrf.mxu0
      %v3391 = vadd.f32 0.0, %v3390
      %v3392 = vpop.f32.mrf.mxu0
      %v3393 = vpop.f32.mrf.mxu0
      %v3394 = vadd.f32 0.0, %v3393
      %v3395 = vpop.f32.mrf.mxu0
      %3396 = vmatprep.mubr.bf16.mxu0 0
      %3397 = vmatmul.mubr.bf16.gmra.mxu0 %v2998
      %v3398 = vpop.f32.mrf.mxu0
      %v3399 = vadd.f32 0.0, %v3398
      %v3400 = vpop.f32.mrf.mxu0
      %v3401 = vpop.f32.mrf.mxu0
      %v3402 = vadd.f32 0.0, %v3401
      %v3403 = vpop.f32.mrf.mxu0
      %3404 = vmatprep.mubr.bf16.mxu0 0
      %3405 = vmatmul.mubr.bf16.gmra.mxu0 %v3001
      %v3406 = vpop.f32.mrf.mxu0
      %v3407 = vadd.f32 0.0, %v3406
      %v3408 = vpop.f32.mrf.mxu0
      %v3409 = vpop.f32.mrf.mxu0
      %v3410 = vadd.f32 0.0, %v3409
      %v3411 = vpop.f32.mrf.mxu0
      %3412 = vmatprep.mubr.bf16.mxu0 0
      %3413 = vmatmul.mubr.bf16.gmra.mxu0 %v3004
      %v3414 = vpop.f32.mrf.mxu0
      %v3415 = vadd.f32 0.0, %v3414
      %v3416 = vpop.f32.mrf.mxu0
      %v3417 = vpop.f32.mrf.mxu0
      %v3418 = vadd.f32 0.0, %v3417
      %v3419 = vpop.f32.mrf.mxu0
      %3420 = vmatprep.mubr.bf16.mxu0 0
      %3421 = vmatmul.mubr.bf16.gmra.mxu0 %v3007
      %v3422 = vpop.f32.mrf.mxu0
      %v3423 = vadd.f32 0.0, %v3422
      %v3424 = vpop.f32.mrf.mxu0
      %v3425 = vpop.f32.mrf.mxu0
      %v3426 = vadd.f32 0.0, %v3425
      %v3427 = vpop.f32.mrf.mxu0
      %3428 = vmatprep.mubr.bf16.mxu0 0
      %3429 = vmatmul.mubr.bf16.gmra.mxu0 %v3010
      %v3430 = vpop.f32.mrf.mxu0
      %v3431 = vadd.f32 0.0, %v3430
      %v3432 = vpop.f32.mrf.mxu0
      %v3433 = vpop.f32.mrf.mxu0
      %v3434 = vadd.f32 0.0, %v3433
      %v3435 = vpop.f32.mrf.mxu0
      %3436 = vmatprep.mubr.bf16.mxu0 0
      %3437 = vmatmul.mubr.bf16.gmra.mxu0 %v3013
      %v3438 = vpop.f32.mrf.mxu0
      %v3439 = vadd.f32 0.0, %v3438
      %v3440 = vpop.f32.mrf.mxu0
      %v3441 = vpop.f32.mrf.mxu0
      %v3442 = vadd.f32 0.0, %v3441
      %v3443 = vpop.f32.mrf.mxu0
      %3444 = vmatprep.mubr.bf16.mxu0 0
      %3445 = vmatmul.mubr.bf16.gmra.mxu0 %v3016
      %v3446 = vpop.f32.mrf.mxu0
      %v3447 = vadd.f32 0.0, %v3446
      %v3448 = vpop.f32.mrf.mxu0
      %v3449 = vpop.f32.mrf.mxu0
      %v3450 = vadd.f32 0.0, %v3449
      %v3451 = vpop.f32.mrf.mxu0
      %3452 = vmatprep.mubr.bf16.mxu0 0
      %3453 = vmatmul.mubr.bf16.gmra.mxu0 %v3019
      %v3454 = vpop.f32.mrf.mxu0
      %v3455 = vadd.f32 0.0, %v3454
      %v3456 = vpop.f32.mrf.mxu0
      %v3457 = vpop.f32.mrf.mxu0
      %v3458 = vadd.f32 0.0, %v3457
      %v3459 = vpop.f32.mrf.mxu0
      %3460 = vmatprep.mubr.bf16.mxu0 0
      %3461 = vmatmul.mubr.bf16.gmra.mxu0 %v3022
      %v3462 = vpop.f32.mrf.mxu0
      %v3463 = vadd.f32 0.0, %v3462
      %v3464 = vpop.f32.mrf.mxu0
      %v3465 = vpop.f32.mrf.mxu0
      %v3466 = vadd.f32 0.0, %v3465
      %v3467 = vpop.f32.mrf.mxu0
      %3468 = vmatprep.mubr.bf16.mxu0 0
      %3469 = vmatmul.mubr.bf16.gmra.mxu0 %v3025
      %v3470 = vpop.f32.mrf.mxu0
      %v3471 = vadd.f32 0.0, %v3470
      %v3472 = vpop.f32.mrf.mxu0
      %v3473 = vpop.f32.mrf.mxu0
      %v3474 = vadd.f32 0.0, %v3473
      %v3475 = vpop.f32.mrf.mxu0
      %3476 = vmatprep.mubr.bf16.mxu0 0
      %3477 = vmatmul.mubr.bf16.gmra.mxu0 %v3028
      %v3478 = vpop.f32.mrf.mxu0
      %v3479 = vadd.f32 0.0, %v3478
      %v3480 = vpop.f32.mrf.mxu0
      %v3481 = vpop.f32.mrf.mxu0
      %v3482 = vadd.f32 0.0, %v3481
      %v3483 = vpop.f32.mrf.mxu0
      %3484 = vmatprep.mubr.bf16.mxu0 0
      %3485 = vmatmul.mubr.bf16.gmra.mxu0 %v3031
      %v3486 = vpop.f32.mrf.mxu0
      %v3487 = vadd.f32 0.0, %v3486
      %v3488 = vpop.f32.mrf.mxu0
      %v3489 = vpop.f32.mrf.mxu0
      %v3490 = vadd.f32 0.0, %v3489
      %v3491 = vpop.f32.mrf.mxu0
      %3492 = vmatprep.mubr.bf16.mxu0 0
      %3493 = vmatmul.mubr.bf16.gmra.mxu0 %v3034
      %v3494 = vpop.f32.mrf.mxu0
      %v3495 = vadd.f32 0.0, %v3494
      %v3496 = vpop.f32.mrf.mxu0
      %v3497 = vpop.f32.mrf.mxu0
      %v3498 = vadd.f32 0.0, %v3497
      %v3499 = vpop.f32.mrf.mxu0
      %3500 = vmatprep.mubr.bf16.mxu0 0
      %3501 = vmatmul.mubr.bf16.gmra.mxu0 %v3037
      %v3502 = vpop.f32.mrf.mxu0
      %v3503 = vadd.f32 0.0, %v3502
      %v3504 = vpop.f32.mrf.mxu0
      %v3505 = vpop.f32.mrf.mxu0
      %v3506 = vadd.f32 0.0, %v3505
      %v3507 = vpop.f32.mrf.mxu0
      %3508 = vmatprep.mubr.bf16.mxu0 0
      %3509 = vmatmul.mubr.bf16.gmra.mxu0 %v3040
      %v3510 = vpop.f32.mrf.mxu0
      %v3511 = vadd.f32 0.0, %v3510
      %v3512 = vpop.f32.mrf.mxu0
      %v3513 = vpop.f32.mrf.mxu0
      %v3514 = vadd.f32 0.0, %v3513
      %v3515 = vpop.f32.mrf.mxu0
      %3516 = vmatprep.mubr.bf16.mxu0 0
      %3517 = vmatmul.mubr.bf16.gmra.mxu0 %v3043
      %v3518 = vpop.f32.mrf.mxu0
      %v3519 = vadd.f32 0.0, %v3518
      %v3520 = vpop.f32.mrf.mxu0
      %v3521 = vpop.f32.mrf.mxu0
      %v3522 = vadd.f32 0.0, %v3521
      %v3523 = vpop.f32.mrf.mxu0
      %3524 = vmatprep.mubr.bf16.mxu0 0
      %3525 = vmatmul.mubr.bf16.gmra.mxu0 %v3046
      %v3526 = vpop.f32.mrf.mxu0
      %v3527 = vadd.f32 0.0, %v3526
      %v3528 = vpop.f32.mrf.mxu0
      %v3529 = vpop.f32.mrf.mxu0
      %v3530 = vadd.f32 0.0, %v3529
      %v3531 = vpop.f32.mrf.mxu0
      %3532 = vmatprep.mubr.bf16.mxu0 0
      %3533 = vmatmul.mubr.bf16.gmra.mxu0 %v3049
      %v3534 = vpop.f32.mrf.mxu0
      %v3535 = vadd.f32 0.0, %v3534
      %v3536 = vpop.f32.mrf.mxu0
      %v3537 = vpop.f32.mrf.mxu0
      %v3538 = vadd.f32 0.0, %v3537
      %v3539 = vpop.f32.mrf.mxu0
      %3540 = vmatprep.mubr.bf16.mxu0 0
      %3541 = vmatmul.mubr.bf16.gmra.mxu0 %v3052
      %v3542 = vpop.f32.mrf.mxu0
      %v3543 = vadd.f32 0.0, %v3542
      %v3544 = vpop.f32.mrf.mxu0
      %v3545 = vpop.f32.mrf.mxu0
      %v3546 = vadd.f32 0.0, %v3545
      %v3547 = vpop.f32.mrf.mxu0
      %3548 = vmatprep.mubr.bf16.mxu0 0
      %3549 = vmatmul.mubr.bf16.gmra.mxu0 %v3055
      %v3550 = vpop.f32.mrf.mxu0
      %v3551 = vadd.f32 0.0, %v3550
      %v3552 = vpop.f32.mrf.mxu0
      %v3553 = vpop.f32.mrf.mxu0
      %v3554 = vadd.f32 0.0, %v3553
      %v3555 = vpop.f32.mrf.mxu0
      %3556 = vmatprep.mubr.bf16.mxu0 0
      %3557 = vmatmul.mubr.bf16.gmra.mxu0 %v3058
      %v3558 = vpop.f32.mrf.mxu0
      %v3559 = vadd.f32 0.0, %v3558
      %v3560 = vpop.f32.mrf.mxu0
      %v3561 = vpop.f32.mrf.mxu0
      %v3562 = vadd.f32 0.0, %v3561
      %v3563 = vpop.f32.mrf.mxu0
      %3564 = vmatprep.mubr.bf16.mxu0 0
      %3565 = vmatmul.mubr.bf16.gmra.mxu0 %v3061
      %v3566 = vpop.f32.mrf.mxu0
      %v3567 = vadd.f32 0.0, %v3566
      %v3568 = vpop.f32.mrf.mxu0
      %v3569 = vpop.f32.mrf.mxu0
      %v3570 = vadd.f32 0.0, %v3569
      %v3571 = vpop.f32.mrf.mxu0
      %3572 = vmatprep.mubr.bf16.mxu0 0
      %3573 = vmatmul.mubr.bf16.gmra.mxu0 %v3064
      %v3574 = vpop.f32.mrf.mxu0
      %v3575 = vadd.f32 0.0, %v3574
      %v3576 = vpop.f32.mrf.mxu0
      %v3577 = vpop.f32.mrf.mxu0
      %v3578 = vadd.f32 0.0, %v3577
      %v3579 = vpop.f32.mrf.mxu0
      %3580 = vmatprep.mubr.bf16.mxu0 0
      %3581 = vmatmul.mubr.bf16.gmra.mxu0 %v3067
      %v3582 = vpop.f32.mrf.mxu0
      %v3583 = vadd.f32 0.0, %v3582
      %v3584 = vpop.f32.mrf.mxu0
      %v3585 = vpop.f32.mrf.mxu0
      %v3586 = vadd.f32 0.0, %v3585
      %v3587 = vpop.f32.mrf.mxu0
      %3588 = vmatprep.mubr.bf16.mxu0 0
      %3589 = vmatmul.mubr.bf16.gmra.mxu0 %v3070
      %v3590 = vpop.f32.mrf.mxu0
      %v3591 = vadd.f32 0.0, %v3590
      %v3592 = vpop.f32.mrf.mxu0
      %v3593 = vpop.f32.mrf.mxu0
      %v3594 = vadd.f32 0.0, %v3593
      %v3595 = vpop.f32.mrf.mxu0
      %3596 = vmatprep.mubr.bf16.mxu0 0
      %3597 = vmatmul.mubr.bf16.gmra.mxu0 %v3073
      %v3598 = vpop.f32.mrf.mxu0
      %v3599 = vadd.f32 0.0, %v3598
      %v3600 = vpop.f32.mrf.mxu0
      %v3601 = vpop.f32.mrf.mxu0
      %v3602 = vadd.f32 0.0, %v3601
      %v3603 = vpop.f32.mrf.mxu0
      %3604 = vmatprep.mubr.bf16.mxu0 0
      %3605 = vmatmul.mubr.bf16.gmra.mxu0 %v3076
      %v3606 = vpop.f32.mrf.mxu0
      %v3607 = vadd.f32 0.0, %v3606
      %v3608 = vpop.f32.mrf.mxu0
      %v3609 = vpop.f32.mrf.mxu0
      %v3610 = vadd.f32 0.0, %v3609
      %v3611 = vpop.f32.mrf.mxu0
      %3612 = vmatprep.mubr.bf16.mxu0 0
      %3613 = vmatmul.mubr.bf16.gmra.mxu0 %v3079
      %v3614 = vpop.f32.mrf.mxu0
      %v3615 = vadd.f32 0.0, %v3614
      %v3616 = vpop.f32.mrf.mxu0
      %v3617 = vpop.f32.mrf.mxu0
      %v3618 = vadd.f32 0.0, %v3617
      %v3619 = vpop.f32.mrf.mxu0
      %3620 = vmatprep.mubr.bf16.mxu0 0
      %3621 = vmatmul.mubr.bf16.gmra.mxu0 %v3082
      %v3622 = vpop.f32.mrf.mxu0
      %v3623 = vadd.f32 0.0, %v3622
      %v3624 = vpop.f32.mrf.mxu0
      %v3625 = vpop.f32.mrf.mxu0
      %v3626 = vadd.f32 0.0, %v3625
      %v3627 = vpop.f32.mrf.mxu0
      %3628 = vmatprep.mubr.bf16.mxu0 0
      %3629 = vmatmul.mubr.bf16.gmra.mxu0 %v3085
      %v3630 = vpop.f32.mrf.mxu0
      %v3631 = vadd.f32 0.0, %v3630
      %v3632 = vpop.f32.mrf.mxu0
      %v3633 = vpop.f32.mrf.mxu0
      %v3634 = vadd.f32 0.0, %v3633
      %v3635 = vpop.f32.mrf.mxu0
      %3636 = vmatprep.mubr.bf16.mxu0 0
      %3637 = vmatmul.mubr.bf16.gmra.mxu0 %v3088
      %v3638 = vpop.f32.mrf.mxu0
      %v3639 = vadd.f32 0.0, %v3638
      %v3640 = vpop.f32.mrf.mxu0
      %v3641 = vpop.f32.mrf.mxu0
      %v3642 = vadd.f32 0.0, %v3641
      %v3643 = vpop.f32.mrf.mxu0
      %3644 = vmatprep.mubr.bf16.mxu0 0
      %3645 = vmatmul.mubr.bf16.gmra.mxu0 %v3091
      %v3646 = vpop.f32.mrf.mxu0
      %v3647 = vadd.f32 0.0, %v3646
      %v3648 = vpop.f32.mrf.mxu0
      %v3649 = vpop.f32.mrf.mxu0
      %v3650 = vadd.f32 0.0, %v3649
      %v3651 = vpop.f32.mrf.mxu0
      %3652 = vmatprep.mubr.bf16.mxu0 0
      %3653 = vmatmul.mubr.bf16.gmra.mxu0 %v3094
      %v3654 = vpop.f32.mrf.mxu0
      %v3655 = vadd.f32 0.0, %v3654
      %v3656 = vpop.f32.mrf.mxu0
      %v3657 = vpop.f32.mrf.mxu0
      %v3658 = vadd.f32 0.0, %v3657
      %v3659 = vpop.f32.mrf.mxu0
      %3660 = vmatprep.mubr.bf16.mxu0 0
      %3661 = vmatmul.mubr.bf16.gmra.mxu0 %v3097
      %v3662 = vpop.f32.mrf.mxu0
      %v3663 = vadd.f32 0.0, %v3662
      %v3664 = vpop.f32.mrf.mxu0
      %v3665 = vpop.f32.mrf.mxu0
      %v3666 = vadd.f32 0.0, %v3665
      %v3667 = vpop.f32.mrf.mxu0
      %3668 = vmatprep.mubr.bf16.mxu0 0
      %3669 = vmatmul.mubr.bf16.gmra.mxu0 %v3100
      %v3670 = vpop.f32.mrf.mxu0
      %v3671 = vadd.f32 0.0, %v3670
      %v3672 = vpop.f32.mrf.mxu0
      %v3673 = vpop.f32.mrf.mxu0
      %v3674 = vadd.f32 0.0, %v3673
      %v3675 = vpop.f32.mrf.mxu0
      %3676 = vmatprep.mubr.bf16.mxu0 0
      %3677 = vmatmul.mubr.bf16.gmra.mxu0 %v3103
      %v3678 = vpop.f32.mrf.mxu0
      %v3679 = vadd.f32 0.0, %v3678
      %v3680 = vpop.f32.mrf.mxu0
      %v3681 = vpop.f32.mrf.mxu0
      %v3682 = vadd.f32 0.0, %v3681
      %v3683 = vpop.f32.mrf.mxu0
      %3684 = vdwg.mxu0
      %v3685 = vadd.f32 %v2215, %v3143
      %v3686 = vadd.f32 %v2218, %v3146
      %v3687 = vadd.f32 %v2223, %v3151
      %v3688 = vadd.f32 %v2226, %v3154
      %v3689 = vadd.f32 %v2231, %v3159
      %v3690 = vadd.f32 %v2234, %v3162
      %v3691 = vadd.f32 %v2239, %v3167
      %v3692 = vadd.f32 %v2242, %v3170
      %v3693 = vadd.f32 %v2247, %v3175
      %v3694 = vadd.f32 %v2250, %v3178
      %v3695 = vadd.f32 %v2255, %v3183
      %v3696 = vadd.f32 %v2258, %v3186
      %v3697 = vadd.f32 %v2263, %v3191
      %v3698 = vadd.f32 %v2266, %v3194
      %v3699 = vadd.f32 %v2271, %v3199
      %v3700 = vadd.f32 %v2274, %v3202
      %v3701 = vadd.f32 %v2279, %v3207
      %v3702 = vadd.f32 %v2282, %v3210
      %v3703 = vadd.f32 %v2287, %v3215
      %v3704 = vadd.f32 %v2290, %v3218
      %v3705 = vadd.f32 %v2295, %v3223
      %v3706 = vadd.f32 %v2298, %v3226
      %v3707 = vadd.f32 %v2303, %v3231
      %v3708 = vadd.f32 %v2306, %v3234
      %v3709 = vadd.f32 %v2311, %v3239
      %v3710 = vadd.f32 %v2314, %v3242
      %v3711 = vadd.f32 %v2319, %v3247
      %v3712 = vadd.f32 %v2322, %v3250
      %v3713 = vadd.f32 %v2327, %v3255
      %v3714 = vadd.f32 %v2330, %v3258
      %v3715 = vadd.f32 %v2335, %v3263
      %v3716 = vadd.f32 %v2338, %v3266
      %v3717 = vadd.f32 %v2343, %v3271
      %v3718 = vadd.f32 %v2346, %v3274
      %v3719 = vadd.f32 %v2351, %v3279
      %v3720 = vadd.f32 %v2354, %v3282
      %v3721 = vadd.f32 %v2359, %v3287
      %v3722 = vadd.f32 %v2362, %v3290
      %v3723 = vadd.f32 %v2367, %v3295
      %v3724 = vadd.f32 %v2370, %v3298
      %v3725 = vadd.f32 %v2375, %v3303
      %v3726 = vadd.f32 %v2378, %v3306
      %v3727 = vadd.f32 %v2383, %v3311
      %v3728 = vadd.f32 %v2386, %v3314
      %v3729 = vadd.f32 %v2391, %v3319
      %v3730 = vadd.f32 %v2394, %v3322
      %v3731 = vadd.f32 %v2399, %v3327
      %v3732 = vadd.f32 %v2402, %v3330
      %v3733 = vadd.f32 %v2407, %v3335
      %v3734 = vadd.f32 %v2410, %v3338
      %v3735 = vadd.f32 %v2415, %v3343
      %v3736 = vadd.f32 %v2418, %v3346
      %v3737 = vadd.f32 %v2423, %v3351
      %v3738 = vadd.f32 %v2426, %v3354
      %v3739 = vadd.f32 %v2431, %v3359
      %v3740 = vadd.f32 %v2434, %v3362
      %v3741 = vadd.f32 %v2439, %v3367
      %v3742 = vadd.f32 %v2442, %v3370
      %v3743 = vadd.f32 %v2447, %v3375
      %v3744 = vadd.f32 %v2450, %v3378
      %v3745 = vadd.f32 %v2455, %v3383
      %v3746 = vadd.f32 %v2458, %v3386
      %v3747 = vadd.f32 %v2463, %v3391
      %v3748 = vadd.f32 %v2466, %v3394
      %v3749 = vadd.f32 %v2471, %v3399
      %v3750 = vadd.f32 %v2474, %v3402
      %v3751 = vadd.f32 %v2479, %v3407
      %v3752 = vadd.f32 %v2482, %v3410
      %v3753 = vadd.f32 %v2487, %v3415
      %v3754 = vadd.f32 %v2490, %v3418
      %v3755 = vadd.f32 %v2495, %v3423
      %v3756 = vadd.f32 %v2498, %v3426
      %v3757 = vadd.f32 %v2503, %v3431
      %v3758 = vadd.f32 %v2506, %v3434
      %v3759 = vadd.f32 %v2511, %v3439
      %v3760 = vadd.f32 %v2514, %v3442
      %v3761 = vadd.f32 %v2519, %v3447
      %v3762 = vadd.f32 %v2522, %v3450
      %v3763 = vadd.f32 %v2527, %v3455
      %v3764 = vadd.f32 %v2530, %v3458
      %v3765 = vadd.f32 %v2535, %v3463
      %v3766 = vadd.f32 %v2538, %v3466
      %v3767 = vadd.f32 %v2543, %v3471
      %v3768 = vadd.f32 %v2546, %v3474
      %v3769 = vadd.f32 %v2551, %v3479
      %v3770 = vadd.f32 %v2554, %v3482
      %v3771 = vadd.f32 %v2559, %v3487
      %v3772 = vadd.f32 %v2562, %v3490
      %v3773 = vadd.f32 %v2567, %v3495
      %v3774 = vadd.f32 %v2570, %v3498
      %v3775 = vadd.f32 %v2575, %v3503
      %v3776 = vadd.f32 %v2578, %v3506
      %v3777 = vadd.f32 %v2583, %v3511
      %v3778 = vadd.f32 %v2586, %v3514
      %v3779 = vadd.f32 %v2591, %v3519
      %v3780 = vadd.f32 %v2594, %v3522
      %v3781 = vadd.f32 %v2599, %v3527
      %v3782 = vadd.f32 %v2602, %v3530
      %v3783 = vadd.f32 %v2607, %v3535
      %v3784 = vadd.f32 %v2610, %v3538
      %v3785 = vadd.f32 %v2615, %v3543
      %v3786 = vadd.f32 %v2618, %v3546
      %v3787 = vadd.f32 %v2623, %v3551
      %v3788 = vadd.f32 %v2626, %v3554
      %v3789 = vadd.f32 %v2631, %v3559
      %v3790 = vadd.f32 %v2634, %v3562
      %v3791 = vadd.f32 %v2639, %v3567
      %v3792 = vadd.f32 %v2642, %v3570
      %v3793 = vadd.f32 %v2647, %v3575
      %v3794 = vadd.f32 %v2650, %v3578
      %v3795 = vadd.f32 %v2655, %v3583
      %v3796 = vadd.f32 %v2658, %v3586
      %v3797 = vadd.f32 %v2663, %v3591
      %v3798 = vadd.f32 %v2666, %v3594
      %v3799 = vadd.f32 %v2671, %v3599
      %v3800 = vadd.f32 %v2674, %v3602
      %v3801 = vadd.f32 %v2679, %v3607
      %v3802 = vadd.f32 %v2682, %v3610
      %v3803 = vadd.f32 %v2687, %v3615
      %v3804 = vadd.f32 %v2690, %v3618
      %v3805 = vadd.f32 %v2695, %v3623
      %v3806 = vadd.f32 %v2698, %v3626
      %v3807 = vadd.f32 %v2703, %v3631
      %v3808 = vadd.f32 %v2706, %v3634
      %v3809 = vadd.f32 %v2711, %v3639
      %v3810 = vadd.f32 %v2714, %v3642
      %v3811 = vadd.f32 %v2719, %v3647
      %v3812 = vadd.f32 %v2722, %v3650
      %v3813 = vadd.f32 %v2727, %v3655
      %v3814 = vadd.f32 %v2730, %v3658
      %v3815 = vadd.f32 %v2735, %v3663
      %v3816 = vadd.f32 %v2738, %v3666
      %v3817 = vadd.f32 %v2743, %v3671
      %v3818 = vadd.f32 %v2746, %v3674
      %v3819 = vadd.f32 %v2751, %v3679
      %v3820 = vadd.f32 %v2754, %v3682
      %v3821 = vld [vmem:[%s206 + $0x10] sm:$0xe]
      %v3822 = vld [vmem:[%s206 + $0x14] sm:$0xf]
      %v3823 = vld [vmem:[%s206 + $0x18] sm:$0xf]
      %v3824 = vld [vmem:[%s206 + $0x1c] sm:$0xf]
      %v3825 = vld [vmem:[%s206 + $0x20] sm:$0xf]
      %v3826 = vld [vmem:[%s206 + $0x24] sm:$0xf]
      %v3827 = vld [vmem:[%s206 + $0x28] sm:$0xf]
      %v3828 = vld [vmem:[%s206 + $0x2c] sm:$0xf]
      %v3829 = vld [vmem:[%s206 + $0x30] sm:$0xf]
      %v3830 = vld [vmem:[%s206 + $0x34] sm:$0xf]
      %v3831 = vld [vmem:[%s206 + $0x38] sm:$0xf]
      %v3832 = vld [vmem:[%s206 + $0x3c] sm:$0xf]
      %v3833 = vld [vmem:[%s206 + $0x40] sm:$0xf]
      %v3834 = vld [vmem:[%s206 + $0x44] sm:$0xf]
      %v3835 = vld [vmem:[%s206 + $0x48] sm:$0xf]
      %v3836 = vld [vmem:[%s206 + $0x4c] sm:$0xf]
      %v3837 = vld [vmem:[%s206 + $0x50] sm:$0xf]
      %v3838 = vld [vmem:[%s206 + $0x54] sm:$0xf]
      %v3839 = vld [vmem:[%s206 + $0x58] sm:$0xf]
      %v3840 = vld [vmem:[%s206 + $0x5c] sm:$0xf]
      %v3841 = vld [vmem:[%s206 + $0x60] sm:$0xf]
      %v3842 = vld [vmem:[%s206 + $0x64] sm:$0xf]
      %v3843 = vld [vmem:[%s206 + $0x68] sm:$0xf]
      %v3844 = vld [vmem:[%s206 + $0x6c] sm:$0xf]
      %v3845 = vld [vmem:[%s206 + $0x70] sm:$0xf]
      %v3846 = vld [vmem:[%s206 + $0x74] sm:$0xf]
      %v3847 = vld [vmem:[%s206 + $0x78] sm:$0xf]
      %v3848 = vld [vmem:[%s206 + $0x7c] sm:$0xf]
      %v3849 = vld [vmem:[%s206 + $0x80] sm:$0xf]
      %v3850 = vld [vmem:[%s206 + $0x84] sm:$0xf]
      %v3851 = vld [vmem:[%s206 + $0x88] sm:$0xf]
      %v3852 = vld [vmem:[%s206 + $0x8c] sm:$0xf]
      %v3853 = vld [vmem:[%s206 + $0x90] sm:$0xf]
      %v3854 = vld [vmem:[%s206 + $0x94] sm:$0xf]
      %v3855 = vld [vmem:[%s206 + $0x98] sm:$0xf]
      %v3856 = vld [vmem:[%s206 + $0x9c] sm:$0xf]
      %v3857 = vld [vmem:[%s206 + $0xa0] sm:$0xf]
      %v3858 = vld [vmem:[%s206 + $0xa4] sm:$0xf]
      %v3859 = vld [vmem:[%s206 + $0xa8] sm:$0xf]
      %v3860 = vld [vmem:[%s206 + $0xac] sm:$0xf]
      %v3861 = vld [vmem:[%s206 + $0xb0] sm:$0xf]
      %v3862 = vld [vmem:[%s206 + $0xb4] sm:$0xf]
      %v3863 = vld [vmem:[%s206 + $0xb8] sm:$0xf]
      %v3864 = vld [vmem:[%s206 + $0xbc] sm:$0xf]
      %v3865 = vld [vmem:[%s206 + $0xc0] sm:$0xf]
      %v3866 = vld [vmem:[%s206 + $0xc4] sm:$0xf]
      %v3867 = vld [vmem:[%s206 + $0xc8] sm:$0xf]
      %v3868 = vld [vmem:[%s206 + $0xcc] sm:$0xf]
      %v3869 = vld [vmem:[%s206 + $0xd0] sm:$0xf]
      %v3870 = vld [vmem:[%s206 + $0xd4] sm:$0xf]
      %v3871 = vld [vmem:[%s206 + $0xd8] sm:$0xf]
      %v3872 = vld [vmem:[%s206 + $0xdc] sm:$0xf]
      %v3873 = vld [vmem:[%s206 + $0xe0] sm:$0xf]
      %v3874 = vld [vmem:[%s206 + $0xe4] sm:$0xf]
      %v3875 = vld [vmem:[%s206 + $0xe8] sm:$0xf]
      %v3876 = vld [vmem:[%s206 + $0xec] sm:$0xf]
      %v3877 = vld [vmem:[%s206 + $0xf0] sm:$0xf]
      %v3878 = vld [vmem:[%s206 + $0xf4] sm:$0xf]
      %v3879 = vld [vmem:[%s206 + $0xf8] sm:$0xf]
      %v3880 = vld [vmem:[%s206 + $0xfc] sm:$0xf]
      %v3881 = vld [vmem:[%s206 + $0x100] sm:$0xf]
      %v3882 = vld [vmem:[%s206 + $0x104] sm:$0xf]
      %v3883 = vld [vmem:[%s206 + $0x108] sm:$0xf]
      %v3884 = vld [vmem:[%s206 + $0x10c] sm:$0xf]
      %v3885 = vld [vmem:[%s206 + $0x110] sm:$0xf]
      %v3886 = vld [vmem:[%s206 + $0x114] sm:$0xf]
      %v3887 = vld [vmem:[%s206 + $0x118] sm:$0xf]
      %v3888 = vld [vmem:[%s206 + $0x11c] sm:$0xf]
      %v3889 = vld [vmem:[%s206 + $0x120] sm:$0xf]
      %v3890 = vld [vmem:[%s206 + $0x124] sm:$0xf]
      %v3891 = vld [vmem:[%s206 + $0x128] sm:$0xf]
      %v3892 = vld [vmem:[%s206 + $0x12c] sm:$0xf]
      %v3893 = vld [vmem:[%s206 + $0x130] sm:$0xf]
      %v3894 = vld [vmem:[%s206 + $0x134] sm:$0xf]
      %v3895 = vld [vmem:[%s206 + $0x138] sm:$0xf]
      %v3896 = vld [vmem:[%s206 + $0x13c] sm:$0xf]
      %v3897 = vld [vmem:[%s206 + $0x140] sm:$0xf]
      %v3898 = vld [vmem:[%s206 + $0x144] sm:$0xf]
      %v3899 = vld [vmem:[%s206 + $0x148] sm:$0xf]
      %v3900 = vld [vmem:[%s206 + $0x14c] sm:$0xf]
      %v3901 = vld [vmem:[%s206 + $0x150] sm:$0xf]
      %v3902 = vld [vmem:[%s206 + $0x154] sm:$0xf]
      %v3903 = vld [vmem:[%s206 + $0x158] sm:$0xf]
      %v3904 = vld [vmem:[%s206 + $0x15c] sm:$0xf]
      %v3905 = vld [vmem:[%s206 + $0x160] sm:$0xf]
      %v3906 = vld [vmem:[%s206 + $0x164] sm:$0xf]
      %v3907 = vld [vmem:[%s206 + $0x168] sm:$0xf]
      %v3908 = vld [vmem:[%s206 + $0x16c] sm:$0xf]
      %v3909 = vld [vmem:[%s206 + $0x170] sm:$0xf]
      %v3910 = vld [vmem:[%s206 + $0x174] sm:$0xf]
      %v3911 = vld [vmem:[%s206 + $0x178] sm:$0xf]
      %v3912 = vld [vmem:[%s206 + $0x17c] sm:$0xf]
      %v3913 = vld [vmem:[%s206 + $0x180] sm:$0xf]
      %v3914 = vld [vmem:[%s206 + $0x184] sm:$0xf]
      %v3915 = vld [vmem:[%s206 + $0x188] sm:$0xf]
      %v3916 = vld [vmem:[%s206 + $0x18c] sm:$0xf]
      %v3917 = vld [vmem:[%s206 + $0x190] sm:$0xf]
      %v3918 = vld [vmem:[%s206 + $0x194] sm:$0xf]
      %v3919 = vld [vmem:[%s206 + $0x198] sm:$0xf]
      %v3920 = vld [vmem:[%s206 + $0x19c] sm:$0xf]
      %v3921 = vld [vmem:[%s206 + $0x1a0] sm:$0xf]
      %v3922 = vld [vmem:[%s206 + $0x1a4] sm:$0xf]
      %v3923 = vld [vmem:[%s206 + $0x1a8] sm:$0xf]
      %v3924 = vld [vmem:[%s206 + $0x1ac] sm:$0xf]
      %v3925 = vld [vmem:[%s206 + $0x1b0] sm:$0xf]
      %v3926 = vld [vmem:[%s206 + $0x1b4] sm:$0xf]
      %v3927 = vld [vmem:[%s206 + $0x1b8] sm:$0xf]
      %v3928 = vld [vmem:[%s206 + $0x1bc] sm:$0xf]
      %v3929 = vld [vmem:[%s206 + $0x1c0] sm:$0xf]
      %v3930 = vld [vmem:[%s206 + $0x1c4] sm:$0xf]
      %v3931 = vld [vmem:[%s206 + $0x1c8] sm:$0xf]
      %v3932 = vld [vmem:[%s206 + $0x1cc] sm:$0xf]
      %v3933 = vld [vmem:[%s206 + $0x1d0] sm:$0xf]
      %v3934 = vld [vmem:[%s206 + $0x1d4] sm:$0xf]
      %v3935 = vld [vmem:[%s206 + $0x1d8] sm:$0xf]
      %v3936 = vld [vmem:[%s206 + $0x1dc] sm:$0xf]
      %v3937 = vld [vmem:[%s206 + $0x1e0] sm:$0xf]
      %v3938 = vld [vmem:[%s206 + $0x1e4] sm:$0xf]
      %v3939 = vld [vmem:[%s206 + $0x1e8] sm:$0xf]
      %v3940 = vld [vmem:[%s206 + $0x1ec] sm:$0xf]
      %v3941 = vld [vmem:[%s206 + $0x1f0] sm:$0xf]
      %v3942 = vld [vmem:[%s206 + $0x1f4] sm:$0xf]
      %v3943 = vld [vmem:[%s206 + $0x1f8] sm:$0xf]
      %v3944 = vld [vmem:[%s206 + $0x1fc] sm:$0xf]
      %v3945 = vld [vmem:[%s206 + $0x200] sm:$0xf]
      %v3946 = vld [vmem:[%s206 + $0x204] sm:$0xf]
      %v3947 = vld [vmem:[%s206 + $0x208] sm:$0xf]
      %v3948 = vld [vmem:[%s206 + $0x20c] sm:$0xf]
      %v3949 = vld [vmem:[%s206 + $0x210] sm:$0xf]
      %v3950 = vld [vmem:[%s206 + $0x214] sm:$0xf]
      %v3951 = vld [vmem:[%s206 + $0x218] sm:$0xf]
      %v3952 = vld [vmem:[%s206 + $0x21c] sm:$0xf]
      %v3953 = vld [vmem:[%s206 + $0x220] sm:$0xf]
      %v3954 = vld [vmem:[%s206 + $0x224] sm:$0xf]
      %v3955 = vld [vmem:[%s206 + $0x228] sm:$0xf]
      %v3956 = vld [vmem:[%s206 + $0x22c] sm:$0xf]
      %v3957 = vld [vmem:[%s206 + $0x230] sm:$0x1]
      %s3958 = scalar_lea.vmem %s210, 12
      %v3959 = vld [vmem:[%s3958] sm:$0xf]
      %v4097 = vunpack.c.l.b16 %v3821
      %v4098 = vunpack.c.l.b16 %v3822
      %v4099 = vunpack.c.l.b16 %v3823
      %v4100 = vunpack.c.l.b16 %v3824
      %v4101 = vunpack.c.l.b16 %v3825
      %v4102 = vunpack.c.l.b16 %v3826
      %v4103 = vunpack.c.l.b16 %v3827
      %v4104 = vunpack.c.l.b16 %v3828
      %v4105 = vunpack.c.l.b16 %v3829
      %v4106 = vunpack.c.l.b16 %v3830
      %v4107 = vunpack.c.l.b16 %v3831
      %v4108 = vunpack.c.l.b16 %v3832
      %v4109 = vunpack.c.l.b16 %v3833
      %v4110 = vunpack.c.l.b16 %v3834
      %v4111 = vunpack.c.l.b16 %v3835
      %v4112 = vunpack.c.l.b16 %v3836
      %v4113 = vunpack.c.l.b16 %v3837
      %v4114 = vunpack.c.l.b16 %v3838
      %v4115 = vunpack.c.l.b16 %v3839
      %v4116 = vunpack.c.l.b16 %v3840
      %v4117 = vunpack.c.l.b16 %v3841
      %v4118 = vunpack.c.l.b16 %v3842
      %v4119 = vunpack.c.l.b16 %v3843
      %v4120 = vunpack.c.l.b16 %v3844
      %v4121 = vunpack.c.l.b16 %v3845
      %v4122 = vunpack.c.l.b16 %v3846
      %v4123 = vunpack.c.l.b16 %v3847
      %v4124 = vunpack.c.l.b16 %v3848
      %v4125 = vunpack.c.l.b16 %v3849
      %v4126 = vunpack.c.l.b16 %v3850
      %v4127 = vunpack.c.l.b16 %v3851
      %v4128 = vunpack.c.l.b16 %v3852
      %v4129 = vunpack.c.l.b16 %v3853
      %v4130 = vunpack.c.l.b16 %v3854
      %v4131 = vunpack.c.l.b16 %v3855
      %v4132 = vunpack.c.l.b16 %v3856
      %v4133 = vunpack.c.l.b16 %v3857
      %v4134 = vunpack.c.l.b16 %v3858
      %v4135 = vunpack.c.l.b16 %v3859
      %v4136 = vunpack.c.l.b16 %v3860
      %v4137 = vunpack.c.l.b16 %v3861
      %v4138 = vunpack.c.l.b16 %v3862
      %v4139 = vunpack.c.l.b16 %v3863
      %v4140 = vunpack.c.l.b16 %v3864
      %v4141 = vunpack.c.l.b16 %v3865
      %v4142 = vunpack.c.l.b16 %v3866
      %v4143 = vunpack.c.l.b16 %v3867
      %v4144 = vunpack.c.l.b16 %v3868
      %v4145 = vunpack.c.l.b16 %v3869
      %v4146 = vunpack.c.l.b16 %v3870
      %v4147 = vunpack.c.l.b16 %v3871
      %v4148 = vunpack.c.l.b16 %v3872
      %v4149 = vunpack.c.l.b16 %v3873
      %v4150 = vunpack.c.l.b16 %v3874
      %v4151 = vunpack.c.l.b16 %v3875
      %v4152 = vunpack.c.l.b16 %v3876
      %v4153 = vunpack.c.l.b16 %v3877
      %v4154 = vunpack.c.l.b16 %v3878
      %v4155 = vunpack.c.l.b16 %v3879
      %v4156 = vunpack.c.l.b16 %v3880
      %v4157 = vunpack.c.l.b16 %v3881
      %v4158 = vunpack.c.l.b16 %v3882
      %v4159 = vunpack.c.l.b16 %v3883
      %v4160 = vunpack.c.l.b16 %v3884
      %v4161 = vunpack.c.l.b16 %v3885
      %v4162 = vunpack.c.l.b16 %v3886
      %v4163 = vunpack.c.l.b16 %v3887
      %v4164 = vunpack.c.l.b16 %v3888
      %v4165 = vunpack.c.l.b16 %v3889
      %v4166 = vunpack.c.l.b16 %v3890
      %v4167 = vunpack.c.l.b16 %v3891
      %v4168 = vunpack.c.l.b16 %v3892
      %v4169 = vunpack.c.l.b16 %v3893
      %v4170 = vunpack.c.l.b16 %v3894
      %v4171 = vunpack.c.l.b16 %v3895
      %v4172 = vunpack.c.l.b16 %v3896
      %v4173 = vunpack.c.l.b16 %v3897
      %v4174 = vunpack.c.l.b16 %v3898
      %v4175 = vunpack.c.l.b16 %v3899
      %v4176 = vunpack.c.l.b16 %v3900
      %v4177 = vunpack.c.l.b16 %v3901
      %v4178 = vunpack.c.l.b16 %v3902
      %v4179 = vunpack.c.l.b16 %v3903
      %v4180 = vunpack.c.l.b16 %v3904
      %v4181 = vunpack.c.l.b16 %v3905
      %v4182 = vunpack.c.l.b16 %v3906
      %v4183 = vunpack.c.l.b16 %v3907
      %v4184 = vunpack.c.l.b16 %v3908
      %v4185 = vunpack.c.l.b16 %v3909
      %v4186 = vunpack.c.l.b16 %v3910
      %v4187 = vunpack.c.l.b16 %v3911
      %v4188 = vunpack.c.l.b16 %v3912
      %v4189 = vunpack.c.l.b16 %v3913
      %v4190 = vunpack.c.l.b16 %v3914
      %v4191 = vunpack.c.l.b16 %v3915
      %v4192 = vunpack.c.l.b16 %v3916
      %v4193 = vunpack.c.l.b16 %v3917
      %v4194 = vunpack.c.l.b16 %v3918
      %v4195 = vunpack.c.l.b16 %v3919
      %v4196 = vunpack.c.l.b16 %v3920
      %v4197 = vunpack.c.l.b16 %v3921
      %v4198 = vunpack.c.l.b16 %v3922
      %v4199 = vunpack.c.l.b16 %v3923
      %v4200 = vunpack.c.l.b16 %v3924
      %v4201 = vunpack.c.l.b16 %v3925
      %v4202 = vunpack.c.l.b16 %v3926
      %v4203 = vunpack.c.l.b16 %v3927
      %v4204 = vunpack.c.l.b16 %v3928
      %v4205 = vunpack.c.l.b16 %v3929
      %v4206 = vunpack.c.l.b16 %v3930
      %v4207 = vunpack.c.l.b16 %v3931
      %v4208 = vunpack.c.l.b16 %v3932
      %v4209 = vunpack.c.l.b16 %v3933
      %v4210 = vunpack.c.l.b16 %v3934
      %v4211 = vunpack.c.l.b16 %v3935
      %v4212 = vunpack.c.l.b16 %v3936
      %v4213 = vunpack.c.l.b16 %v3937
      %v4214 = vunpack.c.l.b16 %v3938
      %v4215 = vunpack.c.l.b16 %v3939
      %v4216 = vunpack.c.l.b16 %v3940
      %v4217 = vunpack.c.l.b16 %v3941
      %v4218 = vunpack.c.l.b16 %v3942
      %v4219 = vunpack.c.l.b16 %v3943
      %v4220 = vunpack.c.l.b16 %v3944
      %v4221 = vunpack.c.l.b16 %v3945
      %v4222 = vunpack.c.l.b16 %v3946
      %v4223 = vunpack.c.l.b16 %v3947
      %v4224 = vunpack.c.l.b16 %v3948
      %v4225 = vunpack.c.l.b16 %v3949
      %v4226 = vunpack.c.l.b16 %v3950
      %v4227 = vunpack.c.l.b16 %v3951
      %v4228 = vunpack.c.l.b16 %v3952
      %v4229 = vunpack.c.l.b16 %v3953
      %v4230 = vunpack.c.l.b16 %v3954
      %v4231 = vunpack.c.l.b16 %v3955
      %v4232 = vunpack.c.l.b16 %v3956
      %v4233 = vunpack.c.l.b16 %v3957
      %v4234 = vpack.c.b16 %v4098, %v4097
      %v4235 = vpack.c.b16 %v4100, %v4099
      %v4236 = vpack.c.b16 %v4102, %v4101
      %v4237 = vpack.c.b16 %v4104, %v4103
      %v4238 = vpack.c.b16 %v4106, %v4105
      %v4239 = vpack.c.b16 %v4108, %v4107
      %v4240 = vpack.c.b16 %v4110, %v4109
      %v4241 = vpack.c.b16 %v4112, %v4111
      %v4242 = vpack.c.b16 %v4114, %v4113
      %v4243 = vpack.c.b16 %v4116, %v4115
      %v4244 = vpack.c.b16 %v4118, %v4117
      %v4245 = vpack.c.b16 %v4120, %v4119
      %v4246 = vpack.c.b16 %v4122, %v4121
      %v4247 = vpack.c.b16 %v4124, %v4123
      %v4248 = vpack.c.b16 %v4126, %v4125
      %v4249 = vpack.c.b16 %v4128, %v4127
      %v4250 = vpack.c.b16 %v4130, %v4129
      %v4251 = vpack.c.b16 %v4132, %v4131
      %v4252 = vpack.c.b16 %v4134, %v4133
      %v4253 = vpack.c.b16 %v4136, %v4135
      %v4254 = vpack.c.b16 %v4138, %v4137
      %v4255 = vpack.c.b16 %v4140, %v4139
      %v4256 = vpack.c.b16 %v4142, %v4141
      %v4257 = vpack.c.b16 %v4144, %v4143
      %v4258 = vpack.c.b16 %v4146, %v4145
      %v4259 = vpack.c.b16 %v4148, %v4147
      %v4260 = vpack.c.b16 %v4150, %v4149
      %v4261 = vpack.c.b16 %v4152, %v4151
      %v4262 = vpack.c.b16 %v4154, %v4153
      %v4263 = vpack.c.b16 %v4156, %v4155
      %v4264 = vpack.c.b16 %v4158, %v4157
      %v4265 = vpack.c.b16 %v4160, %v4159
      %v4266 = vpack.c.b16 %v4162, %v4161
      %v4267 = vpack.c.b16 %v4164, %v4163
      %v4268 = vpack.c.b16 %v4166, %v4165
      %v4269 = vpack.c.b16 %v4168, %v4167
      %v4270 = vpack.c.b16 %v4170, %v4169
      %v4271 = vpack.c.b16 %v4172, %v4171
      %v4272 = vpack.c.b16 %v4174, %v4173
      %v4273 = vpack.c.b16 %v4176, %v4175
      %v4274 = vpack.c.b16 %v4178, %v4177
      %v4275 = vpack.c.b16 %v4180, %v4179
      %v4276 = vpack.c.b16 %v4182, %v4181
      %v4277 = vpack.c.b16 %v4184, %v4183
      %v4278 = vpack.c.b16 %v4186, %v4185
      %v4279 = vpack.c.b16 %v4188, %v4187
      %v4280 = vpack.c.b16 %v4190, %v4189
      %v4281 = vpack.c.b16 %v4192, %v4191
      %v4282 = vpack.c.b16 %v4194, %v4193
      %v4283 = vpack.c.b16 %v4196, %v4195
      %v4284 = vpack.c.b16 %v4198, %v4197
      %v4285 = vpack.c.b16 %v4200, %v4199
      %v4286 = vpack.c.b16 %v4202, %v4201
      %v4287 = vpack.c.b16 %v4204, %v4203
      %v4288 = vpack.c.b16 %v4206, %v4205
      %v4289 = vpack.c.b16 %v4208, %v4207
      %v4290 = vpack.c.b16 %v4210, %v4209
      %v4291 = vpack.c.b16 %v4212, %v4211
      %v4292 = vpack.c.b16 %v4214, %v4213
      %v4293 = vpack.c.b16 %v4216, %v4215
      %v4294 = vpack.c.b16 %v4218, %v4217
      %v4295 = vpack.c.b16 %v4220, %v4219
      %v4296 = vpack.c.b16 %v4222, %v4221
      %v4297 = vpack.c.b16 %v4224, %v4223
      %v4298 = vpack.c.b16 %v4226, %v4225
      %v4299 = vpack.c.b16 %v4228, %v4227
      %v4300 = vpack.c.b16 %v4230, %v4229
      %v4301 = vpack.c.b16 %v4232, %v4231
      %v4302 = vpack.c.b16 %v4233, %v4233
      %v4303 = vrot.slane %v4234, 1
      %v4304 = vrot.slane %v4235, 1
      %v4305 = vsel %vm2763, %v4303, %v4304
      %v4306 = vrot.slane %v4236, 1
      %v4307 = vsel %vm2763, %v4304, %v4306
      %v4308 = vrot.slane %v4237, 1
      %v4309 = vsel %vm2763, %v4306, %v4308
      %v4310 = vrot.slane %v4238, 1
      %v4311 = vsel %vm2763, %v4308, %v4310
      %v4312 = vrot.slane %v4239, 1
      %v4313 = vsel %vm2763, %v4310, %v4312
      %v4314 = vrot.slane %v4240, 1
      %v4315 = vsel %vm2763, %v4312, %v4314
      %v4316 = vrot.slane %v4241, 1
      %v4317 = vsel %vm2763, %v4314, %v4316
      %v4318 = vrot.slane %v4242, 1
      %v4319 = vsel %vm2763, %v4316, %v4318
      %v4320 = vrot.slane %v4243, 1
      %v4321 = vsel %vm2763, %v4318, %v4320
      %v4322 = vrot.slane %v4244, 1
      %v4323 = vsel %vm2763, %v4320, %v4322
      %v4324 = vrot.slane %v4245, 1
      %v4325 = vsel %vm2763, %v4322, %v4324
      %v4326 = vrot.slane %v4246, 1
      %v4327 = vsel %vm2763, %v4324, %v4326
      %v4328 = vrot.slane %v4247, 1
      %v4329 = vsel %vm2763, %v4326, %v4328
      %v4330 = vrot.slane %v4248, 1
      %v4331 = vsel %vm2763, %v4328, %v4330
      %v4332 = vrot.slane %v4249, 1
      %v4333 = vsel %vm2763, %v4330, %v4332
      %v4334 = vrot.slane %v4250, 1
      %v4335 = vsel %vm2763, %v4332, %v4334
      %v4336 = vrot.slane %v4251, 1
      %v4337 = vsel %vm2763, %v4334, %v4336
      %v4338 = vrot.slane %v4252, 1
      %v4339 = vsel %vm2763, %v4336, %v4338
      %v4340 = vrot.slane %v4253, 1
      %v4341 = vsel %vm2763, %v4338, %v4340
      %v4342 = vrot.slane %v4254, 1
      %v4343 = vsel %vm2763, %v4340, %v4342
      %v4344 = vrot.slane %v4255, 1
      %v4345 = vsel %vm2763, %v4342, %v4344
      %v4346 = vrot.slane %v4256, 1
      %v4347 = vsel %vm2763, %v4344, %v4346
      %v4348 = vrot.slane %v4257, 1
      %v4349 = vsel %vm2763, %v4346, %v4348
      %v4350 = vrot.slane %v4258, 1
      %v4351 = vsel %vm2763, %v4348, %v4350
      %v4352 = vrot.slane %v4259, 1
      %v4353 = vsel %vm2763, %v4350, %v4352
      %v4354 = vrot.slane %v4260, 1
      %v4355 = vsel %vm2763, %v4352, %v4354
      %v4356 = vrot.slane %v4261, 1
      %v4357 = vsel %vm2763, %v4354, %v4356
      %v4358 = vrot.slane %v4262, 1
      %v4359 = vsel %vm2763, %v4356, %v4358
      %v4360 = vrot.slane %v4263, 1
      %v4361 = vsel %vm2763, %v4358, %v4360
      %v4362 = vrot.slane %v4264, 1
      %v4363 = vsel %vm2763, %v4360, %v4362
      %v4364 = vrot.slane %v4265, 1
      %v4365 = vsel %vm2763, %v4362, %v4364
      %v4366 = vrot.slane %v4266, 1
      %v4367 = vsel %vm2763, %v4364, %v4366
      %v4368 = vrot.slane %v4267, 1
      %v4369 = vsel %vm2763, %v4366, %v4368
      %v4370 = vrot.slane %v4268, 1
      %v4371 = vsel %vm2763, %v4368, %v4370
      %v4372 = vrot.slane %v4269, 1
      %v4373 = vsel %vm2763, %v4370, %v4372
      %v4374 = vrot.slane %v4270, 1
      %v4375 = vsel %vm2763, %v4372, %v4374
      %v4376 = vrot.slane %v4271, 1
      %v4377 = vsel %vm2763, %v4374, %v4376
      %v4378 = vrot.slane %v4272, 1
      %v4379 = vsel %vm2763, %v4376, %v4378
      %v4380 = vrot.slane %v4273, 1
      %v4381 = vsel %vm2763, %v4378, %v4380
      %v4382 = vrot.slane %v4274, 1
      %v4383 = vsel %vm2763, %v4380, %v4382
      %v4384 = vrot.slane %v4275, 1
      %v4385 = vsel %vm2763, %v4382, %v4384
      %v4386 = vrot.slane %v4276, 1
      %v4387 = vsel %vm2763, %v4384, %v4386
      %v4388 = vrot.slane %v4277, 1
      %v4389 = vsel %vm2763, %v4386, %v4388
      %v4390 = vrot.slane %v4278, 1
      %v4391 = vsel %vm2763, %v4388, %v4390
      %v4392 = vrot.slane %v4279, 1
      %v4393 = vsel %vm2763, %v4390, %v4392
      %v4394 = vrot.slane %v4280, 1
      %v4395 = vsel %vm2763, %v4392, %v4394
      %v4396 = vrot.slane %v4281, 1
      %v4397 = vsel %vm2763, %v4394, %v4396
      %v4398 = vrot.slane %v4282, 1
      %v4399 = vsel %vm2763, %v4396, %v4398
      %v4400 = vrot.slane %v4283, 1
      %v4401 = vsel %vm2763, %v4398, %v4400
      %v4402 = vrot.slane %v4284, 1
      %v4403 = vsel %vm2763, %v4400, %v4402
      %v4404 = vrot.slane %v4285, 1
      %v4405 = vsel %vm2763, %v4402, %v4404
      %v4406 = vrot.slane %v4286, 1
      %v4407 = vsel %vm2763, %v4404, %v4406
      %v4408 = vrot.slane %v4287, 1
      %v4409 = vsel %vm2763, %v4406, %v4408
      %v4410 = vrot.slane %v4288, 1
      %v4411 = vsel %vm2763, %v4408, %v4410
      %v4412 = vrot.slane %v4289, 1
      %v4413 = vsel %vm2763, %v4410, %v4412
      %v4414 = vrot.slane %v4290, 1
      %v4415 = vsel %vm2763, %v4412, %v4414
      %v4416 = vrot.slane %v4291, 1
      %v4417 = vsel %vm2763, %v4414, %v4416
      %v4418 = vrot.slane %v4292, 1
      %v4419 = vsel %vm2763, %v4416, %v4418
      %v4420 = vrot.slane %v4293, 1
      %v4421 = vsel %vm2763, %v4418, %v4420
      %v4422 = vrot.slane %v4294, 1
      %v4423 = vsel %vm2763, %v4420, %v4422
      %v4424 = vrot.slane %v4295, 1
      %v4425 = vsel %vm2763, %v4422, %v4424
      %v4426 = vrot.slane %v4296, 1
      %v4427 = vsel %vm2763, %v4424, %v4426
      %v4428 = vrot.slane %v4297, 1
      %v4429 = vsel %vm2763, %v4426, %v4428
      %v4430 = vrot.slane %v4298, 1
      %v4431 = vsel %vm2763, %v4428, %v4430
      %v4432 = vrot.slane %v4299, 1
      %v4433 = vsel %vm2763, %v4430, %v4432
      %v4434 = vrot.slane %v4300, 1
      %v4435 = vsel %vm2763, %v4432, %v4434
      %v4436 = vrot.slane %v4301, 1
      %v4437 = vsel %vm2763, %v4434, %v4436
      %v4438 = vrot.slane %v4302, 1
      %v4439 = vsel %vm2763, %v4436, %v4438
      %v4441 = vsel %vm1255, %v4305, 0
      %v4444 = vsel %vm1255, %v4307, 0
      %v4447 = vsel %vm1255, %v4309, 0
      %v4450 = vsel %vm1255, %v4311, 0
      %v4453 = vsel %vm1255, %v4313, 0
      %v4456 = vsel %vm1255, %v4315, 0
      %v4459 = vsel %vm1255, %v4317, 0
      %v4462 = vsel %vm1255, %v4319, 0
      %v4465 = vsel %vm1255, %v4321, 0
      %v4468 = vsel %vm1255, %v4323, 0
      %v4471 = vsel %vm1255, %v4325, 0
      %v4474 = vsel %vm1255, %v4327, 0
      %v4477 = vsel %vm1255, %v4329, 0
      %v4480 = vsel %vm1255, %v4331, 0
      %v4483 = vsel %vm1255, %v4333, 0
      %v4486 = vsel %vm1255, %v4335, 0
      %v4489 = vsel %vm1255, %v4337, 0
      %v4492 = vsel %vm1255, %v4339, 0
      %v4495 = vsel %vm1255, %v4341, 0
      %v4498 = vsel %vm1255, %v4343, 0
      %v4501 = vsel %vm1255, %v4345, 0
      %v4504 = vsel %vm1255, %v4347, 0
      %v4507 = vsel %vm1255, %v4349, 0
      %v4510 = vsel %vm1255, %v4351, 0
      %v4513 = vsel %vm1255, %v4353, 0
      %v4516 = vsel %vm1255, %v4355, 0
      %v4519 = vsel %vm1255, %v4357, 0
      %v4522 = vsel %vm1255, %v4359, 0
      %v4525 = vsel %vm1255, %v4361, 0
      %v4528 = vsel %vm1255, %v4363, 0
      %v4531 = vsel %vm1255, %v4365, 0
      %v4534 = vsel %vm1255, %v4367, 0
      %v4537 = vsel %vm1255, %v4369, 0
      %v4540 = vsel %vm1255, %v4371, 0
      %v4543 = vsel %vm1255, %v4373, 0
      %v4546 = vsel %vm1255, %v4375, 0
      %v4549 = vsel %vm1255, %v4377, 0
      %v4552 = vsel %vm1255, %v4379, 0
      %v4555 = vsel %vm1255, %v4381, 0
      %v4558 = vsel %vm1255, %v4383, 0
      %v4561 = vsel %vm1255, %v4385, 0
      %v4564 = vsel %vm1255, %v4387, 0
      %v4567 = vsel %vm1255, %v4389, 0
      %v4570 = vsel %vm1255, %v4391, 0
      %v4573 = vsel %vm1255, %v4393, 0
      %v4576 = vsel %vm1255, %v4395, 0
      %v4579 = vsel %vm1255, %v4397, 0
      %v4582 = vsel %vm1255, %v4399, 0
      %v4585 = vsel %vm1255, %v4401, 0
      %v4588 = vsel %vm1255, %v4403, 0
      %v4591 = vsel %vm1255, %v4405, 0
      %v4594 = vsel %vm1255, %v4407, 0
      %v4597 = vsel %vm1255, %v4409, 0
      %v4600 = vsel %vm1255, %v4411, 0
      %v4603 = vsel %vm1255, %v4413, 0
      %v4606 = vsel %vm1255, %v4415, 0
      %v4609 = vsel %vm1255, %v4417, 0
      %v4612 = vsel %vm1255, %v4419, 0
      %v4615 = vsel %vm1255, %v4421, 0
      %v4618 = vsel %vm1255, %v4423, 0
      %v4621 = vsel %vm1255, %v4425, 0
      %v4624 = vsel %vm1255, %v4427, 0
      %v4627 = vsel %vm1255, %v4429, 0
      %v4630 = vsel %vm1255, %v4431, 0
      %v4633 = vsel %vm1255, %v4433, 0
      %v4636 = vsel %vm1255, %v4435, 0
      %v4639 = vsel %vm1255, %v4437, 0
      %v4642 = vsel %vm1255, %v4439, 0
      %v4645 = vsel %vm1460, %v3959, 0
      %4647 = vmatprep.subr.bf16.mxu0 0
      %4648 = vmatpush1.bf16.msra.mxu0 0
      %4649 = vmatprep.subr.bf16.mxu0 0
      %4650 = vmatpush1.bf16.msra.mxu0 0
      %4651 = vmatprep.subr.bf16.mxu0 0
      %4652 = vmatpush1.bf16.msra.mxu0 0
      %4653 = vmatprep.subr.bf16.mxu0 0
      %4654 = vmatpush1.bf16.msra.mxu0 0
      %4655 = vmatprep.subr.bf16.mxu0 0
      %4656 = vmatpush1.bf16.msra.mxu0 0
      %4657 = vmatprep.subr.bf16.mxu0 0
      %4658 = vmatpush1.bf16.msra.mxu0 0
      %4659 = vmatprep.subr.bf16.mxu0 0
      %4660 = vmatpush1.bf16.msra.mxu0 0
      %4661 = vmatprep.subr.bf16.mxu0 0
      %4662 = vmatpush1.bf16.msra.mxu0 %v4645
      %4663 = vmatprep.subr.bf16.mxu0 0
      %4664 = vmatpush2.bf16.msra.mxu0 0
      %4665 = vmatprep.subr.bf16.mxu0 0
      %4666 = vmatpush2.bf16.msra.mxu0 0
      %4667 = vmatprep.subr.bf16.mxu0 0
      %4668 = vmatpush2.bf16.msra.mxu0 0
      %4669 = vmatprep.subr.bf16.mxu0 0
      %4670 = vmatpush2.bf16.msra.mxu0 0
      %4671 = vmatprep.subr.bf16.mxu0 0
      %4672 = vmatpush2.bf16.msra.mxu0 0
      %4673 = vmatprep.subr.bf16.mxu0 0
      %4674 = vmatpush2.bf16.msra.mxu0 0
      %4675 = vmatprep.subr.bf16.mxu0 0
      %4676 = vmatpush2.bf16.msra.mxu0 0
      %4677 = vmatprep.subr.bf16.mxu0 0
      %4678 = vmatpush2.bf16.msra.mxu0 0
      %4679 = vmatprep.mubr.bf16.mxu0 0
      %4680 = vmatmul.mubr.bf16.gmra.mxu0 %v4441
      %v4681 = vpop.f32.mrf.mxu0
      %v4682 = vadd.f32 0.0, %v4681
      %v4683 = vpop.f32.mrf.mxu0
      %v4684 = vpop.f32.mrf.mxu0
      %v4685 = vadd.f32 0.0, %v4684
      %v4686 = vpop.f32.mrf.mxu0
      %4687 = vmatprep.mubr.bf16.mxu0 0
      %4688 = vmatmul.mubr.bf16.gmra.mxu0 %v4444
      %v4689 = vpop.f32.mrf.mxu0
      %v4690 = vadd.f32 0.0, %v4689
      %v4691 = vpop.f32.mrf.mxu0
      %v4692 = vpop.f32.mrf.mxu0
      %v4693 = vadd.f32 0.0, %v4692
      %v4694 = vpop.f32.mrf.mxu0
      %4695 = vmatprep.mubr.bf16.mxu0 0
      %4696 = vmatmul.mubr.bf16.gmra.mxu0 %v4447
      %v4697 = vpop.f32.mrf.mxu0
      %v4698 = vadd.f32 0.0, %v4697
      %v4699 = vpop.f32.mrf.mxu0
      %v4700 = vpop.f32.mrf.mxu0
      %v4701 = vadd.f32 0.0, %v4700
      %v4702 = vpop.f32.mrf.mxu0
      %4703 = vmatprep.mubr.bf16.mxu0 0
      %4704 = vmatmul.mubr.bf16.gmra.mxu0 %v4450
      %v4705 = vpop.f32.mrf.mxu0
      %v4706 = vadd.f32 0.0, %v4705
      %v4707 = vpop.f32.mrf.mxu0
      %v4708 = vpop.f32.mrf.mxu0
      %v4709 = vadd.f32 0.0, %v4708
      %v4710 = vpop.f32.mrf.mxu0
      %4711 = vmatprep.mubr.bf16.mxu0 0
      %4712 = vmatmul.mubr.bf16.gmra.mxu0 %v4453
      %v4713 = vpop.f32.mrf.mxu0
      %v4714 = vadd.f32 0.0, %v4713
      %v4715 = vpop.f32.mrf.mxu0
      %v4716 = vpop.f32.mrf.mxu0
      %v4717 = vadd.f32 0.0, %v4716
      %v4718 = vpop.f32.mrf.mxu0
      %4719 = vmatprep.mubr.bf16.mxu0 0
      %4720 = vmatmul.mubr.bf16.gmra.mxu0 %v4456
      %v4721 = vpop.f32.mrf.mxu0
      %v4722 = vadd.f32 0.0, %v4721
      %v4723 = vpop.f32.mrf.mxu0
      %v4724 = vpop.f32.mrf.mxu0
      %v4725 = vadd.f32 0.0, %v4724
      %v4726 = vpop.f32.mrf.mxu0
      %4727 = vmatprep.mubr.bf16.mxu0 0
      %4728 = vmatmul.mubr.bf16.gmra.mxu0 %v4459
      %v4729 = vpop.f32.mrf.mxu0
      %v4730 = vadd.f32 0.0, %v4729
      %v4731 = vpop.f32.mrf.mxu0
      %v4732 = vpop.f32.mrf.mxu0
      %v4733 = vadd.f32 0.0, %v4732
      %v4734 = vpop.f32.mrf.mxu0
      %4735 = vmatprep.mubr.bf16.mxu0 0
      %4736 = vmatmul.mubr.bf16.gmra.mxu0 %v4462
      %v4737 = vpop.f32.mrf.mxu0
      %v4738 = vadd.f32 0.0, %v4737
      %v4739 = vpop.f32.mrf.mxu0
      %v4740 = vpop.f32.mrf.mxu0
      %v4741 = vadd.f32 0.0, %v4740
      %v4742 = vpop.f32.mrf.mxu0
      %4743 = vmatprep.mubr.bf16.mxu0 0
      %4744 = vmatmul.mubr.bf16.gmra.mxu0 %v4465
      %v4745 = vpop.f32.mrf.mxu0
      %v4746 = vadd.f32 0.0, %v4745
      %v4747 = vpop.f32.mrf.mxu0
      %v4748 = vpop.f32.mrf.mxu0
      %v4749 = vadd.f32 0.0, %v4748
      %v4750 = vpop.f32.mrf.mxu0
      %4751 = vmatprep.mubr.bf16.mxu0 0
      %4752 = vmatmul.mubr.bf16.gmra.mxu0 %v4468
      %v4753 = vpop.f32.mrf.mxu0
      %v4754 = vadd.f32 0.0, %v4753
      %v4755 = vpop.f32.mrf.mxu0
      %v4756 = vpop.f32.mrf.mxu0
      %v4757 = vadd.f32 0.0, %v4756
      %v4758 = vpop.f32.mrf.mxu0
      %4759 = vmatprep.mubr.bf16.mxu0 0
      %4760 = vmatmul.mubr.bf16.gmra.mxu0 %v4471
      %v4761 = vpop.f32.mrf.mxu0
      %v4762 = vadd.f32 0.0, %v4761
      %v4763 = vpop.f32.mrf.mxu0
      %v4764 = vpop.f32.mrf.mxu0
      %v4765 = vadd.f32 0.0, %v4764
      %v4766 = vpop.f32.mrf.mxu0
      %4767 = vmatprep.mubr.bf16.mxu0 0
      %4768 = vmatmul.mubr.bf16.gmra.mxu0 %v4474
      %v4769 = vpop.f32.mrf.mxu0
      %v4770 = vadd.f32 0.0, %v4769
      %v4771 = vpop.f32.mrf.mxu0
      %v4772 = vpop.f32.mrf.mxu0
      %v4773 = vadd.f32 0.0, %v4772
      %v4774 = vpop.f32.mrf.mxu0
      %4775 = vmatprep.mubr.bf16.mxu0 0
      %4776 = vmatmul.mubr.bf16.gmra.mxu0 %v4477
      %v4777 = vpop.f32.mrf.mxu0
      %v4778 = vadd.f32 0.0, %v4777
      %v4779 = vpop.f32.mrf.mxu0
      %v4780 = vpop.f32.mrf.mxu0
      %v4781 = vadd.f32 0.0, %v4780
      %v4782 = vpop.f32.mrf.mxu0
      %4783 = vmatprep.mubr.bf16.mxu0 0
      %4784 = vmatmul.mubr.bf16.gmra.mxu0 %v4480
      %v4785 = vpop.f32.mrf.mxu0
      %v4786 = vadd.f32 0.0, %v4785
      %v4787 = vpop.f32.mrf.mxu0
      %v4788 = vpop.f32.mrf.mxu0
      %v4789 = vadd.f32 0.0, %v4788
      %v4790 = vpop.f32.mrf.mxu0
      %4791 = vmatprep.mubr.bf16.mxu0 0
      %4792 = vmatmul.mubr.bf16.gmra.mxu0 %v4483
      %v4793 = vpop.f32.mrf.mxu0
      %v4794 = vadd.f32 0.0, %v4793
      %v4795 = vpop.f32.mrf.mxu0
      %v4796 = vpop.f32.mrf.mxu0
      %v4797 = vadd.f32 0.0, %v4796
      %v4798 = vpop.f32.mrf.mxu0
      %4799 = vmatprep.mubr.bf16.mxu0 0
      %4800 = vmatmul.mubr.bf16.gmra.mxu0 %v4486
      %v4801 = vpop.f32.mrf.mxu0
      %v4802 = vadd.f32 0.0, %v4801
      %v4803 = vpop.f32.mrf.mxu0
      %v4804 = vpop.f32.mrf.mxu0
      %v4805 = vadd.f32 0.0, %v4804
      %v4806 = vpop.f32.mrf.mxu0
      %4807 = vmatprep.mubr.bf16.mxu0 0
      %4808 = vmatmul.mubr.bf16.gmra.mxu0 %v4489
      %v4809 = vpop.f32.mrf.mxu0
      %v4810 = vadd.f32 0.0, %v4809
      %v4811 = vpop.f32.mrf.mxu0
      %v4812 = vpop.f32.mrf.mxu0
      %v4813 = vadd.f32 0.0, %v4812
      %v4814 = vpop.f32.mrf.mxu0
      %4815 = vmatprep.mubr.bf16.mxu0 0
      %4816 = vmatmul.mubr.bf16.gmra.mxu0 %v4492
      %v4817 = vpop.f32.mrf.mxu0
      %v4818 = vadd.f32 0.0, %v4817
      %v4819 = vpop.f32.mrf.mxu0
      %v4820 = vpop.f32.mrf.mxu0
      %v4821 = vadd.f32 0.0, %v4820
      %v4822 = vpop.f32.mrf.mxu0
      %4823 = vmatprep.mubr.bf16.mxu0 0
      %4824 = vmatmul.mubr.bf16.gmra.mxu0 %v4495
      %v4825 = vpop.f32.mrf.mxu0
      %v4826 = vadd.f32 0.0, %v4825
      %v4827 = vpop.f32.mrf.mxu0
      %v4828 = vpop.f32.mrf.mxu0
      %v4829 = vadd.f32 0.0, %v4828
      %v4830 = vpop.f32.mrf.mxu0
      %4831 = vmatprep.mubr.bf16.mxu0 0
      %4832 = vmatmul.mubr.bf16.gmra.mxu0 %v4498
      %v4833 = vpop.f32.mrf.mxu0
      %v4834 = vadd.f32 0.0, %v4833
      %v4835 = vpop.f32.mrf.mxu0
      %v4836 = vpop.f32.mrf.mxu0
      %v4837 = vadd.f32 0.0, %v4836
      %v4838 = vpop.f32.mrf.mxu0
      %4839 = vmatprep.mubr.bf16.mxu0 0
      %4840 = vmatmul.mubr.bf16.gmra.mxu0 %v4501
      %v4841 = vpop.f32.mrf.mxu0
      %v4842 = vadd.f32 0.0, %v4841
      %v4843 = vpop.f32.mrf.mxu0
      %v4844 = vpop.f32.mrf.mxu0
      %v4845 = vadd.f32 0.0, %v4844
      %v4846 = vpop.f32.mrf.mxu0
      %4847 = vmatprep.mubr.bf16.mxu0 0
      %4848 = vmatmul.mubr.bf16.gmra.mxu0 %v4504
      %v4849 = vpop.f32.mrf.mxu0
      %v4850 = vadd.f32 0.0, %v4849
      %v4851 = vpop.f32.mrf.mxu0
      %v4852 = vpop.f32.mrf.mxu0
      %v4853 = vadd.f32 0.0, %v4852
      %v4854 = vpop.f32.mrf.mxu0
      %4855 = vmatprep.mubr.bf16.mxu0 0
      %4856 = vmatmul.mubr.bf16.gmra.mxu0 %v4507
      %v4857 = vpop.f32.mrf.mxu0
      %v4858 = vadd.f32 0.0, %v4857
      %v4859 = vpop.f32.mrf.mxu0
      %v4860 = vpop.f32.mrf.mxu0
      %v4861 = vadd.f32 0.0, %v4860
      %v4862 = vpop.f32.mrf.mxu0
      %4863 = vmatprep.mubr.bf16.mxu0 0
      %4864 = vmatmul.mubr.bf16.gmra.mxu0 %v4510
      %v4865 = vpop.f32.mrf.mxu0
      %v4866 = vadd.f32 0.0, %v4865
      %v4867 = vpop.f32.mrf.mxu0
      %v4868 = vpop.f32.mrf.mxu0
      %v4869 = vadd.f32 0.0, %v4868
      %v4870 = vpop.f32.mrf.mxu0
      %4871 = vmatprep.mubr.bf16.mxu0 0
      %4872 = vmatmul.mubr.bf16.gmra.mxu0 %v4513
      %v4873 = vpop.f32.mrf.mxu0
      %v4874 = vadd.f32 0.0, %v4873
      %v4875 = vpop.f32.mrf.mxu0
      %v4876 = vpop.f32.mrf.mxu0
      %v4877 = vadd.f32 0.0, %v4876
      %v4878 = vpop.f32.mrf.mxu0
      %4879 = vmatprep.mubr.bf16.mxu0 0
      %4880 = vmatmul.mubr.bf16.gmra.mxu0 %v4516
      %v4881 = vpop.f32.mrf.mxu0
      %v4882 = vadd.f32 0.0, %v4881
      %v4883 = vpop.f32.mrf.mxu0
      %v4884 = vpop.f32.mrf.mxu0
      %v4885 = vadd.f32 0.0, %v4884
      %v4886 = vpop.f32.mrf.mxu0
      %4887 = vmatprep.mubr.bf16.mxu0 0
      %4888 = vmatmul.mubr.bf16.gmra.mxu0 %v4519
      %v4889 = vpop.f32.mrf.mxu0
      %v4890 = vadd.f32 0.0, %v4889
      %v4891 = vpop.f32.mrf.mxu0
      %v4892 = vpop.f32.mrf.mxu0
      %v4893 = vadd.f32 0.0, %v4892
      %v4894 = vpop.f32.mrf.mxu0
      %4895 = vmatprep.mubr.bf16.mxu0 0
      %4896 = vmatmul.mubr.bf16.gmra.mxu0 %v4522
      %v4897 = vpop.f32.mrf.mxu0
      %v4898 = vadd.f32 0.0, %v4897
      %v4899 = vpop.f32.mrf.mxu0
      %v4900 = vpop.f32.mrf.mxu0
      %v4901 = vadd.f32 0.0, %v4900
      %v4902 = vpop.f32.mrf.mxu0
      %4903 = vmatprep.mubr.bf16.mxu0 0
      %4904 = vmatmul.mubr.bf16.gmra.mxu0 %v4525
      %v4905 = vpop.f32.mrf.mxu0
      %v4906 = vadd.f32 0.0, %v4905
      %v4907 = vpop.f32.mrf.mxu0
      %v4908 = vpop.f32.mrf.mxu0
      %v4909 = vadd.f32 0.0, %v4908
      %v4910 = vpop.f32.mrf.mxu0
      %4911 = vmatprep.mubr.bf16.mxu0 0
      %4912 = vmatmul.mubr.bf16.gmra.mxu0 %v4528
      %v4913 = vpop.f32.mrf.mxu0
      %v4914 = vadd.f32 0.0, %v4913
      %v4915 = vpop.f32.mrf.mxu0
      %v4916 = vpop.f32.mrf.mxu0
      %v4917 = vadd.f32 0.0, %v4916
      %v4918 = vpop.f32.mrf.mxu0
      %4919 = vmatprep.mubr.bf16.mxu0 0
      %4920 = vmatmul.mubr.bf16.gmra.mxu0 %v4531
      %v4921 = vpop.f32.mrf.mxu0
      %v4922 = vadd.f32 0.0, %v4921
      %v4923 = vpop.f32.mrf.mxu0
      %v4924 = vpop.f32.mrf.mxu0
      %v4925 = vadd.f32 0.0, %v4924
      %v4926 = vpop.f32.mrf.mxu0
      %4927 = vmatprep.mubr.bf16.mxu0 0
      %4928 = vmatmul.mubr.bf16.gmra.mxu0 %v4534
      %v4929 = vpop.f32.mrf.mxu0
      %v4930 = vadd.f32 0.0, %v4929
      %v4931 = vpop.f32.mrf.mxu0
      %v4932 = vpop.f32.mrf.mxu0
      %v4933 = vadd.f32 0.0, %v4932
      %v4934 = vpop.f32.mrf.mxu0
      %4935 = vmatprep.mubr.bf16.mxu0 0
      %4936 = vmatmul.mubr.bf16.gmra.mxu0 %v4537
      %v4937 = vpop.f32.mrf.mxu0
      %v4938 = vadd.f32 0.0, %v4937
      %v4939 = vpop.f32.mrf.mxu0
      %v4940 = vpop.f32.mrf.mxu0
      %v4941 = vadd.f32 0.0, %v4940
      %v4942 = vpop.f32.mrf.mxu0
      %4943 = vmatprep.mubr.bf16.mxu0 0
      %4944 = vmatmul.mubr.bf16.gmra.mxu0 %v4540
      %v4945 = vpop.f32.mrf.mxu0
      %v4946 = vadd.f32 0.0, %v4945
      %v4947 = vpop.f32.mrf.mxu0
      %v4948 = vpop.f32.mrf.mxu0
      %v4949 = vadd.f32 0.0, %v4948
      %v4950 = vpop.f32.mrf.mxu0
      %4951 = vmatprep.mubr.bf16.mxu0 0
      %4952 = vmatmul.mubr.bf16.gmra.mxu0 %v4543
      %v4953 = vpop.f32.mrf.mxu0
      %v4954 = vadd.f32 0.0, %v4953
      %v4955 = vpop.f32.mrf.mxu0
      %v4956 = vpop.f32.mrf.mxu0
      %v4957 = vadd.f32 0.0, %v4956
      %v4958 = vpop.f32.mrf.mxu0
      %4959 = vmatprep.mubr.bf16.mxu0 0
      %4960 = vmatmul.mubr.bf16.gmra.mxu0 %v4546
      %v4961 = vpop.f32.mrf.mxu0
      %v4962 = vadd.f32 0.0, %v4961
      %v4963 = vpop.f32.mrf.mxu0
      %v4964 = vpop.f32.mrf.mxu0
      %v4965 = vadd.f32 0.0, %v4964
      %v4966 = vpop.f32.mrf.mxu0
      %4967 = vmatprep.mubr.bf16.mxu0 0
      %4968 = vmatmul.mubr.bf16.gmra.mxu0 %v4549
      %v4969 = vpop.f32.mrf.mxu0
      %v4970 = vadd.f32 0.0, %v4969
      %v4971 = vpop.f32.mrf.mxu0
      %v4972 = vpop.f32.mrf.mxu0
      %v4973 = vadd.f32 0.0, %v4972
      %v4974 = vpop.f32.mrf.mxu0
      %4975 = vmatprep.mubr.bf16.mxu0 0
      %4976 = vmatmul.mubr.bf16.gmra.mxu0 %v4552
      %v4977 = vpop.f32.mrf.mxu0
      %v4978 = vadd.f32 0.0, %v4977
      %v4979 = vpop.f32.mrf.mxu0
      %v4980 = vpop.f32.mrf.mxu0
      %v4981 = vadd.f32 0.0, %v4980
      %v4982 = vpop.f32.mrf.mxu0
      %4983 = vmatprep.mubr.bf16.mxu0 0
      %4984 = vmatmul.mubr.bf16.gmra.mxu0 %v4555
      %v4985 = vpop.f32.mrf.mxu0
      %v4986 = vadd.f32 0.0, %v4985
      %v4987 = vpop.f32.mrf.mxu0
      %v4988 = vpop.f32.mrf.mxu0
      %v4989 = vadd.f32 0.0, %v4988
      %v4990 = vpop.f32.mrf.mxu0
      %4991 = vmatprep.mubr.bf16.mxu0 0
      %4992 = vmatmul.mubr.bf16.gmra.mxu0 %v4558
      %v4993 = vpop.f32.mrf.mxu0
      %v4994 = vadd.f32 0.0, %v4993
      %v4995 = vpop.f32.mrf.mxu0
      %v4996 = vpop.f32.mrf.mxu0
      %v4997 = vadd.f32 0.0, %v4996
      %v4998 = vpop.f32.mrf.mxu0
      %4999 = vmatprep.mubr.bf16.mxu0 0
      %5000 = vmatmul.mubr.bf16.gmra.mxu0 %v4561
      %v5001 = vpop.f32.mrf.mxu0
      %v5002 = vadd.f32 0.0, %v5001
      %v5003 = vpop.f32.mrf.mxu0
      %v5004 = vpop.f32.mrf.mxu0
      %v5005 = vadd.f32 0.0, %v5004
      %v5006 = vpop.f32.mrf.mxu0
      %5007 = vmatprep.mubr.bf16.mxu0 0
      %5008 = vmatmul.mubr.bf16.gmra.mxu0 %v4564
      %v5009 = vpop.f32.mrf.mxu0
      %v5010 = vadd.f32 0.0, %v5009
      %v5011 = vpop.f32.mrf.mxu0
      %v5012 = vpop.f32.mrf.mxu0
      %v5013 = vadd.f32 0.0, %v5012
      %v5014 = vpop.f32.mrf.mxu0
      %5015 = vmatprep.mubr.bf16.mxu0 0
      %5016 = vmatmul.mubr.bf16.gmra.mxu0 %v4567
      %v5017 = vpop.f32.mrf.mxu0
      %v5018 = vadd.f32 0.0, %v5017
      %v5019 = vpop.f32.mrf.mxu0
      %v5020 = vpop.f32.mrf.mxu0
      %v5021 = vadd.f32 0.0, %v5020
      %v5022 = vpop.f32.mrf.mxu0
      %5023 = vmatprep.mubr.bf16.mxu0 0
      %5024 = vmatmul.mubr.bf16.gmra.mxu0 %v4570
      %v5025 = vpop.f32.mrf.mxu0
      %v5026 = vadd.f32 0.0, %v5025
      %v5027 = vpop.f32.mrf.mxu0
      %v5028 = vpop.f32.mrf.mxu0
      %v5029 = vadd.f32 0.0, %v5028
      %v5030 = vpop.f32.mrf.mxu0
      %5031 = vmatprep.mubr.bf16.mxu0 0
      %5032 = vmatmul.mubr.bf16.gmra.mxu0 %v4573
      %v5033 = vpop.f32.mrf.mxu0
      %v5034 = vadd.f32 0.0, %v5033
      %v5035 = vpop.f32.mrf.mxu0
      %v5036 = vpop.f32.mrf.mxu0
      %v5037 = vadd.f32 0.0, %v5036
      %v5038 = vpop.f32.mrf.mxu0
      %5039 = vmatprep.mubr.bf16.mxu0 0
      %5040 = vmatmul.mubr.bf16.gmra.mxu0 %v4576
      %v5041 = vpop.f32.mrf.mxu0
      %v5042 = vadd.f32 0.0, %v5041
      %v5043 = vpop.f32.mrf.mxu0
      %v5044 = vpop.f32.mrf.mxu0
      %v5045 = vadd.f32 0.0, %v5044
      %v5046 = vpop.f32.mrf.mxu0
      %5047 = vmatprep.mubr.bf16.mxu0 0
      %5048 = vmatmul.mubr.bf16.gmra.mxu0 %v4579
      %v5049 = vpop.f32.mrf.mxu0
      %v5050 = vadd.f32 0.0, %v5049
      %v5051 = vpop.f32.mrf.mxu0
      %v5052 = vpop.f32.mrf.mxu0
      %v5053 = vadd.f32 0.0, %v5052
      %v5054 = vpop.f32.mrf.mxu0
      %5055 = vmatprep.mubr.bf16.mxu0 0
      %5056 = vmatmul.mubr.bf16.gmra.mxu0 %v4582
      %v5057 = vpop.f32.mrf.mxu0
      %v5058 = vadd.f32 0.0, %v5057
      %v5059 = vpop.f32.mrf.mxu0
      %v5060 = vpop.f32.mrf.mxu0
      %v5061 = vadd.f32 0.0, %v5060
      %v5062 = vpop.f32.mrf.mxu0
      %5063 = vmatprep.mubr.bf16.mxu0 0
      %5064 = vmatmul.mubr.bf16.gmra.mxu0 %v4585
      %v5065 = vpop.f32.mrf.mxu0
      %v5066 = vadd.f32 0.0, %v5065
      %v5067 = vpop.f32.mrf.mxu0
      %v5068 = vpop.f32.mrf.mxu0
      %v5069 = vadd.f32 0.0, %v5068
      %v5070 = vpop.f32.mrf.mxu0
      %5071 = vmatprep.mubr.bf16.mxu0 0
      %5072 = vmatmul.mubr.bf16.gmra.mxu0 %v4588
      %v5073 = vpop.f32.mrf.mxu0
      %v5074 = vadd.f32 0.0, %v5073
      %v5075 = vpop.f32.mrf.mxu0
      %v5076 = vpop.f32.mrf.mxu0
      %v5077 = vadd.f32 0.0, %v5076
      %v5078 = vpop.f32.mrf.mxu0
      %5079 = vmatprep.mubr.bf16.mxu0 0
      %5080 = vmatmul.mubr.bf16.gmra.mxu0 %v4591
      %v5081 = vpop.f32.mrf.mxu0
      %v5082 = vadd.f32 0.0, %v5081
      %v5083 = vpop.f32.mrf.mxu0
      %v5084 = vpop.f32.mrf.mxu0
      %v5085 = vadd.f32 0.0, %v5084
      %v5086 = vpop.f32.mrf.mxu0
      %5087 = vmatprep.mubr.bf16.mxu0 0
      %5088 = vmatmul.mubr.bf16.gmra.mxu0 %v4594
      %v5089 = vpop.f32.mrf.mxu0
      %v5090 = vadd.f32 0.0, %v5089
      %v5091 = vpop.f32.mrf.mxu0
      %v5092 = vpop.f32.mrf.mxu0
      %v5093 = vadd.f32 0.0, %v5092
      %v5094 = vpop.f32.mrf.mxu0
      %5095 = vmatprep.mubr.bf16.mxu0 0
      %5096 = vmatmul.mubr.bf16.gmra.mxu0 %v4597
      %v5097 = vpop.f32.mrf.mxu0
      %v5098 = vadd.f32 0.0, %v5097
      %v5099 = vpop.f32.mrf.mxu0
      %v5100 = vpop.f32.mrf.mxu0
      %v5101 = vadd.f32 0.0, %v5100
      %v5102 = vpop.f32.mrf.mxu0
      %5103 = vmatprep.mubr.bf16.mxu0 0
      %5104 = vmatmul.mubr.bf16.gmra.mxu0 %v4600
      %v5105 = vpop.f32.mrf.mxu0
      %v5106 = vadd.f32 0.0, %v5105
      %v5107 = vpop.f32.mrf.mxu0
      %v5108 = vpop.f32.mrf.mxu0
      %v5109 = vadd.f32 0.0, %v5108
      %v5110 = vpop.f32.mrf.mxu0
      %5111 = vmatprep.mubr.bf16.mxu0 0
      %5112 = vmatmul.mubr.bf16.gmra.mxu0 %v4603
      %v5113 = vpop.f32.mrf.mxu0
      %v5114 = vadd.f32 0.0, %v5113
      %v5115 = vpop.f32.mrf.mxu0
      %v5116 = vpop.f32.mrf.mxu0
      %v5117 = vadd.f32 0.0, %v5116
      %v5118 = vpop.f32.mrf.mxu0
      %5119 = vmatprep.mubr.bf16.mxu0 0
      %5120 = vmatmul.mubr.bf16.gmra.mxu0 %v4606
      %v5121 = vpop.f32.mrf.mxu0
      %v5122 = vadd.f32 0.0, %v5121
      %v5123 = vpop.f32.mrf.mxu0
      %v5124 = vpop.f32.mrf.mxu0
      %v5125 = vadd.f32 0.0, %v5124
      %v5126 = vpop.f32.mrf.mxu0
      %5127 = vmatprep.mubr.bf16.mxu0 0
      %5128 = vmatmul.mubr.bf16.gmra.mxu0 %v4609
      %v5129 = vpop.f32.mrf.mxu0
      %v5130 = vadd.f32 0.0, %v5129
      %v5131 = vpop.f32.mrf.mxu0
      %v5132 = vpop.f32.mrf.mxu0
      %v5133 = vadd.f32 0.0, %v5132
      %v5134 = vpop.f32.mrf.mxu0
      %5135 = vmatprep.mubr.bf16.mxu0 0
      %5136 = vmatmul.mubr.bf16.gmra.mxu0 %v4612
      %v5137 = vpop.f32.mrf.mxu0
      %v5138 = vadd.f32 0.0, %v5137
      %v5139 = vpop.f32.mrf.mxu0
      %v5140 = vpop.f32.mrf.mxu0
      %v5141 = vadd.f32 0.0, %v5140
      %v5142 = vpop.f32.mrf.mxu0
      %5143 = vmatprep.mubr.bf16.mxu0 0
      %5144 = vmatmul.mubr.bf16.gmra.mxu0 %v4615
      %v5145 = vpop.f32.mrf.mxu0
      %v5146 = vadd.f32 0.0, %v5145
      %v5147 = vpop.f32.mrf.mxu0
      %v5148 = vpop.f32.mrf.mxu0
      %v5149 = vadd.f32 0.0, %v5148
      %v5150 = vpop.f32.mrf.mxu0
      %5151 = vmatprep.mubr.bf16.mxu0 0
      %5152 = vmatmul.mubr.bf16.gmra.mxu0 %v4618
      %v5153 = vpop.f32.mrf.mxu0
      %v5154 = vadd.f32 0.0, %v5153
      %v5155 = vpop.f32.mrf.mxu0
      %v5156 = vpop.f32.mrf.mxu0
      %v5157 = vadd.f32 0.0, %v5156
      %v5158 = vpop.f32.mrf.mxu0
      %5159 = vmatprep.mubr.bf16.mxu0 0
      %5160 = vmatmul.mubr.bf16.gmra.mxu0 %v4621
      %v5161 = vpop.f32.mrf.mxu0
      %v5162 = vadd.f32 0.0, %v5161
      %v5163 = vpop.f32.mrf.mxu0
      %v5164 = vpop.f32.mrf.mxu0
      %v5165 = vadd.f32 0.0, %v5164
      %v5166 = vpop.f32.mrf.mxu0
      %5167 = vmatprep.mubr.bf16.mxu0 0
      %5168 = vmatmul.mubr.bf16.gmra.mxu0 %v4624
      %v5169 = vpop.f32.mrf.mxu0
      %v5170 = vadd.f32 0.0, %v5169
      %v5171 = vpop.f32.mrf.mxu0
      %v5172 = vpop.f32.mrf.mxu0
      %v5173 = vadd.f32 0.0, %v5172
      %v5174 = vpop.f32.mrf.mxu0
      %5175 = vmatprep.mubr.bf16.mxu0 0
      %5176 = vmatmul.mubr.bf16.gmra.mxu0 %v4627
      %v5177 = vpop.f32.mrf.mxu0
      %v5178 = vadd.f32 0.0, %v5177
      %v5179 = vpop.f32.mrf.mxu0
      %v5180 = vpop.f32.mrf.mxu0
      %v5181 = vadd.f32 0.0, %v5180
      %v5182 = vpop.f32.mrf.mxu0
      %5183 = vmatprep.mubr.bf16.mxu0 0
      %5184 = vmatmul.mubr.bf16.gmra.mxu0 %v4630
      %v5185 = vpop.f32.mrf.mxu0
      %v5186 = vadd.f32 0.0, %v5185
      %v5187 = vpop.f32.mrf.mxu0
      %v5188 = vpop.f32.mrf.mxu0
      %v5189 = vadd.f32 0.0, %v5188
      %v5190 = vpop.f32.mrf.mxu0
      %5191 = vmatprep.mubr.bf16.mxu0 0
      %5192 = vmatmul.mubr.bf16.gmra.mxu0 %v4633
      %v5193 = vpop.f32.mrf.mxu0
      %v5194 = vadd.f32 0.0, %v5193
      %v5195 = vpop.f32.mrf.mxu0
      %v5196 = vpop.f32.mrf.mxu0
      %v5197 = vadd.f32 0.0, %v5196
      %v5198 = vpop.f32.mrf.mxu0
      %5199 = vmatprep.mubr.bf16.mxu0 0
      %5200 = vmatmul.mubr.bf16.gmra.mxu0 %v4636
      %v5201 = vpop.f32.mrf.mxu0
      %v5202 = vadd.f32 0.0, %v5201
      %v5203 = vpop.f32.mrf.mxu0
      %v5204 = vpop.f32.mrf.mxu0
      %v5205 = vadd.f32 0.0, %v5204
      %v5206 = vpop.f32.mrf.mxu0
      %5207 = vmatprep.mubr.bf16.mxu0 0
      %5208 = vmatmul.mubr.bf16.gmra.mxu0 %v4639
      %v5209 = vpop.f32.mrf.mxu0
      %v5210 = vadd.f32 0.0, %v5209
      %v5211 = vpop.f32.mrf.mxu0
      %v5212 = vpop.f32.mrf.mxu0
      %v5213 = vadd.f32 0.0, %v5212
      %v5214 = vpop.f32.mrf.mxu0
      %5215 = vmatprep.mubr.bf16.mxu0 0
      %5216 = vmatmul.mubr.bf16.gmra.mxu0 %v4642
      %v5217 = vpop.f32.mrf.mxu0
      %v5218 = vadd.f32 0.0, %v5217
      %v5219 = vpop.f32.mrf.mxu0
      %v5220 = vpop.f32.mrf.mxu0
      %v5221 = vadd.f32 0.0, %v5220
      %v5222 = vpop.f32.mrf.mxu0
      %5223 = vdwg.mxu0
      %v5224 = vadd.f32 %v3685, %v4682
      %v5225 = vadd.f32 %v3686, %v4685
      %v5226 = vadd.f32 %v3687, %v4690
      %v5227 = vadd.f32 %v3688, %v4693
      %v5228 = vadd.f32 %v3689, %v4698
      %v5229 = vadd.f32 %v3690, %v4701
      %v5230 = vadd.f32 %v3691, %v4706
      %v5231 = vadd.f32 %v3692, %v4709
      %v5232 = vadd.f32 %v3693, %v4714
      %v5233 = vadd.f32 %v3694, %v4717
      %v5234 = vadd.f32 %v3695, %v4722
      %v5235 = vadd.f32 %v3696, %v4725
      %v5236 = vadd.f32 %v3697, %v4730
      %v5237 = vadd.f32 %v3698, %v4733
      %v5238 = vadd.f32 %v3699, %v4738
      %v5239 = vadd.f32 %v3700, %v4741
      %v5240 = vadd.f32 %v3701, %v4746
      %v5241 = vadd.f32 %v3702, %v4749
      %v5242 = vadd.f32 %v3703, %v4754
      %v5243 = vadd.f32 %v3704, %v4757
      %v5244 = vadd.f32 %v3705, %v4762
      %v5245 = vadd.f32 %v3706, %v4765
      %v5246 = vadd.f32 %v3707, %v4770
      %v5247 = vadd.f32 %v3708, %v4773
      %v5248 = vadd.f32 %v3709, %v4778
      %v5249 = vadd.f32 %v3710, %v4781
      %v5250 = vadd.f32 %v3711, %v4786
      %v5251 = vadd.f32 %v3712, %v4789
      %v5252 = vadd.f32 %v3713, %v4794
      %v5253 = vadd.f32 %v3714, %v4797
      %v5254 = vadd.f32 %v3715, %v4802
      %v5255 = vadd.f32 %v3716, %v4805
      %v5256 = vadd.f32 %v3717, %v4810
      %v5257 = vadd.f32 %v3718, %v4813
      %v5258 = vadd.f32 %v3719, %v4818
      %v5259 = vadd.f32 %v3720, %v4821
      %v5260 = vadd.f32 %v3721, %v4826
      %v5261 = vadd.f32 %v3722, %v4829
      %v5262 = vadd.f32 %v3723, %v4834
      %v5263 = vadd.f32 %v3724, %v4837
      %v5264 = vadd.f32 %v3725, %v4842
      %v5265 = vadd.f32 %v3726, %v4845
      %v5266 = vadd.f32 %v3727, %v4850
      %v5267 = vadd.f32 %v3728, %v4853
      %v5268 = vadd.f32 %v3729, %v4858
      %v5269 = vadd.f32 %v3730, %v4861
      %v5270 = vadd.f32 %v3731, %v4866
      %v5271 = vadd.f32 %v3732, %v4869
      %v5272 = vadd.f32 %v3733, %v4874
      %v5273 = vadd.f32 %v3734, %v4877
      %v5274 = vadd.f32 %v3735, %v4882
      %v5275 = vadd.f32 %v3736, %v4885
      %v5276 = vadd.f32 %v3737, %v4890
      %v5277 = vadd.f32 %v3738, %v4893
      %v5278 = vadd.f32 %v3739, %v4898
      %v5279 = vadd.f32 %v3740, %v4901
      %v5280 = vadd.f32 %v3741, %v4906
      %v5281 = vadd.f32 %v3742, %v4909
      %v5282 = vadd.f32 %v3743, %v4914
      %v5283 = vadd.f32 %v3744, %v4917
      %v5284 = vadd.f32 %v3745, %v4922
      %v5285 = vadd.f32 %v3746, %v4925
      %v5286 = vadd.f32 %v3747, %v4930
      %v5287 = vadd.f32 %v3748, %v4933
      %v5288 = vadd.f32 %v3749, %v4938
      %v5289 = vadd.f32 %v3750, %v4941
      %v5290 = vadd.f32 %v3751, %v4946
      %v5291 = vadd.f32 %v3752, %v4949
      %v5292 = vadd.f32 %v3753, %v4954
      %v5293 = vadd.f32 %v3754, %v4957
      %v5294 = vadd.f32 %v3755, %v4962
      %v5295 = vadd.f32 %v3756, %v4965
      %v5296 = vadd.f32 %v3757, %v4970
      %v5297 = vadd.f32 %v3758, %v4973
      %v5298 = vadd.f32 %v3759, %v4978
      %v5299 = vadd.f32 %v3760, %v4981
      %v5300 = vadd.f32 %v3761, %v4986
      %v5301 = vadd.f32 %v3762, %v4989
      %v5302 = vadd.f32 %v3763, %v4994
      %v5303 = vadd.f32 %v3764, %v4997
      %v5304 = vadd.f32 %v3765, %v5002
      %v5305 = vadd.f32 %v3766, %v5005
      %v5306 = vadd.f32 %v3767, %v5010
      %v5307 = vadd.f32 %v3768, %v5013
      %v5308 = vadd.f32 %v3769, %v5018
      %v5309 = vadd.f32 %v3770, %v5021
      %v5310 = vadd.f32 %v3771, %v5026
      %v5311 = vadd.f32 %v3772, %v5029
      %v5312 = vadd.f32 %v3773, %v5034
      %v5313 = vadd.f32 %v3774, %v5037
      %v5314 = vadd.f32 %v3775, %v5042
      %v5315 = vadd.f32 %v3776, %v5045
      %v5316 = vadd.f32 %v3777, %v5050
      %v5317 = vadd.f32 %v3778, %v5053
      %v5318 = vadd.f32 %v3779, %v5058
      %v5319 = vadd.f32 %v3780, %v5061
      %v5320 = vadd.f32 %v3781, %v5066
      %v5321 = vadd.f32 %v3782, %v5069
      %v5322 = vadd.f32 %v3783, %v5074
      %v5323 = vadd.f32 %v3784, %v5077
      %v5324 = vadd.f32 %v3785, %v5082
      %v5325 = vadd.f32 %v3786, %v5085
      %v5326 = vadd.f32 %v3787, %v5090
      %v5327 = vadd.f32 %v3788, %v5093
      %v5328 = vadd.f32 %v3789, %v5098
      %v5329 = vadd.f32 %v3790, %v5101
      %v5330 = vadd.f32 %v3791, %v5106
      %v5331 = vadd.f32 %v3792, %v5109
      %v5332 = vadd.f32 %v3793, %v5114
      %v5333 = vadd.f32 %v3794, %v5117
      %v5334 = vadd.f32 %v3795, %v5122
      %v5335 = vadd.f32 %v3796, %v5125
      %v5336 = vadd.f32 %v3797, %v5130
      %v5337 = vadd.f32 %v3798, %v5133
      %v5338 = vadd.f32 %v3799, %v5138
      %v5339 = vadd.f32 %v3800, %v5141
      %v5340 = vadd.f32 %v3801, %v5146
      %v5341 = vadd.f32 %v3802, %v5149
      %v5342 = vadd.f32 %v3803, %v5154
      %v5343 = vadd.f32 %v3804, %v5157
      %v5344 = vadd.f32 %v3805, %v5162
      %v5345 = vadd.f32 %v3806, %v5165
      %v5346 = vadd.f32 %v3807, %v5170
      %v5347 = vadd.f32 %v3808, %v5173
      %v5348 = vadd.f32 %v3809, %v5178
      %v5349 = vadd.f32 %v3810, %v5181
      %v5350 = vadd.f32 %v3811, %v5186
      %v5351 = vadd.f32 %v3812, %v5189
      %v5352 = vadd.f32 %v3813, %v5194
      %v5353 = vadd.f32 %v3814, %v5197
      %v5354 = vadd.f32 %v3815, %v5202
      %v5355 = vadd.f32 %v3816, %v5205
      %v5356 = vadd.f32 %v3817, %v5210
      %v5357 = vadd.f32 %v3818, %v5213
      %v5358 = vadd.f32 %v3819, %v5218
      %v5359 = vadd.f32 %v3820, %v5221
      %v5360 = vld [vmem:[%s206 + $0x230] sm:$0x3]
      %s5361 = scalar_lea.vmem %s210, 16
      %v5362 = vld [vmem:[%s5361] sm:$0xf]
      %v5364 = vunpack.c.l.b16 %v5360
      %v5365 = vpack.c.b16 %v5364, %v5364
      %vm5366 = vsmask.f32 6400
      %v5368 = vshrl.u32 %v4234, 16
      %v5370 = vrot.slane %v5368, 1
      %v5371 = vshll.u32 %v4234, 16
      %v5373 = vrot.slane %v5371, 2
      %v5374 = vor.u32 %v5370, %v5373
      %v5376 = vshrl.u32 %v4235, 16
      %v5378 = vrot.slane %v5376, 1
      %v5379 = vshll.u32 %v4235, 16
      %v5381 = vrot.slane %v5379, 2
      %v5382 = vor.u32 %v5378, %v5381
      %v5383 = vsel %vm5366, %v5374, %v5382
      %v5385 = vshrl.u32 %v4236, 16
      %v5387 = vrot.slane %v5385, 1
      %v5388 = vshll.u32 %v4236, 16
      %v5390 = vrot.slane %v5388, 2
      %v5391 = vor.u32 %v5387, %v5390
      %v5392 = vsel %vm5366, %v5382, %v5391
      %v5394 = vshrl.u32 %v4237, 16
      %v5396 = vrot.slane %v5394, 1
      %v5397 = vshll.u32 %v4237, 16
      %v5399 = vrot.slane %v5397, 2
      %v5400 = vor.u32 %v5396, %v5399
      %v5401 = vsel %vm5366, %v5391, %v5400
      %v5403 = vshrl.u32 %v4238, 16
      %v5405 = vrot.slane %v5403, 1
      %v5406 = vshll.u32 %v4238, 16
      %v5408 = vrot.slane %v5406, 2
      %v5409 = vor.u32 %v5405, %v5408
      %v5410 = vsel %vm5366, %v5400, %v5409
      %v5412 = vshrl.u32 %v4239, 16
      %v5414 = vrot.slane %v5412, 1
      %v5415 = vshll.u32 %v4239, 16
      %v5417 = vrot.slane %v5415, 2
      %v5418 = vor.u32 %v5414, %v5417
      %v5419 = vsel %vm5366, %v5409, %v5418
      %v5421 = vshrl.u32 %v4240, 16
      %v5423 = vrot.slane %v5421, 1
      %v5424 = vshll.u32 %v4240, 16
      %v5426 = vrot.slane %v5424, 2
      %v5427 = vor.u32 %v5423, %v5426
      %v5428 = vsel %vm5366, %v5418, %v5427
      %v5430 = vshrl.u32 %v4241, 16
      %v5432 = vrot.slane %v5430, 1
      %v5433 = vshll.u32 %v4241, 16
      %v5435 = vrot.slane %v5433, 2
      %v5436 = vor.u32 %v5432, %v5435
      %v5437 = vsel %vm5366, %v5427, %v5436
      %v5439 = vshrl.u32 %v4242, 16
      %v5441 = vrot.slane %v5439, 1
      %v5442 = vshll.u32 %v4242, 16
      %v5444 = vrot.slane %v5442, 2
      %v5445 = vor.u32 %v5441, %v5444
      %v5446 = vsel %vm5366, %v5436, %v5445
      %v5448 = vshrl.u32 %v4243, 16
      %v5450 = vrot.slane %v5448, 1
      %v5451 = vshll.u32 %v4243, 16
      %v5453 = vrot.slane %v5451, 2
      %v5454 = vor.u32 %v5450, %v5453
      %v5455 = vsel %vm5366, %v5445, %v5454
      %v5457 = vshrl.u32 %v4244, 16
      %v5459 = vrot.slane %v5457, 1
      %v5460 = vshll.u32 %v4244, 16
      %v5462 = vrot.slane %v5460, 2
      %v5463 = vor.u32 %v5459, %v5462
      %v5464 = vsel %vm5366, %v5454, %v5463
      %v5466 = vshrl.u32 %v4245, 16
      %v5468 = vrot.slane %v5466, 1
      %v5469 = vshll.u32 %v4245, 16
      %v5471 = vrot.slane %v5469, 2
      %v5472 = vor.u32 %v5468, %v5471
      %v5473 = vsel %vm5366, %v5463, %v5472
      %v5475 = vshrl.u32 %v4246, 16
      %v5477 = vrot.slane %v5475, 1
      %v5478 = vshll.u32 %v4246, 16
      %v5480 = vrot.slane %v5478, 2
      %v5481 = vor.u32 %v5477, %v5480
      %v5482 = vsel %vm5366, %v5472, %v5481
      %v5484 = vshrl.u32 %v4247, 16
      %v5486 = vrot.slane %v5484, 1
      %v5487 = vshll.u32 %v4247, 16
      %v5489 = vrot.slane %v5487, 2
      %v5490 = vor.u32 %v5486, %v5489
      %v5491 = vsel %vm5366, %v5481, %v5490
      %v5493 = vshrl.u32 %v4248, 16
      %v5495 = vrot.slane %v5493, 1
      %v5496 = vshll.u32 %v4248, 16
      %v5498 = vrot.slane %v5496, 2
      %v5499 = vor.u32 %v5495, %v5498
      %v5500 = vsel %vm5366, %v5490, %v5499
      %v5502 = vshrl.u32 %v4249, 16
      %v5504 = vrot.slane %v5502, 1
      %v5505 = vshll.u32 %v4249, 16
      %v5507 = vrot.slane %v5505, 2
      %v5508 = vor.u32 %v5504, %v5507
      %v5509 = vsel %vm5366, %v5499, %v5508
      %v5511 = vshrl.u32 %v4250, 16
      %v5513 = vrot.slane %v5511, 1
      %v5514 = vshll.u32 %v4250, 16
      %v5516 = vrot.slane %v5514, 2
      %v5517 = vor.u32 %v5513, %v5516
      %v5518 = vsel %vm5366, %v5508, %v5517
      %v5520 = vshrl.u32 %v4251, 16
      %v5522 = vrot.slane %v5520, 1
      %v5523 = vshll.u32 %v4251, 16
      %v5525 = vrot.slane %v5523, 2
      %v5526 = vor.u32 %v5522, %v5525
      %v5527 = vsel %vm5366, %v5517, %v5526
      %v5529 = vshrl.u32 %v4252, 16
      %v5531 = vrot.slane %v5529, 1
      %v5532 = vshll.u32 %v4252, 16
      %v5534 = vrot.slane %v5532, 2
      %v5535 = vor.u32 %v5531, %v5534
      %v5536 = vsel %vm5366, %v5526, %v5535
      %v5538 = vshrl.u32 %v4253, 16
      %v5540 = vrot.slane %v5538, 1
      %v5541 = vshll.u32 %v4253, 16
      %v5543 = vrot.slane %v5541, 2
      %v5544 = vor.u32 %v5540, %v5543
      %v5545 = vsel %vm5366, %v5535, %v5544
      %v5547 = vshrl.u32 %v4254, 16
      %v5549 = vrot.slane %v5547, 1
      %v5550 = vshll.u32 %v4254, 16
      %v5552 = vrot.slane %v5550, 2
      %v5553 = vor.u32 %v5549, %v5552
      %v5554 = vsel %vm5366, %v5544, %v5553
      %v5556 = vshrl.u32 %v4255, 16
      %v5558 = vrot.slane %v5556, 1
      %v5559 = vshll.u32 %v4255, 16
      %v5561 = vrot.slane %v5559, 2
      %v5562 = vor.u32 %v5558, %v5561
      %v5563 = vsel %vm5366, %v5553, %v5562
      %v5565 = vshrl.u32 %v4256, 16
      %v5567 = vrot.slane %v5565, 1
      %v5568 = vshll.u32 %v4256, 16
      %v5570 = vrot.slane %v5568, 2
      %v5571 = vor.u32 %v5567, %v5570
      %v5572 = vsel %vm5366, %v5562, %v5571
      %v5574 = vshrl.u32 %v4257, 16
      %v5576 = vrot.slane %v5574, 1
      %v5577 = vshll.u32 %v4257, 16
      %v5579 = vrot.slane %v5577, 2
      %v5580 = vor.u32 %v5576, %v5579
      %v5581 = vsel %vm5366, %v5571, %v5580
      %v5583 = vshrl.u32 %v4258, 16
      %v5585 = vrot.slane %v5583, 1
      %v5586 = vshll.u32 %v4258, 16
      %v5588 = vrot.slane %v5586, 2
      %v5589 = vor.u32 %v5585, %v5588
      %v5590 = vsel %vm5366, %v5580, %v5589
      %v5592 = vshrl.u32 %v4259, 16
      %v5594 = vrot.slane %v5592, 1
      %v5595 = vshll.u32 %v4259, 16
      %v5597 = vrot.slane %v5595, 2
      %v5598 = vor.u32 %v5594, %v5597
      %v5599 = vsel %vm5366, %v5589, %v5598
      %v5601 = vshrl.u32 %v4260, 16
      %v5603 = vrot.slane %v5601, 1
      %v5604 = vshll.u32 %v4260, 16
      %v5606 = vrot.slane %v5604, 2
      %v5607 = vor.u32 %v5603, %v5606
      %v5608 = vsel %vm5366, %v5598, %v5607
      %v5610 = vshrl.u32 %v4261, 16
      %v5612 = vrot.slane %v5610, 1
      %v5613 = vshll.u32 %v4261, 16
      %v5615 = vrot.slane %v5613, 2
      %v5616 = vor.u32 %v5612, %v5615
      %v5617 = vsel %vm5366, %v5607, %v5616
      %v5619 = vshrl.u32 %v4262, 16
      %v5621 = vrot.slane %v5619, 1
      %v5622 = vshll.u32 %v4262, 16
      %v5624 = vrot.slane %v5622, 2
      %v5625 = vor.u32 %v5621, %v5624
      %v5626 = vsel %vm5366, %v5616, %v5625
      %v5628 = vshrl.u32 %v4263, 16
      %v5630 = vrot.slane %v5628, 1
      %v5631 = vshll.u32 %v4263, 16
      %v5633 = vrot.slane %v5631, 2
      %v5634 = vor.u32 %v5630, %v5633
      %v5635 = vsel %vm5366, %v5625, %v5634
      %v5637 = vshrl.u32 %v4264, 16
      %v5639 = vrot.slane %v5637, 1
      %v5640 = vshll.u32 %v4264, 16
      %v5642 = vrot.slane %v5640, 2
      %v5643 = vor.u32 %v5639, %v5642
      %v5644 = vsel %vm5366, %v5634, %v5643
      %v5646 = vshrl.u32 %v4265, 16
      %v5648 = vrot.slane %v5646, 1
      %v5649 = vshll.u32 %v4265, 16
      %v5651 = vrot.slane %v5649, 2
      %v5652 = vor.u32 %v5648, %v5651
      %v5653 = vsel %vm5366, %v5643, %v5652
      %v5655 = vshrl.u32 %v4266, 16
      %v5657 = vrot.slane %v5655, 1
      %v5658 = vshll.u32 %v4266, 16
      %v5660 = vrot.slane %v5658, 2
      %v5661 = vor.u32 %v5657, %v5660
      %v5662 = vsel %vm5366, %v5652, %v5661
      %v5664 = vshrl.u32 %v4267, 16
      %v5666 = vrot.slane %v5664, 1
      %v5667 = vshll.u32 %v4267, 16
      %v5669 = vrot.slane %v5667, 2
      %v5670 = vor.u32 %v5666, %v5669
      %v5671 = vsel %vm5366, %v5661, %v5670
      %v5673 = vshrl.u32 %v4268, 16
      %v5675 = vrot.slane %v5673, 1
      %v5676 = vshll.u32 %v4268, 16
      %v5678 = vrot.slane %v5676, 2
      %v5679 = vor.u32 %v5675, %v5678
      %v5680 = vsel %vm5366, %v5670, %v5679
      %v5682 = vshrl.u32 %v4269, 16
      %v5684 = vrot.slane %v5682, 1
      %v5685 = vshll.u32 %v4269, 16
      %v5687 = vrot.slane %v5685, 2
      %v5688 = vor.u32 %v5684, %v5687
      %v5689 = vsel %vm5366, %v5679, %v5688
      %v5691 = vshrl.u32 %v4270, 16
      %v5693 = vrot.slane %v5691, 1
      %v5694 = vshll.u32 %v4270, 16
      %v5696 = vrot.slane %v5694, 2
      %v5697 = vor.u32 %v5693, %v5696
      %v5698 = vsel %vm5366, %v5688, %v5697
      %v5700 = vshrl.u32 %v4271, 16
      %v5702 = vrot.slane %v5700, 1
      %v5703 = vshll.u32 %v4271, 16
      %v5705 = vrot.slane %v5703, 2
      %v5706 = vor.u32 %v5702, %v5705
      %v5707 = vsel %vm5366, %v5697, %v5706
      %v5709 = vshrl.u32 %v4272, 16
      %v5711 = vrot.slane %v5709, 1
      %v5712 = vshll.u32 %v4272, 16
      %v5714 = vrot.slane %v5712, 2
      %v5715 = vor.u32 %v5711, %v5714
      %v5716 = vsel %vm5366, %v5706, %v5715
      %v5718 = vshrl.u32 %v4273, 16
      %v5720 = vrot.slane %v5718, 1
      %v5721 = vshll.u32 %v4273, 16
      %v5723 = vrot.slane %v5721, 2
      %v5724 = vor.u32 %v5720, %v5723
      %v5725 = vsel %vm5366, %v5715, %v5724
      %v5727 = vshrl.u32 %v4274, 16
      %v5729 = vrot.slane %v5727, 1
      %v5730 = vshll.u32 %v4274, 16
      %v5732 = vrot.slane %v5730, 2
      %v5733 = vor.u32 %v5729, %v5732
      %v5734 = vsel %vm5366, %v5724, %v5733
      %v5736 = vshrl.u32 %v4275, 16
      %v5738 = vrot.slane %v5736, 1
      %v5739 = vshll.u32 %v4275, 16
      %v5741 = vrot.slane %v5739, 2
      %v5742 = vor.u32 %v5738, %v5741
      %v5743 = vsel %vm5366, %v5733, %v5742
      %v5745 = vshrl.u32 %v4276, 16
      %v5747 = vrot.slane %v5745, 1
      %v5748 = vshll.u32 %v4276, 16
      %v5750 = vrot.slane %v5748, 2
      %v5751 = vor.u32 %v5747, %v5750
      %v5752 = vsel %vm5366, %v5742, %v5751
      %v5754 = vshrl.u32 %v4277, 16
      %v5756 = vrot.slane %v5754, 1
      %v5757 = vshll.u32 %v4277, 16
      %v5759 = vrot.slane %v5757, 2
      %v5760 = vor.u32 %v5756, %v5759
      %v5761 = vsel %vm5366, %v5751, %v5760
      %v5763 = vshrl.u32 %v4278, 16
      %v5765 = vrot.slane %v5763, 1
      %v5766 = vshll.u32 %v4278, 16
      %v5768 = vrot.slane %v5766, 2
      %v5769 = vor.u32 %v5765, %v5768
      %v5770 = vsel %vm5366, %v5760, %v5769
      %v5772 = vshrl.u32 %v4279, 16
      %v5774 = vrot.slane %v5772, 1
      %v5775 = vshll.u32 %v4279, 16
      %v5777 = vrot.slane %v5775, 2
      %v5778 = vor.u32 %v5774, %v5777
      %v5779 = vsel %vm5366, %v5769, %v5778
      %v5781 = vshrl.u32 %v4280, 16
      %v5783 = vrot.slane %v5781, 1
      %v5784 = vshll.u32 %v4280, 16
      %v5786 = vrot.slane %v5784, 2
      %v5787 = vor.u32 %v5783, %v5786
      %v5788 = vsel %vm5366, %v5778, %v5787
      %v5790 = vshrl.u32 %v4281, 16
      %v5792 = vrot.slane %v5790, 1
      %v5793 = vshll.u32 %v4281, 16
      %v5795 = vrot.slane %v5793, 2
      %v5796 = vor.u32 %v5792, %v5795
      %v5797 = vsel %vm5366, %v5787, %v5796
      %v5799 = vshrl.u32 %v4282, 16
      %v5801 = vrot.slane %v5799, 1
      %v5802 = vshll.u32 %v4282, 16
      %v5804 = vrot.slane %v5802, 2
      %v5805 = vor.u32 %v5801, %v5804
      %v5806 = vsel %vm5366, %v5796, %v5805
      %v5808 = vshrl.u32 %v4283, 16
      %v5810 = vrot.slane %v5808, 1
      %v5811 = vshll.u32 %v4283, 16
      %v5813 = vrot.slane %v5811, 2
      %v5814 = vor.u32 %v5810, %v5813
      %v5815 = vsel %vm5366, %v5805, %v5814
      %v5817 = vshrl.u32 %v4284, 16
      %v5819 = vrot.slane %v5817, 1
      %v5820 = vshll.u32 %v4284, 16
      %v5822 = vrot.slane %v5820, 2
      %v5823 = vor.u32 %v5819, %v5822
      %v5824 = vsel %vm5366, %v5814, %v5823
      %v5826 = vshrl.u32 %v4285, 16
      %v5828 = vrot.slane %v5826, 1
      %v5829 = vshll.u32 %v4285, 16
      %v5831 = vrot.slane %v5829, 2
      %v5832 = vor.u32 %v5828, %v5831
      %v5833 = vsel %vm5366, %v5823, %v5832
      %v5835 = vshrl.u32 %v4286, 16
      %v5837 = vrot.slane %v5835, 1
      %v5838 = vshll.u32 %v4286, 16
      %v5840 = vrot.slane %v5838, 2
      %v5841 = vor.u32 %v5837, %v5840
      %v5842 = vsel %vm5366, %v5832, %v5841
      %v5844 = vshrl.u32 %v4287, 16
      %v5846 = vrot.slane %v5844, 1
      %v5847 = vshll.u32 %v4287, 16
      %v5849 = vrot.slane %v5847, 2
      %v5850 = vor.u32 %v5846, %v5849
      %v5851 = vsel %vm5366, %v5841, %v5850
      %v5853 = vshrl.u32 %v4288, 16
      %v5855 = vrot.slane %v5853, 1
      %v5856 = vshll.u32 %v4288, 16
      %v5858 = vrot.slane %v5856, 2
      %v5859 = vor.u32 %v5855, %v5858
      %v5860 = vsel %vm5366, %v5850, %v5859
      %v5862 = vshrl.u32 %v4289, 16
      %v5864 = vrot.slane %v5862, 1
      %v5865 = vshll.u32 %v4289, 16
      %v5867 = vrot.slane %v5865, 2
      %v5868 = vor.u32 %v5864, %v5867
      %v5869 = vsel %vm5366, %v5859, %v5868
      %v5871 = vshrl.u32 %v4290, 16
      %v5873 = vrot.slane %v5871, 1
      %v5874 = vshll.u32 %v4290, 16
      %v5876 = vrot.slane %v5874, 2
      %v5877 = vor.u32 %v5873, %v5876
      %v5878 = vsel %vm5366, %v5868, %v5877
      %v5880 = vshrl.u32 %v4291, 16
      %v5882 = vrot.slane %v5880, 1
      %v5883 = vshll.u32 %v4291, 16
      %v5885 = vrot.slane %v5883, 2
      %v5886 = vor.u32 %v5882, %v5885
      %v5887 = vsel %vm5366, %v5877, %v5886
      %v5889 = vshrl.u32 %v4292, 16
      %v5891 = vrot.slane %v5889, 1
      %v5892 = vshll.u32 %v4292, 16
      %v5894 = vrot.slane %v5892, 2
      %v5895 = vor.u32 %v5891, %v5894
      %v5896 = vsel %vm5366, %v5886, %v5895
      %v5898 = vshrl.u32 %v4293, 16
      %v5900 = vrot.slane %v5898, 1
      %v5901 = vshll.u32 %v4293, 16
      %v5903 = vrot.slane %v5901, 2
      %v5904 = vor.u32 %v5900, %v5903
      %v5905 = vsel %vm5366, %v5895, %v5904
      %v5907 = vshrl.u32 %v4294, 16
      %v5909 = vrot.slane %v5907, 1
      %v5910 = vshll.u32 %v4294, 16
      %v5912 = vrot.slane %v5910, 2
      %v5913 = vor.u32 %v5909, %v5912
      %v5914 = vsel %vm5366, %v5904, %v5913
      %v5916 = vshrl.u32 %v4295, 16
      %v5918 = vrot.slane %v5916, 1
      %v5919 = vshll.u32 %v4295, 16
      %v5921 = vrot.slane %v5919, 2
      %v5922 = vor.u32 %v5918, %v5921
      %v5923 = vsel %vm5366, %v5913, %v5922
      %v5925 = vshrl.u32 %v4296, 16
      %v5927 = vrot.slane %v5925, 1
      %v5928 = vshll.u32 %v4296, 16
      %v5930 = vrot.slane %v5928, 2
      %v5931 = vor.u32 %v5927, %v5930
      %v5932 = vsel %vm5366, %v5922, %v5931
      %v5934 = vshrl.u32 %v4297, 16
      %v5936 = vrot.slane %v5934, 1
      %v5937 = vshll.u32 %v4297, 16
      %v5939 = vrot.slane %v5937, 2
      %v5940 = vor.u32 %v5936, %v5939
      %v5941 = vsel %vm5366, %v5931, %v5940
      %v5943 = vshrl.u32 %v4298, 16
      %v5945 = vrot.slane %v5943, 1
      %v5946 = vshll.u32 %v4298, 16
      %v5948 = vrot.slane %v5946, 2
      %v5949 = vor.u32 %v5945, %v5948
      %v5950 = vsel %vm5366, %v5940, %v5949
      %v5952 = vshrl.u32 %v4299, 16
      %v5954 = vrot.slane %v5952, 1
      %v5955 = vshll.u32 %v4299, 16
      %v5957 = vrot.slane %v5955, 2
      %v5958 = vor.u32 %v5954, %v5957
      %v5959 = vsel %vm5366, %v5949, %v5958
      %v5961 = vshrl.u32 %v4300, 16
      %v5963 = vrot.slane %v5961, 1
      %v5964 = vshll.u32 %v4300, 16
      %v5966 = vrot.slane %v5964, 2
      %v5967 = vor.u32 %v5963, %v5966
      %v5968 = vsel %vm5366, %v5958, %v5967
      %v5970 = vshrl.u32 %v4301, 16
      %v5972 = vrot.slane %v5970, 1
      %v5973 = vshll.u32 %v4301, 16
      %v5975 = vrot.slane %v5973, 2
      %v5976 = vor.u32 %v5972, %v5975
      %v5977 = vsel %vm5366, %v5967, %v5976
      %v5979 = vshrl.u32 %v5365, 16
      %v5981 = vrot.slane %v5979, 1
      %v5982 = vshll.u32 %v5365, 16
      %v5984 = vrot.slane %v5982, 2
      %v5985 = vor.u32 %v5981, %v5984
      %v5986 = vsel %vm5366, %v5976, %v5985
      %v5988 = vsel %vm1255, %v5383, 0
      %v5991 = vsel %vm1255, %v5392, 0
      %v5994 = vsel %vm1255, %v5401, 0
      %v5997 = vsel %vm1255, %v5410, 0
      %v6000 = vsel %vm1255, %v5419, 0
      %v6003 = vsel %vm1255, %v5428, 0
      %v6006 = vsel %vm1255, %v5437, 0
      %v6009 = vsel %vm1255, %v5446, 0
      %v6012 = vsel %vm1255, %v5455, 0
      %v6015 = vsel %vm1255, %v5464, 0
      %v6018 = vsel %vm1255, %v5473, 0
      %v6021 = vsel %vm1255, %v5482, 0
      %v6024 = vsel %vm1255, %v5491, 0
      %v6027 = vsel %vm1255, %v5500, 0
      %v6030 = vsel %vm1255, %v5509, 0
      %v6033 = vsel %vm1255, %v5518, 0
      %v6036 = vsel %vm1255, %v5527, 0
      %v6039 = vsel %vm1255, %v5536, 0
      %v6042 = vsel %vm1255, %v5545, 0
      %v6045 = vsel %vm1255, %v5554, 0
      %v6048 = vsel %vm1255, %v5563, 0
      %v6051 = vsel %vm1255, %v5572, 0
      %v6054 = vsel %vm1255, %v5581, 0
      %v6057 = vsel %vm1255, %v5590, 0
      %v6060 = vsel %vm1255, %v5599, 0
      %v6063 = vsel %vm1255, %v5608, 0
      %v6066 = vsel %vm1255, %v5617, 0
      %v6069 = vsel %vm1255, %v5626, 0
      %v6072 = vsel %vm1255, %v5635, 0
      %v6075 = vsel %vm1255, %v5644, 0
      %v6078 = vsel %vm1255, %v5653, 0
      %v6081 = vsel %vm1255, %v5662, 0
      %v6084 = vsel %vm1255, %v5671, 0
      %v6087 = vsel %vm1255, %v5680, 0
      %v6090 = vsel %vm1255, %v5689, 0
      %v6093 = vsel %vm1255, %v5698, 0
      %v6096 = vsel %vm1255, %v5707, 0
      %v6099 = vsel %vm1255, %v5716, 0
      %v6102 = vsel %vm1255, %v5725, 0
      %v6105 = vsel %vm1255, %v5734, 0
      %v6108 = vsel %vm1255, %v5743, 0
      %v6111 = vsel %vm1255, %v5752, 0
      %v6114 = vsel %vm1255, %v5761, 0
      %v6117 = vsel %vm1255, %v5770, 0
      %v6120 = vsel %vm1255, %v5779, 0
      %v6123 = vsel %vm1255, %v5788, 0
      %v6126 = vsel %vm1255, %v5797, 0
      %v6129 = vsel %vm1255, %v5806, 0
      %v6132 = vsel %vm1255, %v5815, 0
      %v6135 = vsel %vm1255, %v5824, 0
      %v6138 = vsel %vm1255, %v5833, 0
      %v6141 = vsel %vm1255, %v5842, 0
      %v6144 = vsel %vm1255, %v5851, 0
      %v6147 = vsel %vm1255, %v5860, 0
      %v6150 = vsel %vm1255, %v5869, 0
      %v6153 = vsel %vm1255, %v5878, 0
      %v6156 = vsel %vm1255, %v5887, 0
      %v6159 = vsel %vm1255, %v5896, 0
      %v6162 = vsel %vm1255, %v5905, 0
      %v6165 = vsel %vm1255, %v5914, 0
      %v6168 = vsel %vm1255, %v5923, 0
      %v6171 = vsel %vm1255, %v5932, 0
      %v6174 = vsel %vm1255, %v5941, 0
      %v6177 = vsel %vm1255, %v5950, 0
      %v6180 = vsel %vm1255, %v5959, 0
      %v6183 = vsel %vm1255, %v5968, 0
      %v6186 = vsel %vm1255, %v5977, 0
      %v6189 = vsel %vm1255, %v5986, 0
      %v6192 = vsel %vm1460, %v5362, 0
      %6194 = vmatprep.subr.bf16.mxu0 0
      %6195 = vmatpush1.bf16.msra.mxu0 0
      %6196 = vmatprep.subr.bf16.mxu0 0
      %6197 = vmatpush1.bf16.msra.mxu0 0
      %6198 = vmatprep.subr.bf16.mxu0 0
      %6199 = vmatpush1.bf16.msra.mxu0 0
      %6200 = vmatprep.subr.bf16.mxu0 0
      %6201 = vmatpush1.bf16.msra.mxu0 0
      %6202 = vmatprep.subr.bf16.mxu0 0
      %6203 = vmatpush1.bf16.msra.mxu0 0
      %6204 = vmatprep.subr.bf16.mxu0 0
      %6205 = vmatpush1.bf16.msra.mxu0 0
      %6206 = vmatprep.subr.bf16.mxu0 0
      %6207 = vmatpush1.bf16.msra.mxu0 0
      %6208 = vmatprep.subr.bf16.mxu0 0
      %6209 = vmatpush1.bf16.msra.mxu0 %v6192
      %6210 = vmatprep.subr.bf16.mxu0 0
      %6211 = vmatpush2.bf16.msra.mxu0 0
      %6212 = vmatprep.subr.bf16.mxu0 0
      %6213 = vmatpush2.bf16.msra.mxu0 0
      %6214 = vmatprep.subr.bf16.mxu0 0
      %6215 = vmatpush2.bf16.msra.mxu0 0
      %6216 = vmatprep.subr.bf16.mxu0 0
      %6217 = vmatpush2.bf16.msra.mxu0 0
      %6218 = vmatprep.subr.bf16.mxu0 0
      %6219 = vmatpush2.bf16.msra.mxu0 0
      %6220 = vmatprep.subr.bf16.mxu0 0
      %6221 = vmatpush2.bf16.msra.mxu0 0
      %6222 = vmatprep.subr.bf16.mxu0 0
      %6223 = vmatpush2.bf16.msra.mxu0 0
      %6224 = vmatprep.subr.bf16.mxu0 0
      %6225 = vmatpush2.bf16.msra.mxu0 0
      %6226 = vmatprep.mubr.bf16.mxu0 0
      %6227 = vmatmul.mubr.bf16.gmra.mxu0 %v5988
      %v6228 = vpop.f32.mrf.mxu0
      %v6229 = vadd.f32 0.0, %v6228
      %v6230 = vpop.f32.mrf.mxu0
      %v6231 = vpop.f32.mrf.mxu0
      %v6232 = vadd.f32 0.0, %v6231
      %v6233 = vpop.f32.mrf.mxu0
      %6234 = vmatprep.mubr.bf16.mxu0 0
      %6235 = vmatmul.mubr.bf16.gmra.mxu0 %v5991
      %v6236 = vpop.f32.mrf.mxu0
      %v6237 = vadd.f32 0.0, %v6236
      %v6238 = vpop.f32.mrf.mxu0
      %v6239 = vpop.f32.mrf.mxu0
      %v6240 = vadd.f32 0.0, %v6239
      %v6241 = vpop.f32.mrf.mxu0
      %6242 = vmatprep.mubr.bf16.mxu0 0
      %6243 = vmatmul.mubr.bf16.gmra.mxu0 %v5994
      %v6244 = vpop.f32.mrf.mxu0
      %v6245 = vadd.f32 0.0, %v6244
      %v6246 = vpop.f32.mrf.mxu0
      %v6247 = vpop.f32.mrf.mxu0
      %v6248 = vadd.f32 0.0, %v6247
      %v6249 = vpop.f32.mrf.mxu0
      %6250 = vmatprep.mubr.bf16.mxu0 0
      %6251 = vmatmul.mubr.bf16.gmra.mxu0 %v5997
      %v6252 = vpop.f32.mrf.mxu0
      %v6253 = vadd.f32 0.0, %v6252
      %v6254 = vpop.f32.mrf.mxu0
      %v6255 = vpop.f32.mrf.mxu0
      %v6256 = vadd.f32 0.0, %v6255
      %v6257 = vpop.f32.mrf.mxu0
      %6258 = vmatprep.mubr.bf16.mxu0 0
      %6259 = vmatmul.mubr.bf16.gmra.mxu0 %v6000
      %v6260 = vpop.f32.mrf.mxu0
      %v6261 = vadd.f32 0.0, %v6260
      %v6262 = vpop.f32.mrf.mxu0
      %v6263 = vpop.f32.mrf.mxu0
      %v6264 = vadd.f32 0.0, %v6263
      %v6265 = vpop.f32.mrf.mxu0
      %6266 = vmatprep.mubr.bf16.mxu0 0
      %6267 = vmatmul.mubr.bf16.gmra.mxu0 %v6003
      %v6268 = vpop.f32.mrf.mxu0
      %v6269 = vadd.f32 0.0, %v6268
      %v6270 = vpop.f32.mrf.mxu0
      %v6271 = vpop.f32.mrf.mxu0
      %v6272 = vadd.f32 0.0, %v6271
      %v6273 = vpop.f32.mrf.mxu0
      %6274 = vmatprep.mubr.bf16.mxu0 0
      %6275 = vmatmul.mubr.bf16.gmra.mxu0 %v6006
      %v6276 = vpop.f32.mrf.mxu0
      %v6277 = vadd.f32 0.0, %v6276
      %v6278 = vpop.f32.mrf.mxu0
      %v6279 = vpop.f32.mrf.mxu0
      %v6280 = vadd.f32 0.0, %v6279
      %v6281 = vpop.f32.mrf.mxu0
      %6282 = vmatprep.mubr.bf16.mxu0 0
      %6283 = vmatmul.mubr.bf16.gmra.mxu0 %v6009
      %v6284 = vpop.f32.mrf.mxu0
      %v6285 = vadd.f32 0.0, %v6284
      %v6286 = vpop.f32.mrf.mxu0
      %v6287 = vpop.f32.mrf.mxu0
      %v6288 = vadd.f32 0.0, %v6287
      %v6289 = vpop.f32.mrf.mxu0
      %6290 = vmatprep.mubr.bf16.mxu0 0
      %6291 = vmatmul.mubr.bf16.gmra.mxu0 %v6012
      %v6292 = vpop.f32.mrf.mxu0
      %v6293 = vadd.f32 0.0, %v6292
      %v6294 = vpop.f32.mrf.mxu0
      %v6295 = vpop.f32.mrf.mxu0
      %v6296 = vadd.f32 0.0, %v6295
      %v6297 = vpop.f32.mrf.mxu0
      %6298 = vmatprep.mubr.bf16.mxu0 0
      %6299 = vmatmul.mubr.bf16.gmra.mxu0 %v6015
      %v6300 = vpop.f32.mrf.mxu0
      %v6301 = vadd.f32 0.0, %v6300
      %v6302 = vpop.f32.mrf.mxu0
      %v6303 = vpop.f32.mrf.mxu0
      %v6304 = vadd.f32 0.0, %v6303
      %v6305 = vpop.f32.mrf.mxu0
      %6306 = vmatprep.mubr.bf16.mxu0 0
      %6307 = vmatmul.mubr.bf16.gmra.mxu0 %v6018
      %v6308 = vpop.f32.mrf.mxu0
      %v6309 = vadd.f32 0.0, %v6308
      %v6310 = vpop.f32.mrf.mxu0
      %v6311 = vpop.f32.mrf.mxu0
      %v6312 = vadd.f32 0.0, %v6311
      %v6313 = vpop.f32.mrf.mxu0
      %6314 = vmatprep.mubr.bf16.mxu0 0
      %6315 = vmatmul.mubr.bf16.gmra.mxu0 %v6021
      %v6316 = vpop.f32.mrf.mxu0
      %v6317 = vadd.f32 0.0, %v6316
      %v6318 = vpop.f32.mrf.mxu0
      %v6319 = vpop.f32.mrf.mxu0
      %v6320 = vadd.f32 0.0, %v6319
      %v6321 = vpop.f32.mrf.mxu0
      %6322 = vmatprep.mubr.bf16.mxu0 0
      %6323 = vmatmul.mubr.bf16.gmra.mxu0 %v6024
      %v6324 = vpop.f32.mrf.mxu0
      %v6325 = vadd.f32 0.0, %v6324
      %v6326 = vpop.f32.mrf.mxu0
      %v6327 = vpop.f32.mrf.mxu0
      %v6328 = vadd.f32 0.0, %v6327
      %v6329 = vpop.f32.mrf.mxu0
      %6330 = vmatprep.mubr.bf16.mxu0 0
      %6331 = vmatmul.mubr.bf16.gmra.mxu0 %v6027
      %v6332 = vpop.f32.mrf.mxu0
      %v6333 = vadd.f32 0.0, %v6332
      %v6334 = vpop.f32.mrf.mxu0
      %v6335 = vpop.f32.mrf.mxu0
      %v6336 = vadd.f32 0.0, %v6335
      %v6337 = vpop.f32.mrf.mxu0
      %6338 = vmatprep.mubr.bf16.mxu0 0
      %6339 = vmatmul.mubr.bf16.gmra.mxu0 %v6030
      %v6340 = vpop.f32.mrf.mxu0
      %v6341 = vadd.f32 0.0, %v6340
      %v6342 = vpop.f32.mrf.mxu0
      %v6343 = vpop.f32.mrf.mxu0
      %v6344 = vadd.f32 0.0, %v6343
      %v6345 = vpop.f32.mrf.mxu0
      %6346 = vmatprep.mubr.bf16.mxu0 0
      %6347 = vmatmul.mubr.bf16.gmra.mxu0 %v6033
      %v6348 = vpop.f32.mrf.mxu0
      %v6349 = vadd.f32 0.0, %v6348
      %v6350 = vpop.f32.mrf.mxu0
      %v6351 = vpop.f32.mrf.mxu0
      %v6352 = vadd.f32 0.0, %v6351
      %v6353 = vpop.f32.mrf.mxu0
      %6354 = vmatprep.mubr.bf16.mxu0 0
      %6355 = vmatmul.mubr.bf16.gmra.mxu0 %v6036
      %v6356 = vpop.f32.mrf.mxu0
      %v6357 = vadd.f32 0.0, %v6356
      %v6358 = vpop.f32.mrf.mxu0
      %v6359 = vpop.f32.mrf.mxu0
      %v6360 = vadd.f32 0.0, %v6359
      %v6361 = vpop.f32.mrf.mxu0
      %6362 = vmatprep.mubr.bf16.mxu0 0
      %6363 = vmatmul.mubr.bf16.gmra.mxu0 %v6039
      %v6364 = vpop.f32.mrf.mxu0
      %v6365 = vadd.f32 0.0, %v6364
      %v6366 = vpop.f32.mrf.mxu0
      %v6367 = vpop.f32.mrf.mxu0
      %v6368 = vadd.f32 0.0, %v6367
      %v6369 = vpop.f32.mrf.mxu0
      %6370 = vmatprep.mubr.bf16.mxu0 0
      %6371 = vmatmul.mubr.bf16.gmra.mxu0 %v6042
      %v6372 = vpop.f32.mrf.mxu0
      %v6373 = vadd.f32 0.0, %v6372
      %v6374 = vpop.f32.mrf.mxu0
      %v6375 = vpop.f32.mrf.mxu0
      %v6376 = vadd.f32 0.0, %v6375
      %v6377 = vpop.f32.mrf.mxu0
      %6378 = vmatprep.mubr.bf16.mxu0 0
      %6379 = vmatmul.mubr.bf16.gmra.mxu0 %v6045
      %v6380 = vpop.f32.mrf.mxu0
      %v6381 = vadd.f32 0.0, %v6380
      %v6382 = vpop.f32.mrf.mxu0
      %v6383 = vpop.f32.mrf.mxu0
      %v6384 = vadd.f32 0.0, %v6383
      %v6385 = vpop.f32.mrf.mxu0
      %6386 = vmatprep.mubr.bf16.mxu0 0
      %6387 = vmatmul.mubr.bf16.gmra.mxu0 %v6048
      %v6388 = vpop.f32.mrf.mxu0
      %v6389 = vadd.f32 0.0, %v6388
      %v6390 = vpop.f32.mrf.mxu0
      %v6391 = vpop.f32.mrf.mxu0
      %v6392 = vadd.f32 0.0, %v6391
      %v6393 = vpop.f32.mrf.mxu0
      %6394 = vmatprep.mubr.bf16.mxu0 0
      %6395 = vmatmul.mubr.bf16.gmra.mxu0 %v6051
      %v6396 = vpop.f32.mrf.mxu0
      %v6397 = vadd.f32 0.0, %v6396
      %v6398 = vpop.f32.mrf.mxu0
      %v6399 = vpop.f32.mrf.mxu0
      %v6400 = vadd.f32 0.0, %v6399
      %v6401 = vpop.f32.mrf.mxu0
      %6402 = vmatprep.mubr.bf16.mxu0 0
      %6403 = vmatmul.mubr.bf16.gmra.mxu0 %v6054
      %v6404 = vpop.f32.mrf.mxu0
      %v6405 = vadd.f32 0.0, %v6404
      %v6406 = vpop.f32.mrf.mxu0
      %v6407 = vpop.f32.mrf.mxu0
      %v6408 = vadd.f32 0.0, %v6407
      %v6409 = vpop.f32.mrf.mxu0
      %6410 = vmatprep.mubr.bf16.mxu0 0
      %6411 = vmatmul.mubr.bf16.gmra.mxu0 %v6057
      %v6412 = vpop.f32.mrf.mxu0
      %v6413 = vadd.f32 0.0, %v6412
      %v6414 = vpop.f32.mrf.mxu0
      %v6415 = vpop.f32.mrf.mxu0
      %v6416 = vadd.f32 0.0, %v6415
      %v6417 = vpop.f32.mrf.mxu0
      %6418 = vmatprep.mubr.bf16.mxu0 0
      %6419 = vmatmul.mubr.bf16.gmra.mxu0 %v6060
      %v6420 = vpop.f32.mrf.mxu0
      %v6421 = vadd.f32 0.0, %v6420
      %v6422 = vpop.f32.mrf.mxu0
      %v6423 = vpop.f32.mrf.mxu0
      %v6424 = vadd.f32 0.0, %v6423
      %v6425 = vpop.f32.mrf.mxu0
      %6426 = vmatprep.mubr.bf16.mxu0 0
      %6427 = vmatmul.mubr.bf16.gmra.mxu0 %v6063
      %v6428 = vpop.f32.mrf.mxu0
      %v6429 = vadd.f32 0.0, %v6428
      %v6430 = vpop.f32.mrf.mxu0
      %v6431 = vpop.f32.mrf.mxu0
      %v6432 = vadd.f32 0.0, %v6431
      %v6433 = vpop.f32.mrf.mxu0
      %6434 = vmatprep.mubr.bf16.mxu0 0
      %6435 = vmatmul.mubr.bf16.gmra.mxu0 %v6066
      %v6436 = vpop.f32.mrf.mxu0
      %v6437 = vadd.f32 0.0, %v6436
      %v6438 = vpop.f32.mrf.mxu0
      %v6439 = vpop.f32.mrf.mxu0
      %v6440 = vadd.f32 0.0, %v6439
      %v6441 = vpop.f32.mrf.mxu0
      %6442 = vmatprep.mubr.bf16.mxu0 0
      %6443 = vmatmul.mubr.bf16.gmra.mxu0 %v6069
      %v6444 = vpop.f32.mrf.mxu0
      %v6445 = vadd.f32 0.0, %v6444
      %v6446 = vpop.f32.mrf.mxu0
      %v6447 = vpop.f32.mrf.mxu0
      %v6448 = vadd.f32 0.0, %v6447
      %v6449 = vpop.f32.mrf.mxu0
      %6450 = vmatprep.mubr.bf16.mxu0 0
      %6451 = vmatmul.mubr.bf16.gmra.mxu0 %v6072
      %v6452 = vpop.f32.mrf.mxu0
      %v6453 = vadd.f32 0.0, %v6452
      %v6454 = vpop.f32.mrf.mxu0
      %v6455 = vpop.f32.mrf.mxu0
      %v6456 = vadd.f32 0.0, %v6455
      %v6457 = vpop.f32.mrf.mxu0
      %6458 = vmatprep.mubr.bf16.mxu0 0
      %6459 = vmatmul.mubr.bf16.gmra.mxu0 %v6075
      %v6460 = vpop.f32.mrf.mxu0
      %v6461 = vadd.f32 0.0, %v6460
      %v6462 = vpop.f32.mrf.mxu0
      %v6463 = vpop.f32.mrf.mxu0
      %v6464 = vadd.f32 0.0, %v6463
      %v6465 = vpop.f32.mrf.mxu0
      %6466 = vmatprep.mubr.bf16.mxu0 0
      %6467 = vmatmul.mubr.bf16.gmra.mxu0 %v6078
      %v6468 = vpop.f32.mrf.mxu0
      %v6469 = vadd.f32 0.0, %v6468
      %v6470 = vpop.f32.mrf.mxu0
      %v6471 = vpop.f32.mrf.mxu0
      %v6472 = vadd.f32 0.0, %v6471
      %v6473 = vpop.f32.mrf.mxu0
      %6474 = vmatprep.mubr.bf16.mxu0 0
      %6475 = vmatmul.mubr.bf16.gmra.mxu0 %v6081
      %v6476 = vpop.f32.mrf.mxu0
      %v6477 = vadd.f32 0.0, %v6476
      %v6478 = vpop.f32.mrf.mxu0
      %v6479 = vpop.f32.mrf.mxu0
      %v6480 = vadd.f32 0.0, %v6479
      %v6481 = vpop.f32.mrf.mxu0
      %6482 = vmatprep.mubr.bf16.mxu0 0
      %6483 = vmatmul.mubr.bf16.gmra.mxu0 %v6084
      %v6484 = vpop.f32.mrf.mxu0
      %v6485 = vadd.f32 0.0, %v6484
      %v6486 = vpop.f32.mrf.mxu0
      %v6487 = vpop.f32.mrf.mxu0
      %v6488 = vadd.f32 0.0, %v6487
      %v6489 = vpop.f32.mrf.mxu0
      %6490 = vmatprep.mubr.bf16.mxu0 0
      %6491 = vmatmul.mubr.bf16.gmra.mxu0 %v6087
      %v6492 = vpop.f32.mrf.mxu0
      %v6493 = vadd.f32 0.0, %v6492
      %v6494 = vpop.f32.mrf.mxu0
      %v6495 = vpop.f32.mrf.mxu0
      %v6496 = vadd.f32 0.0, %v6495
      %v6497 = vpop.f32.mrf.mxu0
      %6498 = vmatprep.mubr.bf16.mxu0 0
      %6499 = vmatmul.mubr.bf16.gmra.mxu0 %v6090
      %v6500 = vpop.f32.mrf.mxu0
      %v6501 = vadd.f32 0.0, %v6500
      %v6502 = vpop.f32.mrf.mxu0
      %v6503 = vpop.f32.mrf.mxu0
      %v6504 = vadd.f32 0.0, %v6503
      %v6505 = vpop.f32.mrf.mxu0
      %6506 = vmatprep.mubr.bf16.mxu0 0
      %6507 = vmatmul.mubr.bf16.gmra.mxu0 %v6093
      %v6508 = vpop.f32.mrf.mxu0
      %v6509 = vadd.f32 0.0, %v6508
      %v6510 = vpop.f32.mrf.mxu0
      %v6511 = vpop.f32.mrf.mxu0
      %v6512 = vadd.f32 0.0, %v6511
      %v6513 = vpop.f32.mrf.mxu0
      %6514 = vmatprep.mubr.bf16.mxu0 0
      %6515 = vmatmul.mubr.bf16.gmra.mxu0 %v6096
      %v6516 = vpop.f32.mrf.mxu0
      %v6517 = vadd.f32 0.0, %v6516
      %v6518 = vpop.f32.mrf.mxu0
      %v6519 = vpop.f32.mrf.mxu0
      %v6520 = vadd.f32 0.0, %v6519
      %v6521 = vpop.f32.mrf.mxu0
      %6522 = vmatprep.mubr.bf16.mxu0 0
      %6523 = vmatmul.mubr.bf16.gmra.mxu0 %v6099
      %v6524 = vpop.f32.mrf.mxu0
      %v6525 = vadd.f32 0.0, %v6524
      %v6526 = vpop.f32.mrf.mxu0
      %v6527 = vpop.f32.mrf.mxu0
      %v6528 = vadd.f32 0.0, %v6527
      %v6529 = vpop.f32.mrf.mxu0
      %6530 = vmatprep.mubr.bf16.mxu0 0
      %6531 = vmatmul.mubr.bf16.gmra.mxu0 %v6102
      %v6532 = vpop.f32.mrf.mxu0
      %v6533 = vadd.f32 0.0, %v6532
      %v6534 = vpop.f32.mrf.mxu0
      %v6535 = vpop.f32.mrf.mxu0
      %v6536 = vadd.f32 0.0, %v6535
      %v6537 = vpop.f32.mrf.mxu0
      %6538 = vmatprep.mubr.bf16.mxu0 0
      %6539 = vmatmul.mubr.bf16.gmra.mxu0 %v6105
      %v6540 = vpop.f32.mrf.mxu0
      %v6541 = vadd.f32 0.0, %v6540
      %v6542 = vpop.f32.mrf.mxu0
      %v6543 = vpop.f32.mrf.mxu0
      %v6544 = vadd.f32 0.0, %v6543
      %v6545 = vpop.f32.mrf.mxu0
      %6546 = vmatprep.mubr.bf16.mxu0 0
      %6547 = vmatmul.mubr.bf16.gmra.mxu0 %v6108
      %v6548 = vpop.f32.mrf.mxu0
      %v6549 = vadd.f32 0.0, %v6548
      %v6550 = vpop.f32.mrf.mxu0
      %v6551 = vpop.f32.mrf.mxu0
      %v6552 = vadd.f32 0.0, %v6551
      %v6553 = vpop.f32.mrf.mxu0
      %6554 = vmatprep.mubr.bf16.mxu0 0
      %6555 = vmatmul.mubr.bf16.gmra.mxu0 %v6111
      %v6556 = vpop.f32.mrf.mxu0
      %v6557 = vadd.f32 0.0, %v6556
      %v6558 = vpop.f32.mrf.mxu0
      %v6559 = vpop.f32.mrf.mxu0
      %v6560 = vadd.f32 0.0, %v6559
      %v6561 = vpop.f32.mrf.mxu0
      %6562 = vmatprep.mubr.bf16.mxu0 0
      %6563 = vmatmul.mubr.bf16.gmra.mxu0 %v6114
      %v6564 = vpop.f32.mrf.mxu0
      %v6565 = vadd.f32 0.0, %v6564
      %v6566 = vpop.f32.mrf.mxu0
      %v6567 = vpop.f32.mrf.mxu0
      %v6568 = vadd.f32 0.0, %v6567
      %v6569 = vpop.f32.mrf.mxu0
      %6570 = vmatprep.mubr.bf16.mxu0 0
      %6571 = vmatmul.mubr.bf16.gmra.mxu0 %v6117
      %v6572 = vpop.f32.mrf.mxu0
      %v6573 = vadd.f32 0.0, %v6572
      %v6574 = vpop.f32.mrf.mxu0
      %v6575 = vpop.f32.mrf.mxu0
      %v6576 = vadd.f32 0.0, %v6575
      %v6577 = vpop.f32.mrf.mxu0
      %6578 = vmatprep.mubr.bf16.mxu0 0
      %6579 = vmatmul.mubr.bf16.gmra.mxu0 %v6120
      %v6580 = vpop.f32.mrf.mxu0
      %v6581 = vadd.f32 0.0, %v6580
      %v6582 = vpop.f32.mrf.mxu0
      %v6583 = vpop.f32.mrf.mxu0
      %v6584 = vadd.f32 0.0, %v6583
      %v6585 = vpop.f32.mrf.mxu0
      %6586 = vmatprep.mubr.bf16.mxu0 0
      %6587 = vmatmul.mubr.bf16.gmra.mxu0 %v6123
      %v6588 = vpop.f32.mrf.mxu0
      %v6589 = vadd.f32 0.0, %v6588
      %v6590 = vpop.f32.mrf.mxu0
      %v6591 = vpop.f32.mrf.mxu0
      %v6592 = vadd.f32 0.0, %v6591
      %v6593 = vpop.f32.mrf.mxu0
      %6594 = vmatprep.mubr.bf16.mxu0 0
      %6595 = vmatmul.mubr.bf16.gmra.mxu0 %v6126
      %v6596 = vpop.f32.mrf.mxu0
      %v6597 = vadd.f32 0.0, %v6596
      %v6598 = vpop.f32.mrf.mxu0
      %v6599 = vpop.f32.mrf.mxu0
      %v6600 = vadd.f32 0.0, %v6599
      %v6601 = vpop.f32.mrf.mxu0
      %6602 = vmatprep.mubr.bf16.mxu0 0
      %6603 = vmatmul.mubr.bf16.gmra.mxu0 %v6129
      %v6604 = vpop.f32.mrf.mxu0
      %v6605 = vadd.f32 0.0, %v6604
      %v6606 = vpop.f32.mrf.mxu0
      %v6607 = vpop.f32.mrf.mxu0
      %v6608 = vadd.f32 0.0, %v6607
      %v6609 = vpop.f32.mrf.mxu0
      %6610 = vmatprep.mubr.bf16.mxu0 0
      %6611 = vmatmul.mubr.bf16.gmra.mxu0 %v6132
      %v6612 = vpop.f32.mrf.mxu0
      %v6613 = vadd.f32 0.0, %v6612
      %v6614 = vpop.f32.mrf.mxu0
      %v6615 = vpop.f32.mrf.mxu0
      %v6616 = vadd.f32 0.0, %v6615
      %v6617 = vpop.f32.mrf.mxu0
      %6618 = vmatprep.mubr.bf16.mxu0 0
      %6619 = vmatmul.mubr.bf16.gmra.mxu0 %v6135
      %v6620 = vpop.f32.mrf.mxu0
      %v6621 = vadd.f32 0.0, %v6620
      %v6622 = vpop.f32.mrf.mxu0
      %v6623 = vpop.f32.mrf.mxu0
      %v6624 = vadd.f32 0.0, %v6623
      %v6625 = vpop.f32.mrf.mxu0
      %6626 = vmatprep.mubr.bf16.mxu0 0
      %6627 = vmatmul.mubr.bf16.gmra.mxu0 %v6138
      %v6628 = vpop.f32.mrf.mxu0
      %v6629 = vadd.f32 0.0, %v6628
      %v6630 = vpop.f32.mrf.mxu0
      %v6631 = vpop.f32.mrf.mxu0
      %v6632 = vadd.f32 0.0, %v6631
      %v6633 = vpop.f32.mrf.mxu0
      %6634 = vmatprep.mubr.bf16.mxu0 0
      %6635 = vmatmul.mubr.bf16.gmra.mxu0 %v6141
      %v6636 = vpop.f32.mrf.mxu0
      %v6637 = vadd.f32 0.0, %v6636
      %v6638 = vpop.f32.mrf.mxu0
      %v6639 = vpop.f32.mrf.mxu0
      %v6640 = vadd.f32 0.0, %v6639
      %v6641 = vpop.f32.mrf.mxu0
      %6642 = vmatprep.mubr.bf16.mxu0 0
      %6643 = vmatmul.mubr.bf16.gmra.mxu0 %v6144
      %v6644 = vpop.f32.mrf.mxu0
      %v6645 = vadd.f32 0.0, %v6644
      %v6646 = vpop.f32.mrf.mxu0
      %v6647 = vpop.f32.mrf.mxu0
      %v6648 = vadd.f32 0.0, %v6647
      %v6649 = vpop.f32.mrf.mxu0
      %6650 = vmatprep.mubr.bf16.mxu0 0
      %6651 = vmatmul.mubr.bf16.gmra.mxu0 %v6147
      %v6652 = vpop.f32.mrf.mxu0
      %v6653 = vadd.f32 0.0, %v6652
      %v6654 = vpop.f32.mrf.mxu0
      %v6655 = vpop.f32.mrf.mxu0
      %v6656 = vadd.f32 0.0, %v6655
      %v6657 = vpop.f32.mrf.mxu0
      %6658 = vmatprep.mubr.bf16.mxu0 0
      %6659 = vmatmul.mubr.bf16.gmra.mxu0 %v6150
      %v6660 = vpop.f32.mrf.mxu0
      %v6661 = vadd.f32 0.0, %v6660
      %v6662 = vpop.f32.mrf.mxu0
      %v6663 = vpop.f32.mrf.mxu0
      %v6664 = vadd.f32 0.0, %v6663
      %v6665 = vpop.f32.mrf.mxu0
      %6666 = vmatprep.mubr.bf16.mxu0 0
      %6667 = vmatmul.mubr.bf16.gmra.mxu0 %v6153
      %v6668 = vpop.f32.mrf.mxu0
      %v6669 = vadd.f32 0.0, %v6668
      %v6670 = vpop.f32.mrf.mxu0
      %v6671 = vpop.f32.mrf.mxu0
      %v6672 = vadd.f32 0.0, %v6671
      %v6673 = vpop.f32.mrf.mxu0
      %6674 = vmatprep.mubr.bf16.mxu0 0
      %6675 = vmatmul.mubr.bf16.gmra.mxu0 %v6156
      %v6676 = vpop.f32.mrf.mxu0
      %v6677 = vadd.f32 0.0, %v6676
      %v6678 = vpop.f32.mrf.mxu0
      %v6679 = vpop.f32.mrf.mxu0
      %v6680 = vadd.f32 0.0, %v6679
      %v6681 = vpop.f32.mrf.mxu0
      %6682 = vmatprep.mubr.bf16.mxu0 0
      %6683 = vmatmul.mubr.bf16.gmra.mxu0 %v6159
      %v6684 = vpop.f32.mrf.mxu0
      %v6685 = vadd.f32 0.0, %v6684
      %v6686 = vpop.f32.mrf.mxu0
      %v6687 = vpop.f32.mrf.mxu0
      %v6688 = vadd.f32 0.0, %v6687
      %v6689 = vpop.f32.mrf.mxu0
      %6690 = vmatprep.mubr.bf16.mxu0 0
      %6691 = vmatmul.mubr.bf16.gmra.mxu0 %v6162
      %v6692 = vpop.f32.mrf.mxu0
      %v6693 = vadd.f32 0.0, %v6692
      %v6694 = vpop.f32.mrf.mxu0
      %v6695 = vpop.f32.mrf.mxu0
      %v6696 = vadd.f32 0.0, %v6695
      %v6697 = vpop.f32.mrf.mxu0
      %6698 = vmatprep.mubr.bf16.mxu0 0
      %6699 = vmatmul.mubr.bf16.gmra.mxu0 %v6165
      %v6700 = vpop.f32.mrf.mxu0
      %v6701 = vadd.f32 0.0, %v6700
      %v6702 = vpop.f32.mrf.mxu0
      %v6703 = vpop.f32.mrf.mxu0
      %v6704 = vadd.f32 0.0, %v6703
      %v6705 = vpop.f32.mrf.mxu0
      %6706 = vmatprep.mubr.bf16.mxu0 0
      %6707 = vmatmul.mubr.bf16.gmra.mxu0 %v6168
      %v6708 = vpop.f32.mrf.mxu0
      %v6709 = vadd.f32 0.0, %v6708
      %v6710 = vpop.f32.mrf.mxu0
      %v6711 = vpop.f32.mrf.mxu0
      %v6712 = vadd.f32 0.0, %v6711
      %v6713 = vpop.f32.mrf.mxu0
      %6714 = vmatprep.mubr.bf16.mxu0 0
      %6715 = vmatmul.mubr.bf16.gmra.mxu0 %v6171
      %v6716 = vpop.f32.mrf.mxu0
      %v6717 = vadd.f32 0.0, %v6716
      %v6718 = vpop.f32.mrf.mxu0
      %v6719 = vpop.f32.mrf.mxu0
      %v6720 = vadd.f32 0.0, %v6719
      %v6721 = vpop.f32.mrf.mxu0
      %6722 = vmatprep.mubr.bf16.mxu0 0
      %6723 = vmatmul.mubr.bf16.gmra.mxu0 %v6174
      %v6724 = vpop.f32.mrf.mxu0
      %v6725 = vadd.f32 0.0, %v6724
      %v6726 = vpop.f32.mrf.mxu0
      %v6727 = vpop.f32.mrf.mxu0
      %v6728 = vadd.f32 0.0, %v6727
      %v6729 = vpop.f32.mrf.mxu0
      %6730 = vmatprep.mubr.bf16.mxu0 0
      %6731 = vmatmul.mubr.bf16.gmra.mxu0 %v6177
      %v6732 = vpop.f32.mrf.mxu0
      %v6733 = vadd.f32 0.0, %v6732
      %v6734 = vpop.f32.mrf.mxu0
      %v6735 = vpop.f32.mrf.mxu0
      %v6736 = vadd.f32 0.0, %v6735
      %v6737 = vpop.f32.mrf.mxu0
      %6738 = vmatprep.mubr.bf16.mxu0 0
      %6739 = vmatmul.mubr.bf16.gmra.mxu0 %v6180
      %v6740 = vpop.f32.mrf.mxu0
      %v6741 = vadd.f32 0.0, %v6740
      %v6742 = vpop.f32.mrf.mxu0
      %v6743 = vpop.f32.mrf.mxu0
      %v6744 = vadd.f32 0.0, %v6743
      %v6745 = vpop.f32.mrf.mxu0
      %6746 = vmatprep.mubr.bf16.mxu0 0
      %6747 = vmatmul.mubr.bf16.gmra.mxu0 %v6183
      %v6748 = vpop.f32.mrf.mxu0
      %v6749 = vadd.f32 0.0, %v6748
      %v6750 = vpop.f32.mrf.mxu0
      %v6751 = vpop.f32.mrf.mxu0
      %v6752 = vadd.f32 0.0, %v6751
      %v6753 = vpop.f32.mrf.mxu0
      %6754 = vmatprep.mubr.bf16.mxu0 0
      %6755 = vmatmul.mubr.bf16.gmra.mxu0 %v6186
      %v6756 = vpop.f32.mrf.mxu0
      %v6757 = vadd.f32 0.0, %v6756
      %v6758 = vpop.f32.mrf.mxu0
      %v6759 = vpop.f32.mrf.mxu0
      %v6760 = vadd.f32 0.0, %v6759
      %v6761 = vpop.f32.mrf.mxu0
      %6762 = vmatprep.mubr.bf16.mxu0 0
      %6763 = vmatmul.mubr.bf16.gmra.mxu0 %v6189
      %v6764 = vpop.f32.mrf.mxu0
      %v6765 = vadd.f32 0.0, %v6764
      %v6766 = vpop.f32.mrf.mxu0
      %v6767 = vpop.f32.mrf.mxu0
      %v6768 = vadd.f32 0.0, %v6767
      %v6769 = vpop.f32.mrf.mxu0
      %6770 = vdwg.mxu0
      %v6771 = vadd.f32 %v5224, %v6229
      %v6772 = vadd.f32 %v5225, %v6232
      %v6773 = vadd.f32 %v5226, %v6237
      %v6774 = vadd.f32 %v5227, %v6240
      %v6775 = vadd.f32 %v5228, %v6245
      %v6776 = vadd.f32 %v5229, %v6248
      %v6777 = vadd.f32 %v5230, %v6253
      %v6778 = vadd.f32 %v5231, %v6256
      %v6779 = vadd.f32 %v5232, %v6261
      %v6780 = vadd.f32 %v5233, %v6264
      %v6781 = vadd.f32 %v5234, %v6269
      %v6782 = vadd.f32 %v5235, %v6272
      %v6783 = vadd.f32 %v5236, %v6277
      %v6784 = vadd.f32 %v5237, %v6280
      %v6785 = vadd.f32 %v5238, %v6285
      %v6786 = vadd.f32 %v5239, %v6288
      %v6787 = vadd.f32 %v5240, %v6293
      %v6788 = vadd.f32 %v5241, %v6296
      %v6789 = vadd.f32 %v5242, %v6301
      %v6790 = vadd.f32 %v5243, %v6304
      %v6791 = vadd.f32 %v5244, %v6309
      %v6792 = vadd.f32 %v5245, %v6312
      %v6793 = vadd.f32 %v5246, %v6317
      %v6794 = vadd.f32 %v5247, %v6320
      %v6795 = vadd.f32 %v5248, %v6325
      %v6796 = vadd.f32 %v5249, %v6328
      %v6797 = vadd.f32 %v5250, %v6333
      %v6798 = vadd.f32 %v5251, %v6336
      %v6799 = vadd.f32 %v5252, %v6341
      %v6800 = vadd.f32 %v5253, %v6344
      %v6801 = vadd.f32 %v5254, %v6349
      %v6802 = vadd.f32 %v5255, %v6352
      %v6803 = vadd.f32 %v5256, %v6357
      %v6804 = vadd.f32 %v5257, %v6360
      %v6805 = vadd.f32 %v5258, %v6365
      %v6806 = vadd.f32 %v5259, %v6368
      %v6807 = vadd.f32 %v5260, %v6373
      %v6808 = vadd.f32 %v5261, %v6376
      %v6809 = vadd.f32 %v5262, %v6381
      %v6810 = vadd.f32 %v5263, %v6384
      %v6811 = vadd.f32 %v5264, %v6389
      %v6812 = vadd.f32 %v5265, %v6392
      %v6813 = vadd.f32 %v5266, %v6397
      %v6814 = vadd.f32 %v5267, %v6400
      %v6815 = vadd.f32 %v5268, %v6405
      %v6816 = vadd.f32 %v5269, %v6408
      %v6817 = vadd.f32 %v5270, %v6413
      %v6818 = vadd.f32 %v5271, %v6416
      %v6819 = vadd.f32 %v5272, %v6421
      %v6820 = vadd.f32 %v5273, %v6424
      %v6821 = vadd.f32 %v5274, %v6429
      %v6822 = vadd.f32 %v5275, %v6432
      %v6823 = vadd.f32 %v5276, %v6437
      %v6824 = vadd.f32 %v5277, %v6440
      %v6825 = vadd.f32 %v5278, %v6445
      %v6826 = vadd.f32 %v5279, %v6448
      %v6827 = vadd.f32 %v5280, %v6453
      %v6828 = vadd.f32 %v5281, %v6456
      %v6829 = vadd.f32 %v5282, %v6461
      %v6830 = vadd.f32 %v5283, %v6464
      %v6831 = vadd.f32 %v5284, %v6469
      %v6832 = vadd.f32 %v5285, %v6472
      %v6833 = vadd.f32 %v5286, %v6477
      %v6834 = vadd.f32 %v5287, %v6480
      %v6835 = vadd.f32 %v5288, %v6485
      %v6836 = vadd.f32 %v5289, %v6488
      %v6837 = vadd.f32 %v5290, %v6493
      %v6838 = vadd.f32 %v5291, %v6496
      %v6839 = vadd.f32 %v5292, %v6501
      %v6840 = vadd.f32 %v5293, %v6504
      %v6841 = vadd.f32 %v5294, %v6509
      %v6842 = vadd.f32 %v5295, %v6512
      %v6843 = vadd.f32 %v5296, %v6517
      %v6844 = vadd.f32 %v5297, %v6520
      %v6845 = vadd.f32 %v5298, %v6525
      %v6846 = vadd.f32 %v5299, %v6528
      %v6847 = vadd.f32 %v5300, %v6533
      %v6848 = vadd.f32 %v5301, %v6536
      %v6849 = vadd.f32 %v5302, %v6541
      %v6850 = vadd.f32 %v5303, %v6544
      %v6851 = vadd.f32 %v5304, %v6549
      %v6852 = vadd.f32 %v5305, %v6552
      %v6853 = vadd.f32 %v5306, %v6557
      %v6854 = vadd.f32 %v5307, %v6560
      %v6855 = vadd.f32 %v5308, %v6565
      %v6856 = vadd.f32 %v5309, %v6568
      %v6857 = vadd.f32 %v5310, %v6573
      %v6858 = vadd.f32 %v5311, %v6576
      %v6859 = vadd.f32 %v5312, %v6581
      %v6860 = vadd.f32 %v5313, %v6584
      %v6861 = vadd.f32 %v5314, %v6589
      %v6862 = vadd.f32 %v5315, %v6592
      %v6863 = vadd.f32 %v5316, %v6597
      %v6864 = vadd.f32 %v5317, %v6600
      %v6865 = vadd.f32 %v5318, %v6605
      %v6866 = vadd.f32 %v5319, %v6608
      %v6867 = vadd.f32 %v5320, %v6613
      %v6868 = vadd.f32 %v5321, %v6616
      %v6869 = vadd.f32 %v5322, %v6621
      %v6870 = vadd.f32 %v5323, %v6624
      %v6871 = vadd.f32 %v5324, %v6629
      %v6872 = vadd.f32 %v5325, %v6632
      %v6873 = vadd.f32 %v5326, %v6637
      %v6874 = vadd.f32 %v5327, %v6640
      %v6875 = vadd.f32 %v5328, %v6645
      %v6876 = vadd.f32 %v5329, %v6648
      %v6877 = vadd.f32 %v5330, %v6653
      %v6878 = vadd.f32 %v5331, %v6656
      %v6879 = vadd.f32 %v5332, %v6661
      %v6880 = vadd.f32 %v5333, %v6664
      %v6881 = vadd.f32 %v5334, %v6669
      %v6882 = vadd.f32 %v5335, %v6672
      %v6883 = vadd.f32 %v5336, %v6677
      %v6884 = vadd.f32 %v5337, %v6680
      %v6885 = vadd.f32 %v5338, %v6685
      %v6886 = vadd.f32 %v5339, %v6688
      %v6887 = vadd.f32 %v5340, %v6693
      %v6888 = vadd.f32 %v5341, %v6696
      %v6889 = vadd.f32 %v5342, %v6701
      %v6890 = vadd.f32 %v5343, %v6704
      %v6891 = vadd.f32 %v5344, %v6709
      %v6892 = vadd.f32 %v5345, %v6712
      %v6893 = vadd.f32 %v5346, %v6717
      %v6894 = vadd.f32 %v5347, %v6720
      %v6895 = vadd.f32 %v5348, %v6725
      %v6896 = vadd.f32 %v5349, %v6728
      %v6897 = vadd.f32 %v5350, %v6733
      %v6898 = vadd.f32 %v5351, %v6736
      %v6899 = vadd.f32 %v5352, %v6741
      %v6900 = vadd.f32 %v5353, %v6744
      %v6901 = vadd.f32 %v5354, %v6749
      %v6902 = vadd.f32 %v5355, %v6752
      %v6903 = vadd.f32 %v5356, %v6757
      %v6904 = vadd.f32 %v5357, %v6760
      %v6905 = vadd.f32 %v5358, %v6765
      %v6906 = vadd.f32 %v5359, %v6768
      %v6907 = vld [vmem:[%s206 + $0x10] sm:$0xc]
      %s6908 = scalar_lea.vmem %s210, 20
      %v6909 = vld [vmem:[%s6908] sm:$0xf]
      %v6911 = vunpack.c.l.b16 %v6907
      %v6912 = vpack.c.b16 %v4098, %v6911
      %vm6913 = vcmask 1045504
      %v6914 = vrot.slane %v6912, 2
      %v6915 = vrot.slane %v4235, 2
      %v6916 = vsel %vm6913, %v6914, %v6915
      %v6917 = vrot.slane %v4236, 2
      %v6918 = vsel %vm6913, %v6915, %v6917
      %v6919 = vrot.slane %v4237, 2
      %v6920 = vsel %vm6913, %v6917, %v6919
      %v6921 = vrot.slane %v4238, 2
      %v6922 = vsel %vm6913, %v6919, %v6921
      %v6923 = vrot.slane %v4239, 2
      %v6924 = vsel %vm6913, %v6921, %v6923
      %v6925 = vrot.slane %v4240, 2
      %v6926 = vsel %vm6913, %v6923, %v6925
      %v6927 = vrot.slane %v4241, 2
      %v6928 = vsel %vm6913, %v6925, %v6927
      %v6929 = vrot.slane %v4242, 2
      %v6930 = vsel %vm6913, %v6927, %v6929
      %v6931 = vrot.slane %v4243, 2
      %v6932 = vsel %vm6913, %v6929, %v6931
      %v6933 = vrot.slane %v4244, 2
      %v6934 = vsel %vm6913, %v6931, %v6933
      %v6935 = vrot.slane %v4245, 2
      %v6936 = vsel %vm6913, %v6933, %v6935
      %v6937 = vrot.slane %v4246, 2
      %v6938 = vsel %vm6913, %v6935, %v6937
      %v6939 = vrot.slane %v4247, 2
      %v6940 = vsel %vm6913, %v6937, %v6939
      %v6941 = vrot.slane %v4248, 2
      %v6942 = vsel %vm6913, %v6939, %v6941
      %v6943 = vrot.slane %v4249, 2
      %v6944 = vsel %vm6913, %v6941, %v6943
      %v6945 = vrot.slane %v4250, 2
      %v6946 = vsel %vm6913, %v6943, %v6945
      %v6947 = vrot.slane %v4251, 2
      %v6948 = vsel %vm6913, %v6945, %v6947
      %v6949 = vrot.slane %v4252, 2
      %v6950 = vsel %vm6913, %v6947, %v6949
      %v6951 = vrot.slane %v4253, 2
      %v6952 = vsel %vm6913, %v6949, %v6951
      %v6953 = vrot.slane %v4254, 2
      %v6954 = vsel %vm6913, %v6951, %v6953
      %v6955 = vrot.slane %v4255, 2
      %v6956 = vsel %vm6913, %v6953, %v6955
      %v6957 = vrot.slane %v4256, 2
      %v6958 = vsel %vm6913, %v6955, %v6957
      %v6959 = vrot.slane %v4257, 2
      %v6960 = vsel %vm6913, %v6957, %v6959
      %v6961 = vrot.slane %v4258, 2
      %v6962 = vsel %vm6913, %v6959, %v6961
      %v6963 = vrot.slane %v4259, 2
      %v6964 = vsel %vm6913, %v6961, %v6963
      %v6965 = vrot.slane %v4260, 2
      %v6966 = vsel %vm6913, %v6963, %v6965
      %v6967 = vrot.slane %v4261, 2
      %v6968 = vsel %vm6913, %v6965, %v6967
      %v6969 = vrot.slane %v4262, 2
      %v6970 = vsel %vm6913, %v6967, %v6969
      %v6971 = vrot.slane %v4263, 2
      %v6972 = vsel %vm6913, %v6969, %v6971
      %v6973 = vrot.slane %v4264, 2
      %v6974 = vsel %vm6913, %v6971, %v6973
      %v6975 = vrot.slane %v4265, 2
      %v6976 = vsel %vm6913, %v6973, %v6975
      %v6977 = vrot.slane %v4266, 2
      %v6978 = vsel %vm6913, %v6975, %v6977
      %v6979 = vrot.slane %v4267, 2
      %v6980 = vsel %vm6913, %v6977, %v6979
      %v6981 = vrot.slane %v4268, 2
      %v6982 = vsel %vm6913, %v6979, %v6981
      %v6983 = vrot.slane %v4269, 2
      %v6984 = vsel %vm6913, %v6981, %v6983
      %v6985 = vrot.slane %v4270, 2
      %v6986 = vsel %vm6913, %v6983, %v6985
      %v6987 = vrot.slane %v4271, 2
      %v6988 = vsel %vm6913, %v6985, %v6987
      %v6989 = vrot.slane %v4272, 2
      %v6990 = vsel %vm6913, %v6987, %v6989
      %v6991 = vrot.slane %v4273, 2
      %v6992 = vsel %vm6913, %v6989, %v6991
      %v6993 = vrot.slane %v4274, 2
      %v6994 = vsel %vm6913, %v6991, %v6993
      %v6995 = vrot.slane %v4275, 2
      %v6996 = vsel %vm6913, %v6993, %v6995
      %v6997 = vrot.slane %v4276, 2
      %v6998 = vsel %vm6913, %v6995, %v6997
      %v6999 = vrot.slane %v4277, 2
      %v7000 = vsel %vm6913, %v6997, %v6999
      %v7001 = vrot.slane %v4278, 2
      %v7002 = vsel %vm6913, %v6999, %v7001
      %v7003 = vrot.slane %v4279, 2
      %v7004 = vsel %vm6913, %v7001, %v7003
      %v7005 = vrot.slane %v4280, 2
      %v7006 = vsel %vm6913, %v7003, %v7005
      %v7007 = vrot.slane %v4281, 2
      %v7008 = vsel %vm6913, %v7005, %v7007
      %v7009 = vrot.slane %v4282, 2
      %v7010 = vsel %vm6913, %v7007, %v7009
      %v7011 = vrot.slane %v4283, 2
      %v7012 = vsel %vm6913, %v7009, %v7011
      %v7013 = vrot.slane %v4284, 2
      %v7014 = vsel %vm6913, %v7011, %v7013
      %v7015 = vrot.slane %v4285, 2
      %v7016 = vsel %vm6913, %v7013, %v7015
      %v7017 = vrot.slane %v4286, 2
      %v7018 = vsel %vm6913, %v7015, %v7017
      %v7019 = vrot.slane %v4287, 2
      %v7020 = vsel %vm6913, %v7017, %v7019
      %v7021 = vrot.slane %v4288, 2
      %v7022 = vsel %vm6913, %v7019, %v7021
      %v7023 = vrot.slane %v4289, 2
      %v7024 = vsel %vm6913, %v7021, %v7023
      %v7025 = vrot.slane %v4290, 2
      %v7026 = vsel %vm6913, %v7023, %v7025
      %v7027 = vrot.slane %v4291, 2
      %v7028 = vsel %vm6913, %v7025, %v7027
      %v7029 = vrot.slane %v4292, 2
      %v7030 = vsel %vm6913, %v7027, %v7029
      %v7031 = vrot.slane %v4293, 2
      %v7032 = vsel %vm6913, %v7029, %v7031
      %v7033 = vrot.slane %v4294, 2
      %v7034 = vsel %vm6913, %v7031, %v7033
      %v7035 = vrot.slane %v4295, 2
      %v7036 = vsel %vm6913, %v7033, %v7035
      %v7037 = vrot.slane %v4296, 2
      %v7038 = vsel %vm6913, %v7035, %v7037
      %v7039 = vrot.slane %v4297, 2
      %v7040 = vsel %vm6913, %v7037, %v7039
      %v7041 = vrot.slane %v4298, 2
      %v7042 = vsel %vm6913, %v7039, %v7041
      %v7043 = vrot.slane %v4299, 2
      %v7044 = vsel %vm6913, %v7041, %v7043
      %v7045 = vrot.slane %v4300, 2
      %v7046 = vsel %vm6913, %v7043, %v7045
      %v7047 = vrot.slane %v4301, 2
      %v7048 = vsel %vm6913, %v7045, %v7047
      %v7049 = vrot.slane %v5365, 2
      %v7050 = vsel %vm6913, %v7047, %v7049
      %v7052 = vsel %vm1255, %v6916, 0
      %v7055 = vsel %vm1255, %v6918, 0
      %v7058 = vsel %vm1255, %v6920, 0
      %v7061 = vsel %vm1255, %v6922, 0
      %v7064 = vsel %vm1255, %v6924, 0
      %v7067 = vsel %vm1255, %v6926, 0
      %v7070 = vsel %vm1255, %v6928, 0
      %v7073 = vsel %vm1255, %v6930, 0
      %v7076 = vsel %vm1255, %v6932, 0
      %v7079 = vsel %vm1255, %v6934, 0
      %v7082 = vsel %vm1255, %v6936, 0
      %v7085 = vsel %vm1255, %v6938, 0
      %v7088 = vsel %vm1255, %v6940, 0
      %v7091 = vsel %vm1255, %v6942, 0
      %v7094 = vsel %vm1255, %v6944, 0
      %v7097 = vsel %vm1255, %v6946, 0
      %v7100 = vsel %vm1255, %v6948, 0
      %v7103 = vsel %vm1255, %v6950, 0
      %v7106 = vsel %vm1255, %v6952, 0
      %v7109 = vsel %vm1255, %v6954, 0
      %v7112 = vsel %vm1255, %v6956, 0
      %v7115 = vsel %vm1255, %v6958, 0
      %v7118 = vsel %vm1255, %v6960, 0
      %v7121 = vsel %vm1255, %v6962, 0
      %v7124 = vsel %vm1255, %v6964, 0
      %v7127 = vsel %vm1255, %v6966, 0
      %v7130 = vsel %vm1255, %v6968, 0
      %v7133 = vsel %vm1255, %v6970, 0
      %v7136 = vsel %vm1255, %v6972, 0
      %v7139 = vsel %vm1255, %v6974, 0
      %v7142 = vsel %vm1255, %v6976, 0
      %v7145 = vsel %vm1255, %v6978, 0
      %v7148 = vsel %vm1255, %v6980, 0
      %v7151 = vsel %vm1255, %v6982, 0
      %v7154 = vsel %vm1255, %v6984, 0
      %v7157 = vsel %vm1255, %v6986, 0
      %v7160 = vsel %vm1255, %v6988, 0
      %v7163 = vsel %vm1255, %v6990, 0
      %v7166 = vsel %vm1255, %v6992, 0
      %v7169 = vsel %vm1255, %v6994, 0
      %v7172 = vsel %vm1255, %v6996, 0
      %v7175 = vsel %vm1255, %v6998, 0
      %v7178 = vsel %vm1255, %v7000, 0
      %v7181 = vsel %vm1255, %v7002, 0
      %v7184 = vsel %vm1255, %v7004, 0
      %v7187 = vsel %vm1255, %v7006, 0
      %v7190 = vsel %vm1255, %v7008, 0
      %v7193 = vsel %vm1255, %v7010, 0
      %v7196 = vsel %vm1255, %v7012, 0
      %v7199 = vsel %vm1255, %v7014, 0
      %v7202 = vsel %vm1255, %v7016, 0
      %v7205 = vsel %vm1255, %v7018, 0
      %v7208 = vsel %vm1255, %v7020, 0
      %v7211 = vsel %vm1255, %v7022, 0
      %v7214 = vsel %vm1255, %v7024, 0
      %v7217 = vsel %vm1255, %v7026, 0
      %v7220 = vsel %vm1255, %v7028, 0
      %v7223 = vsel %vm1255, %v7030, 0
      %v7226 = vsel %vm1255, %v7032, 0
      %v7229 = vsel %vm1255, %v7034, 0
      %v7232 = vsel %vm1255, %v7036, 0
      %v7235 = vsel %vm1255, %v7038, 0
      %v7238 = vsel %vm1255, %v7040, 0
      %v7241 = vsel %vm1255, %v7042, 0
      %v7244 = vsel %vm1255, %v7044, 0
      %v7247 = vsel %vm1255, %v7046, 0
      %v7250 = vsel %vm1255, %v7048, 0
      %v7253 = vsel %vm1255, %v7050, 0
      %v7256 = vsel %vm1460, %v6909, 0
      %7258 = vmatprep.subr.bf16.mxu0 0
      %7259 = vmatpush1.bf16.msra.mxu0 0
      %7260 = vmatprep.subr.bf16.mxu0 0
      %7261 = vmatpush1.bf16.msra.mxu0 0
      %7262 = vmatprep.subr.bf16.mxu0 0
      %7263 = vmatpush1.bf16.msra.mxu0 0
      %7264 = vmatprep.subr.bf16.mxu0 0
      %7265 = vmatpush1.bf16.msra.mxu0 0
      %7266 = vmatprep.subr.bf16.mxu0 0
      %7267 = vmatpush1.bf16.msra.mxu0 0
      %7268 = vmatprep.subr.bf16.mxu0 0
      %7269 = vmatpush1.bf16.msra.mxu0 0
      %7270 = vmatprep.subr.bf16.mxu0 0
      %7271 = vmatpush1.bf16.msra.mxu0 0
      %7272 = vmatprep.subr.bf16.mxu0 0
      %7273 = vmatpush1.bf16.msra.mxu0 %v7256
      %7274 = vmatprep.subr.bf16.mxu0 0
      %7275 = vmatpush2.bf16.msra.mxu0 0
      %7276 = vmatprep.subr.bf16.mxu0 0
      %7277 = vmatpush2.bf16.msra.mxu0 0
      %7278 = vmatprep.subr.bf16.mxu0 0
      %7279 = vmatpush2.bf16.msra.mxu0 0
      %7280 = vmatprep.subr.bf16.mxu0 0
      %7281 = vmatpush2.bf16.msra.mxu0 0
      %7282 = vmatprep.subr.bf16.mxu0 0
      %7283 = vmatpush2.bf16.msra.mxu0 0
      %7284 = vmatprep.subr.bf16.mxu0 0
      %7285 = vmatpush2.bf16.msra.mxu0 0
      %7286 = vmatprep.subr.bf16.mxu0 0
      %7287 = vmatpush2.bf16.msra.mxu0 0
      %7288 = vmatprep.subr.bf16.mxu0 0
      %7289 = vmatpush2.bf16.msra.mxu0 0
      %7290 = vmatprep.mubr.bf16.mxu0 0
      %7291 = vmatmul.mubr.bf16.gmra.mxu0 %v7052
      %v7292 = vpop.f32.mrf.mxu0
      %v7293 = vadd.f32 0.0, %v7292
      %v7294 = vpop.f32.mrf.mxu0
      %v7295 = vpop.f32.mrf.mxu0
      %v7296 = vadd.f32 0.0, %v7295
      %v7297 = vpop.f32.mrf.mxu0
      %7298 = vmatprep.mubr.bf16.mxu0 0
      %7299 = vmatmul.mubr.bf16.gmra.mxu0 %v7055
      %v7300 = vpop.f32.mrf.mxu0
      %v7301 = vadd.f32 0.0, %v7300
      %v7302 = vpop.f32.mrf.mxu0
      %v7303 = vpop.f32.mrf.mxu0
      %v7304 = vadd.f32 0.0, %v7303
      %v7305 = vpop.f32.mrf.mxu0
      %7306 = vmatprep.mubr.bf16.mxu0 0
      %7307 = vmatmul.mubr.bf16.gmra.mxu0 %v7058
      %v7308 = vpop.f32.mrf.mxu0
      %v7309 = vadd.f32 0.0, %v7308
      %v7310 = vpop.f32.mrf.mxu0
      %v7311 = vpop.f32.mrf.mxu0
      %v7312 = vadd.f32 0.0, %v7311
      %v7313 = vpop.f32.mrf.mxu0
      %7314 = vmatprep.mubr.bf16.mxu0 0
      %7315 = vmatmul.mubr.bf16.gmra.mxu0 %v7061
      %v7316 = vpop.f32.mrf.mxu0
      %v7317 = vadd.f32 0.0, %v7316
      %v7318 = vpop.f32.mrf.mxu0
      %v7319 = vpop.f32.mrf.mxu0
      %v7320 = vadd.f32 0.0, %v7319
      %v7321 = vpop.f32.mrf.mxu0
      %7322 = vmatprep.mubr.bf16.mxu0 0
      %7323 = vmatmul.mubr.bf16.gmra.mxu0 %v7064
      %v7324 = vpop.f32.mrf.mxu0
      %v7325 = vadd.f32 0.0, %v7324
      %v7326 = vpop.f32.mrf.mxu0
      %v7327 = vpop.f32.mrf.mxu0
      %v7328 = vadd.f32 0.0, %v7327
      %v7329 = vpop.f32.mrf.mxu0
      %7330 = vmatprep.mubr.bf16.mxu0 0
      %7331 = vmatmul.mubr.bf16.gmra.mxu0 %v7067
      %v7332 = vpop.f32.mrf.mxu0
      %v7333 = vadd.f32 0.0, %v7332
      %v7334 = vpop.f32.mrf.mxu0
      %v7335 = vpop.f32.mrf.mxu0
      %v7336 = vadd.f32 0.0, %v7335
      %v7337 = vpop.f32.mrf.mxu0
      %7338 = vmatprep.mubr.bf16.mxu0 0
      %7339 = vmatmul.mubr.bf16.gmra.mxu0 %v7070
      %v7340 = vpop.f32.mrf.mxu0
      %v7341 = vadd.f32 0.0, %v7340
      %v7342 = vpop.f32.mrf.mxu0
      %v7343 = vpop.f32.mrf.mxu0
      %v7344 = vadd.f32 0.0, %v7343
      %v7345 = vpop.f32.mrf.mxu0
      %7346 = vmatprep.mubr.bf16.mxu0 0
      %7347 = vmatmul.mubr.bf16.gmra.mxu0 %v7073
      %v7348 = vpop.f32.mrf.mxu0
      %v7349 = vadd.f32 0.0, %v7348
      %v7350 = vpop.f32.mrf.mxu0
      %v7351 = vpop.f32.mrf.mxu0
      %v7352 = vadd.f32 0.0, %v7351
      %v7353 = vpop.f32.mrf.mxu0
      %7354 = vmatprep.mubr.bf16.mxu0 0
      %7355 = vmatmul.mubr.bf16.gmra.mxu0 %v7076
      %v7356 = vpop.f32.mrf.mxu0
      %v7357 = vadd.f32 0.0, %v7356
      %v7358 = vpop.f32.mrf.mxu0
      %v7359 = vpop.f32.mrf.mxu0
      %v7360 = vadd.f32 0.0, %v7359
      %v7361 = vpop.f32.mrf.mxu0
      %7362 = vmatprep.mubr.bf16.mxu0 0
      %7363 = vmatmul.mubr.bf16.gmra.mxu0 %v7079
      %v7364 = vpop.f32.mrf.mxu0
      %v7365 = vadd.f32 0.0, %v7364
      %v7366 = vpop.f32.mrf.mxu0
      %v7367 = vpop.f32.mrf.mxu0
      %v7368 = vadd.f32 0.0, %v7367
      %v7369 = vpop.f32.mrf.mxu0
      %7370 = vmatprep.mubr.bf16.mxu0 0
      %7371 = vmatmul.mubr.bf16.gmra.mxu0 %v7082
      %v7372 = vpop.f32.mrf.mxu0
      %v7373 = vadd.f32 0.0, %v7372
      %v7374 = vpop.f32.mrf.mxu0
      %v7375 = vpop.f32.mrf.mxu0
      %v7376 = vadd.f32 0.0, %v7375
      %v7377 = vpop.f32.mrf.mxu0
      %7378 = vmatprep.mubr.bf16.mxu0 0
      %7379 = vmatmul.mubr.bf16.gmra.mxu0 %v7085
      %v7380 = vpop.f32.mrf.mxu0
      %v7381 = vadd.f32 0.0, %v7380
      %v7382 = vpop.f32.mrf.mxu0
      %v7383 = vpop.f32.mrf.mxu0
      %v7384 = vadd.f32 0.0, %v7383
      %v7385 = vpop.f32.mrf.mxu0
      %7386 = vmatprep.mubr.bf16.mxu0 0
      %7387 = vmatmul.mubr.bf16.gmra.mxu0 %v7088
      %v7388 = vpop.f32.mrf.mxu0
      %v7389 = vadd.f32 0.0, %v7388
      %v7390 = vpop.f32.mrf.mxu0
      %v7391 = vpop.f32.mrf.mxu0
      %v7392 = vadd.f32 0.0, %v7391
      %v7393 = vpop.f32.mrf.mxu0
      %7394 = vmatprep.mubr.bf16.mxu0 0
      %7395 = vmatmul.mubr.bf16.gmra.mxu0 %v7091
      %v7396 = vpop.f32.mrf.mxu0
      %v7397 = vadd.f32 0.0, %v7396
      %v7398 = vpop.f32.mrf.mxu0
      %v7399 = vpop.f32.mrf.mxu0
      %v7400 = vadd.f32 0.0, %v7399
      %v7401 = vpop.f32.mrf.mxu0
      %7402 = vmatprep.mubr.bf16.mxu0 0
      %7403 = vmatmul.mubr.bf16.gmra.mxu0 %v7094
      %v7404 = vpop.f32.mrf.mxu0
      %v7405 = vadd.f32 0.0, %v7404
      %v7406 = vpop.f32.mrf.mxu0
      %v7407 = vpop.f32.mrf.mxu0
      %v7408 = vadd.f32 0.0, %v7407
      %v7409 = vpop.f32.mrf.mxu0
      %7410 = vmatprep.mubr.bf16.mxu0 0
      %7411 = vmatmul.mubr.bf16.gmra.mxu0 %v7097
      %v7412 = vpop.f32.mrf.mxu0
      %v7413 = vadd.f32 0.0, %v7412
      %v7414 = vpop.f32.mrf.mxu0
      %v7415 = vpop.f32.mrf.mxu0
      %v7416 = vadd.f32 0.0, %v7415
      %v7417 = vpop.f32.mrf.mxu0
      %7418 = vmatprep.mubr.bf16.mxu0 0
      %7419 = vmatmul.mubr.bf16.gmra.mxu0 %v7100
      %v7420 = vpop.f32.mrf.mxu0
      %v7421 = vadd.f32 0.0, %v7420
      %v7422 = vpop.f32.mrf.mxu0
      %v7423 = vpop.f32.mrf.mxu0
      %v7424 = vadd.f32 0.0, %v7423
      %v7425 = vpop.f32.mrf.mxu0
      %7426 = vmatprep.mubr.bf16.mxu0 0
      %7427 = vmatmul.mubr.bf16.gmra.mxu0 %v7103
      %v7428 = vpop.f32.mrf.mxu0
      %v7429 = vadd.f32 0.0, %v7428
      %v7430 = vpop.f32.mrf.mxu0
      %v7431 = vpop.f32.mrf.mxu0
      %v7432 = vadd.f32 0.0, %v7431
      %v7433 = vpop.f32.mrf.mxu0
      %7434 = vmatprep.mubr.bf16.mxu0 0
      %7435 = vmatmul.mubr.bf16.gmra.mxu0 %v7106
      %v7436 = vpop.f32.mrf.mxu0
      %v7437 = vadd.f32 0.0, %v7436
      %v7438 = vpop.f32.mrf.mxu0
      %v7439 = vpop.f32.mrf.mxu0
      %v7440 = vadd.f32 0.0, %v7439
      %v7441 = vpop.f32.mrf.mxu0
      %7442 = vmatprep.mubr.bf16.mxu0 0
      %7443 = vmatmul.mubr.bf16.gmra.mxu0 %v7109
      %v7444 = vpop.f32.mrf.mxu0
      %v7445 = vadd.f32 0.0, %v7444
      %v7446 = vpop.f32.mrf.mxu0
      %v7447 = vpop.f32.mrf.mxu0
      %v7448 = vadd.f32 0.0, %v7447
      %v7449 = vpop.f32.mrf.mxu0
      %7450 = vmatprep.mubr.bf16.mxu0 0
      %7451 = vmatmul.mubr.bf16.gmra.mxu0 %v7112
      %v7452 = vpop.f32.mrf.mxu0
      %v7453 = vadd.f32 0.0, %v7452
      %v7454 = vpop.f32.mrf.mxu0
      %v7455 = vpop.f32.mrf.mxu0
      %v7456 = vadd.f32 0.0, %v7455
      %v7457 = vpop.f32.mrf.mxu0
      %7458 = vmatprep.mubr.bf16.mxu0 0
      %7459 = vmatmul.mubr.bf16.gmra.mxu0 %v7115
      %v7460 = vpop.f32.mrf.mxu0
      %v7461 = vadd.f32 0.0, %v7460
      %v7462 = vpop.f32.mrf.mxu0
      %v7463 = vpop.f32.mrf.mxu0
      %v7464 = vadd.f32 0.0, %v7463
      %v7465 = vpop.f32.mrf.mxu0
      %7466 = vmatprep.mubr.bf16.mxu0 0
      %7467 = vmatmul.mubr.bf16.gmra.mxu0 %v7118
      %v7468 = vpop.f32.mrf.mxu0
      %v7469 = vadd.f32 0.0, %v7468
      %v7470 = vpop.f32.mrf.mxu0
      %v7471 = vpop.f32.mrf.mxu0
      %v7472 = vadd.f32 0.0, %v7471
      %v7473 = vpop.f32.mrf.mxu0
      %7474 = vmatprep.mubr.bf16.mxu0 0
      %7475 = vmatmul.mubr.bf16.gmra.mxu0 %v7121
      %v7476 = vpop.f32.mrf.mxu0
      %v7477 = vadd.f32 0.0, %v7476
      %v7478 = vpop.f32.mrf.mxu0
      %v7479 = vpop.f32.mrf.mxu0
      %v7480 = vadd.f32 0.0, %v7479
      %v7481 = vpop.f32.mrf.mxu0
      %7482 = vmatprep.mubr.bf16.mxu0 0
      %7483 = vmatmul.mubr.bf16.gmra.mxu0 %v7124
      %v7484 = vpop.f32.mrf.mxu0
      %v7485 = vadd.f32 0.0, %v7484
      %v7486 = vpop.f32.mrf.mxu0
      %v7487 = vpop.f32.mrf.mxu0
      %v7488 = vadd.f32 0.0, %v7487
      %v7489 = vpop.f32.mrf.mxu0
      %7490 = vmatprep.mubr.bf16.mxu0 0
      %7491 = vmatmul.mubr.bf16.gmra.mxu0 %v7127
      %v7492 = vpop.f32.mrf.mxu0
      %v7493 = vadd.f32 0.0, %v7492
      %v7494 = vpop.f32.mrf.mxu0
      %v7495 = vpop.f32.mrf.mxu0
      %v7496 = vadd.f32 0.0, %v7495
      %v7497 = vpop.f32.mrf.mxu0
      %7498 = vmatprep.mubr.bf16.mxu0 0
      %7499 = vmatmul.mubr.bf16.gmra.mxu0 %v7130
      %v7500 = vpop.f32.mrf.mxu0
      %v7501 = vadd.f32 0.0, %v7500
      %v7502 = vpop.f32.mrf.mxu0
      %v7503 = vpop.f32.mrf.mxu0
      %v7504 = vadd.f32 0.0, %v7503
      %v7505 = vpop.f32.mrf.mxu0
      %7506 = vmatprep.mubr.bf16.mxu0 0
      %7507 = vmatmul.mubr.bf16.gmra.mxu0 %v7133
      %v7508 = vpop.f32.mrf.mxu0
      %v7509 = vadd.f32 0.0, %v7508
      %v7510 = vpop.f32.mrf.mxu0
      %v7511 = vpop.f32.mrf.mxu0
      %v7512 = vadd.f32 0.0, %v7511
      %v7513 = vpop.f32.mrf.mxu0
      %7514 = vmatprep.mubr.bf16.mxu0 0
      %7515 = vmatmul.mubr.bf16.gmra.mxu0 %v7136
      %v7516 = vpop.f32.mrf.mxu0
      %v7517 = vadd.f32 0.0, %v7516
      %v7518 = vpop.f32.mrf.mxu0
      %v7519 = vpop.f32.mrf.mxu0
      %v7520 = vadd.f32 0.0, %v7519
      %v7521 = vpop.f32.mrf.mxu0
      %7522 = vmatprep.mubr.bf16.mxu0 0
      %7523 = vmatmul.mubr.bf16.gmra.mxu0 %v7139
      %v7524 = vpop.f32.mrf.mxu0
      %v7525 = vadd.f32 0.0, %v7524
      %v7526 = vpop.f32.mrf.mxu0
      %v7527 = vpop.f32.mrf.mxu0
      %v7528 = vadd.f32 0.0, %v7527
      %v7529 = vpop.f32.mrf.mxu0
      %7530 = vmatprep.mubr.bf16.mxu0 0
      %7531 = vmatmul.mubr.bf16.gmra.mxu0 %v7142
      %v7532 = vpop.f32.mrf.mxu0
      %v7533 = vadd.f32 0.0, %v7532
      %v7534 = vpop.f32.mrf.mxu0
      %v7535 = vpop.f32.mrf.mxu0
      %v7536 = vadd.f32 0.0, %v7535
      %v7537 = vpop.f32.mrf.mxu0
      %7538 = vmatprep.mubr.bf16.mxu0 0
      %7539 = vmatmul.mubr.bf16.gmra.mxu0 %v7145
      %v7540 = vpop.f32.mrf.mxu0
      %v7541 = vadd.f32 0.0, %v7540
      %v7542 = vpop.f32.mrf.mxu0
      %v7543 = vpop.f32.mrf.mxu0
      %v7544 = vadd.f32 0.0, %v7543
      %v7545 = vpop.f32.mrf.mxu0
      %7546 = vmatprep.mubr.bf16.mxu0 0
      %7547 = vmatmul.mubr.bf16.gmra.mxu0 %v7148
      %v7548 = vpop.f32.mrf.mxu0
      %v7549 = vadd.f32 0.0, %v7548
      %v7550 = vpop.f32.mrf.mxu0
      %v7551 = vpop.f32.mrf.mxu0
      %v7552 = vadd.f32 0.0, %v7551
      %v7553 = vpop.f32.mrf.mxu0
      %7554 = vmatprep.mubr.bf16.mxu0 0
      %7555 = vmatmul.mubr.bf16.gmra.mxu0 %v7151
      %v7556 = vpop.f32.mrf.mxu0
      %v7557 = vadd.f32 0.0, %v7556
      %v7558 = vpop.f32.mrf.mxu0
      %v7559 = vpop.f32.mrf.mxu0
      %v7560 = vadd.f32 0.0, %v7559
      %v7561 = vpop.f32.mrf.mxu0
      %7562 = vmatprep.mubr.bf16.mxu0 0
      %7563 = vmatmul.mubr.bf16.gmra.mxu0 %v7154
      %v7564 = vpop.f32.mrf.mxu0
      %v7565 = vadd.f32 0.0, %v7564
      %v7566 = vpop.f32.mrf.mxu0
      %v7567 = vpop.f32.mrf.mxu0
      %v7568 = vadd.f32 0.0, %v7567
      %v7569 = vpop.f32.mrf.mxu0
      %7570 = vmatprep.mubr.bf16.mxu0 0
      %7571 = vmatmul.mubr.bf16.gmra.mxu0 %v7157
      %v7572 = vpop.f32.mrf.mxu0
      %v7573 = vadd.f32 0.0, %v7572
      %v7574 = vpop.f32.mrf.mxu0
      %v7575 = vpop.f32.mrf.mxu0
      %v7576 = vadd.f32 0.0, %v7575
      %v7577 = vpop.f32.mrf.mxu0
      %7578 = vmatprep.mubr.bf16.mxu0 0
      %7579 = vmatmul.mubr.bf16.gmra.mxu0 %v7160
      %v7580 = vpop.f32.mrf.mxu0
      %v7581 = vadd.f32 0.0, %v7580
      %v7582 = vpop.f32.mrf.mxu0
      %v7583 = vpop.f32.mrf.mxu0
      %v7584 = vadd.f32 0.0, %v7583
      %v7585 = vpop.f32.mrf.mxu0
      %7586 = vmatprep.mubr.bf16.mxu0 0
      %7587 = vmatmul.mubr.bf16.gmra.mxu0 %v7163
      %v7588 = vpop.f32.mrf.mxu0
      %v7589 = vadd.f32 0.0, %v7588
      %v7590 = vpop.f32.mrf.mxu0
      %v7591 = vpop.f32.mrf.mxu0
      %v7592 = vadd.f32 0.0, %v7591
      %v7593 = vpop.f32.mrf.mxu0
      %7594 = vmatprep.mubr.bf16.mxu0 0
      %7595 = vmatmul.mubr.bf16.gmra.mxu0 %v7166
      %v7596 = vpop.f32.mrf.mxu0
      %v7597 = vadd.f32 0.0, %v7596
      %v7598 = vpop.f32.mrf.mxu0
      %v7599 = vpop.f32.mrf.mxu0
      %v7600 = vadd.f32 0.0, %v7599
      %v7601 = vpop.f32.mrf.mxu0
      %7602 = vmatprep.mubr.bf16.mxu0 0
      %7603 = vmatmul.mubr.bf16.gmra.mxu0 %v7169
      %v7604 = vpop.f32.mrf.mxu0
      %v7605 = vadd.f32 0.0, %v7604
      %v7606 = vpop.f32.mrf.mxu0
      %v7607 = vpop.f32.mrf.mxu0
      %v7608 = vadd.f32 0.0, %v7607
      %v7609 = vpop.f32.mrf.mxu0
      %7610 = vmatprep.mubr.bf16.mxu0 0
      %7611 = vmatmul.mubr.bf16.gmra.mxu0 %v7172
      %v7612 = vpop.f32.mrf.mxu0
      %v7613 = vadd.f32 0.0, %v7612
      %v7614 = vpop.f32.mrf.mxu0
      %v7615 = vpop.f32.mrf.mxu0
      %v7616 = vadd.f32 0.0, %v7615
      %v7617 = vpop.f32.mrf.mxu0
      %7618 = vmatprep.mubr.bf16.mxu0 0
      %7619 = vmatmul.mubr.bf16.gmra.mxu0 %v7175
      %v7620 = vpop.f32.mrf.mxu0
      %v7621 = vadd.f32 0.0, %v7620
      %v7622 = vpop.f32.mrf.mxu0
      %v7623 = vpop.f32.mrf.mxu0
      %v7624 = vadd.f32 0.0, %v7623
      %v7625 = vpop.f32.mrf.mxu0
      %7626 = vmatprep.mubr.bf16.mxu0 0
      %7627 = vmatmul.mubr.bf16.gmra.mxu0 %v7178
      %v7628 = vpop.f32.mrf.mxu0
      %v7629 = vadd.f32 0.0, %v7628
      %v7630 = vpop.f32.mrf.mxu0
      %v7631 = vpop.f32.mrf.mxu0
      %v7632 = vadd.f32 0.0, %v7631
      %v7633 = vpop.f32.mrf.mxu0
      %7634 = vmatprep.mubr.bf16.mxu0 0
      %7635 = vmatmul.mubr.bf16.gmra.mxu0 %v7181
      %v7636 = vpop.f32.mrf.mxu0
      %v7637 = vadd.f32 0.0, %v7636
      %v7638 = vpop.f32.mrf.mxu0
      %v7639 = vpop.f32.mrf.mxu0
      %v7640 = vadd.f32 0.0, %v7639
      %v7641 = vpop.f32.mrf.mxu0
      %7642 = vmatprep.mubr.bf16.mxu0 0
      %7643 = vmatmul.mubr.bf16.gmra.mxu0 %v7184
      %v7644 = vpop.f32.mrf.mxu0
      %v7645 = vadd.f32 0.0, %v7644
      %v7646 = vpop.f32.mrf.mxu0
      %v7647 = vpop.f32.mrf.mxu0
      %v7648 = vadd.f32 0.0, %v7647
      %v7649 = vpop.f32.mrf.mxu0
      %7650 = vmatprep.mubr.bf16.mxu0 0
      %7651 = vmatmul.mubr.bf16.gmra.mxu0 %v7187
      %v7652 = vpop.f32.mrf.mxu0
      %v7653 = vadd.f32 0.0, %v7652
      %v7654 = vpop.f32.mrf.mxu0
      %v7655 = vpop.f32.mrf.mxu0
      %v7656 = vadd.f32 0.0, %v7655
      %v7657 = vpop.f32.mrf.mxu0
      %7658 = vmatprep.mubr.bf16.mxu0 0
      %7659 = vmatmul.mubr.bf16.gmra.mxu0 %v7190
      %v7660 = vpop.f32.mrf.mxu0
      %v7661 = vadd.f32 0.0, %v7660
      %v7662 = vpop.f32.mrf.mxu0
      %v7663 = vpop.f32.mrf.mxu0
      %v7664 = vadd.f32 0.0, %v7663
      %v7665 = vpop.f32.mrf.mxu0
      %7666 = vmatprep.mubr.bf16.mxu0 0
      %7667 = vmatmul.mubr.bf16.gmra.mxu0 %v7193
      %v7668 = vpop.f32.mrf.mxu0
      %v7669 = vadd.f32 0.0, %v7668
      %v7670 = vpop.f32.mrf.mxu0
      %v7671 = vpop.f32.mrf.mxu0
      %v7672 = vadd.f32 0.0, %v7671
      %v7673 = vpop.f32.mrf.mxu0
      %7674 = vmatprep.mubr.bf16.mxu0 0
      %7675 = vmatmul.mubr.bf16.gmra.mxu0 %v7196
      %v7676 = vpop.f32.mrf.mxu0
      %v7677 = vadd.f32 0.0, %v7676
      %v7678 = vpop.f32.mrf.mxu0
      %v7679 = vpop.f32.mrf.mxu0
      %v7680 = vadd.f32 0.0, %v7679
      %v7681 = vpop.f32.mrf.mxu0
      %7682 = vmatprep.mubr.bf16.mxu0 0
      %7683 = vmatmul.mubr.bf16.gmra.mxu0 %v7199
      %v7684 = vpop.f32.mrf.mxu0
      %v7685 = vadd.f32 0.0, %v7684
      %v7686 = vpop.f32.mrf.mxu0
      %v7687 = vpop.f32.mrf.mxu0
      %v7688 = vadd.f32 0.0, %v7687
      %v7689 = vpop.f32.mrf.mxu0
      %7690 = vmatprep.mubr.bf16.mxu0 0
      %7691 = vmatmul.mubr.bf16.gmra.mxu0 %v7202
      %v7692 = vpop.f32.mrf.mxu0
      %v7693 = vadd.f32 0.0, %v7692
      %v7694 = vpop.f32.mrf.mxu0
      %v7695 = vpop.f32.mrf.mxu0
      %v7696 = vadd.f32 0.0, %v7695
      %v7697 = vpop.f32.mrf.mxu0
      %7698 = vmatprep.mubr.bf16.mxu0 0
      %7699 = vmatmul.mubr.bf16.gmra.mxu0 %v7205
      %v7700 = vpop.f32.mrf.mxu0
      %v7701 = vadd.f32 0.0, %v7700
      %v7702 = vpop.f32.mrf.mxu0
      %v7703 = vpop.f32.mrf.mxu0
      %v7704 = vadd.f32 0.0, %v7703
      %v7705 = vpop.f32.mrf.mxu0
      %7706 = vmatprep.mubr.bf16.mxu0 0
      %7707 = vmatmul.mubr.bf16.gmra.mxu0 %v7208
      %v7708 = vpop.f32.mrf.mxu0
      %v7709 = vadd.f32 0.0, %v7708
      %v7710 = vpop.f32.mrf.mxu0
      %v7711 = vpop.f32.mrf.mxu0
      %v7712 = vadd.f32 0.0, %v7711
      %v7713 = vpop.f32.mrf.mxu0
      %7714 = vmatprep.mubr.bf16.mxu0 0
      %7715 = vmatmul.mubr.bf16.gmra.mxu0 %v7211
      %v7716 = vpop.f32.mrf.mxu0
      %v7717 = vadd.f32 0.0, %v7716
      %v7718 = vpop.f32.mrf.mxu0
      %v7719 = vpop.f32.mrf.mxu0
      %v7720 = vadd.f32 0.0, %v7719
      %v7721 = vpop.f32.mrf.mxu0
      %7722 = vmatprep.mubr.bf16.mxu0 0
      %7723 = vmatmul.mubr.bf16.gmra.mxu0 %v7214
      %v7724 = vpop.f32.mrf.mxu0
      %v7725 = vadd.f32 0.0, %v7724
      %v7726 = vpop.f32.mrf.mxu0
      %v7727 = vpop.f32.mrf.mxu0
      %v7728 = vadd.f32 0.0, %v7727
      %v7729 = vpop.f32.mrf.mxu0
      %7730 = vmatprep.mubr.bf16.mxu0 0
      %7731 = vmatmul.mubr.bf16.gmra.mxu0 %v7217
      %v7732 = vpop.f32.mrf.mxu0
      %v7733 = vadd.f32 0.0, %v7732
      %v7734 = vpop.f32.mrf.mxu0
      %v7735 = vpop.f32.mrf.mxu0
      %v7736 = vadd.f32 0.0, %v7735
      %v7737 = vpop.f32.mrf.mxu0
      %7738 = vmatprep.mubr.bf16.mxu0 0
      %7739 = vmatmul.mubr.bf16.gmra.mxu0 %v7220
      %v7740 = vpop.f32.mrf.mxu0
      %v7741 = vadd.f32 0.0, %v7740
      %v7742 = vpop.f32.mrf.mxu0
      %v7743 = vpop.f32.mrf.mxu0
      %v7744 = vadd.f32 0.0, %v7743
      %v7745 = vpop.f32.mrf.mxu0
      %7746 = vmatprep.mubr.bf16.mxu0 0
      %7747 = vmatmul.mubr.bf16.gmra.mxu0 %v7223
      %v7748 = vpop.f32.mrf.mxu0
      %v7749 = vadd.f32 0.0, %v7748
      %v7750 = vpop.f32.mrf.mxu0
      %v7751 = vpop.f32.mrf.mxu0
      %v7752 = vadd.f32 0.0, %v7751
      %v7753 = vpop.f32.mrf.mxu0
      %7754 = vmatprep.mubr.bf16.mxu0 0
      %7755 = vmatmul.mubr.bf16.gmra.mxu0 %v7226
      %v7756 = vpop.f32.mrf.mxu0
      %v7757 = vadd.f32 0.0, %v7756
      %v7758 = vpop.f32.mrf.mxu0
      %v7759 = vpop.f32.mrf.mxu0
      %v7760 = vadd.f32 0.0, %v7759
      %v7761 = vpop.f32.mrf.mxu0
      %7762 = vmatprep.mubr.bf16.mxu0 0
      %7763 = vmatmul.mubr.bf16.gmra.mxu0 %v7229
      %v7764 = vpop.f32.mrf.mxu0
      %v7765 = vadd.f32 0.0, %v7764
      %v7766 = vpop.f32.mrf.mxu0
      %v7767 = vpop.f32.mrf.mxu0
      %v7768 = vadd.f32 0.0, %v7767
      %v7769 = vpop.f32.mrf.mxu0
      %7770 = vmatprep.mubr.bf16.mxu0 0
      %7771 = vmatmul.mubr.bf16.gmra.mxu0 %v7232
      %v7772 = vpop.f32.mrf.mxu0
      %v7773 = vadd.f32 0.0, %v7772
      %v7774 = vpop.f32.mrf.mxu0
      %v7775 = vpop.f32.mrf.mxu0
      %v7776 = vadd.f32 0.0, %v7775
      %v7777 = vpop.f32.mrf.mxu0
      %7778 = vmatprep.mubr.bf16.mxu0 0
      %7779 = vmatmul.mubr.bf16.gmra.mxu0 %v7235
      %v7780 = vpop.f32.mrf.mxu0
      %v7781 = vadd.f32 0.0, %v7780
      %v7782 = vpop.f32.mrf.mxu0
      %v7783 = vpop.f32.mrf.mxu0
      %v7784 = vadd.f32 0.0, %v7783
      %v7785 = vpop.f32.mrf.mxu0
      %7786 = vmatprep.mubr.bf16.mxu0 0
      %7787 = vmatmul.mubr.bf16.gmra.mxu0 %v7238
      %v7788 = vpop.f32.mrf.mxu0
      %v7789 = vadd.f32 0.0, %v7788
      %v7790 = vpop.f32.mrf.mxu0
      %v7791 = vpop.f32.mrf.mxu0
      %v7792 = vadd.f32 0.0, %v7791
      %v7793 = vpop.f32.mrf.mxu0
      %7794 = vmatprep.mubr.bf16.mxu0 0
      %7795 = vmatmul.mubr.bf16.gmra.mxu0 %v7241
      %v7796 = vpop.f32.mrf.mxu0
      %v7797 = vadd.f32 0.0, %v7796
      %v7798 = vpop.f32.mrf.mxu0
      %v7799 = vpop.f32.mrf.mxu0
      %v7800 = vadd.f32 0.0, %v7799
      %v7801 = vpop.f32.mrf.mxu0
      %7802 = vmatprep.mubr.bf16.mxu0 0
      %7803 = vmatmul.mubr.bf16.gmra.mxu0 %v7244
      %v7804 = vpop.f32.mrf.mxu0
      %v7805 = vadd.f32 0.0, %v7804
      %v7806 = vpop.f32.mrf.mxu0
      %v7807 = vpop.f32.mrf.mxu0
      %v7808 = vadd.f32 0.0, %v7807
      %v7809 = vpop.f32.mrf.mxu0
      %7810 = vmatprep.mubr.bf16.mxu0 0
      %7811 = vmatmul.mubr.bf16.gmra.mxu0 %v7247
      %v7812 = vpop.f32.mrf.mxu0
      %v7813 = vadd.f32 0.0, %v7812
      %v7814 = vpop.f32.mrf.mxu0
      %v7815 = vpop.f32.mrf.mxu0
      %v7816 = vadd.f32 0.0, %v7815
      %v7817 = vpop.f32.mrf.mxu0
      %7818 = vmatprep.mubr.bf16.mxu0 0
      %7819 = vmatmul.mubr.bf16.gmra.mxu0 %v7250
      %v7820 = vpop.f32.mrf.mxu0
      %v7821 = vadd.f32 0.0, %v7820
      %v7822 = vpop.f32.mrf.mxu0
      %v7823 = vpop.f32.mrf.mxu0
      %v7824 = vadd.f32 0.0, %v7823
      %v7825 = vpop.f32.mrf.mxu0
      %7826 = vmatprep.mubr.bf16.mxu0 0
      %7827 = vmatmul.mubr.bf16.gmra.mxu0 %v7253
      %v7828 = vpop.f32.mrf.mxu0
      %v7829 = vadd.f32 0.0, %v7828
      %v7830 = vpop.f32.mrf.mxu0
      %v7831 = vpop.f32.mrf.mxu0
      %v7832 = vadd.f32 0.0, %v7831
      %v7833 = vpop.f32.mrf.mxu0
      %7834 = vdwg.mxu0
      %v7835 = vadd.f32 %v6771, %v7293
      %v7836 = vadd.f32 %v6772, %v7296
      %v7837 = vadd.f32 %v6773, %v7301
      %v7838 = vadd.f32 %v6774, %v7304
      %v7839 = vadd.f32 %v6775, %v7309
      %v7840 = vadd.f32 %v6776, %v7312
      %v7841 = vadd.f32 %v6777, %v7317
      %v7842 = vadd.f32 %v6778, %v7320
      %v7843 = vadd.f32 %v6779, %v7325
      %v7844 = vadd.f32 %v6780, %v7328
      %v7845 = vadd.f32 %v6781, %v7333
      %v7846 = vadd.f32 %v6782, %v7336
      %v7847 = vadd.f32 %v6783, %v7341
      %v7848 = vadd.f32 %v6784, %v7344
      %v7849 = vadd.f32 %v6785, %v7349
      %v7850 = vadd.f32 %v6786, %v7352
      %v7851 = vadd.f32 %v6787, %v7357
      %v7852 = vadd.f32 %v6788, %v7360
      %v7853 = vadd.f32 %v6789, %v7365
      %v7854 = vadd.f32 %v6790, %v7368
      %v7855 = vadd.f32 %v6791, %v7373
      %v7856 = vadd.f32 %v6792, %v7376
      %v7857 = vadd.f32 %v6793, %v7381
      %v7858 = vadd.f32 %v6794, %v7384
      %v7859 = vadd.f32 %v6795, %v7389
      %v7860 = vadd.f32 %v6796, %v7392
      %v7861 = vadd.f32 %v6797, %v7397
      %v7862 = vadd.f32 %v6798, %v7400
      %v7863 = vadd.f32 %v6799, %v7405
      %v7864 = vadd.f32 %v6800, %v7408
      %v7865 = vadd.f32 %v6801, %v7413
      %v7866 = vadd.f32 %v6802, %v7416
      %v7867 = vadd.f32 %v6803, %v7421
      %v7868 = vadd.f32 %v6804, %v7424
      %v7869 = vadd.f32 %v6805, %v7429
      %v7870 = vadd.f32 %v6806, %v7432
      %v7871 = vadd.f32 %v6807, %v7437
      %v7872 = vadd.f32 %v6808, %v7440
      %v7873 = vadd.f32 %v6809, %v7445
      %v7874 = vadd.f32 %v6810, %v7448
      %v7875 = vadd.f32 %v6811, %v7453
      %v7876 = vadd.f32 %v6812, %v7456
      %v7877 = vadd.f32 %v6813, %v7461
      %v7878 = vadd.f32 %v6814, %v7464
      %v7879 = vadd.f32 %v6815, %v7469
      %v7880 = vadd.f32 %v6816, %v7472
      %v7881 = vadd.f32 %v6817, %v7477
      %v7882 = vadd.f32 %v6818, %v7480
      %v7883 = vadd.f32 %v6819, %v7485
      %v7884 = vadd.f32 %v6820, %v7488
      %v7885 = vadd.f32 %v6821, %v7493
      %v7886 = vadd.f32 %v6822, %v7496
      %v7887 = vadd.f32 %v6823, %v7501
      %v7888 = vadd.f32 %v6824, %v7504
      %v7889 = vadd.f32 %v6825, %v7509
      %v7890 = vadd.f32 %v6826, %v7512
      %v7891 = vadd.f32 %v6827, %v7517
      %v7892 = vadd.f32 %v6828, %v7520
      %v7893 = vadd.f32 %v6829, %v7525
      %v7894 = vadd.f32 %v6830, %v7528
      %v7895 = vadd.f32 %v6831, %v7533
      %v7896 = vadd.f32 %v6832, %v7536
      %v7897 = vadd.f32 %v6833, %v7541
      %v7898 = vadd.f32 %v6834, %v7544
      %v7899 = vadd.f32 %v6835, %v7549
      %v7900 = vadd.f32 %v6836, %v7552
      %v7901 = vadd.f32 %v6837, %v7557
      %v7902 = vadd.f32 %v6838, %v7560
      %v7903 = vadd.f32 %v6839, %v7565
      %v7904 = vadd.f32 %v6840, %v7568
      %v7905 = vadd.f32 %v6841, %v7573
      %v7906 = vadd.f32 %v6842, %v7576
      %v7907 = vadd.f32 %v6843, %v7581
      %v7908 = vadd.f32 %v6844, %v7584
      %v7909 = vadd.f32 %v6845, %v7589
      %v7910 = vadd.f32 %v6846, %v7592
      %v7911 = vadd.f32 %v6847, %v7597
      %v7912 = vadd.f32 %v6848, %v7600
      %v7913 = vadd.f32 %v6849, %v7605
      %v7914 = vadd.f32 %v6850, %v7608
      %v7915 = vadd.f32 %v6851, %v7613
      %v7916 = vadd.f32 %v6852, %v7616
      %v7917 = vadd.f32 %v6853, %v7621
      %v7918 = vadd.f32 %v6854, %v7624
      %v7919 = vadd.f32 %v6855, %v7629
      %v7920 = vadd.f32 %v6856, %v7632
      %v7921 = vadd.f32 %v6857, %v7637
      %v7922 = vadd.f32 %v6858, %v7640
      %v7923 = vadd.f32 %v6859, %v7645
      %v7924 = vadd.f32 %v6860, %v7648
      %v7925 = vadd.f32 %v6861, %v7653
      %v7926 = vadd.f32 %v6862, %v7656
      %v7927 = vadd.f32 %v6863, %v7661
      %v7928 = vadd.f32 %v6864, %v7664
      %v7929 = vadd.f32 %v6865, %v7669
      %v7930 = vadd.f32 %v6866, %v7672
      %v7931 = vadd.f32 %v6867, %v7677
      %v7932 = vadd.f32 %v6868, %v7680
      %v7933 = vadd.f32 %v6869, %v7685
      %v7934 = vadd.f32 %v6870, %v7688
      %v7935 = vadd.f32 %v6871, %v7693
      %v7936 = vadd.f32 %v6872, %v7696
      %v7937 = vadd.f32 %v6873, %v7701
      %v7938 = vadd.f32 %v6874, %v7704
      %v7939 = vadd.f32 %v6875, %v7709
      %v7940 = vadd.f32 %v6876, %v7712
      %v7941 = vadd.f32 %v6877, %v7717
      %v7942 = vadd.f32 %v6878, %v7720
      %v7943 = vadd.f32 %v6879, %v7725
      %v7944 = vadd.f32 %v6880, %v7728
      %v7945 = vadd.f32 %v6881, %v7733
      %v7946 = vadd.f32 %v6882, %v7736
      %v7947 = vadd.f32 %v6883, %v7741
      %v7948 = vadd.f32 %v6884, %v7744
      %v7949 = vadd.f32 %v6885, %v7749
      %v7950 = vadd.f32 %v6886, %v7752
      %v7951 = vadd.f32 %v6887, %v7757
      %v7952 = vadd.f32 %v6888, %v7760
      %v7953 = vadd.f32 %v6889, %v7765
      %v7954 = vadd.f32 %v6890, %v7768
      %v7955 = vadd.f32 %v6891, %v7773
      %v7956 = vadd.f32 %v6892, %v7776
      %v7957 = vadd.f32 %v6893, %v7781
      %v7958 = vadd.f32 %v6894, %v7784
      %v7959 = vadd.f32 %v6895, %v7789
      %v7960 = vadd.f32 %v6896, %v7792
      %v7961 = vadd.f32 %v6897, %v7797
      %v7962 = vadd.f32 %v6898, %v7800
      %v7963 = vadd.f32 %v6899, %v7805
      %v7964 = vadd.f32 %v6900, %v7808
      %v7965 = vadd.f32 %v6901, %v7813
      %v7966 = vadd.f32 %v6902, %v7816
      %v7967 = vadd.f32 %v6903, %v7821
      %v7968 = vadd.f32 %v6904, %v7824
      %v7969 = vadd.f32 %v6905, %v7829
      %v7970 = vadd.f32 %v6906, %v7832
      %v7971 = vld [vmem:[%s206 + $0x20] sm:$0xc]
      %v7972 = vld [vmem:[%s206 + $0x24] sm:$0xf]
      %v7973 = vld [vmem:[%s206 + $0x28] sm:$0xf]
      %v7974 = vld [vmem:[%s206 + $0x2c] sm:$0xf]
      %v7975 = vld [vmem:[%s206 + $0x30] sm:$0xf]
      %v7976 = vld [vmem:[%s206 + $0x34] sm:$0xf]
      %v7977 = vld [vmem:[%s206 + $0x38] sm:$0xf]
      %v7978 = vld [vmem:[%s206 + $0x3c] sm:$0xf]
      %v7979 = vld [vmem:[%s206 + $0x40] sm:$0xf]
      %v7980 = vld [vmem:[%s206 + $0x44] sm:$0xf]
      %v7981 = vld [vmem:[%s206 + $0x48] sm:$0xf]
      %v7982 = vld [vmem:[%s206 + $0x4c] sm:$0xf]
      %v7983 = vld [vmem:[%s206 + $0x50] sm:$0xf]
      %v7984 = vld [vmem:[%s206 + $0x54] sm:$0xf]
      %v7985 = vld [vmem:[%s206 + $0x58] sm:$0xf]
      %v7986 = vld [vmem:[%s206 + $0x5c] sm:$0xf]
      %v7987 = vld [vmem:[%s206 + $0x60] sm:$0xf]
      %v7988 = vld [vmem:[%s206 + $0x64] sm:$0xf]
      %v7989 = vld [vmem:[%s206 + $0x68] sm:$0xf]
      %v7990 = vld [vmem:[%s206 + $0x6c] sm:$0xf]
      %v7991 = vld [vmem:[%s206 + $0x70] sm:$0xf]
      %v7992 = vld [vmem:[%s206 + $0x74] sm:$0xf]
      %v7993 = vld [vmem:[%s206 + $0x78] sm:$0xf]
      %v7994 = vld [vmem:[%s206 + $0x7c] sm:$0xf]
      %v7995 = vld [vmem:[%s206 + $0x80] sm:$0xf]
      %v7996 = vld [vmem:[%s206 + $0x84] sm:$0xf]
      %v7997 = vld [vmem:[%s206 + $0x88] sm:$0xf]
      %v7998 = vld [vmem:[%s206 + $0x8c] sm:$0xf]
      %v7999 = vld [vmem:[%s206 + $0x90] sm:$0xf]
      %v8000 = vld [vmem:[%s206 + $0x94] sm:$0xf]
      %v8001 = vld [vmem:[%s206 + $0x98] sm:$0xf]
      %v8002 = vld [vmem:[%s206 + $0x9c] sm:$0xf]
      %v8003 = vld [vmem:[%s206 + $0xa0] sm:$0xf]
      %v8004 = vld [vmem:[%s206 + $0xa4] sm:$0xf]
      %v8005 = vld [vmem:[%s206 + $0xa8] sm:$0xf]
      %v8006 = vld [vmem:[%s206 + $0xac] sm:$0xf]
      %v8007 = vld [vmem:[%s206 + $0xb0] sm:$0xf]
      %v8008 = vld [vmem:[%s206 + $0xb4] sm:$0xf]
      %v8009 = vld [vmem:[%s206 + $0xb8] sm:$0xf]
      %v8010 = vld [vmem:[%s206 + $0xbc] sm:$0xf]
      %v8011 = vld [vmem:[%s206 + $0xc0] sm:$0xf]
      %v8012 = vld [vmem:[%s206 + $0xc4] sm:$0xf]
      %v8013 = vld [vmem:[%s206 + $0xc8] sm:$0xf]
      %v8014 = vld [vmem:[%s206 + $0xcc] sm:$0xf]
      %v8015 = vld [vmem:[%s206 + $0xd0] sm:$0xf]
      %v8016 = vld [vmem:[%s206 + $0xd4] sm:$0xf]
      %v8017 = vld [vmem:[%s206 + $0xd8] sm:$0xf]
      %v8018 = vld [vmem:[%s206 + $0xdc] sm:$0xf]
      %v8019 = vld [vmem:[%s206 + $0xe0] sm:$0xf]
      %v8020 = vld [vmem:[%s206 + $0xe4] sm:$0xf]
      %v8021 = vld [vmem:[%s206 + $0xe8] sm:$0xf]
      %v8022 = vld [vmem:[%s206 + $0xec] sm:$0xf]
      %v8023 = vld [vmem:[%s206 + $0xf0] sm:$0xf]
      %v8024 = vld [vmem:[%s206 + $0xf4] sm:$0xf]
      %v8025 = vld [vmem:[%s206 + $0xf8] sm:$0xf]
      %v8026 = vld [vmem:[%s206 + $0xfc] sm:$0xf]
      %v8027 = vld [vmem:[%s206 + $0x100] sm:$0xf]
      %v8028 = vld [vmem:[%s206 + $0x104] sm:$0xf]
      %v8029 = vld [vmem:[%s206 + $0x108] sm:$0xf]
      %v8030 = vld [vmem:[%s206 + $0x10c] sm:$0xf]
      %v8031 = vld [vmem:[%s206 + $0x110] sm:$0xf]
      %v8032 = vld [vmem:[%s206 + $0x114] sm:$0xf]
      %v8033 = vld [vmem:[%s206 + $0x118] sm:$0xf]
      %v8034 = vld [vmem:[%s206 + $0x11c] sm:$0xf]
      %v8035 = vld [vmem:[%s206 + $0x120] sm:$0xf]
      %v8036 = vld [vmem:[%s206 + $0x124] sm:$0xf]
      %v8037 = vld [vmem:[%s206 + $0x128] sm:$0xf]
      %v8038 = vld [vmem:[%s206 + $0x12c] sm:$0xf]
      %v8039 = vld [vmem:[%s206 + $0x130] sm:$0xf]
      %v8040 = vld [vmem:[%s206 + $0x134] sm:$0xf]
      %v8041 = vld [vmem:[%s206 + $0x138] sm:$0xf]
      %v8042 = vld [vmem:[%s206 + $0x13c] sm:$0xf]
      %v8043 = vld [vmem:[%s206 + $0x140] sm:$0xf]
      %v8044 = vld [vmem:[%s206 + $0x144] sm:$0xf]
      %v8045 = vld [vmem:[%s206 + $0x148] sm:$0xf]
      %v8046 = vld [vmem:[%s206 + $0x14c] sm:$0xf]
      %v8047 = vld [vmem:[%s206 + $0x150] sm:$0xf]
      %v8048 = vld [vmem:[%s206 + $0x154] sm:$0xf]
      %v8049 = vld [vmem:[%s206 + $0x158] sm:$0xf]
      %v8050 = vld [vmem:[%s206 + $0x15c] sm:$0xf]
      %v8051 = vld [vmem:[%s206 + $0x160] sm:$0xf]
      %v8052 = vld [vmem:[%s206 + $0x164] sm:$0xf]
      %v8053 = vld [vmem:[%s206 + $0x168] sm:$0xf]
      %v8054 = vld [vmem:[%s206 + $0x16c] sm:$0xf]
      %v8055 = vld [vmem:[%s206 + $0x170] sm:$0xf]
      %v8056 = vld [vmem:[%s206 + $0x174] sm:$0xf]
      %v8057 = vld [vmem:[%s206 + $0x178] sm:$0xf]
      %v8058 = vld [vmem:[%s206 + $0x17c] sm:$0xf]
      %v8059 = vld [vmem:[%s206 + $0x180] sm:$0xf]
      %v8060 = vld [vmem:[%s206 + $0x184] sm:$0xf]
      %v8061 = vld [vmem:[%s206 + $0x188] sm:$0xf]
      %v8062 = vld [vmem:[%s206 + $0x18c] sm:$0xf]
      %v8063 = vld [vmem:[%s206 + $0x190] sm:$0xf]
      %v8064 = vld [vmem:[%s206 + $0x194] sm:$0xf]
      %v8065 = vld [vmem:[%s206 + $0x198] sm:$0xf]
      %v8066 = vld [vmem:[%s206 + $0x19c] sm:$0xf]
      %v8067 = vld [vmem:[%s206 + $0x1a0] sm:$0xf]
      %v8068 = vld [vmem:[%s206 + $0x1a4] sm:$0xf]
      %v8069 = vld [vmem:[%s206 + $0x1a8] sm:$0xf]
      %v8070 = vld [vmem:[%s206 + $0x1ac] sm:$0xf]
      %v8071 = vld [vmem:[%s206 + $0x1b0] sm:$0xf]
      %v8072 = vld [vmem:[%s206 + $0x1b4] sm:$0xf]
      %v8073 = vld [vmem:[%s206 + $0x1b8] sm:$0xf]
      %v8074 = vld [vmem:[%s206 + $0x1bc] sm:$0xf]
      %v8075 = vld [vmem:[%s206 + $0x1c0] sm:$0xf]
      %v8076 = vld [vmem:[%s206 + $0x1c4] sm:$0xf]
      %v8077 = vld [vmem:[%s206 + $0x1c8] sm:$0xf]
      %v8078 = vld [vmem:[%s206 + $0x1cc] sm:$0xf]
      %v8079 = vld [vmem:[%s206 + $0x1d0] sm:$0xf]
      %v8080 = vld [vmem:[%s206 + $0x1d4] sm:$0xf]
      %v8081 = vld [vmem:[%s206 + $0x1d8] sm:$0xf]
      %v8082 = vld [vmem:[%s206 + $0x1dc] sm:$0xf]
      %v8083 = vld [vmem:[%s206 + $0x1e0] sm:$0xf]
      %v8084 = vld [vmem:[%s206 + $0x1e4] sm:$0xf]
      %v8085 = vld [vmem:[%s206 + $0x1e8] sm:$0xf]
      %v8086 = vld [vmem:[%s206 + $0x1ec] sm:$0xf]
      %v8087 = vld [vmem:[%s206 + $0x1f0] sm:$0xf]
      %v8088 = vld [vmem:[%s206 + $0x1f4] sm:$0xf]
      %v8089 = vld [vmem:[%s206 + $0x1f8] sm:$0xf]
      %v8090 = vld [vmem:[%s206 + $0x1fc] sm:$0xf]
      %v8091 = vld [vmem:[%s206 + $0x200] sm:$0xf]
      %v8092 = vld [vmem:[%s206 + $0x204] sm:$0xf]
      %v8093 = vld [vmem:[%s206 + $0x208] sm:$0xf]
      %v8094 = vld [vmem:[%s206 + $0x20c] sm:$0xf]
      %v8095 = vld [vmem:[%s206 + $0x210] sm:$0xf]
      %v8096 = vld [vmem:[%s206 + $0x214] sm:$0xf]
      %v8097 = vld [vmem:[%s206 + $0x218] sm:$0xf]
      %v8098 = vld [vmem:[%s206 + $0x21c] sm:$0xf]
      %v8099 = vld [vmem:[%s206 + $0x220] sm:$0xf]
      %v8100 = vld [vmem:[%s206 + $0x224] sm:$0xf]
      %v8101 = vld [vmem:[%s206 + $0x228] sm:$0xf]
      %v8102 = vld [vmem:[%s206 + $0x22c] sm:$0xf]
      %v8103 = vld [vmem:[%s206 + $0x230] sm:$0xf]
      %v8104 = vld [vmem:[%s206 + $0x234] sm:$0xf]
      %v8105 = vld [vmem:[%s206 + $0x238] sm:$0xf]
      %v8106 = vld [vmem:[%s206 + $0x23c] sm:$0xf]
      %v8107 = vld [vmem:[%s206 + $0x240] sm:$0x3]
      %s8108 = scalar_lea.vmem %s210, 24
      %v8109 = vld [vmem:[%s8108] sm:$0xf]
      %v8247 = vunpack.c.l.b16 %v7971
      %v8248 = vunpack.c.l.b16 %v7972
      %v8249 = vunpack.c.l.b16 %v7973
      %v8250 = vunpack.c.l.b16 %v7974
      %v8251 = vunpack.c.l.b16 %v7975
      %v8252 = vunpack.c.l.b16 %v7976
      %v8253 = vunpack.c.l.b16 %v7977
      %v8254 = vunpack.c.l.b16 %v7978
      %v8255 = vunpack.c.l.b16 %v7979
      %v8256 = vunpack.c.l.b16 %v7980
      %v8257 = vunpack.c.l.b16 %v7981
      %v8258 = vunpack.c.l.b16 %v7982
      %v8259 = vunpack.c.l.b16 %v7983
      %v8260 = vunpack.c.l.b16 %v7984
      %v8261 = vunpack.c.l.b16 %v7985
      %v8262 = vunpack.c.l.b16 %v7986
      %v8263 = vunpack.c.l.b16 %v7987
      %v8264 = vunpack.c.l.b16 %v7988
      %v8265 = vunpack.c.l.b16 %v7989
      %v8266 = vunpack.c.l.b16 %v7990
      %v8267 = vunpack.c.l.b16 %v7991
      %v8268 = vunpack.c.l.b16 %v7992
      %v8269 = vunpack.c.l.b16 %v7993
      %v8270 = vunpack.c.l.b16 %v7994
      %v8271 = vunpack.c.l.b16 %v7995
      %v8272 = vunpack.c.l.b16 %v7996
      %v8273 = vunpack.c.l.b16 %v7997
      %v8274 = vunpack.c.l.b16 %v7998
      %v8275 = vunpack.c.l.b16 %v7999
      %v8276 = vunpack.c.l.b16 %v8000
      %v8277 = vunpack.c.l.b16 %v8001
      %v8278 = vunpack.c.l.b16 %v8002
      %v8279 = vunpack.c.l.b16 %v8003
      %v8280 = vunpack.c.l.b16 %v8004
      %v8281 = vunpack.c.l.b16 %v8005
      %v8282 = vunpack.c.l.b16 %v8006
      %v8283 = vunpack.c.l.b16 %v8007
      %v8284 = vunpack.c.l.b16 %v8008
      %v8285 = vunpack.c.l.b16 %v8009
      %v8286 = vunpack.c.l.b16 %v8010
      %v8287 = vunpack.c.l.b16 %v8011
      %v8288 = vunpack.c.l.b16 %v8012
      %v8289 = vunpack.c.l.b16 %v8013
      %v8290 = vunpack.c.l.b16 %v8014
      %v8291 = vunpack.c.l.b16 %v8015
      %v8292 = vunpack.c.l.b16 %v8016
      %v8293 = vunpack.c.l.b16 %v8017
      %v8294 = vunpack.c.l.b16 %v8018
      %v8295 = vunpack.c.l.b16 %v8019
      %v8296 = vunpack.c.l.b16 %v8020
      %v8297 = vunpack.c.l.b16 %v8021
      %v8298 = vunpack.c.l.b16 %v8022
      %v8299 = vunpack.c.l.b16 %v8023
      %v8300 = vunpack.c.l.b16 %v8024
      %v8301 = vunpack.c.l.b16 %v8025
      %v8302 = vunpack.c.l.b16 %v8026
      %v8303 = vunpack.c.l.b16 %v8027
      %v8304 = vunpack.c.l.b16 %v8028
      %v8305 = vunpack.c.l.b16 %v8029
      %v8306 = vunpack.c.l.b16 %v8030
      %v8307 = vunpack.c.l.b16 %v8031
      %v8308 = vunpack.c.l.b16 %v8032
      %v8309 = vunpack.c.l.b16 %v8033
      %v8310 = vunpack.c.l.b16 %v8034
      %v8311 = vunpack.c.l.b16 %v8035
      %v8312 = vunpack.c.l.b16 %v8036
      %v8313 = vunpack.c.l.b16 %v8037
      %v8314 = vunpack.c.l.b16 %v8038
      %v8315 = vunpack.c.l.b16 %v8039
      %v8316 = vunpack.c.l.b16 %v8040
      %v8317 = vunpack.c.l.b16 %v8041
      %v8318 = vunpack.c.l.b16 %v8042
      %v8319 = vunpack.c.l.b16 %v8043
      %v8320 = vunpack.c.l.b16 %v8044
      %v8321 = vunpack.c.l.b16 %v8045
      %v8322 = vunpack.c.l.b16 %v8046
      %v8323 = vunpack.c.l.b16 %v8047
      %v8324 = vunpack.c.l.b16 %v8048
      %v8325 = vunpack.c.l.b16 %v8049
      %v8326 = vunpack.c.l.b16 %v8050
      %v8327 = vunpack.c.l.b16 %v8051
      %v8328 = vunpack.c.l.b16 %v8052
      %v8329 = vunpack.c.l.b16 %v8053
      %v8330 = vunpack.c.l.b16 %v8054
      %v8331 = vunpack.c.l.b16 %v8055
      %v8332 = vunpack.c.l.b16 %v8056
      %v8333 = vunpack.c.l.b16 %v8057
      %v8334 = vunpack.c.l.b16 %v8058
      %v8335 = vunpack.c.l.b16 %v8059
      %v8336 = vunpack.c.l.b16 %v8060
      %v8337 = vunpack.c.l.b16 %v8061
      %v8338 = vunpack.c.l.b16 %v8062
      %v8339 = vunpack.c.l.b16 %v8063
      %v8340 = vunpack.c.l.b16 %v8064
      %v8341 = vunpack.c.l.b16 %v8065
      %v8342 = vunpack.c.l.b16 %v8066
      %v8343 = vunpack.c.l.b16 %v8067
      %v8344 = vunpack.c.l.b16 %v8068
      %v8345 = vunpack.c.l.b16 %v8069
      %v8346 = vunpack.c.l.b16 %v8070
      %v8347 = vunpack.c.l.b16 %v8071
      %v8348 = vunpack.c.l.b16 %v8072
      %v8349 = vunpack.c.l.b16 %v8073
      %v8350 = vunpack.c.l.b16 %v8074
      %v8351 = vunpack.c.l.b16 %v8075
      %v8352 = vunpack.c.l.b16 %v8076
      %v8353 = vunpack.c.l.b16 %v8077
      %v8354 = vunpack.c.l.b16 %v8078
      %v8355 = vunpack.c.l.b16 %v8079
      %v8356 = vunpack.c.l.b16 %v8080
      %v8357 = vunpack.c.l.b16 %v8081
      %v8358 = vunpack.c.l.b16 %v8082
      %v8359 = vunpack.c.l.b16 %v8083
      %v8360 = vunpack.c.l.b16 %v8084
      %v8361 = vunpack.c.l.b16 %v8085
      %v8362 = vunpack.c.l.b16 %v8086
      %v8363 = vunpack.c.l.b16 %v8087
      %v8364 = vunpack.c.l.b16 %v8088
      %v8365 = vunpack.c.l.b16 %v8089
      %v8366 = vunpack.c.l.b16 %v8090
      %v8367 = vunpack.c.l.b16 %v8091
      %v8368 = vunpack.c.l.b16 %v8092
      %v8369 = vunpack.c.l.b16 %v8093
      %v8370 = vunpack.c.l.b16 %v8094
      %v8371 = vunpack.c.l.b16 %v8095
      %v8372 = vunpack.c.l.b16 %v8096
      %v8373 = vunpack.c.l.b16 %v8097
      %v8374 = vunpack.c.l.b16 %v8098
      %v8375 = vunpack.c.l.b16 %v8099
      %v8376 = vunpack.c.l.b16 %v8100
      %v8377 = vunpack.c.l.b16 %v8101
      %v8378 = vunpack.c.l.b16 %v8102
      %v8379 = vunpack.c.l.b16 %v8103
      %v8380 = vunpack.c.l.b16 %v8104
      %v8381 = vunpack.c.l.b16 %v8105
      %v8382 = vunpack.c.l.b16 %v8106
      %v8383 = vunpack.c.l.b16 %v8107
      %v8384 = vpack.c.b16 %v8248, %v8247
      %v8385 = vpack.c.b16 %v8250, %v8249
      %v8386 = vpack.c.b16 %v8252, %v8251
      %v8387 = vpack.c.b16 %v8254, %v8253
      %v8388 = vpack.c.b16 %v8256, %v8255
      %v8389 = vpack.c.b16 %v8258, %v8257
      %v8390 = vpack.c.b16 %v8260, %v8259
      %v8391 = vpack.c.b16 %v8262, %v8261
      %v8392 = vpack.c.b16 %v8264, %v8263
      %v8393 = vpack.c.b16 %v8266, %v8265
      %v8394 = vpack.c.b16 %v8268, %v8267
      %v8395 = vpack.c.b16 %v8270, %v8269
      %v8396 = vpack.c.b16 %v8272, %v8271
      %v8397 = vpack.c.b16 %v8274, %v8273
      %v8398 = vpack.c.b16 %v8276, %v8275
      %v8399 = vpack.c.b16 %v8278, %v8277
      %v8400 = vpack.c.b16 %v8280, %v8279
      %v8401 = vpack.c.b16 %v8282, %v8281
      %v8402 = vpack.c.b16 %v8284, %v8283
      %v8403 = vpack.c.b16 %v8286, %v8285
      %v8404 = vpack.c.b16 %v8288, %v8287
      %v8405 = vpack.c.b16 %v8290, %v8289
      %v8406 = vpack.c.b16 %v8292, %v8291
      %v8407 = vpack.c.b16 %v8294, %v8293
      %v8408 = vpack.c.b16 %v8296, %v8295
      %v8409 = vpack.c.b16 %v8298, %v8297
      %v8410 = vpack.c.b16 %v8300, %v8299
      %v8411 = vpack.c.b16 %v8302, %v8301
      %v8412 = vpack.c.b16 %v8304, %v8303
      %v8413 = vpack.c.b16 %v8306, %v8305
      %v8414 = vpack.c.b16 %v8308, %v8307
      %v8415 = vpack.c.b16 %v8310, %v8309
      %v8416 = vpack.c.b16 %v8312, %v8311
      %v8417 = vpack.c.b16 %v8314, %v8313
      %v8418 = vpack.c.b16 %v8316, %v8315
      %v8419 = vpack.c.b16 %v8318, %v8317
      %v8420 = vpack.c.b16 %v8320, %v8319
      %v8421 = vpack.c.b16 %v8322, %v8321
      %v8422 = vpack.c.b16 %v8324, %v8323
      %v8423 = vpack.c.b16 %v8326, %v8325
      %v8424 = vpack.c.b16 %v8328, %v8327
      %v8425 = vpack.c.b16 %v8330, %v8329
      %v8426 = vpack.c.b16 %v8332, %v8331
      %v8427 = vpack.c.b16 %v8334, %v8333
      %v8428 = vpack.c.b16 %v8336, %v8335
      %v8429 = vpack.c.b16 %v8338, %v8337
      %v8430 = vpack.c.b16 %v8340, %v8339
      %v8431 = vpack.c.b16 %v8342, %v8341
      %v8432 = vpack.c.b16 %v8344, %v8343
      %v8433 = vpack.c.b16 %v8346, %v8345
      %v8434 = vpack.c.b16 %v8348, %v8347
      %v8435 = vpack.c.b16 %v8350, %v8349
      %v8436 = vpack.c.b16 %v8352, %v8351
      %v8437 = vpack.c.b16 %v8354, %v8353
      %v8438 = vpack.c.b16 %v8356, %v8355
      %v8439 = vpack.c.b16 %v8358, %v8357
      %v8440 = vpack.c.b16 %v8360, %v8359
      %v8441 = vpack.c.b16 %v8362, %v8361
      %v8442 = vpack.c.b16 %v8364, %v8363
      %v8443 = vpack.c.b16 %v8366, %v8365
      %v8444 = vpack.c.b16 %v8368, %v8367
      %v8445 = vpack.c.b16 %v8370, %v8369
      %v8446 = vpack.c.b16 %v8372, %v8371
      %v8447 = vpack.c.b16 %v8374, %v8373
      %v8448 = vpack.c.b16 %v8376, %v8375
      %v8449 = vpack.c.b16 %v8378, %v8377
      %v8450 = vpack.c.b16 %v8380, %v8379
      %v8451 = vpack.c.b16 %v8382, %v8381
      %v8452 = vpack.c.b16 %v8383, %v8383
      %v8453 = vrot.slane %v8384, 2
      %v8454 = vrot.slane %v8385, 2
      %v8455 = vsel %vm6913, %v8453, %v8454
      %v8456 = vrot.slane %v8386, 2
      %v8457 = vsel %vm6913, %v8454, %v8456
      %v8458 = vrot.slane %v8387, 2
      %v8459 = vsel %vm6913, %v8456, %v8458
      %v8460 = vrot.slane %v8388, 2
      %v8461 = vsel %vm6913, %v8458, %v8460
      %v8462 = vrot.slane %v8389, 2
      %v8463 = vsel %vm6913, %v8460, %v8462
      %v8464 = vrot.slane %v8390, 2
      %v8465 = vsel %vm6913, %v8462, %v8464
      %v8466 = vrot.slane %v8391, 2
      %v8467 = vsel %vm6913, %v8464, %v8466
      %v8468 = vrot.slane %v8392, 2
      %v8469 = vsel %vm6913, %v8466, %v8468
      %v8470 = vrot.slane %v8393, 2
      %v8471 = vsel %vm6913, %v8468, %v8470
      %v8472 = vrot.slane %v8394, 2
      %v8473 = vsel %vm6913, %v8470, %v8472
      %v8474 = vrot.slane %v8395, 2
      %v8475 = vsel %vm6913, %v8472, %v8474
      %v8476 = vrot.slane %v8396, 2
      %v8477 = vsel %vm6913, %v8474, %v8476
      %v8478 = vrot.slane %v8397, 2
      %v8479 = vsel %vm6913, %v8476, %v8478
      %v8480 = vrot.slane %v8398, 2
      %v8481 = vsel %vm6913, %v8478, %v8480
      %v8482 = vrot.slane %v8399, 2
      %v8483 = vsel %vm6913, %v8480, %v8482
      %v8484 = vrot.slane %v8400, 2
      %v8485 = vsel %vm6913, %v8482, %v8484
      %v8486 = vrot.slane %v8401, 2
      %v8487 = vsel %vm6913, %v8484, %v8486
      %v8488 = vrot.slane %v8402, 2
      %v8489 = vsel %vm6913, %v8486, %v8488
      %v8490 = vrot.slane %v8403, 2
      %v8491 = vsel %vm6913, %v8488, %v8490
      %v8492 = vrot.slane %v8404, 2
      %v8493 = vsel %vm6913, %v8490, %v8492
      %v8494 = vrot.slane %v8405, 2
      %v8495 = vsel %vm6913, %v8492, %v8494
      %v8496 = vrot.slane %v8406, 2
      %v8497 = vsel %vm6913, %v8494, %v8496
      %v8498 = vrot.slane %v8407, 2
      %v8499 = vsel %vm6913, %v8496, %v8498
      %v8500 = vrot.slane %v8408, 2
      %v8501 = vsel %vm6913, %v8498, %v8500
      %v8502 = vrot.slane %v8409, 2
      %v8503 = vsel %vm6913, %v8500, %v8502
      %v8504 = vrot.slane %v8410, 2
      %v8505 = vsel %vm6913, %v8502, %v8504
      %v8506 = vrot.slane %v8411, 2
      %v8507 = vsel %vm6913, %v8504, %v8506
      %v8508 = vrot.slane %v8412, 2
      %v8509 = vsel %vm6913, %v8506, %v8508
      %v8510 = vrot.slane %v8413, 2
      %v8511 = vsel %vm6913, %v8508, %v8510
      %v8512 = vrot.slane %v8414, 2
      %v8513 = vsel %vm6913, %v8510, %v8512
      %v8514 = vrot.slane %v8415, 2
      %v8515 = vsel %vm6913, %v8512, %v8514
      %v8516 = vrot.slane %v8416, 2
      %v8517 = vsel %vm6913, %v8514, %v8516
      %v8518 = vrot.slane %v8417, 2
      %v8519 = vsel %vm6913, %v8516, %v8518
      %v8520 = vrot.slane %v8418, 2
      %v8521 = vsel %vm6913, %v8518, %v8520
      %v8522 = vrot.slane %v8419, 2
      %v8523 = vsel %vm6913, %v8520, %v8522
      %v8524 = vrot.slane %v8420, 2
      %v8525 = vsel %vm6913, %v8522, %v8524
      %v8526 = vrot.slane %v8421, 2
      %v8527 = vsel %vm6913, %v8524, %v8526
      %v8528 = vrot.slane %v8422, 2
      %v8529 = vsel %vm6913, %v8526, %v8528
      %v8530 = vrot.slane %v8423, 2
      %v8531 = vsel %vm6913, %v8528, %v8530
      %v8532 = vrot.slane %v8424, 2
      %v8533 = vsel %vm6913, %v8530, %v8532
      %v8534 = vrot.slane %v8425, 2
      %v8535 = vsel %vm6913, %v8532, %v8534
      %v8536 = vrot.slane %v8426, 2
      %v8537 = vsel %vm6913, %v8534, %v8536
      %v8538 = vrot.slane %v8427, 2
      %v8539 = vsel %vm6913, %v8536, %v8538
      %v8540 = vrot.slane %v8428, 2
      %v8541 = vsel %vm6913, %v8538, %v8540
      %v8542 = vrot.slane %v8429, 2
      %v8543 = vsel %vm6913, %v8540, %v8542
      %v8544 = vrot.slane %v8430, 2
      %v8545 = vsel %vm6913, %v8542, %v8544
      %v8546 = vrot.slane %v8431, 2
      %v8547 = vsel %vm6913, %v8544, %v8546
      %v8548 = vrot.slane %v8432, 2
      %v8549 = vsel %vm6913, %v8546, %v8548
      %v8550 = vrot.slane %v8433, 2
      %v8551 = vsel %vm6913, %v8548, %v8550
      %v8552 = vrot.slane %v8434, 2
      %v8553 = vsel %vm6913, %v8550, %v8552
      %v8554 = vrot.slane %v8435, 2
      %v8555 = vsel %vm6913, %v8552, %v8554
      %v8556 = vrot.slane %v8436, 2
      %v8557 = vsel %vm6913, %v8554, %v8556
      %v8558 = vrot.slane %v8437, 2
      %v8559 = vsel %vm6913, %v8556, %v8558
      %v8560 = vrot.slane %v8438, 2
      %v8561 = vsel %vm6913, %v8558, %v8560
      %v8562 = vrot.slane %v8439, 2
      %v8563 = vsel %vm6913, %v8560, %v8562
      %v8564 = vrot.slane %v8440, 2
      %v8565 = vsel %vm6913, %v8562, %v8564
      %v8566 = vrot.slane %v8441, 2
      %v8567 = vsel %vm6913, %v8564, %v8566
      %v8568 = vrot.slane %v8442, 2
      %v8569 = vsel %vm6913, %v8566, %v8568
      %v8570 = vrot.slane %v8443, 2
      %v8571 = vsel %vm6913, %v8568, %v8570
      %v8572 = vrot.slane %v8444, 2
      %v8573 = vsel %vm6913, %v8570, %v8572
      %v8574 = vrot.slane %v8445, 2
      %v8575 = vsel %vm6913, %v8572, %v8574
      %v8576 = vrot.slane %v8446, 2
      %v8577 = vsel %vm6913, %v8574, %v8576
      %v8578 = vrot.slane %v8447, 2
      %v8579 = vsel %vm6913, %v8576, %v8578
      %v8580 = vrot.slane %v8448, 2
      %v8581 = vsel %vm6913, %v8578, %v8580
      %v8582 = vrot.slane %v8449, 2
      %v8583 = vsel %vm6913, %v8580, %v8582
      %v8584 = vrot.slane %v8450, 2
      %v8585 = vsel %vm6913, %v8582, %v8584
      %v8586 = vrot.slane %v8451, 2
      %v8587 = vsel %vm6913, %v8584, %v8586
      %v8588 = vrot.slane %v8452, 2
      %v8589 = vsel %vm6913, %v8586, %v8588
      %v8591 = vsel %vm1255, %v8455, 0
      %v8594 = vsel %vm1255, %v8457, 0
      %v8597 = vsel %vm1255, %v8459, 0
      %v8600 = vsel %vm1255, %v8461, 0
      %v8603 = vsel %vm1255, %v8463, 0
      %v8606 = vsel %vm1255, %v8465, 0
      %v8609 = vsel %vm1255, %v8467, 0
      %v8612 = vsel %vm1255, %v8469, 0
      %v8615 = vsel %vm1255, %v8471, 0
      %v8618 = vsel %vm1255, %v8473, 0
      %v8621 = vsel %vm1255, %v8475, 0
      %v8624 = vsel %vm1255, %v8477, 0
      %v8627 = vsel %vm1255, %v8479, 0
      %v8630 = vsel %vm1255, %v8481, 0
      %v8633 = vsel %vm1255, %v8483, 0
      %v8636 = vsel %vm1255, %v8485, 0
      %v8639 = vsel %vm1255, %v8487, 0
      %v8642 = vsel %vm1255, %v8489, 0
      %v8645 = vsel %vm1255, %v8491, 0
      %v8648 = vsel %vm1255, %v8493, 0
      %v8651 = vsel %vm1255, %v8495, 0
      %v8654 = vsel %vm1255, %v8497, 0
      %v8657 = vsel %vm1255, %v8499, 0
      %v8660 = vsel %vm1255, %v8501, 0
      %v8663 = vsel %vm1255, %v8503, 0
      %v8666 = vsel %vm1255, %v8505, 0
      %v8669 = vsel %vm1255, %v8507, 0
      %v8672 = vsel %vm1255, %v8509, 0
      %v8675 = vsel %vm1255, %v8511, 0
      %v8678 = vsel %vm1255, %v8513, 0
      %v8681 = vsel %vm1255, %v8515, 0
      %v8684 = vsel %vm1255, %v8517, 0
      %v8687 = vsel %vm1255, %v8519, 0
      %v8690 = vsel %vm1255, %v8521, 0
      %v8693 = vsel %vm1255, %v8523, 0
      %v8696 = vsel %vm1255, %v8525, 0
      %v8699 = vsel %vm1255, %v8527, 0
      %v8702 = vsel %vm1255, %v8529, 0
      %v8705 = vsel %vm1255, %v8531, 0
      %v8708 = vsel %vm1255, %v8533, 0
      %v8711 = vsel %vm1255, %v8535, 0
      %v8714 = vsel %vm1255, %v8537, 0
      %v8717 = vsel %vm1255, %v8539, 0
      %v8720 = vsel %vm1255, %v8541, 0
      %v8723 = vsel %vm1255, %v8543, 0
      %v8726 = vsel %vm1255, %v8545, 0
      %v8729 = vsel %vm1255, %v8547, 0
      %v8732 = vsel %vm1255, %v8549, 0
      %v8735 = vsel %vm1255, %v8551, 0
      %v8738 = vsel %vm1255, %v8553, 0
      %v8741 = vsel %vm1255, %v8555, 0
      %v8744 = vsel %vm1255, %v8557, 0
      %v8747 = vsel %vm1255, %v8559, 0
      %v8750 = vsel %vm1255, %v8561, 0
      %v8753 = vsel %vm1255, %v8563, 0
      %v8756 = vsel %vm1255, %v8565, 0
      %v8759 = vsel %vm1255, %v8567, 0
      %v8762 = vsel %vm1255, %v8569, 0
      %v8765 = vsel %vm1255, %v8571, 0
      %v8768 = vsel %vm1255, %v8573, 0
      %v8771 = vsel %vm1255, %v8575, 0
      %v8774 = vsel %vm1255, %v8577, 0
      %v8777 = vsel %vm1255, %v8579, 0
      %v8780 = vsel %vm1255, %v8581, 0
      %v8783 = vsel %vm1255, %v8583, 0
      %v8786 = vsel %vm1255, %v8585, 0
      %v8789 = vsel %vm1255, %v8587, 0
      %v8792 = vsel %vm1255, %v8589, 0
      %v8795 = vsel %vm1460, %v8109, 0
      %8797 = vmatprep.subr.bf16.mxu0 0
      %8798 = vmatpush1.bf16.msra.mxu0 0
      %8799 = vmatprep.subr.bf16.mxu0 0
      %8800 = vmatpush1.bf16.msra.mxu0 0
      %8801 = vmatprep.subr.bf16.mxu0 0
      %8802 = vmatpush1.bf16.msra.mxu0 0
      %8803 = vmatprep.subr.bf16.mxu0 0
      %8804 = vmatpush1.bf16.msra.mxu0 0
      %8805 = vmatprep.subr.bf16.mxu0 0
      %8806 = vmatpush1.bf16.msra.mxu0 0
      %8807 = vmatprep.subr.bf16.mxu0 0
      %8808 = vmatpush1.bf16.msra.mxu0 0
      %8809 = vmatprep.subr.bf16.mxu0 0
      %8810 = vmatpush1.bf16.msra.mxu0 0
      %8811 = vmatprep.subr.bf16.mxu0 0
      %8812 = vmatpush1.bf16.msra.mxu0 %v8795
      %8813 = vmatprep.subr.bf16.mxu0 0
      %8814 = vmatpush2.bf16.msra.mxu0 0
      %8815 = vmatprep.subr.bf16.mxu0 0
      %8816 = vmatpush2.bf16.msra.mxu0 0
      %8817 = vmatprep.subr.bf16.mxu0 0
      %8818 = vmatpush2.bf16.msra.mxu0 0
      %8819 = vmatprep.subr.bf16.mxu0 0
      %8820 = vmatpush2.bf16.msra.mxu0 0
      %8821 = vmatprep.subr.bf16.mxu0 0
      %8822 = vmatpush2.bf16.msra.mxu0 0
      %8823 = vmatprep.subr.bf16.mxu0 0
      %8824 = vmatpush2.bf16.msra.mxu0 0
      %8825 = vmatprep.subr.bf16.mxu0 0
      %8826 = vmatpush2.bf16.msra.mxu0 0
      %8827 = vmatprep.subr.bf16.mxu0 0
      %8828 = vmatpush2.bf16.msra.mxu0 0
      %8829 = vmatprep.mubr.bf16.mxu0 0
      %8830 = vmatmul.mubr.bf16.gmra.mxu0 %v8591
      %v8831 = vpop.f32.mrf.mxu0
      %v8832 = vadd.f32 0.0, %v8831
      %v8833 = vpop.f32.mrf.mxu0
      %v8834 = vpop.f32.mrf.mxu0
      %v8835 = vadd.f32 0.0, %v8834
      %v8836 = vpop.f32.mrf.mxu0
      %8837 = vmatprep.mubr.bf16.mxu0 0
      %8838 = vmatmul.mubr.bf16.gmra.mxu0 %v8594
      %v8839 = vpop.f32.mrf.mxu0
      %v8840 = vadd.f32 0.0, %v8839
      %v8841 = vpop.f32.mrf.mxu0
      %v8842 = vpop.f32.mrf.mxu0
      %v8843 = vadd.f32 0.0, %v8842
      %v8844 = vpop.f32.mrf.mxu0
      %8845 = vmatprep.mubr.bf16.mxu0 0
      %8846 = vmatmul.mubr.bf16.gmra.mxu0 %v8597
      %v8847 = vpop.f32.mrf.mxu0
      %v8848 = vadd.f32 0.0, %v8847
      %v8849 = vpop.f32.mrf.mxu0
      %v8850 = vpop.f32.mrf.mxu0
      %v8851 = vadd.f32 0.0, %v8850
      %v8852 = vpop.f32.mrf.mxu0
      %8853 = vmatprep.mubr.bf16.mxu0 0
      %8854 = vmatmul.mubr.bf16.gmra.mxu0 %v8600
      %v8855 = vpop.f32.mrf.mxu0
      %v8856 = vadd.f32 0.0, %v8855
      %v8857 = vpop.f32.mrf.mxu0
      %v8858 = vpop.f32.mrf.mxu0
      %v8859 = vadd.f32 0.0, %v8858
      %v8860 = vpop.f32.mrf.mxu0
      %8861 = vmatprep.mubr.bf16.mxu0 0
      %8862 = vmatmul.mubr.bf16.gmra.mxu0 %v8603
      %v8863 = vpop.f32.mrf.mxu0
      %v8864 = vadd.f32 0.0, %v8863
      %v8865 = vpop.f32.mrf.mxu0
      %v8866 = vpop.f32.mrf.mxu0
      %v8867 = vadd.f32 0.0, %v8866
      %v8868 = vpop.f32.mrf.mxu0
      %8869 = vmatprep.mubr.bf16.mxu0 0
      %8870 = vmatmul.mubr.bf16.gmra.mxu0 %v8606
      %v8871 = vpop.f32.mrf.mxu0
      %v8872 = vadd.f32 0.0, %v8871
      %v8873 = vpop.f32.mrf.mxu0
      %v8874 = vpop.f32.mrf.mxu0
      %v8875 = vadd.f32 0.0, %v8874
      %v8876 = vpop.f32.mrf.mxu0
      %8877 = vmatprep.mubr.bf16.mxu0 0
      %8878 = vmatmul.mubr.bf16.gmra.mxu0 %v8609
      %v8879 = vpop.f32.mrf.mxu0
      %v8880 = vadd.f32 0.0, %v8879
      %v8881 = vpop.f32.mrf.mxu0
      %v8882 = vpop.f32.mrf.mxu0
      %v8883 = vadd.f32 0.0, %v8882
      %v8884 = vpop.f32.mrf.mxu0
      %8885 = vmatprep.mubr.bf16.mxu0 0
      %8886 = vmatmul.mubr.bf16.gmra.mxu0 %v8612
      %v8887 = vpop.f32.mrf.mxu0
      %v8888 = vadd.f32 0.0, %v8887
      %v8889 = vpop.f32.mrf.mxu0
      %v8890 = vpop.f32.mrf.mxu0
      %v8891 = vadd.f32 0.0, %v8890
      %v8892 = vpop.f32.mrf.mxu0
      %8893 = vmatprep.mubr.bf16.mxu0 0
      %8894 = vmatmul.mubr.bf16.gmra.mxu0 %v8615
      %v8895 = vpop.f32.mrf.mxu0
      %v8896 = vadd.f32 0.0, %v8895
      %v8897 = vpop.f32.mrf.mxu0
      %v8898 = vpop.f32.mrf.mxu0
      %v8899 = vadd.f32 0.0, %v8898
      %v8900 = vpop.f32.mrf.mxu0
      %8901 = vmatprep.mubr.bf16.mxu0 0
      %8902 = vmatmul.mubr.bf16.gmra.mxu0 %v8618
      %v8903 = vpop.f32.mrf.mxu0
      %v8904 = vadd.f32 0.0, %v8903
      %v8905 = vpop.f32.mrf.mxu0
      %v8906 = vpop.f32.mrf.mxu0
      %v8907 = vadd.f32 0.0, %v8906
      %v8908 = vpop.f32.mrf.mxu0
      %8909 = vmatprep.mubr.bf16.mxu0 0
      %8910 = vmatmul.mubr.bf16.gmra.mxu0 %v8621
      %v8911 = vpop.f32.mrf.mxu0
      %v8912 = vadd.f32 0.0, %v8911
      %v8913 = vpop.f32.mrf.mxu0
      %v8914 = vpop.f32.mrf.mxu0
      %v8915 = vadd.f32 0.0, %v8914
      %v8916 = vpop.f32.mrf.mxu0
      %8917 = vmatprep.mubr.bf16.mxu0 0
      %8918 = vmatmul.mubr.bf16.gmra.mxu0 %v8624
      %v8919 = vpop.f32.mrf.mxu0
      %v8920 = vadd.f32 0.0, %v8919
      %v8921 = vpop.f32.mrf.mxu0
      %v8922 = vpop.f32.mrf.mxu0
      %v8923 = vadd.f32 0.0, %v8922
      %v8924 = vpop.f32.mrf.mxu0
      %8925 = vmatprep.mubr.bf16.mxu0 0
      %8926 = vmatmul.mubr.bf16.gmra.mxu0 %v8627
      %v8927 = vpop.f32.mrf.mxu0
      %v8928 = vadd.f32 0.0, %v8927
      %v8929 = vpop.f32.mrf.mxu0
      %v8930 = vpop.f32.mrf.mxu0
      %v8931 = vadd.f32 0.0, %v8930
      %v8932 = vpop.f32.mrf.mxu0
      %8933 = vmatprep.mubr.bf16.mxu0 0
      %8934 = vmatmul.mubr.bf16.gmra.mxu0 %v8630
      %v8935 = vpop.f32.mrf.mxu0
      %v8936 = vadd.f32 0.0, %v8935
      %v8937 = vpop.f32.mrf.mxu0
      %v8938 = vpop.f32.mrf.mxu0
      %v8939 = vadd.f32 0.0, %v8938
      %v8940 = vpop.f32.mrf.mxu0
      %8941 = vmatprep.mubr.bf16.mxu0 0
      %8942 = vmatmul.mubr.bf16.gmra.mxu0 %v8633
      %v8943 = vpop.f32.mrf.mxu0
      %v8944 = vadd.f32 0.0, %v8943
      %v8945 = vpop.f32.mrf.mxu0
      %v8946 = vpop.f32.mrf.mxu0
      %v8947 = vadd.f32 0.0, %v8946
      %v8948 = vpop.f32.mrf.mxu0
      %8949 = vmatprep.mubr.bf16.mxu0 0
      %8950 = vmatmul.mubr.bf16.gmra.mxu0 %v8636
      %v8951 = vpop.f32.mrf.mxu0
      %v8952 = vadd.f32 0.0, %v8951
      %v8953 = vpop.f32.mrf.mxu0
      %v8954 = vpop.f32.mrf.mxu0
      %v8955 = vadd.f32 0.0, %v8954
      %v8956 = vpop.f32.mrf.mxu0
      %8957 = vmatprep.mubr.bf16.mxu0 0
      %8958 = vmatmul.mubr.bf16.gmra.mxu0 %v8639
      %v8959 = vpop.f32.mrf.mxu0
      %v8960 = vadd.f32 0.0, %v8959
      %v8961 = vpop.f32.mrf.mxu0
      %v8962 = vpop.f32.mrf.mxu0
      %v8963 = vadd.f32 0.0, %v8962
      %v8964 = vpop.f32.mrf.mxu0
      %8965 = vmatprep.mubr.bf16.mxu0 0
      %8966 = vmatmul.mubr.bf16.gmra.mxu0 %v8642
      %v8967 = vpop.f32.mrf.mxu0
      %v8968 = vadd.f32 0.0, %v8967
      %v8969 = vpop.f32.mrf.mxu0
      %v8970 = vpop.f32.mrf.mxu0
      %v8971 = vadd.f32 0.0, %v8970
      %v8972 = vpop.f32.mrf.mxu0
      %8973 = vmatprep.mubr.bf16.mxu0 0
      %8974 = vmatmul.mubr.bf16.gmra.mxu0 %v8645
      %v8975 = vpop.f32.mrf.mxu0
      %v8976 = vadd.f32 0.0, %v8975
      %v8977 = vpop.f32.mrf.mxu0
      %v8978 = vpop.f32.mrf.mxu0
      %v8979 = vadd.f32 0.0, %v8978
      %v8980 = vpop.f32.mrf.mxu0
      %8981 = vmatprep.mubr.bf16.mxu0 0
      %8982 = vmatmul.mubr.bf16.gmra.mxu0 %v8648
      %v8983 = vpop.f32.mrf.mxu0
      %v8984 = vadd.f32 0.0, %v8983
      %v8985 = vpop.f32.mrf.mxu0
      %v8986 = vpop.f32.mrf.mxu0
      %v8987 = vadd.f32 0.0, %v8986
      %v8988 = vpop.f32.mrf.mxu0
      %8989 = vmatprep.mubr.bf16.mxu0 0
      %8990 = vmatmul.mubr.bf16.gmra.mxu0 %v8651
      %v8991 = vpop.f32.mrf.mxu0
      %v8992 = vadd.f32 0.0, %v8991
      %v8993 = vpop.f32.mrf.mxu0
      %v8994 = vpop.f32.mrf.mxu0
      %v8995 = vadd.f32 0.0, %v8994
      %v8996 = vpop.f32.mrf.mxu0
      %8997 = vmatprep.mubr.bf16.mxu0 0
      %8998 = vmatmul.mubr.bf16.gmra.mxu0 %v8654
      %v8999 = vpop.f32.mrf.mxu0
      %v9000 = vadd.f32 0.0, %v8999
      %v9001 = vpop.f32.mrf.mxu0
      %v9002 = vpop.f32.mrf.mxu0
      %v9003 = vadd.f32 0.0, %v9002
      %v9004 = vpop.f32.mrf.mxu0
      %9005 = vmatprep.mubr.bf16.mxu0 0
      %9006 = vmatmul.mubr.bf16.gmra.mxu0 %v8657
      %v9007 = vpop.f32.mrf.mxu0
      %v9008 = vadd.f32 0.0, %v9007
      %v9009 = vpop.f32.mrf.mxu0
      %v9010 = vpop.f32.mrf.mxu0
      %v9011 = vadd.f32 0.0, %v9010
      %v9012 = vpop.f32.mrf.mxu0
      %9013 = vmatprep.mubr.bf16.mxu0 0
      %9014 = vmatmul.mubr.bf16.gmra.mxu0 %v8660
      %v9015 = vpop.f32.mrf.mxu0
      %v9016 = vadd.f32 0.0, %v9015
      %v9017 = vpop.f32.mrf.mxu0
      %v9018 = vpop.f32.mrf.mxu0
      %v9019 = vadd.f32 0.0, %v9018
      %v9020 = vpop.f32.mrf.mxu0
      %9021 = vmatprep.mubr.bf16.mxu0 0
      %9022 = vmatmul.mubr.bf16.gmra.mxu0 %v8663
      %v9023 = vpop.f32.mrf.mxu0
      %v9024 = vadd.f32 0.0, %v9023
      %v9025 = vpop.f32.mrf.mxu0
      %v9026 = vpop.f32.mrf.mxu0
      %v9027 = vadd.f32 0.0, %v9026
      %v9028 = vpop.f32.mrf.mxu0
      %9029 = vmatprep.mubr.bf16.mxu0 0
      %9030 = vmatmul.mubr.bf16.gmra.mxu0 %v8666
      %v9031 = vpop.f32.mrf.mxu0
      %v9032 = vadd.f32 0.0, %v9031
      %v9033 = vpop.f32.mrf.mxu0
      %v9034 = vpop.f32.mrf.mxu0
      %v9035 = vadd.f32 0.0, %v9034
      %v9036 = vpop.f32.mrf.mxu0
      %9037 = vmatprep.mubr.bf16.mxu0 0
      %9038 = vmatmul.mubr.bf16.gmra.mxu0 %v8669
      %v9039 = vpop.f32.mrf.mxu0
      %v9040 = vadd.f32 0.0, %v9039
      %v9041 = vpop.f32.mrf.mxu0
      %v9042 = vpop.f32.mrf.mxu0
      %v9043 = vadd.f32 0.0, %v9042
      %v9044 = vpop.f32.mrf.mxu0
      %9045 = vmatprep.mubr.bf16.mxu0 0
      %9046 = vmatmul.mubr.bf16.gmra.mxu0 %v8672
      %v9047 = vpop.f32.mrf.mxu0
      %v9048 = vadd.f32 0.0, %v9047
      %v9049 = vpop.f32.mrf.mxu0
      %v9050 = vpop.f32.mrf.mxu0
      %v9051 = vadd.f32 0.0, %v9050
      %v9052 = vpop.f32.mrf.mxu0
      %9053 = vmatprep.mubr.bf16.mxu0 0
      %9054 = vmatmul.mubr.bf16.gmra.mxu0 %v8675
      %v9055 = vpop.f32.mrf.mxu0
      %v9056 = vadd.f32 0.0, %v9055
      %v9057 = vpop.f32.mrf.mxu0
      %v9058 = vpop.f32.mrf.mxu0
      %v9059 = vadd.f32 0.0, %v9058
      %v9060 = vpop.f32.mrf.mxu0
      %9061 = vmatprep.mubr.bf16.mxu0 0
      %9062 = vmatmul.mubr.bf16.gmra.mxu0 %v8678
      %v9063 = vpop.f32.mrf.mxu0
      %v9064 = vadd.f32 0.0, %v9063
      %v9065 = vpop.f32.mrf.mxu0
      %v9066 = vpop.f32.mrf.mxu0
      %v9067 = vadd.f32 0.0, %v9066
      %v9068 = vpop.f32.mrf.mxu0
      %9069 = vmatprep.mubr.bf16.mxu0 0
      %9070 = vmatmul.mubr.bf16.gmra.mxu0 %v8681
      %v9071 = vpop.f32.mrf.mxu0
      %v9072 = vadd.f32 0.0, %v9071
      %v9073 = vpop.f32.mrf.mxu0
      %v9074 = vpop.f32.mrf.mxu0
      %v9075 = vadd.f32 0.0, %v9074
      %v9076 = vpop.f32.mrf.mxu0
      %9077 = vmatprep.mubr.bf16.mxu0 0
      %9078 = vmatmul.mubr.bf16.gmra.mxu0 %v8684
      %v9079 = vpop.f32.mrf.mxu0
      %v9080 = vadd.f32 0.0, %v9079
      %v9081 = vpop.f32.mrf.mxu0
      %v9082 = vpop.f32.mrf.mxu0
      %v9083 = vadd.f32 0.0, %v9082
      %v9084 = vpop.f32.mrf.mxu0
      %9085 = vmatprep.mubr.bf16.mxu0 0
      %9086 = vmatmul.mubr.bf16.gmra.mxu0 %v8687
      %v9087 = vpop.f32.mrf.mxu0
      %v9088 = vadd.f32 0.0, %v9087
      %v9089 = vpop.f32.mrf.mxu0
      %v9090 = vpop.f32.mrf.mxu0
      %v9091 = vadd.f32 0.0, %v9090
      %v9092 = vpop.f32.mrf.mxu0
      %9093 = vmatprep.mubr.bf16.mxu0 0
      %9094 = vmatmul.mubr.bf16.gmra.mxu0 %v8690
      %v9095 = vpop.f32.mrf.mxu0
      %v9096 = vadd.f32 0.0, %v9095
      %v9097 = vpop.f32.mrf.mxu0
      %v9098 = vpop.f32.mrf.mxu0
      %v9099 = vadd.f32 0.0, %v9098
      %v9100 = vpop.f32.mrf.mxu0
      %9101 = vmatprep.mubr.bf16.mxu0 0
      %9102 = vmatmul.mubr.bf16.gmra.mxu0 %v8693
      %v9103 = vpop.f32.mrf.mxu0
      %v9104 = vadd.f32 0.0, %v9103
      %v9105 = vpop.f32.mrf.mxu0
      %v9106 = vpop.f32.mrf.mxu0
      %v9107 = vadd.f32 0.0, %v9106
      %v9108 = vpop.f32.mrf.mxu0
      %9109 = vmatprep.mubr.bf16.mxu0 0
      %9110 = vmatmul.mubr.bf16.gmra.mxu0 %v8696
      %v9111 = vpop.f32.mrf.mxu0
      %v9112 = vadd.f32 0.0, %v9111
      %v9113 = vpop.f32.mrf.mxu0
      %v9114 = vpop.f32.mrf.mxu0
      %v9115 = vadd.f32 0.0, %v9114
      %v9116 = vpop.f32.mrf.mxu0
      %9117 = vmatprep.mubr.bf16.mxu0 0
      %9118 = vmatmul.mubr.bf16.gmra.mxu0 %v8699
      %v9119 = vpop.f32.mrf.mxu0
      %v9120 = vadd.f32 0.0, %v9119
      %v9121 = vpop.f32.mrf.mxu0
      %v9122 = vpop.f32.mrf.mxu0
      %v9123 = vadd.f32 0.0, %v9122
      %v9124 = vpop.f32.mrf.mxu0
      %9125 = vmatprep.mubr.bf16.mxu0 0
      %9126 = vmatmul.mubr.bf16.gmra.mxu0 %v8702
      %v9127 = vpop.f32.mrf.mxu0
      %v9128 = vadd.f32 0.0, %v9127
      %v9129 = vpop.f32.mrf.mxu0
      %v9130 = vpop.f32.mrf.mxu0
      %v9131 = vadd.f32 0.0, %v9130
      %v9132 = vpop.f32.mrf.mxu0
      %9133 = vmatprep.mubr.bf16.mxu0 0
      %9134 = vmatmul.mubr.bf16.gmra.mxu0 %v8705
      %v9135 = vpop.f32.mrf.mxu0
      %v9136 = vadd.f32 0.0, %v9135
      %v9137 = vpop.f32.mrf.mxu0
      %v9138 = vpop.f32.mrf.mxu0
      %v9139 = vadd.f32 0.0, %v9138
      %v9140 = vpop.f32.mrf.mxu0
      %9141 = vmatprep.mubr.bf16.mxu0 0
      %9142 = vmatmul.mubr.bf16.gmra.mxu0 %v8708
      %v9143 = vpop.f32.mrf.mxu0
      %v9144 = vadd.f32 0.0, %v9143
      %v9145 = vpop.f32.mrf.mxu0
      %v9146 = vpop.f32.mrf.mxu0
      %v9147 = vadd.f32 0.0, %v9146
      %v9148 = vpop.f32.mrf.mxu0
      %9149 = vmatprep.mubr.bf16.mxu0 0
      %9150 = vmatmul.mubr.bf16.gmra.mxu0 %v8711
      %v9151 = vpop.f32.mrf.mxu0
      %v9152 = vadd.f32 0.0, %v9151
      %v9153 = vpop.f32.mrf.mxu0
      %v9154 = vpop.f32.mrf.mxu0
      %v9155 = vadd.f32 0.0, %v9154
      %v9156 = vpop.f32.mrf.mxu0
      %9157 = vmatprep.mubr.bf16.mxu0 0
      %9158 = vmatmul.mubr.bf16.gmra.mxu0 %v8714
      %v9159 = vpop.f32.mrf.mxu0
      %v9160 = vadd.f32 0.0, %v9159
      %v9161 = vpop.f32.mrf.mxu0
      %v9162 = vpop.f32.mrf.mxu0
      %v9163 = vadd.f32 0.0, %v9162
      %v9164 = vpop.f32.mrf.mxu0
      %9165 = vmatprep.mubr.bf16.mxu0 0
      %9166 = vmatmul.mubr.bf16.gmra.mxu0 %v8717
      %v9167 = vpop.f32.mrf.mxu0
      %v9168 = vadd.f32 0.0, %v9167
      %v9169 = vpop.f32.mrf.mxu0
      %v9170 = vpop.f32.mrf.mxu0
      %v9171 = vadd.f32 0.0, %v9170
      %v9172 = vpop.f32.mrf.mxu0
      %9173 = vmatprep.mubr.bf16.mxu0 0
      %9174 = vmatmul.mubr.bf16.gmra.mxu0 %v8720
      %v9175 = vpop.f32.mrf.mxu0
      %v9176 = vadd.f32 0.0, %v9175
      %v9177 = vpop.f32.mrf.mxu0
      %v9178 = vpop.f32.mrf.mxu0
      %v9179 = vadd.f32 0.0, %v9178
      %v9180 = vpop.f32.mrf.mxu0
      %9181 = vmatprep.mubr.bf16.mxu0 0
      %9182 = vmatmul.mubr.bf16.gmra.mxu0 %v8723
      %v9183 = vpop.f32.mrf.mxu0
      %v9184 = vadd.f32 0.0, %v9183
      %v9185 = vpop.f32.mrf.mxu0
      %v9186 = vpop.f32.mrf.mxu0
      %v9187 = vadd.f32 0.0, %v9186
      %v9188 = vpop.f32.mrf.mxu0
      %9189 = vmatprep.mubr.bf16.mxu0 0
      %9190 = vmatmul.mubr.bf16.gmra.mxu0 %v8726
      %v9191 = vpop.f32.mrf.mxu0
      %v9192 = vadd.f32 0.0, %v9191
      %v9193 = vpop.f32.mrf.mxu0
      %v9194 = vpop.f32.mrf.mxu0
      %v9195 = vadd.f32 0.0, %v9194
      %v9196 = vpop.f32.mrf.mxu0
      %9197 = vmatprep.mubr.bf16.mxu0 0
      %9198 = vmatmul.mubr.bf16.gmra.mxu0 %v8729
      %v9199 = vpop.f32.mrf.mxu0
      %v9200 = vadd.f32 0.0, %v9199
      %v9201 = vpop.f32.mrf.mxu0
      %v9202 = vpop.f32.mrf.mxu0
      %v9203 = vadd.f32 0.0, %v9202
      %v9204 = vpop.f32.mrf.mxu0
      %9205 = vmatprep.mubr.bf16.mxu0 0
      %9206 = vmatmul.mubr.bf16.gmra.mxu0 %v8732
      %v9207 = vpop.f32.mrf.mxu0
      %v9208 = vadd.f32 0.0, %v9207
      %v9209 = vpop.f32.mrf.mxu0
      %v9210 = vpop.f32.mrf.mxu0
      %v9211 = vadd.f32 0.0, %v9210
      %v9212 = vpop.f32.mrf.mxu0
      %9213 = vmatprep.mubr.bf16.mxu0 0
      %9214 = vmatmul.mubr.bf16.gmra.mxu0 %v8735
      %v9215 = vpop.f32.mrf.mxu0
      %v9216 = vadd.f32 0.0, %v9215
      %v9217 = vpop.f32.mrf.mxu0
      %v9218 = vpop.f32.mrf.mxu0
      %v9219 = vadd.f32 0.0, %v9218
      %v9220 = vpop.f32.mrf.mxu0
      %9221 = vmatprep.mubr.bf16.mxu0 0
      %9222 = vmatmul.mubr.bf16.gmra.mxu0 %v8738
      %v9223 = vpop.f32.mrf.mxu0
      %v9224 = vadd.f32 0.0, %v9223
      %v9225 = vpop.f32.mrf.mxu0
      %v9226 = vpop.f32.mrf.mxu0
      %v9227 = vadd.f32 0.0, %v9226
      %v9228 = vpop.f32.mrf.mxu0
      %9229 = vmatprep.mubr.bf16.mxu0 0
      %9230 = vmatmul.mubr.bf16.gmra.mxu0 %v8741
      %v9231 = vpop.f32.mrf.mxu0
      %v9232 = vadd.f32 0.0, %v9231
      %v9233 = vpop.f32.mrf.mxu0
      %v9234 = vpop.f32.mrf.mxu0
      %v9235 = vadd.f32 0.0, %v9234
      %v9236 = vpop.f32.mrf.mxu0
      %9237 = vmatprep.mubr.bf16.mxu0 0
      %9238 = vmatmul.mubr.bf16.gmra.mxu0 %v8744
      %v9239 = vpop.f32.mrf.mxu0
      %v9240 = vadd.f32 0.0, %v9239
      %v9241 = vpop.f32.mrf.mxu0
      %v9242 = vpop.f32.mrf.mxu0
      %v9243 = vadd.f32 0.0, %v9242
      %v9244 = vpop.f32.mrf.mxu0
      %9245 = vmatprep.mubr.bf16.mxu0 0
      %9246 = vmatmul.mubr.bf16.gmra.mxu0 %v8747
      %v9247 = vpop.f32.mrf.mxu0
      %v9248 = vadd.f32 0.0, %v9247
      %v9249 = vpop.f32.mrf.mxu0
      %v9250 = vpop.f32.mrf.mxu0
      %v9251 = vadd.f32 0.0, %v9250
      %v9252 = vpop.f32.mrf.mxu0
      %9253 = vmatprep.mubr.bf16.mxu0 0
      %9254 = vmatmul.mubr.bf16.gmra.mxu0 %v8750
      %v9255 = vpop.f32.mrf.mxu0
      %v9256 = vadd.f32 0.0, %v9255
      %v9257 = vpop.f32.mrf.mxu0
      %v9258 = vpop.f32.mrf.mxu0
      %v9259 = vadd.f32 0.0, %v9258
      %v9260 = vpop.f32.mrf.mxu0
      %9261 = vmatprep.mubr.bf16.mxu0 0
      %9262 = vmatmul.mubr.bf16.gmra.mxu0 %v8753
      %v9263 = vpop.f32.mrf.mxu0
      %v9264 = vadd.f32 0.0, %v9263
      %v9265 = vpop.f32.mrf.mxu0
      %v9266 = vpop.f32.mrf.mxu0
      %v9267 = vadd.f32 0.0, %v9266
      %v9268 = vpop.f32.mrf.mxu0
      %9269 = vmatprep.mubr.bf16.mxu0 0
      %9270 = vmatmul.mubr.bf16.gmra.mxu0 %v8756
      %v9271 = vpop.f32.mrf.mxu0
      %v9272 = vadd.f32 0.0, %v9271
      %v9273 = vpop.f32.mrf.mxu0
      %v9274 = vpop.f32.mrf.mxu0
      %v9275 = vadd.f32 0.0, %v9274
      %v9276 = vpop.f32.mrf.mxu0
      %9277 = vmatprep.mubr.bf16.mxu0 0
      %9278 = vmatmul.mubr.bf16.gmra.mxu0 %v8759
      %v9279 = vpop.f32.mrf.mxu0
      %v9280 = vadd.f32 0.0, %v9279
      %v9281 = vpop.f32.mrf.mxu0
      %v9282 = vpop.f32.mrf.mxu0
      %v9283 = vadd.f32 0.0, %v9282
      %v9284 = vpop.f32.mrf.mxu0
      %9285 = vmatprep.mubr.bf16.mxu0 0
      %9286 = vmatmul.mubr.bf16.gmra.mxu0 %v8762
      %v9287 = vpop.f32.mrf.mxu0
      %v9288 = vadd.f32 0.0, %v9287
      %v9289 = vpop.f32.mrf.mxu0
      %v9290 = vpop.f32.mrf.mxu0
      %v9291 = vadd.f32 0.0, %v9290
      %v9292 = vpop.f32.mrf.mxu0
      %9293 = vmatprep.mubr.bf16.mxu0 0
      %9294 = vmatmul.mubr.bf16.gmra.mxu0 %v8765
      %v9295 = vpop.f32.mrf.mxu0
      %v9296 = vadd.f32 0.0, %v9295
      %v9297 = vpop.f32.mrf.mxu0
      %v9298 = vpop.f32.mrf.mxu0
      %v9299 = vadd.f32 0.0, %v9298
      %v9300 = vpop.f32.mrf.mxu0
      %9301 = vmatprep.mubr.bf16.mxu0 0
      %9302 = vmatmul.mubr.bf16.gmra.mxu0 %v8768
      %v9303 = vpop.f32.mrf.mxu0
      %v9304 = vadd.f32 0.0, %v9303
      %v9305 = vpop.f32.mrf.mxu0
      %v9306 = vpop.f32.mrf.mxu0
      %v9307 = vadd.f32 0.0, %v9306
      %v9308 = vpop.f32.mrf.mxu0
      %9309 = vmatprep.mubr.bf16.mxu0 0
      %9310 = vmatmul.mubr.bf16.gmra.mxu0 %v8771
      %v9311 = vpop.f32.mrf.mxu0
      %v9312 = vadd.f32 0.0, %v9311
      %v9313 = vpop.f32.mrf.mxu0
      %v9314 = vpop.f32.mrf.mxu0
      %v9315 = vadd.f32 0.0, %v9314
      %v9316 = vpop.f32.mrf.mxu0
      %9317 = vmatprep.mubr.bf16.mxu0 0
      %9318 = vmatmul.mubr.bf16.gmra.mxu0 %v8774
      %v9319 = vpop.f32.mrf.mxu0
      %v9320 = vadd.f32 0.0, %v9319
      %v9321 = vpop.f32.mrf.mxu0
      %v9322 = vpop.f32.mrf.mxu0
      %v9323 = vadd.f32 0.0, %v9322
      %v9324 = vpop.f32.mrf.mxu0
      %9325 = vmatprep.mubr.bf16.mxu0 0
      %9326 = vmatmul.mubr.bf16.gmra.mxu0 %v8777
      %v9327 = vpop.f32.mrf.mxu0
      %v9328 = vadd.f32 0.0, %v9327
      %v9329 = vpop.f32.mrf.mxu0
      %v9330 = vpop.f32.mrf.mxu0
      %v9331 = vadd.f32 0.0, %v9330
      %v9332 = vpop.f32.mrf.mxu0
      %9333 = vmatprep.mubr.bf16.mxu0 0
      %9334 = vmatmul.mubr.bf16.gmra.mxu0 %v8780
      %v9335 = vpop.f32.mrf.mxu0
      %v9336 = vadd.f32 0.0, %v9335
      %v9337 = vpop.f32.mrf.mxu0
      %v9338 = vpop.f32.mrf.mxu0
      %v9339 = vadd.f32 0.0, %v9338
      %v9340 = vpop.f32.mrf.mxu0
      %9341 = vmatprep.mubr.bf16.mxu0 0
      %9342 = vmatmul.mubr.bf16.gmra.mxu0 %v8783
      %v9343 = vpop.f32.mrf.mxu0
      %v9344 = vadd.f32 0.0, %v9343
      %v9345 = vpop.f32.mrf.mxu0
      %v9346 = vpop.f32.mrf.mxu0
      %v9347 = vadd.f32 0.0, %v9346
      %v9348 = vpop.f32.mrf.mxu0
      %9349 = vmatprep.mubr.bf16.mxu0 0
      %9350 = vmatmul.mubr.bf16.gmra.mxu0 %v8786
      %v9351 = vpop.f32.mrf.mxu0
      %v9352 = vadd.f32 0.0, %v9351
      %v9353 = vpop.f32.mrf.mxu0
      %v9354 = vpop.f32.mrf.mxu0
      %v9355 = vadd.f32 0.0, %v9354
      %v9356 = vpop.f32.mrf.mxu0
      %9357 = vmatprep.mubr.bf16.mxu0 0
      %9358 = vmatmul.mubr.bf16.gmra.mxu0 %v8789
      %v9359 = vpop.f32.mrf.mxu0
      %v9360 = vadd.f32 0.0, %v9359
      %v9361 = vpop.f32.mrf.mxu0
      %v9362 = vpop.f32.mrf.mxu0
      %v9363 = vadd.f32 0.0, %v9362
      %v9364 = vpop.f32.mrf.mxu0
      %9365 = vmatprep.mubr.bf16.mxu0 0
      %9366 = vmatmul.mubr.bf16.gmra.mxu0 %v8792
      %v9367 = vpop.f32.mrf.mxu0
      %v9368 = vadd.f32 0.0, %v9367
      %v9369 = vpop.f32.mrf.mxu0
      %v9370 = vpop.f32.mrf.mxu0
      %v9371 = vadd.f32 0.0, %v9370
      %v9372 = vpop.f32.mrf.mxu0
      %9373 = vdwg.mxu0
      %v9374 = vadd.f32 %v7835, %v8832
      %v9375 = vadd.f32 %v7836, %v8835
      %v9376 = vadd.f32 %v7837, %v8840
      %v9377 = vadd.f32 %v7838, %v8843
      %v9378 = vadd.f32 %v7839, %v8848
      %v9379 = vadd.f32 %v7840, %v8851
      %v9380 = vadd.f32 %v7841, %v8856
      %v9381 = vadd.f32 %v7842, %v8859
      %v9382 = vadd.f32 %v7843, %v8864
      %v9383 = vadd.f32 %v7844, %v8867
      %v9384 = vadd.f32 %v7845, %v8872
      %v9385 = vadd.f32 %v7846, %v8875
      %v9386 = vadd.f32 %v7847, %v8880
      %v9387 = vadd.f32 %v7848, %v8883
      %v9388 = vadd.f32 %v7849, %v8888
      %v9389 = vadd.f32 %v7850, %v8891
      %v9390 = vadd.f32 %v7851, %v8896
      %v9391 = vadd.f32 %v7852, %v8899
      %v9392 = vadd.f32 %v7853, %v8904
      %v9393 = vadd.f32 %v7854, %v8907
      %v9394 = vadd.f32 %v7855, %v8912
      %v9395 = vadd.f32 %v7856, %v8915
      %v9396 = vadd.f32 %v7857, %v8920
      %v9397 = vadd.f32 %v7858, %v8923
      %v9398 = vadd.f32 %v7859, %v8928
      %v9399 = vadd.f32 %v7860, %v8931
      %v9400 = vadd.f32 %v7861, %v8936
      %v9401 = vadd.f32 %v7862, %v8939
      %v9402 = vadd.f32 %v7863, %v8944
      %v9403 = vadd.f32 %v7864, %v8947
      %v9404 = vadd.f32 %v7865, %v8952
      %v9405 = vadd.f32 %v7866, %v8955
      %v9406 = vadd.f32 %v7867, %v8960
      %v9407 = vadd.f32 %v7868, %v8963
      %v9408 = vadd.f32 %v7869, %v8968
      %v9409 = vadd.f32 %v7870, %v8971
      %v9410 = vadd.f32 %v7871, %v8976
      %v9411 = vadd.f32 %v7872, %v8979
      %v9412 = vadd.f32 %v7873, %v8984
      %v9413 = vadd.f32 %v7874, %v8987
      %v9414 = vadd.f32 %v7875, %v8992
      %v9415 = vadd.f32 %v7876, %v8995
      %v9416 = vadd.f32 %v7877, %v9000
      %v9417 = vadd.f32 %v7878, %v9003
      %v9418 = vadd.f32 %v7879, %v9008
      %v9419 = vadd.f32 %v7880, %v9011
      %v9420 = vadd.f32 %v7881, %v9016
      %v9421 = vadd.f32 %v7882, %v9019
      %v9422 = vadd.f32 %v7883, %v9024
      %v9423 = vadd.f32 %v7884, %v9027
      %v9424 = vadd.f32 %v7885, %v9032
      %v9425 = vadd.f32 %v7886, %v9035
      %v9426 = vadd.f32 %v7887, %v9040
      %v9427 = vadd.f32 %v7888, %v9043
      %v9428 = vadd.f32 %v7889, %v9048
      %v9429 = vadd.f32 %v7890, %v9051
      %v9430 = vadd.f32 %v7891, %v9056
      %v9431 = vadd.f32 %v7892, %v9059
      %v9432 = vadd.f32 %v7893, %v9064
      %v9433 = vadd.f32 %v7894, %v9067
      %v9434 = vadd.f32 %v7895, %v9072
      %v9435 = vadd.f32 %v7896, %v9075
      %v9436 = vadd.f32 %v7897, %v9080
      %v9437 = vadd.f32 %v7898, %v9083
      %v9438 = vadd.f32 %v7899, %v9088
      %v9439 = vadd.f32 %v7900, %v9091
      %v9440 = vadd.f32 %v7901, %v9096
      %v9441 = vadd.f32 %v7902, %v9099
      %v9442 = vadd.f32 %v7903, %v9104
      %v9443 = vadd.f32 %v7904, %v9107
      %v9444 = vadd.f32 %v7905, %v9112
      %v9445 = vadd.f32 %v7906, %v9115
      %v9446 = vadd.f32 %v7907, %v9120
      %v9447 = vadd.f32 %v7908, %v9123
      %v9448 = vadd.f32 %v7909, %v9128
      %v9449 = vadd.f32 %v7910, %v9131
      %v9450 = vadd.f32 %v7911, %v9136
      %v9451 = vadd.f32 %v7912, %v9139
      %v9452 = vadd.f32 %v7913, %v9144
      %v9453 = vadd.f32 %v7914, %v9147
      %v9454 = vadd.f32 %v7915, %v9152
      %v9455 = vadd.f32 %v7916, %v9155
      %v9456 = vadd.f32 %v7917, %v9160
      %v9457 = vadd.f32 %v7918, %v9163
      %v9458 = vadd.f32 %v7919, %v9168
      %v9459 = vadd.f32 %v7920, %v9171
      %v9460 = vadd.f32 %v7921, %v9176
      %v9461 = vadd.f32 %v7922, %v9179
      %v9462 = vadd.f32 %v7923, %v9184
      %v9463 = vadd.f32 %v7924, %v9187
      %v9464 = vadd.f32 %v7925, %v9192
      %v9465 = vadd.f32 %v7926, %v9195
      %v9466 = vadd.f32 %v7927, %v9200
      %v9467 = vadd.f32 %v7928, %v9203
      %v9468 = vadd.f32 %v7929, %v9208
      %v9469 = vadd.f32 %v7930, %v9211
      %v9470 = vadd.f32 %v7931, %v9216
      %v9471 = vadd.f32 %v7932, %v9219
      %v9472 = vadd.f32 %v7933, %v9224
      %v9473 = vadd.f32 %v7934, %v9227
      %v9474 = vadd.f32 %v7935, %v9232
      %v9475 = vadd.f32 %v7936, %v9235
      %v9476 = vadd.f32 %v7937, %v9240
      %v9477 = vadd.f32 %v7938, %v9243
      %v9478 = vadd.f32 %v7939, %v9248
      %v9479 = vadd.f32 %v7940, %v9251
      %v9480 = vadd.f32 %v7941, %v9256
      %v9481 = vadd.f32 %v7942, %v9259
      %v9482 = vadd.f32 %v7943, %v9264
      %v9483 = vadd.f32 %v7944, %v9267
      %v9484 = vadd.f32 %v7945, %v9272
      %v9485 = vadd.f32 %v7946, %v9275
      %v9486 = vadd.f32 %v7947, %v9280
      %v9487 = vadd.f32 %v7948, %v9283
      %v9488 = vadd.f32 %v7949, %v9288
      %v9489 = vadd.f32 %v7950, %v9291
      %v9490 = vadd.f32 %v7951, %v9296
      %v9491 = vadd.f32 %v7952, %v9299
      %v9492 = vadd.f32 %v7953, %v9304
      %v9493 = vadd.f32 %v7954, %v9307
      %v9494 = vadd.f32 %v7955, %v9312
      %v9495 = vadd.f32 %v7956, %v9315
      %v9496 = vadd.f32 %v7957, %v9320
      %v9497 = vadd.f32 %v7958, %v9323
      %v9498 = vadd.f32 %v7959, %v9328
      %v9499 = vadd.f32 %v7960, %v9331
      %v9500 = vadd.f32 %v7961, %v9336
      %v9501 = vadd.f32 %v7962, %v9339
      %v9502 = vadd.f32 %v7963, %v9344
      %v9503 = vadd.f32 %v7964, %v9347
      %v9504 = vadd.f32 %v7965, %v9352
      %v9505 = vadd.f32 %v7966, %v9355
      %v9506 = vadd.f32 %v7967, %v9360
      %v9507 = vadd.f32 %v7968, %v9363
      %v9508 = vadd.f32 %v7969, %v9368
      %v9509 = vadd.f32 %v7970, %v9371
      %v9510 = vld [vmem:[%s206 + $0x240] sm:$0x7]
      %s9511 = scalar_lea.vmem %s210, 28
      %v9512 = vld [vmem:[%s9511] sm:$0xf]
      %v9514 = vunpack.c.l.b16 %v9510
      %v9515 = vpack.c.b16 %v9514, %v9514
      %vm9516 = vsmask.f32 5376
      %v9518 = vshrl.u32 %v8384, 16
      %v9520 = vrot.slane %v9518, 2
      %v9521 = vshll.u32 %v8384, 16
      %v9523 = vrot.slane %v9521, 3
      %v9524 = vor.u32 %v9520, %v9523
      %v9526 = vshrl.u32 %v8385, 16
      %v9528 = vrot.slane %v9526, 2
      %v9529 = vshll.u32 %v8385, 16
      %v9531 = vrot.slane %v9529, 3
      %v9532 = vor.u32 %v9528, %v9531
      %v9533 = vsel %vm9516, %v9524, %v9532
      %v9535 = vshrl.u32 %v8386, 16
      %v9537 = vrot.slane %v9535, 2
      %v9538 = vshll.u32 %v8386, 16
      %v9540 = vrot.slane %v9538, 3
      %v9541 = vor.u32 %v9537, %v9540
      %v9542 = vsel %vm9516, %v9532, %v9541
      %v9544 = vshrl.u32 %v8387, 16
      %v9546 = vrot.slane %v9544, 2
      %v9547 = vshll.u32 %v8387, 16
      %v9549 = vrot.slane %v9547, 3
      %v9550 = vor.u32 %v9546, %v9549
      %v9551 = vsel %vm9516, %v9541, %v9550
      %v9553 = vshrl.u32 %v8388, 16
      %v9555 = vrot.slane %v9553, 2
      %v9556 = vshll.u32 %v8388, 16
      %v9558 = vrot.slane %v9556, 3
      %v9559 = vor.u32 %v9555, %v9558
      %v9560 = vsel %vm9516, %v9550, %v9559
      %v9562 = vshrl.u32 %v8389, 16
      %v9564 = vrot.slane %v9562, 2
      %v9565 = vshll.u32 %v8389, 16
      %v9567 = vrot.slane %v9565, 3
      %v9568 = vor.u32 %v9564, %v9567
      %v9569 = vsel %vm9516, %v9559, %v9568
      %v9571 = vshrl.u32 %v8390, 16
      %v9573 = vrot.slane %v9571, 2
      %v9574 = vshll.u32 %v8390, 16
      %v9576 = vrot.slane %v9574, 3
      %v9577 = vor.u32 %v9573, %v9576
      %v9578 = vsel %vm9516, %v9568, %v9577
      %v9580 = vshrl.u32 %v8391, 16
      %v9582 = vrot.slane %v9580, 2
      %v9583 = vshll.u32 %v8391, 16
      %v9585 = vrot.slane %v9583, 3
      %v9586 = vor.u32 %v9582, %v9585
      %v9587 = vsel %vm9516, %v9577, %v9586
      %v9589 = vshrl.u32 %v8392, 16
      %v9591 = vrot.slane %v9589, 2
      %v9592 = vshll.u32 %v8392, 16
      %v9594 = vrot.slane %v9592, 3
      %v9595 = vor.u32 %v9591, %v9594
      %v9596 = vsel %vm9516, %v9586, %v9595
      %v9598 = vshrl.u32 %v8393, 16
      %v9600 = vrot.slane %v9598, 2
      %v9601 = vshll.u32 %v8393, 16
      %v9603 = vrot.slane %v9601, 3
      %v9604 = vor.u32 %v9600, %v9603
      %v9605 = vsel %vm9516, %v9595, %v9604
      %v9607 = vshrl.u32 %v8394, 16
      %v9609 = vrot.slane %v9607, 2
      %v9610 = vshll.u32 %v8394, 16
      %v9612 = vrot.slane %v9610, 3
      %v9613 = vor.u32 %v9609, %v9612
      %v9614 = vsel %vm9516, %v9604, %v9613
      %v9616 = vshrl.u32 %v8395, 16
      %v9618 = vrot.slane %v9616, 2
      %v9619 = vshll.u32 %v8395, 16
      %v9621 = vrot.slane %v9619, 3
      %v9622 = vor.u32 %v9618, %v9621
      %v9623 = vsel %vm9516, %v9613, %v9622
      %v9625 = vshrl.u32 %v8396, 16
      %v9627 = vrot.slane %v9625, 2
      %v9628 = vshll.u32 %v8396, 16
      %v9630 = vrot.slane %v9628, 3
      %v9631 = vor.u32 %v9627, %v9630
      %v9632 = vsel %vm9516, %v9622, %v9631
      %v9634 = vshrl.u32 %v8397, 16
      %v9636 = vrot.slane %v9634, 2
      %v9637 = vshll.u32 %v8397, 16
      %v9639 = vrot.slane %v9637, 3
      %v9640 = vor.u32 %v9636, %v9639
      %v9641 = vsel %vm9516, %v9631, %v9640
      %v9643 = vshrl.u32 %v8398, 16
      %v9645 = vrot.slane %v9643, 2
      %v9646 = vshll.u32 %v8398, 16
      %v9648 = vrot.slane %v9646, 3
      %v9649 = vor.u32 %v9645, %v9648
      %v9650 = vsel %vm9516, %v9640, %v9649
      %v9652 = vshrl.u32 %v8399, 16
      %v9654 = vrot.slane %v9652, 2
      %v9655 = vshll.u32 %v8399, 16
      %v9657 = vrot.slane %v9655, 3
      %v9658 = vor.u32 %v9654, %v9657
      %v9659 = vsel %vm9516, %v9649, %v9658
      %v9661 = vshrl.u32 %v8400, 16
      %v9663 = vrot.slane %v9661, 2
      %v9664 = vshll.u32 %v8400, 16
      %v9666 = vrot.slane %v9664, 3
      %v9667 = vor.u32 %v9663, %v9666
      %v9668 = vsel %vm9516, %v9658, %v9667
      %v9670 = vshrl.u32 %v8401, 16
      %v9672 = vrot.slane %v9670, 2
      %v9673 = vshll.u32 %v8401, 16
      %v9675 = vrot.slane %v9673, 3
      %v9676 = vor.u32 %v9672, %v9675
      %v9677 = vsel %vm9516, %v9667, %v9676
      %v9679 = vshrl.u32 %v8402, 16
      %v9681 = vrot.slane %v9679, 2
      %v9682 = vshll.u32 %v8402, 16
      %v9684 = vrot.slane %v9682, 3
      %v9685 = vor.u32 %v9681, %v9684
      %v9686 = vsel %vm9516, %v9676, %v9685
      %v9688 = vshrl.u32 %v8403, 16
      %v9690 = vrot.slane %v9688, 2
      %v9691 = vshll.u32 %v8403, 16
      %v9693 = vrot.slane %v9691, 3
      %v9694 = vor.u32 %v9690, %v9693
      %v9695 = vsel %vm9516, %v9685, %v9694
      %v9697 = vshrl.u32 %v8404, 16
      %v9699 = vrot.slane %v9697, 2
      %v9700 = vshll.u32 %v8404, 16
      %v9702 = vrot.slane %v9700, 3
      %v9703 = vor.u32 %v9699, %v9702
      %v9704 = vsel %vm9516, %v9694, %v9703
      %v9706 = vshrl.u32 %v8405, 16
      %v9708 = vrot.slane %v9706, 2
      %v9709 = vshll.u32 %v8405, 16
      %v9711 = vrot.slane %v9709, 3
      %v9712 = vor.u32 %v9708, %v9711
      %v9713 = vsel %vm9516, %v9703, %v9712
      %v9715 = vshrl.u32 %v8406, 16
      %v9717 = vrot.slane %v9715, 2
      %v9718 = vshll.u32 %v8406, 16
      %v9720 = vrot.slane %v9718, 3
      %v9721 = vor.u32 %v9717, %v9720
      %v9722 = vsel %vm9516, %v9712, %v9721
      %v9724 = vshrl.u32 %v8407, 16
      %v9726 = vrot.slane %v9724, 2
      %v9727 = vshll.u32 %v8407, 16
      %v9729 = vrot.slane %v9727, 3
      %v9730 = vor.u32 %v9726, %v9729
      %v9731 = vsel %vm9516, %v9721, %v9730
      %v9733 = vshrl.u32 %v8408, 16
      %v9735 = vrot.slane %v9733, 2
      %v9736 = vshll.u32 %v8408, 16
      %v9738 = vrot.slane %v9736, 3
      %v9739 = vor.u32 %v9735, %v9738
      %v9740 = vsel %vm9516, %v9730, %v9739
      %v9742 = vshrl.u32 %v8409, 16
      %v9744 = vrot.slane %v9742, 2
      %v9745 = vshll.u32 %v8409, 16
      %v9747 = vrot.slane %v9745, 3
      %v9748 = vor.u32 %v9744, %v9747
      %v9749 = vsel %vm9516, %v9739, %v9748
      %v9751 = vshrl.u32 %v8410, 16
      %v9753 = vrot.slane %v9751, 2
      %v9754 = vshll.u32 %v8410, 16
      %v9756 = vrot.slane %v9754, 3
      %v9757 = vor.u32 %v9753, %v9756
      %v9758 = vsel %vm9516, %v9748, %v9757
      %v9760 = vshrl.u32 %v8411, 16
      %v9762 = vrot.slane %v9760, 2
      %v9763 = vshll.u32 %v8411, 16
      %v9765 = vrot.slane %v9763, 3
      %v9766 = vor.u32 %v9762, %v9765
      %v9767 = vsel %vm9516, %v9757, %v9766
      %v9769 = vshrl.u32 %v8412, 16
      %v9771 = vrot.slane %v9769, 2
      %v9772 = vshll.u32 %v8412, 16
      %v9774 = vrot.slane %v9772, 3
      %v9775 = vor.u32 %v9771, %v9774
      %v9776 = vsel %vm9516, %v9766, %v9775
      %v9778 = vshrl.u32 %v8413, 16
      %v9780 = vrot.slane %v9778, 2
      %v9781 = vshll.u32 %v8413, 16
      %v9783 = vrot.slane %v9781, 3
      %v9784 = vor.u32 %v9780, %v9783
      %v9785 = vsel %vm9516, %v9775, %v9784
      %v9787 = vshrl.u32 %v8414, 16
      %v9789 = vrot.slane %v9787, 2
      %v9790 = vshll.u32 %v8414, 16
      %v9792 = vrot.slane %v9790, 3
      %v9793 = vor.u32 %v9789, %v9792
      %v9794 = vsel %vm9516, %v9784, %v9793
      %v9796 = vshrl.u32 %v8415, 16
      %v9798 = vrot.slane %v9796, 2
      %v9799 = vshll.u32 %v8415, 16
      %v9801 = vrot.slane %v9799, 3
      %v9802 = vor.u32 %v9798, %v9801
      %v9803 = vsel %vm9516, %v9793, %v9802
      %v9805 = vshrl.u32 %v8416, 16
      %v9807 = vrot.slane %v9805, 2
      %v9808 = vshll.u32 %v8416, 16
      %v9810 = vrot.slane %v9808, 3
      %v9811 = vor.u32 %v9807, %v9810
      %v9812 = vsel %vm9516, %v9802, %v9811
      %v9814 = vshrl.u32 %v8417, 16
      %v9816 = vrot.slane %v9814, 2
      %v9817 = vshll.u32 %v8417, 16
      %v9819 = vrot.slane %v9817, 3
      %v9820 = vor.u32 %v9816, %v9819
      %v9821 = vsel %vm9516, %v9811, %v9820
      %v9823 = vshrl.u32 %v8418, 16
      %v9825 = vrot.slane %v9823, 2
      %v9826 = vshll.u32 %v8418, 16
      %v9828 = vrot.slane %v9826, 3
      %v9829 = vor.u32 %v9825, %v9828
      %v9830 = vsel %vm9516, %v9820, %v9829
      %v9832 = vshrl.u32 %v8419, 16
      %v9834 = vrot.slane %v9832, 2
      %v9835 = vshll.u32 %v8419, 16
      %v9837 = vrot.slane %v9835, 3
      %v9838 = vor.u32 %v9834, %v9837
      %v9839 = vsel %vm9516, %v9829, %v9838
      %v9841 = vshrl.u32 %v8420, 16
      %v9843 = vrot.slane %v9841, 2
      %v9844 = vshll.u32 %v8420, 16
      %v9846 = vrot.slane %v9844, 3
      %v9847 = vor.u32 %v9843, %v9846
      %v9848 = vsel %vm9516, %v9838, %v9847
      %v9850 = vshrl.u32 %v8421, 16
      %v9852 = vrot.slane %v9850, 2
      %v9853 = vshll.u32 %v8421, 16
      %v9855 = vrot.slane %v9853, 3
      %v9856 = vor.u32 %v9852, %v9855
      %v9857 = vsel %vm9516, %v9847, %v9856
      %v9859 = vshrl.u32 %v8422, 16
      %v9861 = vrot.slane %v9859, 2
      %v9862 = vshll.u32 %v8422, 16
      %v9864 = vrot.slane %v9862, 3
      %v9865 = vor.u32 %v9861, %v9864
      %v9866 = vsel %vm9516, %v9856, %v9865
      %v9868 = vshrl.u32 %v8423, 16
      %v9870 = vrot.slane %v9868, 2
      %v9871 = vshll.u32 %v8423, 16
      %v9873 = vrot.slane %v9871, 3
      %v9874 = vor.u32 %v9870, %v9873
      %v9875 = vsel %vm9516, %v9865, %v9874
      %v9877 = vshrl.u32 %v8424, 16
      %v9879 = vrot.slane %v9877, 2
      %v9880 = vshll.u32 %v8424, 16
      %v9882 = vrot.slane %v9880, 3
      %v9883 = vor.u32 %v9879, %v9882
      %v9884 = vsel %vm9516, %v9874, %v9883
      %v9886 = vshrl.u32 %v8425, 16
      %v9888 = vrot.slane %v9886, 2
      %v9889 = vshll.u32 %v8425, 16
      %v9891 = vrot.slane %v9889, 3
      %v9892 = vor.u32 %v9888, %v9891
      %v9893 = vsel %vm9516, %v9883, %v9892
      %v9895 = vshrl.u32 %v8426, 16
      %v9897 = vrot.slane %v9895, 2
      %v9898 = vshll.u32 %v8426, 16
      %v9900 = vrot.slane %v9898, 3
      %v9901 = vor.u32 %v9897, %v9900
      %v9902 = vsel %vm9516, %v9892, %v9901
      %v9904 = vshrl.u32 %v8427, 16
      %v9906 = vrot.slane %v9904, 2
      %v9907 = vshll.u32 %v8427, 16
      %v9909 = vrot.slane %v9907, 3
      %v9910 = vor.u32 %v9906, %v9909
      %v9911 = vsel %vm9516, %v9901, %v9910
      %v9913 = vshrl.u32 %v8428, 16
      %v9915 = vrot.slane %v9913, 2
      %v9916 = vshll.u32 %v8428, 16
      %v9918 = vrot.slane %v9916, 3
      %v9919 = vor.u32 %v9915, %v9918
      %v9920 = vsel %vm9516, %v9910, %v9919
      %v9922 = vshrl.u32 %v8429, 16
      %v9924 = vrot.slane %v9922, 2
      %v9925 = vshll.u32 %v8429, 16
      %v9927 = vrot.slane %v9925, 3
      %v9928 = vor.u32 %v9924, %v9927
      %v9929 = vsel %vm9516, %v9919, %v9928
      %v9931 = vshrl.u32 %v8430, 16
      %v9933 = vrot.slane %v9931, 2
      %v9934 = vshll.u32 %v8430, 16
      %v9936 = vrot.slane %v9934, 3
      %v9937 = vor.u32 %v9933, %v9936
      %v9938 = vsel %vm9516, %v9928, %v9937
      %v9940 = vshrl.u32 %v8431, 16
      %v9942 = vrot.slane %v9940, 2
      %v9943 = vshll.u32 %v8431, 16
      %v9945 = vrot.slane %v9943, 3
      %v9946 = vor.u32 %v9942, %v9945
      %v9947 = vsel %vm9516, %v9937, %v9946
      %v9949 = vshrl.u32 %v8432, 16
      %v9951 = vrot.slane %v9949, 2
      %v9952 = vshll.u32 %v8432, 16
      %v9954 = vrot.slane %v9952, 3
      %v9955 = vor.u32 %v9951, %v9954
      %v9956 = vsel %vm9516, %v9946, %v9955
      %v9958 = vshrl.u32 %v8433, 16
      %v9960 = vrot.slane %v9958, 2
      %v9961 = vshll.u32 %v8433, 16
      %v9963 = vrot.slane %v9961, 3
      %v9964 = vor.u32 %v9960, %v9963
      %v9965 = vsel %vm9516, %v9955, %v9964
      %v9967 = vshrl.u32 %v8434, 16
      %v9969 = vrot.slane %v9967, 2
      %v9970 = vshll.u32 %v8434, 16
      %v9972 = vrot.slane %v9970, 3
      %v9973 = vor.u32 %v9969, %v9972
      %v9974 = vsel %vm9516, %v9964, %v9973
      %v9976 = vshrl.u32 %v8435, 16
      %v9978 = vrot.slane %v9976, 2
      %v9979 = vshll.u32 %v8435, 16
      %v9981 = vrot.slane %v9979, 3
      %v9982 = vor.u32 %v9978, %v9981
      %v9983 = vsel %vm9516, %v9973, %v9982
      %v9985 = vshrl.u32 %v8436, 16
      %v9987 = vrot.slane %v9985, 2
      %v9988 = vshll.u32 %v8436, 16
      %v9990 = vrot.slane %v9988, 3
      %v9991 = vor.u32 %v9987, %v9990
      %v9992 = vsel %vm9516, %v9982, %v9991
      %v9994 = vshrl.u32 %v8437, 16
      %v9996 = vrot.slane %v9994, 2
      %v9997 = vshll.u32 %v8437, 16
      %v9999 = vrot.slane %v9997, 3
      %v10000 = vor.u32 %v9996, %v9999
      %v10001 = vsel %vm9516, %v9991, %v10000
      %v10003 = vshrl.u32 %v8438, 16
      %v10005 = vrot.slane %v10003, 2
      %v10006 = vshll.u32 %v8438, 16
      %v10008 = vrot.slane %v10006, 3
      %v10009 = vor.u32 %v10005, %v10008
      %v10010 = vsel %vm9516, %v10000, %v10009
      %v10012 = vshrl.u32 %v8439, 16
      %v10014 = vrot.slane %v10012, 2
      %v10015 = vshll.u32 %v8439, 16
      %v10017 = vrot.slane %v10015, 3
      %v10018 = vor.u32 %v10014, %v10017
      %v10019 = vsel %vm9516, %v10009, %v10018
      %v10021 = vshrl.u32 %v8440, 16
      %v10023 = vrot.slane %v10021, 2
      %v10024 = vshll.u32 %v8440, 16
      %v10026 = vrot.slane %v10024, 3
      %v10027 = vor.u32 %v10023, %v10026
      %v10028 = vsel %vm9516, %v10018, %v10027
      %v10030 = vshrl.u32 %v8441, 16
      %v10032 = vrot.slane %v10030, 2
      %v10033 = vshll.u32 %v8441, 16
      %v10035 = vrot.slane %v10033, 3
      %v10036 = vor.u32 %v10032, %v10035
      %v10037 = vsel %vm9516, %v10027, %v10036
      %v10039 = vshrl.u32 %v8442, 16
      %v10041 = vrot.slane %v10039, 2
      %v10042 = vshll.u32 %v8442, 16
      %v10044 = vrot.slane %v10042, 3
      %v10045 = vor.u32 %v10041, %v10044
      %v10046 = vsel %vm9516, %v10036, %v10045
      %v10048 = vshrl.u32 %v8443, 16
      %v10050 = vrot.slane %v10048, 2
      %v10051 = vshll.u32 %v8443, 16
      %v10053 = vrot.slane %v10051, 3
      %v10054 = vor.u32 %v10050, %v10053
      %v10055 = vsel %vm9516, %v10045, %v10054
      %v10057 = vshrl.u32 %v8444, 16
      %v10059 = vrot.slane %v10057, 2
      %v10060 = vshll.u32 %v8444, 16
      %v10062 = vrot.slane %v10060, 3
      %v10063 = vor.u32 %v10059, %v10062
      %v10064 = vsel %vm9516, %v10054, %v10063
      %v10066 = vshrl.u32 %v8445, 16
      %v10068 = vrot.slane %v10066, 2
      %v10069 = vshll.u32 %v8445, 16
      %v10071 = vrot.slane %v10069, 3
      %v10072 = vor.u32 %v10068, %v10071
      %v10073 = vsel %vm9516, %v10063, %v10072
      %v10075 = vshrl.u32 %v8446, 16
      %v10077 = vrot.slane %v10075, 2
      %v10078 = vshll.u32 %v8446, 16
      %v10080 = vrot.slane %v10078, 3
      %v10081 = vor.u32 %v10077, %v10080
      %v10082 = vsel %vm9516, %v10072, %v10081
      %v10084 = vshrl.u32 %v8447, 16
      %v10086 = vrot.slane %v10084, 2
      %v10087 = vshll.u32 %v8447, 16
      %v10089 = vrot.slane %v10087, 3
      %v10090 = vor.u32 %v10086, %v10089
      %v10091 = vsel %vm9516, %v10081, %v10090
      %v10093 = vshrl.u32 %v8448, 16
      %v10095 = vrot.slane %v10093, 2
      %v10096 = vshll.u32 %v8448, 16
      %v10098 = vrot.slane %v10096, 3
      %v10099 = vor.u32 %v10095, %v10098
      %v10100 = vsel %vm9516, %v10090, %v10099
      %v10102 = vshrl.u32 %v8449, 16
      %v10104 = vrot.slane %v10102, 2
      %v10105 = vshll.u32 %v8449, 16
      %v10107 = vrot.slane %v10105, 3
      %v10108 = vor.u32 %v10104, %v10107
      %v10109 = vsel %vm9516, %v10099, %v10108
      %v10111 = vshrl.u32 %v8450, 16
      %v10113 = vrot.slane %v10111, 2
      %v10114 = vshll.u32 %v8450, 16
      %v10116 = vrot.slane %v10114, 3
      %v10117 = vor.u32 %v10113, %v10116
      %v10118 = vsel %vm9516, %v10108, %v10117
      %v10120 = vshrl.u32 %v8451, 16
      %v10122 = vrot.slane %v10120, 2
      %v10123 = vshll.u32 %v8451, 16
      %v10125 = vrot.slane %v10123, 3
      %v10126 = vor.u32 %v10122, %v10125
      %v10127 = vsel %vm9516, %v10117, %v10126
      %v10129 = vshrl.u32 %v9515, 16
      %v10131 = vrot.slane %v10129, 2
      %v10132 = vshll.u32 %v9515, 16
      %v10134 = vrot.slane %v10132, 3
      %v10135 = vor.u32 %v10131, %v10134
      %v10136 = vsel %vm9516, %v10126, %v10135
      %v10138 = vsel %vm1255, %v9533, 0
      %v10141 = vsel %vm1255, %v9542, 0
      %v10144 = vsel %vm1255, %v9551, 0
      %v10147 = vsel %vm1255, %v9560, 0
      %v10150 = vsel %vm1255, %v9569, 0
      %v10153 = vsel %vm1255, %v9578, 0
      %v10156 = vsel %vm1255, %v9587, 0
      %v10159 = vsel %vm1255, %v9596, 0
      %v10162 = vsel %vm1255, %v9605, 0
      %v10165 = vsel %vm1255, %v9614, 0
      %v10168 = vsel %vm1255, %v9623, 0
      %v10171 = vsel %vm1255, %v9632, 0
      %v10174 = vsel %vm1255, %v9641, 0
      %v10177 = vsel %vm1255, %v9650, 0
      %v10180 = vsel %vm1255, %v9659, 0
      %v10183 = vsel %vm1255, %v9668, 0
      %v10186 = vsel %vm1255, %v9677, 0
      %v10189 = vsel %vm1255, %v9686, 0
      %v10192 = vsel %vm1255, %v9695, 0
      %v10195 = vsel %vm1255, %v9704, 0
      %v10198 = vsel %vm1255, %v9713, 0
      %v10201 = vsel %vm1255, %v9722, 0
      %v10204 = vsel %vm1255, %v9731, 0
      %v10207 = vsel %vm1255, %v9740, 0
      %v10210 = vsel %vm1255, %v9749, 0
      %v10213 = vsel %vm1255, %v9758, 0
      %v10216 = vsel %vm1255, %v9767, 0
      %v10219 = vsel %vm1255, %v9776, 0
      %v10222 = vsel %vm1255, %v9785, 0
      %v10225 = vsel %vm1255, %v9794, 0
      %v10228 = vsel %vm1255, %v9803, 0
      %v10231 = vsel %vm1255, %v9812, 0
      %v10234 = vsel %vm1255, %v9821, 0
      %v10237 = vsel %vm1255, %v9830, 0
      %v10240 = vsel %vm1255, %v9839, 0
      %v10243 = vsel %vm1255, %v9848, 0
      %v10246 = vsel %vm1255, %v9857, 0
      %v10249 = vsel %vm1255, %v9866, 0
      %v10252 = vsel %vm1255, %v9875, 0
      %v10255 = vsel %vm1255, %v9884, 0
      %v10258 = vsel %vm1255, %v9893, 0
      %v10261 = vsel %vm1255, %v9902, 0
      %v10264 = vsel %vm1255, %v9911, 0
      %v10267 = vsel %vm1255, %v9920, 0
      %v10270 = vsel %vm1255, %v9929, 0
      %v10273 = vsel %vm1255, %v9938, 0
      %v10276 = vsel %vm1255, %v9947, 0
      %v10279 = vsel %vm1255, %v9956, 0
      %v10282 = vsel %vm1255, %v9965, 0
      %v10285 = vsel %vm1255, %v9974, 0
      %v10288 = vsel %vm1255, %v9983, 0
      %v10291 = vsel %vm1255, %v9992, 0
      %v10294 = vsel %vm1255, %v10001, 0
      %v10297 = vsel %vm1255, %v10010, 0
      %v10300 = vsel %vm1255, %v10019, 0
      %v10303 = vsel %vm1255, %v10028, 0
      %v10306 = vsel %vm1255, %v10037, 0
      %v10309 = vsel %vm1255, %v10046, 0
      %v10312 = vsel %vm1255, %v10055, 0
      %v10315 = vsel %vm1255, %v10064, 0
      %v10318 = vsel %vm1255, %v10073, 0
      %v10321 = vsel %vm1255, %v10082, 0
      %v10324 = vsel %vm1255, %v10091, 0
      %v10327 = vsel %vm1255, %v10100, 0
      %v10330 = vsel %vm1255, %v10109, 0
      %v10333 = vsel %vm1255, %v10118, 0
      %v10336 = vsel %vm1255, %v10127, 0
      %v10339 = vsel %vm1255, %v10136, 0
      %v10342 = vsel %vm1460, %v9512, 0
      %10344 = vmatprep.subr.bf16.mxu0 0
      %10345 = vmatpush1.bf16.msra.mxu0 0
      %10346 = vmatprep.subr.bf16.mxu0 0
      %10347 = vmatpush1.bf16.msra.mxu0 0
      %10348 = vmatprep.subr.bf16.mxu0 0
      %10349 = vmatpush1.bf16.msra.mxu0 0
      %10350 = vmatprep.subr.bf16.mxu0 0
      %10351 = vmatpush1.bf16.msra.mxu0 0
      %10352 = vmatprep.subr.bf16.mxu0 0
      %10353 = vmatpush1.bf16.msra.mxu0 0
      %10354 = vmatprep.subr.bf16.mxu0 0
      %10355 = vmatpush1.bf16.msra.mxu0 0
      %10356 = vmatprep.subr.bf16.mxu0 0
      %10357 = vmatpush1.bf16.msra.mxu0 0
      %10358 = vmatprep.subr.bf16.mxu0 0
      %10359 = vmatpush1.bf16.msra.mxu0 %v10342
      %10360 = vmatprep.subr.bf16.mxu0 0
      %10361 = vmatpush2.bf16.msra.mxu0 0
      %10362 = vmatprep.subr.bf16.mxu0 0
      %10363 = vmatpush2.bf16.msra.mxu0 0
      %10364 = vmatprep.subr.bf16.mxu0 0
      %10365 = vmatpush2.bf16.msra.mxu0 0
      %10366 = vmatprep.subr.bf16.mxu0 0
      %10367 = vmatpush2.bf16.msra.mxu0 0
      %10368 = vmatprep.subr.bf16.mxu0 0
      %10369 = vmatpush2.bf16.msra.mxu0 0
      %10370 = vmatprep.subr.bf16.mxu0 0
      %10371 = vmatpush2.bf16.msra.mxu0 0
      %10372 = vmatprep.subr.bf16.mxu0 0
      %10373 = vmatpush2.bf16.msra.mxu0 0
      %10374 = vmatprep.subr.bf16.mxu0 0
      %10375 = vmatpush2.bf16.msra.mxu0 0
      %10376 = vmatprep.mubr.bf16.mxu0 0
      %10377 = vmatmul.mubr.bf16.gmra.mxu0 %v10138
      %v10378 = vpop.f32.mrf.mxu0
      %v10379 = vadd.f32 0.0, %v10378
      %v10380 = vpop.f32.mrf.mxu0
      %v10381 = vpop.f32.mrf.mxu0
      %v10382 = vadd.f32 0.0, %v10381
      %v10383 = vpop.f32.mrf.mxu0
      %10384 = vmatprep.mubr.bf16.mxu0 0
      %10385 = vmatmul.mubr.bf16.gmra.mxu0 %v10141
      %v10386 = vpop.f32.mrf.mxu0
      %v10387 = vadd.f32 0.0, %v10386
      %v10388 = vpop.f32.mrf.mxu0
      %v10389 = vpop.f32.mrf.mxu0
      %v10390 = vadd.f32 0.0, %v10389
      %v10391 = vpop.f32.mrf.mxu0
      %10392 = vmatprep.mubr.bf16.mxu0 0
      %10393 = vmatmul.mubr.bf16.gmra.mxu0 %v10144
      %v10394 = vpop.f32.mrf.mxu0
      %v10395 = vadd.f32 0.0, %v10394
      %v10396 = vpop.f32.mrf.mxu0
      %v10397 = vpop.f32.mrf.mxu0
      %v10398 = vadd.f32 0.0, %v10397
      %v10399 = vpop.f32.mrf.mxu0
      %10400 = vmatprep.mubr.bf16.mxu0 0
      %10401 = vmatmul.mubr.bf16.gmra.mxu0 %v10147
      %v10402 = vpop.f32.mrf.mxu0
      %v10403 = vadd.f32 0.0, %v10402
      %v10404 = vpop.f32.mrf.mxu0
      %v10405 = vpop.f32.mrf.mxu0
      %v10406 = vadd.f32 0.0, %v10405
      %v10407 = vpop.f32.mrf.mxu0
      %10408 = vmatprep.mubr.bf16.mxu0 0
      %10409 = vmatmul.mubr.bf16.gmra.mxu0 %v10150
      %v10410 = vpop.f32.mrf.mxu0
      %v10411 = vadd.f32 0.0, %v10410
      %v10412 = vpop.f32.mrf.mxu0
      %v10413 = vpop.f32.mrf.mxu0
      %v10414 = vadd.f32 0.0, %v10413
      %v10415 = vpop.f32.mrf.mxu0
      %10416 = vmatprep.mubr.bf16.mxu0 0
      %10417 = vmatmul.mubr.bf16.gmra.mxu0 %v10153
      %v10418 = vpop.f32.mrf.mxu0
      %v10419 = vadd.f32 0.0, %v10418
      %v10420 = vpop.f32.mrf.mxu0
      %v10421 = vpop.f32.mrf.mxu0
      %v10422 = vadd.f32 0.0, %v10421
      %v10423 = vpop.f32.mrf.mxu0
      %10424 = vmatprep.mubr.bf16.mxu0 0
      %10425 = vmatmul.mubr.bf16.gmra.mxu0 %v10156
      %v10426 = vpop.f32.mrf.mxu0
      %v10427 = vadd.f32 0.0, %v10426
      %v10428 = vpop.f32.mrf.mxu0
      %v10429 = vpop.f32.mrf.mxu0
      %v10430 = vadd.f32 0.0, %v10429
      %v10431 = vpop.f32.mrf.mxu0
      %10432 = vmatprep.mubr.bf16.mxu0 0
      %10433 = vmatmul.mubr.bf16.gmra.mxu0 %v10159
      %v10434 = vpop.f32.mrf.mxu0
      %v10435 = vadd.f32 0.0, %v10434
      %v10436 = vpop.f32.mrf.mxu0
      %v10437 = vpop.f32.mrf.mxu0
      %v10438 = vadd.f32 0.0, %v10437
      %v10439 = vpop.f32.mrf.mxu0
      %10440 = vmatprep.mubr.bf16.mxu0 0
      %10441 = vmatmul.mubr.bf16.gmra.mxu0 %v10162
      %v10442 = vpop.f32.mrf.mxu0
      %v10443 = vadd.f32 0.0, %v10442
      %v10444 = vpop.f32.mrf.mxu0
      %v10445 = vpop.f32.mrf.mxu0
      %v10446 = vadd.f32 0.0, %v10445
      %v10447 = vpop.f32.mrf.mxu0
      %10448 = vmatprep.mubr.bf16.mxu0 0
      %10449 = vmatmul.mubr.bf16.gmra.mxu0 %v10165
      %v10450 = vpop.f32.mrf.mxu0
      %v10451 = vadd.f32 0.0, %v10450
      %v10452 = vpop.f32.mrf.mxu0
      %v10453 = vpop.f32.mrf.mxu0
      %v10454 = vadd.f32 0.0, %v10453
      %v10455 = vpop.f32.mrf.mxu0
      %10456 = vmatprep.mubr.bf16.mxu0 0
      %10457 = vmatmul.mubr.bf16.gmra.mxu0 %v10168
      %v10458 = vpop.f32.mrf.mxu0
      %v10459 = vadd.f32 0.0, %v10458
      %v10460 = vpop.f32.mrf.mxu0
      %v10461 = vpop.f32.mrf.mxu0
      %v10462 = vadd.f32 0.0, %v10461
      %v10463 = vpop.f32.mrf.mxu0
      %10464 = vmatprep.mubr.bf16.mxu0 0
      %10465 = vmatmul.mubr.bf16.gmra.mxu0 %v10171
      %v10466 = vpop.f32.mrf.mxu0
      %v10467 = vadd.f32 0.0, %v10466
      %v10468 = vpop.f32.mrf.mxu0
      %v10469 = vpop.f32.mrf.mxu0
      %v10470 = vadd.f32 0.0, %v10469
      %v10471 = vpop.f32.mrf.mxu0
      %10472 = vmatprep.mubr.bf16.mxu0 0
      %10473 = vmatmul.mubr.bf16.gmra.mxu0 %v10174
      %v10474 = vpop.f32.mrf.mxu0
      %v10475 = vadd.f32 0.0, %v10474
      %v10476 = vpop.f32.mrf.mxu0
      %v10477 = vpop.f32.mrf.mxu0
      %v10478 = vadd.f32 0.0, %v10477
      %v10479 = vpop.f32.mrf.mxu0
      %10480 = vmatprep.mubr.bf16.mxu0 0
      %10481 = vmatmul.mubr.bf16.gmra.mxu0 %v10177
      %v10482 = vpop.f32.mrf.mxu0
      %v10483 = vadd.f32 0.0, %v10482
      %v10484 = vpop.f32.mrf.mxu0
      %v10485 = vpop.f32.mrf.mxu0
      %v10486 = vadd.f32 0.0, %v10485
      %v10487 = vpop.f32.mrf.mxu0
      %10488 = vmatprep.mubr.bf16.mxu0 0
      %10489 = vmatmul.mubr.bf16.gmra.mxu0 %v10180
      %v10490 = vpop.f32.mrf.mxu0
      %v10491 = vadd.f32 0.0, %v10490
      %v10492 = vpop.f32.mrf.mxu0
      %v10493 = vpop.f32.mrf.mxu0
      %v10494 = vadd.f32 0.0, %v10493
      %v10495 = vpop.f32.mrf.mxu0
      %10496 = vmatprep.mubr.bf16.mxu0 0
      %10497 = vmatmul.mubr.bf16.gmra.mxu0 %v10183
      %v10498 = vpop.f32.mrf.mxu0
      %v10499 = vadd.f32 0.0, %v10498
      %v10500 = vpop.f32.mrf.mxu0
      %v10501 = vpop.f32.mrf.mxu0
      %v10502 = vadd.f32 0.0, %v10501
      %v10503 = vpop.f32.mrf.mxu0
      %10504 = vmatprep.mubr.bf16.mxu0 0
      %10505 = vmatmul.mubr.bf16.gmra.mxu0 %v10186
      %v10506 = vpop.f32.mrf.mxu0
      %v10507 = vadd.f32 0.0, %v10506
      %v10508 = vpop.f32.mrf.mxu0
      %v10509 = vpop.f32.mrf.mxu0
      %v10510 = vadd.f32 0.0, %v10509
      %v10511 = vpop.f32.mrf.mxu0
      %10512 = vmatprep.mubr.bf16.mxu0 0
      %10513 = vmatmul.mubr.bf16.gmra.mxu0 %v10189
      %v10514 = vpop.f32.mrf.mxu0
      %v10515 = vadd.f32 0.0, %v10514
      %v10516 = vpop.f32.mrf.mxu0
      %v10517 = vpop.f32.mrf.mxu0
      %v10518 = vadd.f32 0.0, %v10517
      %v10519 = vpop.f32.mrf.mxu0
      %10520 = vmatprep.mubr.bf16.mxu0 0
      %10521 = vmatmul.mubr.bf16.gmra.mxu0 %v10192
      %v10522 = vpop.f32.mrf.mxu0
      %v10523 = vadd.f32 0.0, %v10522
      %v10524 = vpop.f32.mrf.mxu0
      %v10525 = vpop.f32.mrf.mxu0
      %v10526 = vadd.f32 0.0, %v10525
      %v10527 = vpop.f32.mrf.mxu0
      %10528 = vmatprep.mubr.bf16.mxu0 0
      %10529 = vmatmul.mubr.bf16.gmra.mxu0 %v10195
      %v10530 = vpop.f32.mrf.mxu0
      %v10531 = vadd.f32 0.0, %v10530
      %v10532 = vpop.f32.mrf.mxu0
      %v10533 = vpop.f32.mrf.mxu0
      %v10534 = vadd.f32 0.0, %v10533
      %v10535 = vpop.f32.mrf.mxu0
      %10536 = vmatprep.mubr.bf16.mxu0 0
      %10537 = vmatmul.mubr.bf16.gmra.mxu0 %v10198
      %v10538 = vpop.f32.mrf.mxu0
      %v10539 = vadd.f32 0.0, %v10538
      %v10540 = vpop.f32.mrf.mxu0
      %v10541 = vpop.f32.mrf.mxu0
      %v10542 = vadd.f32 0.0, %v10541
      %v10543 = vpop.f32.mrf.mxu0
      %10544 = vmatprep.mubr.bf16.mxu0 0
      %10545 = vmatmul.mubr.bf16.gmra.mxu0 %v10201
      %v10546 = vpop.f32.mrf.mxu0
      %v10547 = vadd.f32 0.0, %v10546
      %v10548 = vpop.f32.mrf.mxu0
      %v10549 = vpop.f32.mrf.mxu0
      %v10550 = vadd.f32 0.0, %v10549
      %v10551 = vpop.f32.mrf.mxu0
      %10552 = vmatprep.mubr.bf16.mxu0 0
      %10553 = vmatmul.mubr.bf16.gmra.mxu0 %v10204
      %v10554 = vpop.f32.mrf.mxu0
      %v10555 = vadd.f32 0.0, %v10554
      %v10556 = vpop.f32.mrf.mxu0
      %v10557 = vpop.f32.mrf.mxu0
      %v10558 = vadd.f32 0.0, %v10557
      %v10559 = vpop.f32.mrf.mxu0
      %10560 = vmatprep.mubr.bf16.mxu0 0
      %10561 = vmatmul.mubr.bf16.gmra.mxu0 %v10207
      %v10562 = vpop.f32.mrf.mxu0
      %v10563 = vadd.f32 0.0, %v10562
      %v10564 = vpop.f32.mrf.mxu0
      %v10565 = vpop.f32.mrf.mxu0
      %v10566 = vadd.f32 0.0, %v10565
      %v10567 = vpop.f32.mrf.mxu0
      %10568 = vmatprep.mubr.bf16.mxu0 0
      %10569 = vmatmul.mubr.bf16.gmra.mxu0 %v10210
      %v10570 = vpop.f32.mrf.mxu0
      %v10571 = vadd.f32 0.0, %v10570
      %v10572 = vpop.f32.mrf.mxu0
      %v10573 = vpop.f32.mrf.mxu0
      %v10574 = vadd.f32 0.0, %v10573
      %v10575 = vpop.f32.mrf.mxu0
      %10576 = vmatprep.mubr.bf16.mxu0 0
      %10577 = vmatmul.mubr.bf16.gmra.mxu0 %v10213
      %v10578 = vpop.f32.mrf.mxu0
      %v10579 = vadd.f32 0.0, %v10578
      %v10580 = vpop.f32.mrf.mxu0
      %v10581 = vpop.f32.mrf.mxu0
      %v10582 = vadd.f32 0.0, %v10581
      %v10583 = vpop.f32.mrf.mxu0
      %10584 = vmatprep.mubr.bf16.mxu0 0
      %10585 = vmatmul.mubr.bf16.gmra.mxu0 %v10216
      %v10586 = vpop.f32.mrf.mxu0
      %v10587 = vadd.f32 0.0, %v10586
      %v10588 = vpop.f32.mrf.mxu0
      %v10589 = vpop.f32.mrf.mxu0
      %v10590 = vadd.f32 0.0, %v10589
      %v10591 = vpop.f32.mrf.mxu0
      %10592 = vmatprep.mubr.bf16.mxu0 0
      %10593 = vmatmul.mubr.bf16.gmra.mxu0 %v10219
      %v10594 = vpop.f32.mrf.mxu0
      %v10595 = vadd.f32 0.0, %v10594
      %v10596 = vpop.f32.mrf.mxu0
      %v10597 = vpop.f32.mrf.mxu0
      %v10598 = vadd.f32 0.0, %v10597
      %v10599 = vpop.f32.mrf.mxu0
      %10600 = vmatprep.mubr.bf16.mxu0 0
      %10601 = vmatmul.mubr.bf16.gmra.mxu0 %v10222
      %v10602 = vpop.f32.mrf.mxu0
      %v10603 = vadd.f32 0.0, %v10602
      %v10604 = vpop.f32.mrf.mxu0
      %v10605 = vpop.f32.mrf.mxu0
      %v10606 = vadd.f32 0.0, %v10605
      %v10607 = vpop.f32.mrf.mxu0
      %10608 = vmatprep.mubr.bf16.mxu0 0
      %10609 = vmatmul.mubr.bf16.gmra.mxu0 %v10225
      %v10610 = vpop.f32.mrf.mxu0
      %v10611 = vadd.f32 0.0, %v10610
      %v10612 = vpop.f32.mrf.mxu0
      %v10613 = vpop.f32.mrf.mxu0
      %v10614 = vadd.f32 0.0, %v10613
      %v10615 = vpop.f32.mrf.mxu0
      %10616 = vmatprep.mubr.bf16.mxu0 0
      %10617 = vmatmul.mubr.bf16.gmra.mxu0 %v10228
      %v10618 = vpop.f32.mrf.mxu0
      %v10619 = vadd.f32 0.0, %v10618
      %v10620 = vpop.f32.mrf.mxu0
      %v10621 = vpop.f32.mrf.mxu0
      %v10622 = vadd.f32 0.0, %v10621
      %v10623 = vpop.f32.mrf.mxu0
      %10624 = vmatprep.mubr.bf16.mxu0 0
      %10625 = vmatmul.mubr.bf16.gmra.mxu0 %v10231
      %v10626 = vpop.f32.mrf.mxu0
      %v10627 = vadd.f32 0.0, %v10626
      %v10628 = vpop.f32.mrf.mxu0
      %v10629 = vpop.f32.mrf.mxu0
      %v10630 = vadd.f32 0.0, %v10629
      %v10631 = vpop.f32.mrf.mxu0
      %10632 = vmatprep.mubr.bf16.mxu0 0
      %10633 = vmatmul.mubr.bf16.gmra.mxu0 %v10234
      %v10634 = vpop.f32.mrf.mxu0
      %v10635 = vadd.f32 0.0, %v10634
      %v10636 = vpop.f32.mrf.mxu0
      %v10637 = vpop.f32.mrf.mxu0
      %v10638 = vadd.f32 0.0, %v10637
      %v10639 = vpop.f32.mrf.mxu0
      %10640 = vmatprep.mubr.bf16.mxu0 0
      %10641 = vmatmul.mubr.bf16.gmra.mxu0 %v10237
      %v10642 = vpop.f32.mrf.mxu0
      %v10643 = vadd.f32 0.0, %v10642
      %v10644 = vpop.f32.mrf.mxu0
      %v10645 = vpop.f32.mrf.mxu0
      %v10646 = vadd.f32 0.0, %v10645
      %v10647 = vpop.f32.mrf.mxu0
      %10648 = vmatprep.mubr.bf16.mxu0 0
      %10649 = vmatmul.mubr.bf16.gmra.mxu0 %v10240
      %v10650 = vpop.f32.mrf.mxu0
      %v10651 = vadd.f32 0.0, %v10650
      %v10652 = vpop.f32.mrf.mxu0
      %v10653 = vpop.f32.mrf.mxu0
      %v10654 = vadd.f32 0.0, %v10653
      %v10655 = vpop.f32.mrf.mxu0
      %10656 = vmatprep.mubr.bf16.mxu0 0
      %10657 = vmatmul.mubr.bf16.gmra.mxu0 %v10243
      %v10658 = vpop.f32.mrf.mxu0
      %v10659 = vadd.f32 0.0, %v10658
      %v10660 = vpop.f32.mrf.mxu0
      %v10661 = vpop.f32.mrf.mxu0
      %v10662 = vadd.f32 0.0, %v10661
      %v10663 = vpop.f32.mrf.mxu0
      %10664 = vmatprep.mubr.bf16.mxu0 0
      %10665 = vmatmul.mubr.bf16.gmra.mxu0 %v10246
      %v10666 = vpop.f32.mrf.mxu0
      %v10667 = vadd.f32 0.0, %v10666
      %v10668 = vpop.f32.mrf.mxu0
      %v10669 = vpop.f32.mrf.mxu0
      %v10670 = vadd.f32 0.0, %v10669
      %v10671 = vpop.f32.mrf.mxu0
      %10672 = vmatprep.mubr.bf16.mxu0 0
      %10673 = vmatmul.mubr.bf16.gmra.mxu0 %v10249
      %v10674 = vpop.f32.mrf.mxu0
      %v10675 = vadd.f32 0.0, %v10674
      %v10676 = vpop.f32.mrf.mxu0
      %v10677 = vpop.f32.mrf.mxu0
      %v10678 = vadd.f32 0.0, %v10677
      %v10679 = vpop.f32.mrf.mxu0
      %10680 = vmatprep.mubr.bf16.mxu0 0
      %10681 = vmatmul.mubr.bf16.gmra.mxu0 %v10252
      %v10682 = vpop.f32.mrf.mxu0
      %v10683 = vadd.f32 0.0, %v10682
      %v10684 = vpop.f32.mrf.mxu0
      %v10685 = vpop.f32.mrf.mxu0
      %v10686 = vadd.f32 0.0, %v10685
      %v10687 = vpop.f32.mrf.mxu0
      %10688 = vmatprep.mubr.bf16.mxu0 0
      %10689 = vmatmul.mubr.bf16.gmra.mxu0 %v10255
      %v10690 = vpop.f32.mrf.mxu0
      %v10691 = vadd.f32 0.0, %v10690
      %v10692 = vpop.f32.mrf.mxu0
      %v10693 = vpop.f32.mrf.mxu0
      %v10694 = vadd.f32 0.0, %v10693
      %v10695 = vpop.f32.mrf.mxu0
      %10696 = vmatprep.mubr.bf16.mxu0 0
      %10697 = vmatmul.mubr.bf16.gmra.mxu0 %v10258
      %v10698 = vpop.f32.mrf.mxu0
      %v10699 = vadd.f32 0.0, %v10698
      %v10700 = vpop.f32.mrf.mxu0
      %v10701 = vpop.f32.mrf.mxu0
      %v10702 = vadd.f32 0.0, %v10701
      %v10703 = vpop.f32.mrf.mxu0
      %10704 = vmatprep.mubr.bf16.mxu0 0
      %10705 = vmatmul.mubr.bf16.gmra.mxu0 %v10261
      %v10706 = vpop.f32.mrf.mxu0
      %v10707 = vadd.f32 0.0, %v10706
      %v10708 = vpop.f32.mrf.mxu0
      %v10709 = vpop.f32.mrf.mxu0
      %v10710 = vadd.f32 0.0, %v10709
      %v10711 = vpop.f32.mrf.mxu0
      %10712 = vmatprep.mubr.bf16.mxu0 0
      %10713 = vmatmul.mubr.bf16.gmra.mxu0 %v10264
      %v10714 = vpop.f32.mrf.mxu0
      %v10715 = vadd.f32 0.0, %v10714
      %v10716 = vpop.f32.mrf.mxu0
      %v10717 = vpop.f32.mrf.mxu0
      %v10718 = vadd.f32 0.0, %v10717
      %v10719 = vpop.f32.mrf.mxu0
      %10720 = vmatprep.mubr.bf16.mxu0 0
      %10721 = vmatmul.mubr.bf16.gmra.mxu0 %v10267
      %v10722 = vpop.f32.mrf.mxu0
      %v10723 = vadd.f32 0.0, %v10722
      %v10724 = vpop.f32.mrf.mxu0
      %v10725 = vpop.f32.mrf.mxu0
      %v10726 = vadd.f32 0.0, %v10725
      %v10727 = vpop.f32.mrf.mxu0
      %10728 = vmatprep.mubr.bf16.mxu0 0
      %10729 = vmatmul.mubr.bf16.gmra.mxu0 %v10270
      %v10730 = vpop.f32.mrf.mxu0
      %v10731 = vadd.f32 0.0, %v10730
      %v10732 = vpop.f32.mrf.mxu0
      %v10733 = vpop.f32.mrf.mxu0
      %v10734 = vadd.f32 0.0, %v10733
      %v10735 = vpop.f32.mrf.mxu0
      %10736 = vmatprep.mubr.bf16.mxu0 0
      %10737 = vmatmul.mubr.bf16.gmra.mxu0 %v10273
      %v10738 = vpop.f32.mrf.mxu0
      %v10739 = vadd.f32 0.0, %v10738
      %v10740 = vpop.f32.mrf.mxu0
      %v10741 = vpop.f32.mrf.mxu0
      %v10742 = vadd.f32 0.0, %v10741
      %v10743 = vpop.f32.mrf.mxu0
      %10744 = vmatprep.mubr.bf16.mxu0 0
      %10745 = vmatmul.mubr.bf16.gmra.mxu0 %v10276
      %v10746 = vpop.f32.mrf.mxu0
      %v10747 = vadd.f32 0.0, %v10746
      %v10748 = vpop.f32.mrf.mxu0
      %v10749 = vpop.f32.mrf.mxu0
      %v10750 = vadd.f32 0.0, %v10749
      %v10751 = vpop.f32.mrf.mxu0
      %10752 = vmatprep.mubr.bf16.mxu0 0
      %10753 = vmatmul.mubr.bf16.gmra.mxu0 %v10279
      %v10754 = vpop.f32.mrf.mxu0
      %v10755 = vadd.f32 0.0, %v10754
      %v10756 = vpop.f32.mrf.mxu0
      %v10757 = vpop.f32.mrf.mxu0
      %v10758 = vadd.f32 0.0, %v10757
      %v10759 = vpop.f32.mrf.mxu0
      %10760 = vmatprep.mubr.bf16.mxu0 0
      %10761 = vmatmul.mubr.bf16.gmra.mxu0 %v10282
      %v10762 = vpop.f32.mrf.mxu0
      %v10763 = vadd.f32 0.0, %v10762
      %v10764 = vpop.f32.mrf.mxu0
      %v10765 = vpop.f32.mrf.mxu0
      %v10766 = vadd.f32 0.0, %v10765
      %v10767 = vpop.f32.mrf.mxu0
      %10768 = vmatprep.mubr.bf16.mxu0 0
      %10769 = vmatmul.mubr.bf16.gmra.mxu0 %v10285
      %v10770 = vpop.f32.mrf.mxu0
      %v10771 = vadd.f32 0.0, %v10770
      %v10772 = vpop.f32.mrf.mxu0
      %v10773 = vpop.f32.mrf.mxu0
      %v10774 = vadd.f32 0.0, %v10773
      %v10775 = vpop.f32.mrf.mxu0
      %10776 = vmatprep.mubr.bf16.mxu0 0
      %10777 = vmatmul.mubr.bf16.gmra.mxu0 %v10288
      %v10778 = vpop.f32.mrf.mxu0
      %v10779 = vadd.f32 0.0, %v10778
      %v10780 = vpop.f32.mrf.mxu0
      %v10781 = vpop.f32.mrf.mxu0
      %v10782 = vadd.f32 0.0, %v10781
      %v10783 = vpop.f32.mrf.mxu0
      %10784 = vmatprep.mubr.bf16.mxu0 0
      %10785 = vmatmul.mubr.bf16.gmra.mxu0 %v10291
      %v10786 = vpop.f32.mrf.mxu0
      %v10787 = vadd.f32 0.0, %v10786
      %v10788 = vpop.f32.mrf.mxu0
      %v10789 = vpop.f32.mrf.mxu0
      %v10790 = vadd.f32 0.0, %v10789
      %v10791 = vpop.f32.mrf.mxu0
      %10792 = vmatprep.mubr.bf16.mxu0 0
      %10793 = vmatmul.mubr.bf16.gmra.mxu0 %v10294
      %v10794 = vpop.f32.mrf.mxu0
      %v10795 = vadd.f32 0.0, %v10794
      %v10796 = vpop.f32.mrf.mxu0
      %v10797 = vpop.f32.mrf.mxu0
      %v10798 = vadd.f32 0.0, %v10797
      %v10799 = vpop.f32.mrf.mxu0
      %10800 = vmatprep.mubr.bf16.mxu0 0
      %10801 = vmatmul.mubr.bf16.gmra.mxu0 %v10297
      %v10802 = vpop.f32.mrf.mxu0
      %v10803 = vadd.f32 0.0, %v10802
      %v10804 = vpop.f32.mrf.mxu0
      %v10805 = vpop.f32.mrf.mxu0
      %v10806 = vadd.f32 0.0, %v10805
      %v10807 = vpop.f32.mrf.mxu0
      %10808 = vmatprep.mubr.bf16.mxu0 0
      %10809 = vmatmul.mubr.bf16.gmra.mxu0 %v10300
      %v10810 = vpop.f32.mrf.mxu0
      %v10811 = vadd.f32 0.0, %v10810
      %v10812 = vpop.f32.mrf.mxu0
      %v10813 = vpop.f32.mrf.mxu0
      %v10814 = vadd.f32 0.0, %v10813
      %v10815 = vpop.f32.mrf.mxu0
      %10816 = vmatprep.mubr.bf16.mxu0 0
      %10817 = vmatmul.mubr.bf16.gmra.mxu0 %v10303
      %v10818 = vpop.f32.mrf.mxu0
      %v10819 = vadd.f32 0.0, %v10818
      %v10820 = vpop.f32.mrf.mxu0
      %v10821 = vpop.f32.mrf.mxu0
      %v10822 = vadd.f32 0.0, %v10821
      %v10823 = vpop.f32.mrf.mxu0
      %10824 = vmatprep.mubr.bf16.mxu0 0
      %10825 = vmatmul.mubr.bf16.gmra.mxu0 %v10306
      %v10826 = vpop.f32.mrf.mxu0
      %v10827 = vadd.f32 0.0, %v10826
      %v10828 = vpop.f32.mrf.mxu0
      %v10829 = vpop.f32.mrf.mxu0
      %v10830 = vadd.f32 0.0, %v10829
      %v10831 = vpop.f32.mrf.mxu0
      %10832 = vmatprep.mubr.bf16.mxu0 0
      %10833 = vmatmul.mubr.bf16.gmra.mxu0 %v10309
      %v10834 = vpop.f32.mrf.mxu0
      %v10835 = vadd.f32 0.0, %v10834
      %v10836 = vpop.f32.mrf.mxu0
      %v10837 = vpop.f32.mrf.mxu0
      %v10838 = vadd.f32 0.0, %v10837
      %v10839 = vpop.f32.mrf.mxu0
      %10840 = vmatprep.mubr.bf16.mxu0 0
      %10841 = vmatmul.mubr.bf16.gmra.mxu0 %v10312
      %v10842 = vpop.f32.mrf.mxu0
      %v10843 = vadd.f32 0.0, %v10842
      %v10844 = vpop.f32.mrf.mxu0
      %v10845 = vpop.f32.mrf.mxu0
      %v10846 = vadd.f32 0.0, %v10845
      %v10847 = vpop.f32.mrf.mxu0
      %10848 = vmatprep.mubr.bf16.mxu0 0
      %10849 = vmatmul.mubr.bf16.gmra.mxu0 %v10315
      %v10850 = vpop.f32.mrf.mxu0
      %v10851 = vadd.f32 0.0, %v10850
      %v10852 = vpop.f32.mrf.mxu0
      %v10853 = vpop.f32.mrf.mxu0
      %v10854 = vadd.f32 0.0, %v10853
      %v10855 = vpop.f32.mrf.mxu0
      %10856 = vmatprep.mubr.bf16.mxu0 0
      %10857 = vmatmul.mubr.bf16.gmra.mxu0 %v10318
      %v10858 = vpop.f32.mrf.mxu0
      %v10859 = vadd.f32 0.0, %v10858
      %v10860 = vpop.f32.mrf.mxu0
      %v10861 = vpop.f32.mrf.mxu0
      %v10862 = vadd.f32 0.0, %v10861
      %v10863 = vpop.f32.mrf.mxu0
      %10864 = vmatprep.mubr.bf16.mxu0 0
      %10865 = vmatmul.mubr.bf16.gmra.mxu0 %v10321
      %v10866 = vpop.f32.mrf.mxu0
      %v10867 = vadd.f32 0.0, %v10866
      %v10868 = vpop.f32.mrf.mxu0
      %v10869 = vpop.f32.mrf.mxu0
      %v10870 = vadd.f32 0.0, %v10869
      %v10871 = vpop.f32.mrf.mxu0
      %10872 = vmatprep.mubr.bf16.mxu0 0
      %10873 = vmatmul.mubr.bf16.gmra.mxu0 %v10324
      %v10874 = vpop.f32.mrf.mxu0
      %v10875 = vadd.f32 0.0, %v10874
      %v10876 = vpop.f32.mrf.mxu0
      %v10877 = vpop.f32.mrf.mxu0
      %v10878 = vadd.f32 0.0, %v10877
      %v10879 = vpop.f32.mrf.mxu0
      %10880 = vmatprep.mubr.bf16.mxu0 0
      %10881 = vmatmul.mubr.bf16.gmra.mxu0 %v10327
      %v10882 = vpop.f32.mrf.mxu0
      %v10883 = vadd.f32 0.0, %v10882
      %v10884 = vpop.f32.mrf.mxu0
      %v10885 = vpop.f32.mrf.mxu0
      %v10886 = vadd.f32 0.0, %v10885
      %v10887 = vpop.f32.mrf.mxu0
      %10888 = vmatprep.mubr.bf16.mxu0 0
      %10889 = vmatmul.mubr.bf16.gmra.mxu0 %v10330
      %v10890 = vpop.f32.mrf.mxu0
      %v10891 = vadd.f32 0.0, %v10890
      %v10892 = vpop.f32.mrf.mxu0
      %v10893 = vpop.f32.mrf.mxu0
      %v10894 = vadd.f32 0.0, %v10893
      %v10895 = vpop.f32.mrf.mxu0
      %10896 = vmatprep.mubr.bf16.mxu0 0
      %10897 = vmatmul.mubr.bf16.gmra.mxu0 %v10333
      %v10898 = vpop.f32.mrf.mxu0
      %v10899 = vadd.f32 0.0, %v10898
      %v10900 = vpop.f32.mrf.mxu0
      %v10901 = vpop.f32.mrf.mxu0
      %v10902 = vadd.f32 0.0, %v10901
      %v10903 = vpop.f32.mrf.mxu0
      %10904 = vmatprep.mubr.bf16.mxu0 0
      %10905 = vmatmul.mubr.bf16.gmra.mxu0 %v10336
      %v10906 = vpop.f32.mrf.mxu0
      %v10907 = vadd.f32 0.0, %v10906
      %v10908 = vpop.f32.mrf.mxu0
      %v10909 = vpop.f32.mrf.mxu0
      %v10910 = vadd.f32 0.0, %v10909
      %v10911 = vpop.f32.mrf.mxu0
      %10912 = vmatprep.mubr.bf16.mxu0 0
      %10913 = vmatmul.mubr.bf16.gmra.mxu0 %v10339
      %v10914 = vpop.f32.mrf.mxu0
      %v10915 = vadd.f32 0.0, %v10914
      %v10916 = vpop.f32.mrf.mxu0
      %v10917 = vpop.f32.mrf.mxu0
      %v10918 = vadd.f32 0.0, %v10917
      %v10919 = vpop.f32.mrf.mxu0
      %10920 = vdwg.mxu0
      %v10921 = vadd.f32 %v9374, %v10379
      %v10922 = vadd.f32 %v9375, %v10382
      %v10923 = vadd.f32 %v9376, %v10387
      %v10924 = vadd.f32 %v9377, %v10390
      %v10925 = vadd.f32 %v9378, %v10395
      %v10926 = vadd.f32 %v9379, %v10398
      %v10927 = vadd.f32 %v9380, %v10403
      %v10928 = vadd.f32 %v9381, %v10406
      %v10929 = vadd.f32 %v9382, %v10411
      %v10930 = vadd.f32 %v9383, %v10414
      %v10931 = vadd.f32 %v9384, %v10419
      %v10932 = vadd.f32 %v9385, %v10422
      %v10933 = vadd.f32 %v9386, %v10427
      %v10934 = vadd.f32 %v9387, %v10430
      %v10935 = vadd.f32 %v9388, %v10435
      %v10936 = vadd.f32 %v9389, %v10438
      %v10937 = vadd.f32 %v9390, %v10443
      %v10938 = vadd.f32 %v9391, %v10446
      %v10939 = vadd.f32 %v9392, %v10451
      %v10940 = vadd.f32 %v9393, %v10454
      %v10941 = vadd.f32 %v9394, %v10459
      %v10942 = vadd.f32 %v9395, %v10462
      %v10943 = vadd.f32 %v9396, %v10467
      %v10944 = vadd.f32 %v9397, %v10470
      %v10945 = vadd.f32 %v9398, %v10475
      %v10946 = vadd.f32 %v9399, %v10478
      %v10947 = vadd.f32 %v9400, %v10483
      %v10948 = vadd.f32 %v9401, %v10486
      %v10949 = vadd.f32 %v9402, %v10491
      %v10950 = vadd.f32 %v9403, %v10494
      %v10951 = vadd.f32 %v9404, %v10499
      %v10952 = vadd.f32 %v9405, %v10502
      %v10953 = vadd.f32 %v9406, %v10507
      %v10954 = vadd.f32 %v9407, %v10510
      %v10955 = vadd.f32 %v9408, %v10515
      %v10956 = vadd.f32 %v9409, %v10518
      %v10957 = vadd.f32 %v9410, %v10523
      %v10958 = vadd.f32 %v9411, %v10526
      %v10959 = vadd.f32 %v9412, %v10531
      %v10960 = vadd.f32 %v9413, %v10534
      %v10961 = vadd.f32 %v9414, %v10539
      %v10962 = vadd.f32 %v9415, %v10542
      %v10963 = vadd.f32 %v9416, %v10547
      %v10964 = vadd.f32 %v9417, %v10550
      %v10965 = vadd.f32 %v9418, %v10555
      %v10966 = vadd.f32 %v9419, %v10558
      %v10967 = vadd.f32 %v9420, %v10563
      %v10968 = vadd.f32 %v9421, %v10566
      %v10969 = vadd.f32 %v9422, %v10571
      %v10970 = vadd.f32 %v9423, %v10574
      %v10971 = vadd.f32 %v9424, %v10579
      %v10972 = vadd.f32 %v9425, %v10582
      %v10973 = vadd.f32 %v9426, %v10587
      %v10974 = vadd.f32 %v9427, %v10590
      %v10975 = vadd.f32 %v9428, %v10595
      %v10976 = vadd.f32 %v9429, %v10598
      %v10977 = vadd.f32 %v9430, %v10603
      %v10978 = vadd.f32 %v9431, %v10606
      %v10979 = vadd.f32 %v9432, %v10611
      %v10980 = vadd.f32 %v9433, %v10614
      %v10981 = vadd.f32 %v9434, %v10619
      %v10982 = vadd.f32 %v9435, %v10622
      %v10983 = vadd.f32 %v9436, %v10627
      %v10984 = vadd.f32 %v9437, %v10630
      %v10985 = vadd.f32 %v9438, %v10635
      %v10986 = vadd.f32 %v9439, %v10638
      %v10987 = vadd.f32 %v9440, %v10643
      %v10988 = vadd.f32 %v9441, %v10646
      %v10989 = vadd.f32 %v9442, %v10651
      %v10990 = vadd.f32 %v9443, %v10654
      %v10991 = vadd.f32 %v9444, %v10659
      %v10992 = vadd.f32 %v9445, %v10662
      %v10993 = vadd.f32 %v9446, %v10667
      %v10994 = vadd.f32 %v9447, %v10670
      %v10995 = vadd.f32 %v9448, %v10675
      %v10996 = vadd.f32 %v9449, %v10678
      %v10997 = vadd.f32 %v9450, %v10683
      %v10998 = vadd.f32 %v9451, %v10686
      %v10999 = vadd.f32 %v9452, %v10691
      %v11000 = vadd.f32 %v9453, %v10694
      %v11001 = vadd.f32 %v9454, %v10699
      %v11002 = vadd.f32 %v9455, %v10702
      %v11003 = vadd.f32 %v9456, %v10707
      %v11004 = vadd.f32 %v9457, %v10710
      %v11005 = vadd.f32 %v9458, %v10715
      %v11006 = vadd.f32 %v9459, %v10718
      %v11007 = vadd.f32 %v9460, %v10723
      %v11008 = vadd.f32 %v9461, %v10726
      %v11009 = vadd.f32 %v9462, %v10731
      %v11010 = vadd.f32 %v9463, %v10734
      %v11011 = vadd.f32 %v9464, %v10739
      %v11012 = vadd.f32 %v9465, %v10742
      %v11013 = vadd.f32 %v9466, %v10747
      %v11014 = vadd.f32 %v9467, %v10750
      %v11015 = vadd.f32 %v9468, %v10755
      %v11016 = vadd.f32 %v9469, %v10758
      %v11017 = vadd.f32 %v9470, %v10763
      %v11018 = vadd.f32 %v9471, %v10766
      %v11019 = vadd.f32 %v9472, %v10771
      %v11020 = vadd.f32 %v9473, %v10774
      %v11021 = vadd.f32 %v9474, %v10779
      %v11022 = vadd.f32 %v9475, %v10782
      %v11023 = vadd.f32 %v9476, %v10787
      %v11024 = vadd.f32 %v9477, %v10790
      %v11025 = vadd.f32 %v9478, %v10795
      %v11026 = vadd.f32 %v9479, %v10798
      %v11027 = vadd.f32 %v9480, %v10803
      %v11028 = vadd.f32 %v9481, %v10806
      %v11029 = vadd.f32 %v9482, %v10811
      %v11030 = vadd.f32 %v9483, %v10814
      %v11031 = vadd.f32 %v9484, %v10819
      %v11032 = vadd.f32 %v9485, %v10822
      %v11033 = vadd.f32 %v9486, %v10827
      %v11034 = vadd.f32 %v9487, %v10830
      %v11035 = vadd.f32 %v9488, %v10835
      %v11036 = vadd.f32 %v9489, %v10838
      %v11037 = vadd.f32 %v9490, %v10843
      %v11038 = vadd.f32 %v9491, %v10846
      %v11039 = vadd.f32 %v9492, %v10851
      %v11040 = vadd.f32 %v9493, %v10854
      %v11041 = vadd.f32 %v9494, %v10859
      %v11042 = vadd.f32 %v9495, %v10862
      %v11043 = vadd.f32 %v9496, %v10867
      %v11044 = vadd.f32 %v9497, %v10870
      %v11045 = vadd.f32 %v9498, %v10875
      %v11046 = vadd.f32 %v9499, %v10878
      %v11047 = vadd.f32 %v9500, %v10883
      %v11048 = vadd.f32 %v9501, %v10886
      %v11049 = vadd.f32 %v9502, %v10891
      %v11050 = vadd.f32 %v9503, %v10894
      %v11051 = vadd.f32 %v9504, %v10899
      %v11052 = vadd.f32 %v9505, %v10902
      %v11053 = vadd.f32 %v9506, %v10907
      %v11054 = vadd.f32 %v9507, %v10910
      %v11055 = vadd.f32 %v9508, %v10915
      %v11056 = vadd.f32 %v9509, %v10918
      %v11057 = vld [vmem:[%s206 + $0x20] sm:$0x8]
      %s11058 = scalar_lea.vmem %s210, 32
      %v11059 = vld [vmem:[%s11058] sm:$0xf]
      %v11061 = vunpack.c.l.b16 %v11057
      %v11062 = vpack.c.b16 %v8248, %v11061
      %vm11063 = vcmask 1044480
      %v11064 = vrot.slane %v11062, 3
      %v11065 = vrot.slane %v8385, 3
      %v11066 = vsel %vm11063, %v11064, %v11065
      %v11067 = vrot.slane %v8386, 3
      %v11068 = vsel %vm11063, %v11065, %v11067
      %v11069 = vrot.slane %v8387, 3
      %v11070 = vsel %vm11063, %v11067, %v11069
      %v11071 = vrot.slane %v8388, 3
      %v11072 = vsel %vm11063, %v11069, %v11071
      %v11073 = vrot.slane %v8389, 3
      %v11074 = vsel %vm11063, %v11071, %v11073
      %v11075 = vrot.slane %v8390, 3
      %v11076 = vsel %vm11063, %v11073, %v11075
      %v11077 = vrot.slane %v8391, 3
      %v11078 = vsel %vm11063, %v11075, %v11077
      %v11079 = vrot.slane %v8392, 3
      %v11080 = vsel %vm11063, %v11077, %v11079
      %v11081 = vrot.slane %v8393, 3
      %v11082 = vsel %vm11063, %v11079, %v11081
      %v11083 = vrot.slane %v8394, 3
      %v11084 = vsel %vm11063, %v11081, %v11083
      %v11085 = vrot.slane %v8395, 3
      %v11086 = vsel %vm11063, %v11083, %v11085
      %v11087 = vrot.slane %v8396, 3
      %v11088 = vsel %vm11063, %v11085, %v11087
      %v11089 = vrot.slane %v8397, 3
      %v11090 = vsel %vm11063, %v11087, %v11089
      %v11091 = vrot.slane %v8398, 3
      %v11092 = vsel %vm11063, %v11089, %v11091
      %v11093 = vrot.slane %v8399, 3
      %v11094 = vsel %vm11063, %v11091, %v11093
      %v11095 = vrot.slane %v8400, 3
      %v11096 = vsel %vm11063, %v11093, %v11095
      %v11097 = vrot.slane %v8401, 3
      %v11098 = vsel %vm11063, %v11095, %v11097
      %v11099 = vrot.slane %v8402, 3
      %v11100 = vsel %vm11063, %v11097, %v11099
      %v11101 = vrot.slane %v8403, 3
      %v11102 = vsel %vm11063, %v11099, %v11101
      %v11103 = vrot.slane %v8404, 3
      %v11104 = vsel %vm11063, %v11101, %v11103
      %v11105 = vrot.slane %v8405, 3
      %v11106 = vsel %vm11063, %v11103, %v11105
      %v11107 = vrot.slane %v8406, 3
      %v11108 = vsel %vm11063, %v11105, %v11107
      %v11109 = vrot.slane %v8407, 3
      %v11110 = vsel %vm11063, %v11107, %v11109
      %v11111 = vrot.slane %v8408, 3
      %v11112 = vsel %vm11063, %v11109, %v11111
      %v11113 = vrot.slane %v8409, 3
      %v11114 = vsel %vm11063, %v11111, %v11113
      %v11115 = vrot.slane %v8410, 3
      %v11116 = vsel %vm11063, %v11113, %v11115
      %v11117 = vrot.slane %v8411, 3
      %v11118 = vsel %vm11063, %v11115, %v11117
      %v11119 = vrot.slane %v8412, 3
      %v11120 = vsel %vm11063, %v11117, %v11119
      %v11121 = vrot.slane %v8413, 3
      %v11122 = vsel %vm11063, %v11119, %v11121
      %v11123 = vrot.slane %v8414, 3
      %v11124 = vsel %vm11063, %v11121, %v11123
      %v11125 = vrot.slane %v8415, 3
      %v11126 = vsel %vm11063, %v11123, %v11125
      %v11127 = vrot.slane %v8416, 3
      %v11128 = vsel %vm11063, %v11125, %v11127
      %v11129 = vrot.slane %v8417, 3
      %v11130 = vsel %vm11063, %v11127, %v11129
      %v11131 = vrot.slane %v8418, 3
      %v11132 = vsel %vm11063, %v11129, %v11131
      %v11133 = vrot.slane %v8419, 3
      %v11134 = vsel %vm11063, %v11131, %v11133
      %v11135 = vrot.slane %v8420, 3
      %v11136 = vsel %vm11063, %v11133, %v11135
      %v11137 = vrot.slane %v8421, 3
      %v11138 = vsel %vm11063, %v11135, %v11137
      %v11139 = vrot.slane %v8422, 3
      %v11140 = vsel %vm11063, %v11137, %v11139
      %v11141 = vrot.slane %v8423, 3
      %v11142 = vsel %vm11063, %v11139, %v11141
      %v11143 = vrot.slane %v8424, 3
      %v11144 = vsel %vm11063, %v11141, %v11143
      %v11145 = vrot.slane %v8425, 3
      %v11146 = vsel %vm11063, %v11143, %v11145
      %v11147 = vrot.slane %v8426, 3
      %v11148 = vsel %vm11063, %v11145, %v11147
      %v11149 = vrot.slane %v8427, 3
      %v11150 = vsel %vm11063, %v11147, %v11149
      %v11151 = vrot.slane %v8428, 3
      %v11152 = vsel %vm11063, %v11149, %v11151
      %v11153 = vrot.slane %v8429, 3
      %v11154 = vsel %vm11063, %v11151, %v11153
      %v11155 = vrot.slane %v8430, 3
      %v11156 = vsel %vm11063, %v11153, %v11155
      %v11157 = vrot.slane %v8431, 3
      %v11158 = vsel %vm11063, %v11155, %v11157
      %v11159 = vrot.slane %v8432, 3
      %v11160 = vsel %vm11063, %v11157, %v11159
      %v11161 = vrot.slane %v8433, 3
      %v11162 = vsel %vm11063, %v11159, %v11161
      %v11163 = vrot.slane %v8434, 3
      %v11164 = vsel %vm11063, %v11161, %v11163
      %v11165 = vrot.slane %v8435, 3
      %v11166 = vsel %vm11063, %v11163, %v11165
      %v11167 = vrot.slane %v8436, 3
      %v11168 = vsel %vm11063, %v11165, %v11167
      %v11169 = vrot.slane %v8437, 3
      %v11170 = vsel %vm11063, %v11167, %v11169
      %v11171 = vrot.slane %v8438, 3
      %v11172 = vsel %vm11063, %v11169, %v11171
      %v11173 = vrot.slane %v8439, 3
      %v11174 = vsel %vm11063, %v11171, %v11173
      %v11175 = vrot.slane %v8440, 3
      %v11176 = vsel %vm11063, %v11173, %v11175
      %v11177 = vrot.slane %v8441, 3
      %v11178 = vsel %vm11063, %v11175, %v11177
      %v11179 = vrot.slane %v8442, 3
      %v11180 = vsel %vm11063, %v11177, %v11179
      %v11181 = vrot.slane %v8443, 3
      %v11182 = vsel %vm11063, %v11179, %v11181
      %v11183 = vrot.slane %v8444, 3
      %v11184 = vsel %vm11063, %v11181, %v11183
      %v11185 = vrot.slane %v8445, 3
      %v11186 = vsel %vm11063, %v11183, %v11185
      %v11187 = vrot.slane %v8446, 3
      %v11188 = vsel %vm11063, %v11185, %v11187
      %v11189 = vrot.slane %v8447, 3
      %v11190 = vsel %vm11063, %v11187, %v11189
      %v11191 = vrot.slane %v8448, 3
      %v11192 = vsel %vm11063, %v11189, %v11191
      %v11193 = vrot.slane %v8449, 3
      %v11194 = vsel %vm11063, %v11191, %v11193
      %v11195 = vrot.slane %v8450, 3
      %v11196 = vsel %vm11063, %v11193, %v11195
      %v11197 = vrot.slane %v8451, 3
      %v11198 = vsel %vm11063, %v11195, %v11197
      %v11199 = vrot.slane %v9515, 3
      %v11200 = vsel %vm11063, %v11197, %v11199
      %v11202 = vsel %vm1255, %v11066, 0
      %v11205 = vsel %vm1255, %v11068, 0
      %v11208 = vsel %vm1255, %v11070, 0
      %v11211 = vsel %vm1255, %v11072, 0
      %v11214 = vsel %vm1255, %v11074, 0
      %v11217 = vsel %vm1255, %v11076, 0
      %v11220 = vsel %vm1255, %v11078, 0
      %v11223 = vsel %vm1255, %v11080, 0
      %v11226 = vsel %vm1255, %v11082, 0
      %v11229 = vsel %vm1255, %v11084, 0
      %v11232 = vsel %vm1255, %v11086, 0
      %v11235 = vsel %vm1255, %v11088, 0
      %v11238 = vsel %vm1255, %v11090, 0
      %v11241 = vsel %vm1255, %v11092, 0
      %v11244 = vsel %vm1255, %v11094, 0
      %v11247 = vsel %vm1255, %v11096, 0
      %v11250 = vsel %vm1255, %v11098, 0
      %v11253 = vsel %vm1255, %v11100, 0
      %v11256 = vsel %vm1255, %v11102, 0
      %v11259 = vsel %vm1255, %v11104, 0
      %v11262 = vsel %vm1255, %v11106, 0
      %v11265 = vsel %vm1255, %v11108, 0
      %v11268 = vsel %vm1255, %v11110, 0
      %v11271 = vsel %vm1255, %v11112, 0
      %v11274 = vsel %vm1255, %v11114, 0
      %v11277 = vsel %vm1255, %v11116, 0
      %v11280 = vsel %vm1255, %v11118, 0
      %v11283 = vsel %vm1255, %v11120, 0
      %v11286 = vsel %vm1255, %v11122, 0
      %v11289 = vsel %vm1255, %v11124, 0
      %v11292 = vsel %vm1255, %v11126, 0
      %v11295 = vsel %vm1255, %v11128, 0
      %v11298 = vsel %vm1255, %v11130, 0
      %v11301 = vsel %vm1255, %v11132, 0
      %v11304 = vsel %vm1255, %v11134, 0
      %v11307 = vsel %vm1255, %v11136, 0
      %v11310 = vsel %vm1255, %v11138, 0
      %v11313 = vsel %vm1255, %v11140, 0
      %v11316 = vsel %vm1255, %v11142, 0
      %v11319 = vsel %vm1255, %v11144, 0
      %v11322 = vsel %vm1255, %v11146, 0
      %v11325 = vsel %vm1255, %v11148, 0
      %v11328 = vsel %vm1255, %v11150, 0
      %v11331 = vsel %vm1255, %v11152, 0
      %v11334 = vsel %vm1255, %v11154, 0
      %v11337 = vsel %vm1255, %v11156, 0
      %v11340 = vsel %vm1255, %v11158, 0
      %v11343 = vsel %vm1255, %v11160, 0
      %v11346 = vsel %vm1255, %v11162, 0
      %v11349 = vsel %vm1255, %v11164, 0
      %v11352 = vsel %vm1255, %v11166, 0
      %v11355 = vsel %vm1255, %v11168, 0
      %v11358 = vsel %vm1255, %v11170, 0
      %v11361 = vsel %vm1255, %v11172, 0
      %v11364 = vsel %vm1255, %v11174, 0
      %v11367 = vsel %vm1255, %v11176, 0
      %v11370 = vsel %vm1255, %v11178, 0
      %v11373 = vsel %vm1255, %v11180, 0
      %v11376 = vsel %vm1255, %v11182, 0
      %v11379 = vsel %vm1255, %v11184, 0
      %v11382 = vsel %vm1255, %v11186, 0
      %v11385 = vsel %vm1255, %v11188, 0
      %v11388 = vsel %vm1255, %v11190, 0
      %v11391 = vsel %vm1255, %v11192, 0
      %v11394 = vsel %vm1255, %v11194, 0
      %v11397 = vsel %vm1255, %v11196, 0
      %v11400 = vsel %vm1255, %v11198, 0
      %v11403 = vsel %vm1255, %v11200, 0
      %v11406 = vsel %vm1460, %v11059, 0
      %11408 = vmatprep.subr.bf16.mxu0 0
      %11409 = vmatpush1.bf16.msra.mxu0 0
      %11410 = vmatprep.subr.bf16.mxu0 0
      %11411 = vmatpush1.bf16.msra.mxu0 0
      %11412 = vmatprep.subr.bf16.mxu0 0
      %11413 = vmatpush1.bf16.msra.mxu0 0
      %11414 = vmatprep.subr.bf16.mxu0 0
      %11415 = vmatpush1.bf16.msra.mxu0 0
      %11416 = vmatprep.subr.bf16.mxu0 0
      %11417 = vmatpush1.bf16.msra.mxu0 0
      %11418 = vmatprep.subr.bf16.mxu0 0
      %11419 = vmatpush1.bf16.msra.mxu0 0
      %11420 = vmatprep.subr.bf16.mxu0 0
      %11421 = vmatpush1.bf16.msra.mxu0 0
      %11422 = vmatprep.subr.bf16.mxu0 0
      %11423 = vmatpush1.bf16.msra.mxu0 %v11406
      %11424 = vmatprep.subr.bf16.mxu0 0
      %11425 = vmatpush2.bf16.msra.mxu0 0
      %11426 = vmatprep.subr.bf16.mxu0 0
      %11427 = vmatpush2.bf16.msra.mxu0 0
      %11428 = vmatprep.subr.bf16.mxu0 0
      %11429 = vmatpush2.bf16.msra.mxu0 0
      %11430 = vmatprep.subr.bf16.mxu0 0
      %11431 = vmatpush2.bf16.msra.mxu0 0
      %11432 = vmatprep.subr.bf16.mxu0 0
      %11433 = vmatpush2.bf16.msra.mxu0 0
      %11434 = vmatprep.subr.bf16.mxu0 0
      %11435 = vmatpush2.bf16.msra.mxu0 0
      %11436 = vmatprep.subr.bf16.mxu0 0
      %11437 = vmatpush2.bf16.msra.mxu0 0
      %11438 = vmatprep.subr.bf16.mxu0 0
      %11439 = vmatpush2.bf16.msra.mxu0 0
      %11440 = vmatprep.mubr.bf16.mxu0 0
      %11441 = vmatmul.mubr.bf16.gmra.mxu0 %v11202
      %v11442 = vpop.f32.mrf.mxu0
      %v11443 = vadd.f32 0.0, %v11442
      %v11444 = vpop.f32.mrf.mxu0
      %v11445 = vpop.f32.mrf.mxu0
      %v11446 = vadd.f32 0.0, %v11445
      %v11447 = vpop.f32.mrf.mxu0
      %11448 = vmatprep.mubr.bf16.mxu0 0
      %11449 = vmatmul.mubr.bf16.gmra.mxu0 %v11205
      %v11450 = vpop.f32.mrf.mxu0
      %v11451 = vadd.f32 0.0, %v11450
      %v11452 = vpop.f32.mrf.mxu0
      %v11453 = vpop.f32.mrf.mxu0
      %v11454 = vadd.f32 0.0, %v11453
      %v11455 = vpop.f32.mrf.mxu0
      %11456 = vmatprep.mubr.bf16.mxu0 0
      %11457 = vmatmul.mubr.bf16.gmra.mxu0 %v11208
      %v11458 = vpop.f32.mrf.mxu0
      %v11459 = vadd.f32 0.0, %v11458
      %v11460 = vpop.f32.mrf.mxu0
      %v11461 = vpop.f32.mrf.mxu0
      %v11462 = vadd.f32 0.0, %v11461
      %v11463 = vpop.f32.mrf.mxu0
      %11464 = vmatprep.mubr.bf16.mxu0 0
      %11465 = vmatmul.mubr.bf16.gmra.mxu0 %v11211
      %v11466 = vpop.f32.mrf.mxu0
      %v11467 = vadd.f32 0.0, %v11466
      %v11468 = vpop.f32.mrf.mxu0
      %v11469 = vpop.f32.mrf.mxu0
      %v11470 = vadd.f32 0.0, %v11469
      %v11471 = vpop.f32.mrf.mxu0
      %11472 = vmatprep.mubr.bf16.mxu0 0
      %11473 = vmatmul.mubr.bf16.gmra.mxu0 %v11214
      %v11474 = vpop.f32.mrf.mxu0
      %v11475 = vadd.f32 0.0, %v11474
      %v11476 = vpop.f32.mrf.mxu0
      %v11477 = vpop.f32.mrf.mxu0
      %v11478 = vadd.f32 0.0, %v11477
      %v11479 = vpop.f32.mrf.mxu0
      %11480 = vmatprep.mubr.bf16.mxu0 0
      %11481 = vmatmul.mubr.bf16.gmra.mxu0 %v11217
      %v11482 = vpop.f32.mrf.mxu0
      %v11483 = vadd.f32 0.0, %v11482
      %v11484 = vpop.f32.mrf.mxu0
      %v11485 = vpop.f32.mrf.mxu0
      %v11486 = vadd.f32 0.0, %v11485
      %v11487 = vpop.f32.mrf.mxu0
      %11488 = vmatprep.mubr.bf16.mxu0 0
      %11489 = vmatmul.mubr.bf16.gmra.mxu0 %v11220
      %v11490 = vpop.f32.mrf.mxu0
      %v11491 = vadd.f32 0.0, %v11490
      %v11492 = vpop.f32.mrf.mxu0
      %v11493 = vpop.f32.mrf.mxu0
      %v11494 = vadd.f32 0.0, %v11493
      %v11495 = vpop.f32.mrf.mxu0
      %11496 = vmatprep.mubr.bf16.mxu0 0
      %11497 = vmatmul.mubr.bf16.gmra.mxu0 %v11223
      %v11498 = vpop.f32.mrf.mxu0
      %v11499 = vadd.f32 0.0, %v11498
      %v11500 = vpop.f32.mrf.mxu0
      %v11501 = vpop.f32.mrf.mxu0
      %v11502 = vadd.f32 0.0, %v11501
      %v11503 = vpop.f32.mrf.mxu0
      %11504 = vmatprep.mubr.bf16.mxu0 0
      %11505 = vmatmul.mubr.bf16.gmra.mxu0 %v11226
      %v11506 = vpop.f32.mrf.mxu0
      %v11507 = vadd.f32 0.0, %v11506
      %v11508 = vpop.f32.mrf.mxu0
      %v11509 = vpop.f32.mrf.mxu0
      %v11510 = vadd.f32 0.0, %v11509
      %v11511 = vpop.f32.mrf.mxu0
      %11512 = vmatprep.mubr.bf16.mxu0 0
      %11513 = vmatmul.mubr.bf16.gmra.mxu0 %v11229
      %v11514 = vpop.f32.mrf.mxu0
      %v11515 = vadd.f32 0.0, %v11514
      %v11516 = vpop.f32.mrf.mxu0
      %v11517 = vpop.f32.mrf.mxu0
      %v11518 = vadd.f32 0.0, %v11517
      %v11519 = vpop.f32.mrf.mxu0
      %11520 = vmatprep.mubr.bf16.mxu0 0
      %11521 = vmatmul.mubr.bf16.gmra.mxu0 %v11232
      %v11522 = vpop.f32.mrf.mxu0
      %v11523 = vadd.f32 0.0, %v11522
      %v11524 = vpop.f32.mrf.mxu0
      %v11525 = vpop.f32.mrf.mxu0
      %v11526 = vadd.f32 0.0, %v11525
      %v11527 = vpop.f32.mrf.mxu0
      %11528 = vmatprep.mubr.bf16.mxu0 0
      %11529 = vmatmul.mubr.bf16.gmra.mxu0 %v11235
      %v11530 = vpop.f32.mrf.mxu0
      %v11531 = vadd.f32 0.0, %v11530
      %v11532 = vpop.f32.mrf.mxu0
      %v11533 = vpop.f32.mrf.mxu0
      %v11534 = vadd.f32 0.0, %v11533
      %v11535 = vpop.f32.mrf.mxu0
      %11536 = vmatprep.mubr.bf16.mxu0 0
      %11537 = vmatmul.mubr.bf16.gmra.mxu0 %v11238
      %v11538 = vpop.f32.mrf.mxu0
      %v11539 = vadd.f32 0.0, %v11538
      %v11540 = vpop.f32.mrf.mxu0
      %v11541 = vpop.f32.mrf.mxu0
      %v11542 = vadd.f32 0.0, %v11541
      %v11543 = vpop.f32.mrf.mxu0
      %11544 = vmatprep.mubr.bf16.mxu0 0
      %11545 = vmatmul.mubr.bf16.gmra.mxu0 %v11241
      %v11546 = vpop.f32.mrf.mxu0
      %v11547 = vadd.f32 0.0, %v11546
      %v11548 = vpop.f32.mrf.mxu0
      %v11549 = vpop.f32.mrf.mxu0
      %v11550 = vadd.f32 0.0, %v11549
      %v11551 = vpop.f32.mrf.mxu0
      %11552 = vmatprep.mubr.bf16.mxu0 0
      %11553 = vmatmul.mubr.bf16.gmra.mxu0 %v11244
      %v11554 = vpop.f32.mrf.mxu0
      %v11555 = vadd.f32 0.0, %v11554
      %v11556 = vpop.f32.mrf.mxu0
      %v11557 = vpop.f32.mrf.mxu0
      %v11558 = vadd.f32 0.0, %v11557
      %v11559 = vpop.f32.mrf.mxu0
      %11560 = vmatprep.mubr.bf16.mxu0 0
      %11561 = vmatmul.mubr.bf16.gmra.mxu0 %v11247
      %v11562 = vpop.f32.mrf.mxu0
      %v11563 = vadd.f32 0.0, %v11562
      %v11564 = vpop.f32.mrf.mxu0
      %v11565 = vpop.f32.mrf.mxu0
      %v11566 = vadd.f32 0.0, %v11565
      %v11567 = vpop.f32.mrf.mxu0
      %11568 = vmatprep.mubr.bf16.mxu0 0
      %11569 = vmatmul.mubr.bf16.gmra.mxu0 %v11250
      %v11570 = vpop.f32.mrf.mxu0
      %v11571 = vadd.f32 0.0, %v11570
      %v11572 = vpop.f32.mrf.mxu0
      %v11573 = vpop.f32.mrf.mxu0
      %v11574 = vadd.f32 0.0, %v11573
      %v11575 = vpop.f32.mrf.mxu0
      %11576 = vmatprep.mubr.bf16.mxu0 0
      %11577 = vmatmul.mubr.bf16.gmra.mxu0 %v11253
      %v11578 = vpop.f32.mrf.mxu0
      %v11579 = vadd.f32 0.0, %v11578
      %v11580 = vpop.f32.mrf.mxu0
      %v11581 = vpop.f32.mrf.mxu0
      %v11582 = vadd.f32 0.0, %v11581
      %v11583 = vpop.f32.mrf.mxu0
      %11584 = vmatprep.mubr.bf16.mxu0 0
      %11585 = vmatmul.mubr.bf16.gmra.mxu0 %v11256
      %v11586 = vpop.f32.mrf.mxu0
      %v11587 = vadd.f32 0.0, %v11586
      %v11588 = vpop.f32.mrf.mxu0
      %v11589 = vpop.f32.mrf.mxu0
      %v11590 = vadd.f32 0.0, %v11589
      %v11591 = vpop.f32.mrf.mxu0
      %11592 = vmatprep.mubr.bf16.mxu0 0
      %11593 = vmatmul.mubr.bf16.gmra.mxu0 %v11259
      %v11594 = vpop.f32.mrf.mxu0
      %v11595 = vadd.f32 0.0, %v11594
      %v11596 = vpop.f32.mrf.mxu0
      %v11597 = vpop.f32.mrf.mxu0
      %v11598 = vadd.f32 0.0, %v11597
      %v11599 = vpop.f32.mrf.mxu0
      %11600 = vmatprep.mubr.bf16.mxu0 0
      %11601 = vmatmul.mubr.bf16.gmra.mxu0 %v11262
      %v11602 = vpop.f32.mrf.mxu0
      %v11603 = vadd.f32 0.0, %v11602
      %v11604 = vpop.f32.mrf.mxu0
      %v11605 = vpop.f32.mrf.mxu0
      %v11606 = vadd.f32 0.0, %v11605
      %v11607 = vpop.f32.mrf.mxu0
      %11608 = vmatprep.mubr.bf16.mxu0 0
      %11609 = vmatmul.mubr.bf16.gmra.mxu0 %v11265
      %v11610 = vpop.f32.mrf.mxu0
      %v11611 = vadd.f32 0.0, %v11610
      %v11612 = vpop.f32.mrf.mxu0
      %v11613 = vpop.f32.mrf.mxu0
      %v11614 = vadd.f32 0.0, %v11613
      %v11615 = vpop.f32.mrf.mxu0
      %11616 = vmatprep.mubr.bf16.mxu0 0
      %11617 = vmatmul.mubr.bf16.gmra.mxu0 %v11268
      %v11618 = vpop.f32.mrf.mxu0
      %v11619 = vadd.f32 0.0, %v11618
      %v11620 = vpop.f32.mrf.mxu0
      %v11621 = vpop.f32.mrf.mxu0
      %v11622 = vadd.f32 0.0, %v11621
      %v11623 = vpop.f32.mrf.mxu0
      %11624 = vmatprep.mubr.bf16.mxu0 0
      %11625 = vmatmul.mubr.bf16.gmra.mxu0 %v11271
      %v11626 = vpop.f32.mrf.mxu0
      %v11627 = vadd.f32 0.0, %v11626
      %v11628 = vpop.f32.mrf.mxu0
      %v11629 = vpop.f32.mrf.mxu0
      %v11630 = vadd.f32 0.0, %v11629
      %v11631 = vpop.f32.mrf.mxu0
      %11632 = vmatprep.mubr.bf16.mxu0 0
      %11633 = vmatmul.mubr.bf16.gmra.mxu0 %v11274
      %v11634 = vpop.f32.mrf.mxu0
      %v11635 = vadd.f32 0.0, %v11634
      %v11636 = vpop.f32.mrf.mxu0
      %v11637 = vpop.f32.mrf.mxu0
      %v11638 = vadd.f32 0.0, %v11637
      %v11639 = vpop.f32.mrf.mxu0
      %11640 = vmatprep.mubr.bf16.mxu0 0
      %11641 = vmatmul.mubr.bf16.gmra.mxu0 %v11277
      %v11642 = vpop.f32.mrf.mxu0
      %v11643 = vadd.f32 0.0, %v11642
      %v11644 = vpop.f32.mrf.mxu0
      %v11645 = vpop.f32.mrf.mxu0
      %v11646 = vadd.f32 0.0, %v11645
      %v11647 = vpop.f32.mrf.mxu0
      %11648 = vmatprep.mubr.bf16.mxu0 0
      %11649 = vmatmul.mubr.bf16.gmra.mxu0 %v11280
      %v11650 = vpop.f32.mrf.mxu0
      %v11651 = vadd.f32 0.0, %v11650
      %v11652 = vpop.f32.mrf.mxu0
      %v11653 = vpop.f32.mrf.mxu0
      %v11654 = vadd.f32 0.0, %v11653
      %v11655 = vpop.f32.mrf.mxu0
      %11656 = vmatprep.mubr.bf16.mxu0 0
      %11657 = vmatmul.mubr.bf16.gmra.mxu0 %v11283
      %v11658 = vpop.f32.mrf.mxu0
      %v11659 = vadd.f32 0.0, %v11658
      %v11660 = vpop.f32.mrf.mxu0
      %v11661 = vpop.f32.mrf.mxu0
      %v11662 = vadd.f32 0.0, %v11661
      %v11663 = vpop.f32.mrf.mxu0
      %11664 = vmatprep.mubr.bf16.mxu0 0
      %11665 = vmatmul.mubr.bf16.gmra.mxu0 %v11286
      %v11666 = vpop.f32.mrf.mxu0
      %v11667 = vadd.f32 0.0, %v11666
      %v11668 = vpop.f32.mrf.mxu0
      %v11669 = vpop.f32.mrf.mxu0
      %v11670 = vadd.f32 0.0, %v11669
      %v11671 = vpop.f32.mrf.mxu0
      %11672 = vmatprep.mubr.bf16.mxu0 0
      %11673 = vmatmul.mubr.bf16.gmra.mxu0 %v11289
      %v11674 = vpop.f32.mrf.mxu0
      %v11675 = vadd.f32 0.0, %v11674
      %v11676 = vpop.f32.mrf.mxu0
      %v11677 = vpop.f32.mrf.mxu0
      %v11678 = vadd.f32 0.0, %v11677
      %v11679 = vpop.f32.mrf.mxu0
      %11680 = vmatprep.mubr.bf16.mxu0 0
      %11681 = vmatmul.mubr.bf16.gmra.mxu0 %v11292
      %v11682 = vpop.f32.mrf.mxu0
      %v11683 = vadd.f32 0.0, %v11682
      %v11684 = vpop.f32.mrf.mxu0
      %v11685 = vpop.f32.mrf.mxu0
      %v11686 = vadd.f32 0.0, %v11685
      %v11687 = vpop.f32.mrf.mxu0
      %11688 = vmatprep.mubr.bf16.mxu0 0
      %11689 = vmatmul.mubr.bf16.gmra.mxu0 %v11295
      %v11690 = vpop.f32.mrf.mxu0
      %v11691 = vadd.f32 0.0, %v11690
      %v11692 = vpop.f32.mrf.mxu0
      %v11693 = vpop.f32.mrf.mxu0
      %v11694 = vadd.f32 0.0, %v11693
      %v11695 = vpop.f32.mrf.mxu0
      %11696 = vmatprep.mubr.bf16.mxu0 0
      %11697 = vmatmul.mubr.bf16.gmra.mxu0 %v11298
      %v11698 = vpop.f32.mrf.mxu0
      %v11699 = vadd.f32 0.0, %v11698
      %v11700 = vpop.f32.mrf.mxu0
      %v11701 = vpop.f32.mrf.mxu0
      %v11702 = vadd.f32 0.0, %v11701
      %v11703 = vpop.f32.mrf.mxu0
      %11704 = vmatprep.mubr.bf16.mxu0 0
      %11705 = vmatmul.mubr.bf16.gmra.mxu0 %v11301
      %v11706 = vpop.f32.mrf.mxu0
      %v11707 = vadd.f32 0.0, %v11706
      %v11708 = vpop.f32.mrf.mxu0
      %v11709 = vpop.f32.mrf.mxu0
      %v11710 = vadd.f32 0.0, %v11709
      %v11711 = vpop.f32.mrf.mxu0
      %11712 = vmatprep.mubr.bf16.mxu0 0
      %11713 = vmatmul.mubr.bf16.gmra.mxu0 %v11304
      %v11714 = vpop.f32.mrf.mxu0
      %v11715 = vadd.f32 0.0, %v11714
      %v11716 = vpop.f32.mrf.mxu0
      %v11717 = vpop.f32.mrf.mxu0
      %v11718 = vadd.f32 0.0, %v11717
      %v11719 = vpop.f32.mrf.mxu0
      %11720 = vmatprep.mubr.bf16.mxu0 0
      %11721 = vmatmul.mubr.bf16.gmra.mxu0 %v11307
      %v11722 = vpop.f32.mrf.mxu0
      %v11723 = vadd.f32 0.0, %v11722
      %v11724 = vpop.f32.mrf.mxu0
      %v11725 = vpop.f32.mrf.mxu0
      %v11726 = vadd.f32 0.0, %v11725
      %v11727 = vpop.f32.mrf.mxu0
      %11728 = vmatprep.mubr.bf16.mxu0 0
      %11729 = vmatmul.mubr.bf16.gmra.mxu0 %v11310
      %v11730 = vpop.f32.mrf.mxu0
      %v11731 = vadd.f32 0.0, %v11730
      %v11732 = vpop.f32.mrf.mxu0
      %v11733 = vpop.f32.mrf.mxu0
      %v11734 = vadd.f32 0.0, %v11733
      %v11735 = vpop.f32.mrf.mxu0
      %11736 = vmatprep.mubr.bf16.mxu0 0
      %11737 = vmatmul.mubr.bf16.gmra.mxu0 %v11313
      %v11738 = vpop.f32.mrf.mxu0
      %v11739 = vadd.f32 0.0, %v11738
      %v11740 = vpop.f32.mrf.mxu0
      %v11741 = vpop.f32.mrf.mxu0
      %v11742 = vadd.f32 0.0, %v11741
      %v11743 = vpop.f32.mrf.mxu0
      %11744 = vmatprep.mubr.bf16.mxu0 0
      %11745 = vmatmul.mubr.bf16.gmra.mxu0 %v11316
      %v11746 = vpop.f32.mrf.mxu0
      %v11747 = vadd.f32 0.0, %v11746
      %v11748 = vpop.f32.mrf.mxu0
      %v11749 = vpop.f32.mrf.mxu0
      %v11750 = vadd.f32 0.0, %v11749
      %v11751 = vpop.f32.mrf.mxu0
      %11752 = vmatprep.mubr.bf16.mxu0 0
      %11753 = vmatmul.mubr.bf16.gmra.mxu0 %v11319
      %v11754 = vpop.f32.mrf.mxu0
      %v11755 = vadd.f32 0.0, %v11754
      %v11756 = vpop.f32.mrf.mxu0
      %v11757 = vpop.f32.mrf.mxu0
      %v11758 = vadd.f32 0.0, %v11757
      %v11759 = vpop.f32.mrf.mxu0
      %11760 = vmatprep.mubr.bf16.mxu0 0
      %11761 = vmatmul.mubr.bf16.gmra.mxu0 %v11322
      %v11762 = vpop.f32.mrf.mxu0
      %v11763 = vadd.f32 0.0, %v11762
      %v11764 = vpop.f32.mrf.mxu0
      %v11765 = vpop.f32.mrf.mxu0
      %v11766 = vadd.f32 0.0, %v11765
      %v11767 = vpop.f32.mrf.mxu0
      %11768 = vmatprep.mubr.bf16.mxu0 0
      %11769 = vmatmul.mubr.bf16.gmra.mxu0 %v11325
      %v11770 = vpop.f32.mrf.mxu0
      %v11771 = vadd.f32 0.0, %v11770
      %v11772 = vpop.f32.mrf.mxu0
      %v11773 = vpop.f32.mrf.mxu0
      %v11774 = vadd.f32 0.0, %v11773
      %v11775 = vpop.f32.mrf.mxu0
      %11776 = vmatprep.mubr.bf16.mxu0 0
      %11777 = vmatmul.mubr.bf16.gmra.mxu0 %v11328
      %v11778 = vpop.f32.mrf.mxu0
      %v11779 = vadd.f32 0.0, %v11778
      %v11780 = vpop.f32.mrf.mxu0
      %v11781 = vpop.f32.mrf.mxu0
      %v11782 = vadd.f32 0.0, %v11781
      %v11783 = vpop.f32.mrf.mxu0
      %11784 = vmatprep.mubr.bf16.mxu0 0
      %11785 = vmatmul.mubr.bf16.gmra.mxu0 %v11331
      %v11786 = vpop.f32.mrf.mxu0
      %v11787 = vadd.f32 0.0, %v11786
      %v11788 = vpop.f32.mrf.mxu0
      %v11789 = vpop.f32.mrf.mxu0
      %v11790 = vadd.f32 0.0, %v11789
      %v11791 = vpop.f32.mrf.mxu0
      %11792 = vmatprep.mubr.bf16.mxu0 0
      %11793 = vmatmul.mubr.bf16.gmra.mxu0 %v11334
      %v11794 = vpop.f32.mrf.mxu0
      %v11795 = vadd.f32 0.0, %v11794
      %v11796 = vpop.f32.mrf.mxu0
      %v11797 = vpop.f32.mrf.mxu0
      %v11798 = vadd.f32 0.0, %v11797
      %v11799 = vpop.f32.mrf.mxu0
      %11800 = vmatprep.mubr.bf16.mxu0 0
      %11801 = vmatmul.mubr.bf16.gmra.mxu0 %v11337
      %v11802 = vpop.f32.mrf.mxu0
      %v11803 = vadd.f32 0.0, %v11802
      %v11804 = vpop.f32.mrf.mxu0
      %v11805 = vpop.f32.mrf.mxu0
      %v11806 = vadd.f32 0.0, %v11805
      %v11807 = vpop.f32.mrf.mxu0
      %11808 = vmatprep.mubr.bf16.mxu0 0
      %11809 = vmatmul.mubr.bf16.gmra.mxu0 %v11340
      %v11810 = vpop.f32.mrf.mxu0
      %v11811 = vadd.f32 0.0, %v11810
      %v11812 = vpop.f32.mrf.mxu0
      %v11813 = vpop.f32.mrf.mxu0
      %v11814 = vadd.f32 0.0, %v11813
      %v11815 = vpop.f32.mrf.mxu0
      %11816 = vmatprep.mubr.bf16.mxu0 0
      %11817 = vmatmul.mubr.bf16.gmra.mxu0 %v11343
      %v11818 = vpop.f32.mrf.mxu0
      %v11819 = vadd.f32 0.0, %v11818
      %v11820 = vpop.f32.mrf.mxu0
      %v11821 = vpop.f32.mrf.mxu0
      %v11822 = vadd.f32 0.0, %v11821
      %v11823 = vpop.f32.mrf.mxu0
      %11824 = vmatprep.mubr.bf16.mxu0 0
      %11825 = vmatmul.mubr.bf16.gmra.mxu0 %v11346
      %v11826 = vpop.f32.mrf.mxu0
      %v11827 = vadd.f32 0.0, %v11826
      %v11828 = vpop.f32.mrf.mxu0
      %v11829 = vpop.f32.mrf.mxu0
      %v11830 = vadd.f32 0.0, %v11829
      %v11831 = vpop.f32.mrf.mxu0
      %11832 = vmatprep.mubr.bf16.mxu0 0
      %11833 = vmatmul.mubr.bf16.gmra.mxu0 %v11349
      %v11834 = vpop.f32.mrf.mxu0
      %v11835 = vadd.f32 0.0, %v11834
      %v11836 = vpop.f32.mrf.mxu0
      %v11837 = vpop.f32.mrf.mxu0
      %v11838 = vadd.f32 0.0, %v11837
      %v11839 = vpop.f32.mrf.mxu0
      %11840 = vmatprep.mubr.bf16.mxu0 0
      %11841 = vmatmul.mubr.bf16.gmra.mxu0 %v11352
      %v11842 = vpop.f32.mrf.mxu0
      %v11843 = vadd.f32 0.0, %v11842
      %v11844 = vpop.f32.mrf.mxu0
      %v11845 = vpop.f32.mrf.mxu0
      %v11846 = vadd.f32 0.0, %v11845
      %v11847 = vpop.f32.mrf.mxu0
      %11848 = vmatprep.mubr.bf16.mxu0 0
      %11849 = vmatmul.mubr.bf16.gmra.mxu0 %v11355
      %v11850 = vpop.f32.mrf.mxu0
      %v11851 = vadd.f32 0.0, %v11850
      %v11852 = vpop.f32.mrf.mxu0
      %v11853 = vpop.f32.mrf.mxu0
      %v11854 = vadd.f32 0.0, %v11853
      %v11855 = vpop.f32.mrf.mxu0
      %11856 = vmatprep.mubr.bf16.mxu0 0
      %11857 = vmatmul.mubr.bf16.gmra.mxu0 %v11358
      %v11858 = vpop.f32.mrf.mxu0
      %v11859 = vadd.f32 0.0, %v11858
      %v11860 = vpop.f32.mrf.mxu0
      %v11861 = vpop.f32.mrf.mxu0
      %v11862 = vadd.f32 0.0, %v11861
      %v11863 = vpop.f32.mrf.mxu0
      %11864 = vmatprep.mubr.bf16.mxu0 0
      %11865 = vmatmul.mubr.bf16.gmra.mxu0 %v11361
      %v11866 = vpop.f32.mrf.mxu0
      %v11867 = vadd.f32 0.0, %v11866
      %v11868 = vpop.f32.mrf.mxu0
      %v11869 = vpop.f32.mrf.mxu0
      %v11870 = vadd.f32 0.0, %v11869
      %v11871 = vpop.f32.mrf.mxu0
      %11872 = vmatprep.mubr.bf16.mxu0 0
      %11873 = vmatmul.mubr.bf16.gmra.mxu0 %v11364
      %v11874 = vpop.f32.mrf.mxu0
      %v11875 = vadd.f32 0.0, %v11874
      %v11876 = vpop.f32.mrf.mxu0
      %v11877 = vpop.f32.mrf.mxu0
      %v11878 = vadd.f32 0.0, %v11877
      %v11879 = vpop.f32.mrf.mxu0
      %11880 = vmatprep.mubr.bf16.mxu0 0
      %11881 = vmatmul.mubr.bf16.gmra.mxu0 %v11367
      %v11882 = vpop.f32.mrf.mxu0
      %v11883 = vadd.f32 0.0, %v11882
      %v11884 = vpop.f32.mrf.mxu0
      %v11885 = vpop.f32.mrf.mxu0
      %v11886 = vadd.f32 0.0, %v11885
      %v11887 = vpop.f32.mrf.mxu0
      %11888 = vmatprep.mubr.bf16.mxu0 0
      %11889 = vmatmul.mubr.bf16.gmra.mxu0 %v11370
      %v11890 = vpop.f32.mrf.mxu0
      %v11891 = vadd.f32 0.0, %v11890
      %v11892 = vpop.f32.mrf.mxu0
      %v11893 = vpop.f32.mrf.mxu0
      %v11894 = vadd.f32 0.0, %v11893
      %v11895 = vpop.f32.mrf.mxu0
      %11896 = vmatprep.mubr.bf16.mxu0 0
      %11897 = vmatmul.mubr.bf16.gmra.mxu0 %v11373
      %v11898 = vpop.f32.mrf.mxu0
      %v11899 = vadd.f32 0.0, %v11898
      %v11900 = vpop.f32.mrf.mxu0
      %v11901 = vpop.f32.mrf.mxu0
      %v11902 = vadd.f32 0.0, %v11901
      %v11903 = vpop.f32.mrf.mxu0
      %11904 = vmatprep.mubr.bf16.mxu0 0
      %11905 = vmatmul.mubr.bf16.gmra.mxu0 %v11376
      %v11906 = vpop.f32.mrf.mxu0
      %v11907 = vadd.f32 0.0, %v11906
      %v11908 = vpop.f32.mrf.mxu0
      %v11909 = vpop.f32.mrf.mxu0
      %v11910 = vadd.f32 0.0, %v11909
      %v11911 = vpop.f32.mrf.mxu0
      %11912 = vmatprep.mubr.bf16.mxu0 0
      %11913 = vmatmul.mubr.bf16.gmra.mxu0 %v11379
      %v11914 = vpop.f32.mrf.mxu0
      %v11915 = vadd.f32 0.0, %v11914
      %v11916 = vpop.f32.mrf.mxu0
      %v11917 = vpop.f32.mrf.mxu0
      %v11918 = vadd.f32 0.0, %v11917
      %v11919 = vpop.f32.mrf.mxu0
      %11920 = vmatprep.mubr.bf16.mxu0 0
      %11921 = vmatmul.mubr.bf16.gmra.mxu0 %v11382
      %v11922 = vpop.f32.mrf.mxu0
      %v11923 = vadd.f32 0.0, %v11922
      %v11924 = vpop.f32.mrf.mxu0
      %v11925 = vpop.f32.mrf.mxu0
      %v11926 = vadd.f32 0.0, %v11925
      %v11927 = vpop.f32.mrf.mxu0
      %11928 = vmatprep.mubr.bf16.mxu0 0
      %11929 = vmatmul.mubr.bf16.gmra.mxu0 %v11385
      %v11930 = vpop.f32.mrf.mxu0
      %v11931 = vadd.f32 0.0, %v11930
      %v11932 = vpop.f32.mrf.mxu0
      %v11933 = vpop.f32.mrf.mxu0
      %v11934 = vadd.f32 0.0, %v11933
      %v11935 = vpop.f32.mrf.mxu0
      %11936 = vmatprep.mubr.bf16.mxu0 0
      %11937 = vmatmul.mubr.bf16.gmra.mxu0 %v11388
      %v11938 = vpop.f32.mrf.mxu0
      %v11939 = vadd.f32 0.0, %v11938
      %v11940 = vpop.f32.mrf.mxu0
      %v11941 = vpop.f32.mrf.mxu0
      %v11942 = vadd.f32 0.0, %v11941
      %v11943 = vpop.f32.mrf.mxu0
      %11944 = vmatprep.mubr.bf16.mxu0 0
      %11945 = vmatmul.mubr.bf16.gmra.mxu0 %v11391
      %v11946 = vpop.f32.mrf.mxu0
      %v11947 = vadd.f32 0.0, %v11946
      %v11948 = vpop.f32.mrf.mxu0
      %v11949 = vpop.f32.mrf.mxu0
      %v11950 = vadd.f32 0.0, %v11949
      %v11951 = vpop.f32.mrf.mxu0
      %11952 = vmatprep.mubr.bf16.mxu0 0
      %11953 = vmatmul.mubr.bf16.gmra.mxu0 %v11394
      %v11954 = vpop.f32.mrf.mxu0
      %v11955 = vadd.f32 0.0, %v11954
      %v11956 = vpop.f32.mrf.mxu0
      %v11957 = vpop.f32.mrf.mxu0
      %v11958 = vadd.f32 0.0, %v11957
      %v11959 = vpop.f32.mrf.mxu0
      %11960 = vmatprep.mubr.bf16.mxu0 0
      %11961 = vmatmul.mubr.bf16.gmra.mxu0 %v11397
      %v11962 = vpop.f32.mrf.mxu0
      %v11963 = vadd.f32 0.0, %v11962
      %v11964 = vpop.f32.mrf.mxu0
      %v11965 = vpop.f32.mrf.mxu0
      %v11966 = vadd.f32 0.0, %v11965
      %v11967 = vpop.f32.mrf.mxu0
      %11968 = vmatprep.mubr.bf16.mxu0 0
      %11969 = vmatmul.mubr.bf16.gmra.mxu0 %v11400
      %v11970 = vpop.f32.mrf.mxu0
      %v11971 = vadd.f32 0.0, %v11970
      %v11972 = vpop.f32.mrf.mxu0
      %v11973 = vpop.f32.mrf.mxu0
      %v11974 = vadd.f32 0.0, %v11973
      %v11975 = vpop.f32.mrf.mxu0
      %11976 = vmatprep.mubr.bf16.mxu0 0
      %11977 = vmatmul.mubr.bf16.gmra.mxu0 %v11403
      %v11978 = vpop.f32.mrf.mxu0
      %v11979 = vadd.f32 0.0, %v11978
      %v11980 = vpop.f32.mrf.mxu0
      %v11981 = vpop.f32.mrf.mxu0
      %v11982 = vadd.f32 0.0, %v11981
      %v11983 = vpop.f32.mrf.mxu0
      %11984 = vdwg.mxu0
      %v11985 = vadd.f32 %v10921, %v11443
      %v11986 = vadd.f32 %v10922, %v11446
      %v11987 = vadd.f32 %v10923, %v11451
      %v11988 = vadd.f32 %v10924, %v11454
      %v11989 = vadd.f32 %v10925, %v11459
      %v11990 = vadd.f32 %v10926, %v11462
      %v11991 = vadd.f32 %v10927, %v11467
      %v11992 = vadd.f32 %v10928, %v11470
      %v11993 = vadd.f32 %v10929, %v11475
      %v11994 = vadd.f32 %v10930, %v11478
      %v11995 = vadd.f32 %v10931, %v11483
      %v11996 = vadd.f32 %v10932, %v11486
      %v11997 = vadd.f32 %v10933, %v11491
      %v11998 = vadd.f32 %v10934, %v11494
      %v11999 = vadd.f32 %v10935, %v11499
      %v12000 = vadd.f32 %v10936, %v11502
      %v12001 = vadd.f32 %v10937, %v11507
      %v12002 = vadd.f32 %v10938, %v11510
      %v12003 = vadd.f32 %v10939, %v11515
      %v12004 = vadd.f32 %v10940, %v11518
      %v12005 = vadd.f32 %v10941, %v11523
      %v12006 = vadd.f32 %v10942, %v11526
      %v12007 = vadd.f32 %v10943, %v11531
      %v12008 = vadd.f32 %v10944, %v11534
      %v12009 = vadd.f32 %v10945, %v11539
      %v12010 = vadd.f32 %v10946, %v11542
      %v12011 = vadd.f32 %v10947, %v11547
      %v12012 = vadd.f32 %v10948, %v11550
      %v12013 = vadd.f32 %v10949, %v11555
      %v12014 = vadd.f32 %v10950, %v11558
      %v12015 = vadd.f32 %v10951, %v11563
      %v12016 = vadd.f32 %v10952, %v11566
      %v12017 = vadd.f32 %v10953, %v11571
      %v12018 = vadd.f32 %v10954, %v11574
      %v12019 = vadd.f32 %v10955, %v11579
      %v12020 = vadd.f32 %v10956, %v11582
      %v12021 = vadd.f32 %v10957, %v11587
      %v12022 = vadd.f32 %v10958, %v11590
      %v12023 = vadd.f32 %v10959, %v11595
      %v12024 = vadd.f32 %v10960, %v11598
      %v12025 = vadd.f32 %v10961, %v11603
      %v12026 = vadd.f32 %v10962, %v11606
      %v12027 = vadd.f32 %v10963, %v11611
      %v12028 = vadd.f32 %v10964, %v11614
      %v12029 = vadd.f32 %v10965, %v11619
      %v12030 = vadd.f32 %v10966, %v11622
      %v12031 = vadd.f32 %v10967, %v11627
      %v12032 = vadd.f32 %v10968, %v11630
      %v12033 = vadd.f32 %v10969, %v11635
      %v12034 = vadd.f32 %v10970, %v11638
      %v12035 = vadd.f32 %v10971, %v11643
      %v12036 = vadd.f32 %v10972, %v11646
      %v12037 = vadd.f32 %v10973, %v11651
      %v12038 = vadd.f32 %v10974, %v11654
      %v12039 = vadd.f32 %v10975, %v11659
      %v12040 = vadd.f32 %v10976, %v11662
      %v12041 = vadd.f32 %v10977, %v11667
      %v12042 = vadd.f32 %v10978, %v11670
      %v12043 = vadd.f32 %v10979, %v11675
      %v12044 = vadd.f32 %v10980, %v11678
      %v12045 = vadd.f32 %v10981, %v11683
      %v12046 = vadd.f32 %v10982, %v11686
      %v12047 = vadd.f32 %v10983, %v11691
      %v12048 = vadd.f32 %v10984, %v11694
      %v12049 = vadd.f32 %v10985, %v11699
      %v12050 = vadd.f32 %v10986, %v11702
      %v12051 = vadd.f32 %v10987, %v11707
      %v12052 = vadd.f32 %v10988, %v11710
      %v12053 = vadd.f32 %v10989, %v11715
      %v12054 = vadd.f32 %v10990, %v11718
      %v12055 = vadd.f32 %v10991, %v11723
      %v12056 = vadd.f32 %v10992, %v11726
      %v12057 = vadd.f32 %v10993, %v11731
      %v12058 = vadd.f32 %v10994, %v11734
      %v12059 = vadd.f32 %v10995, %v11739
      %v12060 = vadd.f32 %v10996, %v11742
      %v12061 = vadd.f32 %v10997, %v11747
      %v12062 = vadd.f32 %v10998, %v11750
      %v12063 = vadd.f32 %v10999, %v11755
      %v12064 = vadd.f32 %v11000, %v11758
      %v12065 = vadd.f32 %v11001, %v11763
      %v12066 = vadd.f32 %v11002, %v11766
      %v12067 = vadd.f32 %v11003, %v11771
      %v12068 = vadd.f32 %v11004, %v11774
      %v12069 = vadd.f32 %v11005, %v11779
      %v12070 = vadd.f32 %v11006, %v11782
      %v12071 = vadd.f32 %v11007, %v11787
      %v12072 = vadd.f32 %v11008, %v11790
      %v12073 = vadd.f32 %v11009, %v11795
      %v12074 = vadd.f32 %v11010, %v11798
      %v12075 = vadd.f32 %v11011, %v11803
      %v12076 = vadd.f32 %v11012, %v11806
      %v12077 = vadd.f32 %v11013, %v11811
      %v12078 = vadd.f32 %v11014, %v11814
      %v12079 = vadd.f32 %v11015, %v11819
      %v12080 = vadd.f32 %v11016, %v11822
      %v12081 = vadd.f32 %v11017, %v11827
      %v12082 = vadd.f32 %v11018, %v11830
      %v12083 = vadd.f32 %v11019, %v11835
      %v12084 = vadd.f32 %v11020, %v11838
      %v12085 = vadd.f32 %v11021, %v11843
      %v12086 = vadd.f32 %v11022, %v11846
      %v12087 = vadd.f32 %v11023, %v11851
      %v12088 = vadd.f32 %v11024, %v11854
      %v12089 = vadd.f32 %v11025, %v11859
      %v12090 = vadd.f32 %v11026, %v11862
      %v12091 = vadd.f32 %v11027, %v11867
      %v12092 = vadd.f32 %v11028, %v11870
      %v12093 = vadd.f32 %v11029, %v11875
      %v12094 = vadd.f32 %v11030, %v11878
      %v12095 = vadd.f32 %v11031, %v11883
      %v12096 = vadd.f32 %v11032, %v11886
      %v12097 = vadd.f32 %v11033, %v11891
      %v12098 = vadd.f32 %v11034, %v11894
      %v12099 = vadd.f32 %v11035, %v11899
      %v12100 = vadd.f32 %v11036, %v11902
      %v12101 = vadd.f32 %v11037, %v11907
      %v12102 = vadd.f32 %v11038, %v11910
      %v12103 = vadd.f32 %v11039, %v11915
      %v12104 = vadd.f32 %v11040, %v11918
      %v12105 = vadd.f32 %v11041, %v11923
      %v12106 = vadd.f32 %v11042, %v11926
      %v12107 = vadd.f32 %v11043, %v11931
      %v12108 = vadd.f32 %v11044, %v11934
      %v12109 = vadd.f32 %v11045, %v11939
      %v12110 = vadd.f32 %v11046, %v11942
      %v12111 = vadd.f32 %v11047, %v11947
      %v12112 = vadd.f32 %v11048, %v11950
      %v12113 = vadd.f32 %v11049, %v11955
      %v12114 = vadd.f32 %v11050, %v11958
      %v12115 = vadd.f32 %v11051, %v11963
      %v12116 = vadd.f32 %v11052, %v11966
      %v12117 = vadd.f32 %v11053, %v11971
      %v12118 = vadd.f32 %v11054, %v11974
      %v12119 = vadd.f32 %v11055, %v11979
      %v12120 = vadd.f32 %v11056, %v11982
      %v12121 = vld [vmem:[%s213] sm:$0x1]
      %v12123 = vlaneseq
      %v12124 = vshrl.u32 %v12123, 7
      %v12125 = vsub.s32 0, %v12124
      %v12126 = vrot.slane %v12121, %v12125
      %v12128 = vadd.f32 %v11985, %v12126
      %v12129 = vadd.f32 %v11986, %v12126
      %v12130 = vadd.f32 %v11987, %v12126
      %v12131 = vadd.f32 %v11988, %v12126
      %v12132 = vadd.f32 %v11989, %v12126
      %v12133 = vadd.f32 %v11990, %v12126
      %v12134 = vadd.f32 %v11991, %v12126
      %v12135 = vadd.f32 %v11992, %v12126
      %v12136 = vadd.f32 %v11993, %v12126
      %v12137 = vadd.f32 %v11994, %v12126
      %v12138 = vadd.f32 %v11995, %v12126
      %v12139 = vadd.f32 %v11996, %v12126
      %v12140 = vadd.f32 %v11997, %v12126
      %v12141 = vadd.f32 %v11998, %v12126
      %v12142 = vadd.f32 %v11999, %v12126
      %v12143 = vadd.f32 %v12000, %v12126
      %v12144 = vadd.f32 %v12001, %v12126
      %v12145 = vadd.f32 %v12002, %v12126
      %v12146 = vadd.f32 %v12003, %v12126
      %v12147 = vadd.f32 %v12004, %v12126
      %v12148 = vadd.f32 %v12005, %v12126
      %v12149 = vadd.f32 %v12006, %v12126
      %v12150 = vadd.f32 %v12007, %v12126
      %v12151 = vadd.f32 %v12008, %v12126
      %v12152 = vadd.f32 %v12009, %v12126
      %v12153 = vadd.f32 %v12010, %v12126
      %v12154 = vadd.f32 %v12011, %v12126
      %v12155 = vadd.f32 %v12012, %v12126
      %v12156 = vadd.f32 %v12013, %v12126
      %v12157 = vadd.f32 %v12014, %v12126
      %v12158 = vadd.f32 %v12015, %v12126
      %v12159 = vadd.f32 %v12016, %v12126
      %v12160 = vadd.f32 %v12017, %v12126
      %v12161 = vadd.f32 %v12018, %v12126
      %v12162 = vadd.f32 %v12019, %v12126
      %v12163 = vadd.f32 %v12020, %v12126
      %v12164 = vadd.f32 %v12021, %v12126
      %v12165 = vadd.f32 %v12022, %v12126
      %v12166 = vadd.f32 %v12023, %v12126
      %v12167 = vadd.f32 %v12024, %v12126
      %v12168 = vadd.f32 %v12025, %v12126
      %v12169 = vadd.f32 %v12026, %v12126
      %v12170 = vadd.f32 %v12027, %v12126
      %v12171 = vadd.f32 %v12028, %v12126
      %v12172 = vadd.f32 %v12029, %v12126
      %v12173 = vadd.f32 %v12030, %v12126
      %v12174 = vadd.f32 %v12031, %v12126
      %v12175 = vadd.f32 %v12032, %v12126
      %v12176 = vadd.f32 %v12033, %v12126
      %v12177 = vadd.f32 %v12034, %v12126
      %v12178 = vadd.f32 %v12035, %v12126
      %v12179 = vadd.f32 %v12036, %v12126
      %v12180 = vadd.f32 %v12037, %v12126
      %v12181 = vadd.f32 %v12038, %v12126
      %v12182 = vadd.f32 %v12039, %v12126
      %v12183 = vadd.f32 %v12040, %v12126
      %v12184 = vadd.f32 %v12041, %v12126
      %v12185 = vadd.f32 %v12042, %v12126
      %v12186 = vadd.f32 %v12043, %v12126
      %v12187 = vadd.f32 %v12044, %v12126
      %v12188 = vadd.f32 %v12045, %v12126
      %v12189 = vadd.f32 %v12046, %v12126
      %v12190 = vadd.f32 %v12047, %v12126
      %v12191 = vadd.f32 %v12048, %v12126
      %v12192 = vadd.f32 %v12049, %v12126
      %v12193 = vadd.f32 %v12050, %v12126
      %v12194 = vadd.f32 %v12051, %v12126
      %v12195 = vadd.f32 %v12052, %v12126
      %v12196 = vadd.f32 %v12053, %v12126
      %v12197 = vadd.f32 %v12054, %v12126
      %v12198 = vadd.f32 %v12055, %v12126
      %v12199 = vadd.f32 %v12056, %v12126
      %v12200 = vadd.f32 %v12057, %v12126
      %v12201 = vadd.f32 %v12058, %v12126
      %v12202 = vadd.f32 %v12059, %v12126
      %v12203 = vadd.f32 %v12060, %v12126
      %v12204 = vadd.f32 %v12061, %v12126
      %v12205 = vadd.f32 %v12062, %v12126
      %v12206 = vadd.f32 %v12063, %v12126
      %v12207 = vadd.f32 %v12064, %v12126
      %v12208 = vadd.f32 %v12065, %v12126
      %v12209 = vadd.f32 %v12066, %v12126
      %v12210 = vadd.f32 %v12067, %v12126
      %v12211 = vadd.f32 %v12068, %v12126
      %v12212 = vadd.f32 %v12069, %v12126
      %v12213 = vadd.f32 %v12070, %v12126
      %v12214 = vadd.f32 %v12071, %v12126
      %v12215 = vadd.f32 %v12072, %v12126
      %v12216 = vadd.f32 %v12073, %v12126
      %v12217 = vadd.f32 %v12074, %v12126
      %v12218 = vadd.f32 %v12075, %v12126
      %v12219 = vadd.f32 %v12076, %v12126
      %v12220 = vadd.f32 %v12077, %v12126
      %v12221 = vadd.f32 %v12078, %v12126
      %v12222 = vadd.f32 %v12079, %v12126
      %v12223 = vadd.f32 %v12080, %v12126
      %v12224 = vadd.f32 %v12081, %v12126
      %v12225 = vadd.f32 %v12082, %v12126
      %v12226 = vadd.f32 %v12083, %v12126
      %v12227 = vadd.f32 %v12084, %v12126
      %v12228 = vadd.f32 %v12085, %v12126
      %v12229 = vadd.f32 %v12086, %v12126
      %v12230 = vadd.f32 %v12087, %v12126
      %v12231 = vadd.f32 %v12088, %v12126
      %v12232 = vadd.f32 %v12089, %v12126
      %v12233 = vadd.f32 %v12090, %v12126
      %v12234 = vadd.f32 %v12091, %v12126
      %v12235 = vadd.f32 %v12092, %v12126
      %v12236 = vadd.f32 %v12093, %v12126
      %v12237 = vadd.f32 %v12094, %v12126
      %v12238 = vadd.f32 %v12095, %v12126
      %v12239 = vadd.f32 %v12096, %v12126
      %v12240 = vadd.f32 %v12097, %v12126
      %v12241 = vadd.f32 %v12098, %v12126
      %v12242 = vadd.f32 %v12099, %v12126
      %v12243 = vadd.f32 %v12100, %v12126
      %v12244 = vadd.f32 %v12101, %v12126
      %v12245 = vadd.f32 %v12102, %v12126
      %v12246 = vadd.f32 %v12103, %v12126
      %v12247 = vadd.f32 %v12104, %v12126
      %v12248 = vadd.f32 %v12105, %v12126
      %v12249 = vadd.f32 %v12106, %v12126
      %v12250 = vadd.f32 %v12107, %v12126
      %v12251 = vadd.f32 %v12108, %v12126
      %v12252 = vadd.f32 %v12109, %v12126
      %v12253 = vadd.f32 %v12110, %v12126
      %v12254 = vadd.f32 %v12111, %v12126
      %v12255 = vadd.f32 %v12112, %v12126
      %v12256 = vadd.f32 %v12113, %v12126
      %v12257 = vadd.f32 %v12114, %v12126
      %v12258 = vadd.f32 %v12115, %v12126
      %v12259 = vadd.f32 %v12116, %v12126
      %v12260 = vadd.f32 %v12117, %v12126
      %v12261 = vadd.f32 %v12118, %v12126
      %v12262 = vadd.f32 %v12119, %v12126
      %v12263 = vadd.f32 %v12120, %v12126
      %v12264 = vmax.f32 %v12128, 0.0
      %v12265 = vmax.f32 %v12129, 0.0
      %v12266 = vmax.f32 %v12130, 0.0
      %v12267 = vmax.f32 %v12131, 0.0
      %v12268 = vmax.f32 %v12132, 0.0
      %v12269 = vmax.f32 %v12133, 0.0
      %v12270 = vmax.f32 %v12134, 0.0
      %v12271 = vmax.f32 %v12135, 0.0
      %v12272 = vmax.f32 %v12136, 0.0
      %v12273 = vmax.f32 %v12137, 0.0
      %v12274 = vmax.f32 %v12138, 0.0
      %v12275 = vmax.f32 %v12139, 0.0
      %v12276 = vmax.f32 %v12140, 0.0
      %v12277 = vmax.f32 %v12141, 0.0
      %v12278 = vmax.f32 %v12142, 0.0
      %v12279 = vmax.f32 %v12143, 0.0
      %v12280 = vmax.f32 %v12144, 0.0
      %v12281 = vmax.f32 %v12145, 0.0
      %v12282 = vmax.f32 %v12146, 0.0
      %v12283 = vmax.f32 %v12147, 0.0
      %v12284 = vmax.f32 %v12148, 0.0
      %v12285 = vmax.f32 %v12149, 0.0
      %v12286 = vmax.f32 %v12150, 0.0
      %v12287 = vmax.f32 %v12151, 0.0
      %v12288 = vmax.f32 %v12152, 0.0
      %v12289 = vmax.f32 %v12153, 0.0
      %v12290 = vmax.f32 %v12154, 0.0
      %v12291 = vmax.f32 %v12155, 0.0
      %v12292 = vmax.f32 %v12156, 0.0
      %v12293 = vmax.f32 %v12157, 0.0
      %v12294 = vmax.f32 %v12158, 0.0
      %v12295 = vmax.f32 %v12159, 0.0
      %v12296 = vmax.f32 %v12160, 0.0
      %v12297 = vmax.f32 %v12161, 0.0
      %v12298 = vmax.f32 %v12162, 0.0
      %v12299 = vmax.f32 %v12163, 0.0
      %v12300 = vmax.f32 %v12164, 0.0
      %v12301 = vmax.f32 %v12165, 0.0
      %v12302 = vmax.f32 %v12166, 0.0
      %v12303 = vmax.f32 %v12167, 0.0
      %v12304 = vmax.f32 %v12168, 0.0
      %v12305 = vmax.f32 %v12169, 0.0
      %v12306 = vmax.f32 %v12170, 0.0
      %v12307 = vmax.f32 %v12171, 0.0
      %v12308 = vmax.f32 %v12172, 0.0
      %v12309 = vmax.f32 %v12173, 0.0
      %v12310 = vmax.f32 %v12174, 0.0
      %v12311 = vmax.f32 %v12175, 0.0
      %v12312 = vmax.f32 %v12176, 0.0
      %v12313 = vmax.f32 %v12177, 0.0
      %v12314 = vmax.f32 %v12178, 0.0
      %v12315 = vmax.f32 %v12179, 0.0
      %v12316 = vmax.f32 %v12180, 0.0
      %v12317 = vmax.f32 %v12181, 0.0
      %v12318 = vmax.f32 %v12182, 0.0
      %v12319 = vmax.f32 %v12183, 0.0
      %v12320 = vmax.f32 %v12184, 0.0
      %v12321 = vmax.f32 %v12185, 0.0
      %v12322 = vmax.f32 %v12186, 0.0
      %v12323 = vmax.f32 %v12187, 0.0
      %v12324 = vmax.f32 %v12188, 0.0
      %v12325 = vmax.f32 %v12189, 0.0
      %v12326 = vmax.f32 %v12190, 0.0
      %v12327 = vmax.f32 %v12191, 0.0
      %v12328 = vmax.f32 %v12192, 0.0
      %v12329 = vmax.f32 %v12193, 0.0
      %v12330 = vmax.f32 %v12194, 0.0
      %v12331 = vmax.f32 %v12195, 0.0
      %v12332 = vmax.f32 %v12196, 0.0
      %v12333 = vmax.f32 %v12197, 0.0
      %v12334 = vmax.f32 %v12198, 0.0
      %v12335 = vmax.f32 %v12199, 0.0
      %v12336 = vmax.f32 %v12200, 0.0
      %v12337 = vmax.f32 %v12201, 0.0
      %v12338 = vmax.f32 %v12202, 0.0
      %v12339 = vmax.f32 %v12203, 0.0
      %v12340 = vmax.f32 %v12204, 0.0
      %v12341 = vmax.f32 %v12205, 0.0
      %v12342 = vmax.f32 %v12206, 0.0
      %v12343 = vmax.f32 %v12207, 0.0
      %v12344 = vmax.f32 %v12208, 0.0
      %v12345 = vmax.f32 %v12209, 0.0
      %v12346 = vmax.f32 %v12210, 0.0
      %v12347 = vmax.f32 %v12211, 0.0
      %v12348 = vmax.f32 %v12212, 0.0
      %v12349 = vmax.f32 %v12213, 0.0
      %v12350 = vmax.f32 %v12214, 0.0
      %v12351 = vmax.f32 %v12215, 0.0
      %v12352 = vmax.f32 %v12216, 0.0
      %v12353 = vmax.f32 %v12217, 0.0
      %v12354 = vmax.f32 %v12218, 0.0
      %v12355 = vmax.f32 %v12219, 0.0
      %v12356 = vmax.f32 %v12220, 0.0
      %v12357 = vmax.f32 %v12221, 0.0
      %v12358 = vmax.f32 %v12222, 0.0
      %v12359 = vmax.f32 %v12223, 0.0
      %v12360 = vmax.f32 %v12224, 0.0
      %v12361 = vmax.f32 %v12225, 0.0
      %v12362 = vmax.f32 %v12226, 0.0
      %v12363 = vmax.f32 %v12227, 0.0
      %v12364 = vmax.f32 %v12228, 0.0
      %v12365 = vmax.f32 %v12229, 0.0
      %v12366 = vmax.f32 %v12230, 0.0
      %v12367 = vmax.f32 %v12231, 0.0
      %v12368 = vmax.f32 %v12232, 0.0
      %v12369 = vmax.f32 %v12233, 0.0
      %v12370 = vmax.f32 %v12234, 0.0
      %v12371 = vmax.f32 %v12235, 0.0
      %v12372 = vmax.f32 %v12236, 0.0
      %v12373 = vmax.f32 %v12237, 0.0
      %v12374 = vmax.f32 %v12238, 0.0
      %v12375 = vmax.f32 %v12239, 0.0
      %v12376 = vmax.f32 %v12240, 0.0
      %v12377 = vmax.f32 %v12241, 0.0
      %v12378 = vmax.f32 %v12242, 0.0
      %v12379 = vmax.f32 %v12243, 0.0
      %v12380 = vmax.f32 %v12244, 0.0
      %v12381 = vmax.f32 %v12245, 0.0
      %v12382 = vmax.f32 %v12246, 0.0
      %v12383 = vmax.f32 %v12247, 0.0
      %v12384 = vmax.f32 %v12248, 0.0
      %v12385 = vmax.f32 %v12249, 0.0
      %v12386 = vmax.f32 %v12250, 0.0
      %v12387 = vmax.f32 %v12251, 0.0
      %v12388 = vmax.f32 %v12252, 0.0
      %v12389 = vmax.f32 %v12253, 0.0
      %v12390 = vmax.f32 %v12254, 0.0
      %v12391 = vmax.f32 %v12255, 0.0
      %v12392 = vmax.f32 %v12256, 0.0
      %v12393 = vmax.f32 %v12257, 0.0
      %v12394 = vmax.f32 %v12258, 0.0
      %v12395 = vmax.f32 %v12259, 0.0
      %v12396 = vmax.f32 %v12260, 0.0
      %v12397 = vmax.f32 %v12261, 0.0
      %v12398 = vmax.f32 %v12262, 0.0
      %v12399 = vmax.f32 %v12263, 0.0
      %v12400 = vpack.c.bf16 %v12265, %v12264
      %v12401 = vpack.c.bf16 %v12267, %v12266
      %v12402 = vpack.c.bf16 %v12269, %v12268
      %v12403 = vpack.c.bf16 %v12271, %v12270
      %v12404 = vpack.c.bf16 %v12273, %v12272
      %v12405 = vpack.c.bf16 %v12275, %v12274
      %v12406 = vpack.c.bf16 %v12277, %v12276
      %v12407 = vpack.c.bf16 %v12279, %v12278
      %v12408 = vpack.c.bf16 %v12281, %v12280
      %v12409 = vpack.c.bf16 %v12283, %v12282
      %v12410 = vpack.c.bf16 %v12285, %v12284
      %v12411 = vpack.c.bf16 %v12287, %v12286
      %v12412 = vpack.c.bf16 %v12289, %v12288
      %v12413 = vpack.c.bf16 %v12291, %v12290
      %v12414 = vpack.c.bf16 %v12293, %v12292
      %v12415 = vpack.c.bf16 %v12295, %v12294
      %v12416 = vpack.c.bf16 %v12297, %v12296
      %v12417 = vpack.c.bf16 %v12299, %v12298
      %v12418 = vpack.c.bf16 %v12301, %v12300
      %v12419 = vpack.c.bf16 %v12303, %v12302
      %v12420 = vpack.c.bf16 %v12305, %v12304
      %v12421 = vpack.c.bf16 %v12307, %v12306
      %v12422 = vpack.c.bf16 %v12309, %v12308
      %v12423 = vpack.c.bf16 %v12311, %v12310
      %v12424 = vpack.c.bf16 %v12313, %v12312
      %v12425 = vpack.c.bf16 %v12315, %v12314
      %v12426 = vpack.c.bf16 %v12317, %v12316
      %v12427 = vpack.c.bf16 %v12319, %v12318
      %v12428 = vpack.c.bf16 %v12321, %v12320
      %v12429 = vpack.c.bf16 %v12323, %v12322
      %v12430 = vpack.c.bf16 %v12325, %v12324
      %v12431 = vpack.c.bf16 %v12327, %v12326
      %v12432 = vpack.c.bf16 %v12329, %v12328
      %v12433 = vpack.c.bf16 %v12331, %v12330
      %v12434 = vpack.c.bf16 %v12333, %v12332
      %v12435 = vpack.c.bf16 %v12335, %v12334
      %v12436 = vpack.c.bf16 %v12337, %v12336
      %v12437 = vpack.c.bf16 %v12339, %v12338
      %v12438 = vpack.c.bf16 %v12341, %v12340
      %v12439 = vpack.c.bf16 %v12343, %v12342
      %v12440 = vpack.c.bf16 %v12345, %v12344
      %v12441 = vpack.c.bf16 %v12347, %v12346
      %v12442 = vpack.c.bf16 %v12349, %v12348
      %v12443 = vpack.c.bf16 %v12351, %v12350
      %v12444 = vpack.c.bf16 %v12353, %v12352
      %v12445 = vpack.c.bf16 %v12355, %v12354
      %v12446 = vpack.c.bf16 %v12357, %v12356
      %v12447 = vpack.c.bf16 %v12359, %v12358
      %v12448 = vpack.c.bf16 %v12361, %v12360
      %v12449 = vpack.c.bf16 %v12363, %v12362
      %v12450 = vpack.c.bf16 %v12365, %v12364
      %v12451 = vpack.c.bf16 %v12367, %v12366
      %v12452 = vpack.c.bf16 %v12369, %v12368
      %v12453 = vpack.c.bf16 %v12371, %v12370
      %v12454 = vpack.c.bf16 %v12373, %v12372
      %v12455 = vpack.c.bf16 %v12375, %v12374
      %v12456 = vpack.c.bf16 %v12377, %v12376
      %v12457 = vpack.c.bf16 %v12379, %v12378
      %v12458 = vpack.c.bf16 %v12381, %v12380
      %v12459 = vpack.c.bf16 %v12383, %v12382
      %v12460 = vpack.c.bf16 %v12385, %v12384
      %v12461 = vpack.c.bf16 %v12387, %v12386
      %v12462 = vpack.c.bf16 %v12389, %v12388
      %v12463 = vpack.c.bf16 %v12391, %v12390
      %v12464 = vpack.c.bf16 %v12393, %v12392
      %v12465 = vpack.c.bf16 %v12395, %v12394
      %v12466 = vpack.c.bf16 %v12397, %v12396
      %v12467 = vpack.c.bf16 %v12399, %v12398
      %v12536 = vunpack.c.l.b16 %v12400
      %v12537 = vunpack.c.h.b16 %v12400
      %v12538 = vunpack.c.l.b16 %v12401
      %v12539 = vunpack.c.h.b16 %v12401
      %v12540 = vunpack.c.l.b16 %v12402
      %v12541 = vunpack.c.h.b16 %v12402
      %v12542 = vunpack.c.l.b16 %v12403
      %v12543 = vunpack.c.h.b16 %v12403
      %v12544 = vunpack.c.l.b16 %v12404
      %v12545 = vunpack.c.h.b16 %v12404
      %v12546 = vunpack.c.l.b16 %v12405
      %v12547 = vunpack.c.h.b16 %v12405
      %v12548 = vunpack.c.l.b16 %v12406
      %v12549 = vunpack.c.h.b16 %v12406
      %v12550 = vunpack.c.l.b16 %v12407
      %v12551 = vunpack.c.h.b16 %v12407
      %v12552 = vunpack.c.l.b16 %v12408
      %v12553 = vunpack.c.h.b16 %v12408
      %v12554 = vunpack.c.l.b16 %v12409
      %v12555 = vunpack.c.h.b16 %v12409
      %v12556 = vunpack.c.l.b16 %v12410
      %v12557 = vunpack.c.h.b16 %v12410
      %v12558 = vunpack.c.l.b16 %v12411
      %v12559 = vunpack.c.h.b16 %v12411
      %v12560 = vunpack.c.l.b16 %v12412
      %v12561 = vunpack.c.h.b16 %v12412
      %v12562 = vunpack.c.l.b16 %v12413
      %v12563 = vunpack.c.h.b16 %v12413
      %v12564 = vunpack.c.l.b16 %v12414
      %v12565 = vunpack.c.h.b16 %v12414
      %v12566 = vunpack.c.l.b16 %v12415
      %v12567 = vunpack.c.h.b16 %v12415
      %v12568 = vunpack.c.l.b16 %v12416
      %v12569 = vunpack.c.h.b16 %v12416
      %v12570 = vunpack.c.l.b16 %v12417
      %v12571 = vunpack.c.h.b16 %v12417
      %v12572 = vunpack.c.l.b16 %v12418
      %v12573 = vunpack.c.h.b16 %v12418
      %v12574 = vunpack.c.l.b16 %v12419
      %v12575 = vunpack.c.h.b16 %v12419
      %v12576 = vunpack.c.l.b16 %v12420
      %v12577 = vunpack.c.h.b16 %v12420
      %v12578 = vunpack.c.l.b16 %v12421
      %v12579 = vunpack.c.h.b16 %v12421
      %v12580 = vunpack.c.l.b16 %v12422
      %v12581 = vunpack.c.h.b16 %v12422
      %v12582 = vunpack.c.l.b16 %v12423
      %v12583 = vunpack.c.h.b16 %v12423
      %v12584 = vunpack.c.l.b16 %v12424
      %v12585 = vunpack.c.h.b16 %v12424
      %v12586 = vunpack.c.l.b16 %v12425
      %v12587 = vunpack.c.h.b16 %v12425
      %v12588 = vunpack.c.l.b16 %v12426
      %v12589 = vunpack.c.h.b16 %v12426
      %v12590 = vunpack.c.l.b16 %v12427
      %v12591 = vunpack.c.h.b16 %v12427
      %v12592 = vunpack.c.l.b16 %v12428
      %v12593 = vunpack.c.h.b16 %v12428
      %v12594 = vunpack.c.l.b16 %v12429
      %v12595 = vunpack.c.h.b16 %v12429
      %v12596 = vunpack.c.l.b16 %v12430
      %v12597 = vunpack.c.h.b16 %v12430
      %v12598 = vunpack.c.l.b16 %v12431
      %v12599 = vunpack.c.h.b16 %v12431
      %v12600 = vunpack.c.l.b16 %v12432
      %v12601 = vunpack.c.h.b16 %v12432
      %v12602 = vunpack.c.l.b16 %v12433
      %v12603 = vunpack.c.h.b16 %v12433
      %v12604 = vunpack.c.l.b16 %v12434
      %v12605 = vunpack.c.h.b16 %v12434
      %v12606 = vunpack.c.l.b16 %v12435
      %v12607 = vunpack.c.h.b16 %v12435
      %v12608 = vunpack.c.l.b16 %v12436
      %v12609 = vunpack.c.h.b16 %v12436
      %v12610 = vunpack.c.l.b16 %v12437
      %v12611 = vunpack.c.h.b16 %v12437
      %v12612 = vunpack.c.l.b16 %v12438
      %v12613 = vunpack.c.h.b16 %v12438
      %v12614 = vunpack.c.l.b16 %v12439
      %v12615 = vunpack.c.h.b16 %v12439
      %v12616 = vunpack.c.l.b16 %v12440
      %v12617 = vunpack.c.h.b16 %v12440
      %v12618 = vunpack.c.l.b16 %v12441
      %v12619 = vunpack.c.h.b16 %v12441
      %v12620 = vunpack.c.l.b16 %v12442
      %v12621 = vunpack.c.h.b16 %v12442
      %v12622 = vunpack.c.l.b16 %v12443
      %v12623 = vunpack.c.h.b16 %v12443
      %v12624 = vunpack.c.l.b16 %v12444
      %v12625 = vunpack.c.h.b16 %v12444
      %v12626 = vunpack.c.l.b16 %v12445
      %v12627 = vunpack.c.h.b16 %v12445
      %v12628 = vunpack.c.l.b16 %v12446
      %v12629 = vunpack.c.h.b16 %v12446
      %v12630 = vunpack.c.l.b16 %v12447
      %v12631 = vunpack.c.h.b16 %v12447
      %v12632 = vunpack.c.l.b16 %v12448
      %v12633 = vunpack.c.h.b16 %v12448
      %v12634 = vunpack.c.l.b16 %v12449
      %v12635 = vunpack.c.h.b16 %v12449
      %v12636 = vunpack.c.l.b16 %v12450
      %v12637 = vunpack.c.h.b16 %v12450
      %v12638 = vunpack.c.l.b16 %v12451
      %v12639 = vunpack.c.h.b16 %v12451
      %v12640 = vunpack.c.l.b16 %v12452
      %v12641 = vunpack.c.h.b16 %v12452
      %v12642 = vunpack.c.l.b16 %v12453
      %v12643 = vunpack.c.h.b16 %v12453
      %v12644 = vunpack.c.l.b16 %v12454
      %v12645 = vunpack.c.h.b16 %v12454
      %v12646 = vunpack.c.l.b16 %v12455
      %v12647 = vunpack.c.h.b16 %v12455
      %v12648 = vunpack.c.l.b16 %v12456
      %v12649 = vunpack.c.h.b16 %v12456
      %v12650 = vunpack.c.l.b16 %v12457
      %v12651 = vunpack.c.h.b16 %v12457
      %v12652 = vunpack.c.l.b16 %v12458
      %v12653 = vunpack.c.h.b16 %v12458
      %v12654 = vunpack.c.l.b16 %v12459
      %v12655 = vunpack.c.h.b16 %v12459
      %v12656 = vunpack.c.l.b16 %v12460
      %v12657 = vunpack.c.h.b16 %v12460
      %v12658 = vunpack.c.l.b16 %v12461
      %v12659 = vunpack.c.h.b16 %v12461
      %v12660 = vunpack.c.l.b16 %v12462
      %v12661 = vunpack.c.h.b16 %v12462
      %v12662 = vunpack.c.l.b16 %v12463
      %v12663 = vunpack.c.h.b16 %v12463
      %v12664 = vunpack.c.l.b16 %v12464
      %v12665 = vunpack.c.h.b16 %v12464
      %v12666 = vunpack.c.l.b16 %v12465
      %v12667 = vunpack.c.h.b16 %v12465
      %v12668 = vunpack.c.l.b16 %v12466
      %v12669 = vunpack.c.h.b16 %v12466
      %v12670 = vunpack.c.l.b16 %v12467
      %v12671 = vunpack.c.h.b16 %v12467
      %v12672 = vpack.c.b16 %v12536, %v12536
      %v12673 = vpack.c.b16 %v12537, %v12537
      %v12674 = vpack.c.b16 %v12538, %v12538
      %v12675 = vpack.c.b16 %v12539, %v12539
      %v12676 = vpack.c.b16 %v12540, %v12540
      %v12677 = vpack.c.b16 %v12541, %v12541
      %v12678 = vpack.c.b16 %v12542, %v12542
      %v12679 = vpack.c.b16 %v12543, %v12543
      %v12680 = vpack.c.b16 %v12544, %v12544
      %v12681 = vpack.c.b16 %v12545, %v12545
      %v12682 = vpack.c.b16 %v12546, %v12546
      %v12683 = vpack.c.b16 %v12547, %v12547
      %v12684 = vpack.c.b16 %v12548, %v12548
      %v12685 = vpack.c.b16 %v12549, %v12549
      %v12686 = vpack.c.b16 %v12550, %v12550
      %v12687 = vpack.c.b16 %v12551, %v12551
      %v12688 = vpack.c.b16 %v12552, %v12552
      %v12689 = vpack.c.b16 %v12553, %v12553
      %v12690 = vpack.c.b16 %v12554, %v12554
      %v12691 = vpack.c.b16 %v12555, %v12555
      %v12692 = vpack.c.b16 %v12556, %v12556
      %v12693 = vpack.c.b16 %v12557, %v12557
      %v12694 = vpack.c.b16 %v12558, %v12558
      %v12695 = vpack.c.b16 %v12559, %v12559
      %v12696 = vpack.c.b16 %v12560, %v12560
      %v12697 = vpack.c.b16 %v12561, %v12561
      %v12698 = vpack.c.b16 %v12562, %v12562
      %v12699 = vpack.c.b16 %v12563, %v12563
      %v12700 = vpack.c.b16 %v12564, %v12564
      %v12701 = vpack.c.b16 %v12565, %v12565
      %v12702 = vpack.c.b16 %v12566, %v12566
      %v12703 = vpack.c.b16 %v12567, %v12567
      %v12704 = vpack.c.b16 %v12568, %v12568
      %v12705 = vpack.c.b16 %v12569, %v12569
      %v12706 = vpack.c.b16 %v12570, %v12570
      %v12707 = vpack.c.b16 %v12571, %v12571
      %v12708 = vpack.c.b16 %v12572, %v12572
      %v12709 = vpack.c.b16 %v12573, %v12573
      %v12710 = vpack.c.b16 %v12574, %v12574
      %v12711 = vpack.c.b16 %v12575, %v12575
      %v12712 = vpack.c.b16 %v12576, %v12576
      %v12713 = vpack.c.b16 %v12577, %v12577
      %v12714 = vpack.c.b16 %v12578, %v12578
      %v12715 = vpack.c.b16 %v12579, %v12579
      %v12716 = vpack.c.b16 %v12580, %v12580
      %v12717 = vpack.c.b16 %v12581, %v12581
      %v12718 = vpack.c.b16 %v12582, %v12582
      %v12719 = vpack.c.b16 %v12583, %v12583
      %v12720 = vpack.c.b16 %v12584, %v12584
      %v12721 = vpack.c.b16 %v12585, %v12585
      %v12722 = vpack.c.b16 %v12586, %v12586
      %v12723 = vpack.c.b16 %v12587, %v12587
      %v12724 = vpack.c.b16 %v12588, %v12588
      %v12725 = vpack.c.b16 %v12589, %v12589
      %v12726 = vpack.c.b16 %v12590, %v12590
      %v12727 = vpack.c.b16 %v12591, %v12591
      %v12728 = vpack.c.b16 %v12592, %v12592
      %v12729 = vpack.c.b16 %v12593, %v12593
      %v12730 = vpack.c.b16 %v12594, %v12594
      %v12731 = vpack.c.b16 %v12595, %v12595
      %v12732 = vpack.c.b16 %v12596, %v12596
      %v12733 = vpack.c.b16 %v12597, %v12597
      %v12734 = vpack.c.b16 %v12598, %v12598
      %v12735 = vpack.c.b16 %v12599, %v12599
      %v12736 = vpack.c.b16 %v12600, %v12600
      %v12737 = vpack.c.b16 %v12601, %v12601
      %v12738 = vpack.c.b16 %v12602, %v12602
      %v12739 = vpack.c.b16 %v12603, %v12603
      %v12740 = vpack.c.b16 %v12604, %v12604
      %v12741 = vpack.c.b16 %v12605, %v12605
      %v12742 = vpack.c.b16 %v12606, %v12606
      %v12743 = vpack.c.b16 %v12607, %v12607
      %v12744 = vpack.c.b16 %v12608, %v12608
      %v12745 = vpack.c.b16 %v12609, %v12609
      %v12746 = vpack.c.b16 %v12610, %v12610
      %v12747 = vpack.c.b16 %v12611, %v12611
      %v12748 = vpack.c.b16 %v12612, %v12612
      %v12749 = vpack.c.b16 %v12613, %v12613
      %v12750 = vpack.c.b16 %v12614, %v12614
      %v12751 = vpack.c.b16 %v12615, %v12615
      %v12752 = vpack.c.b16 %v12616, %v12616
      %v12753 = vpack.c.b16 %v12617, %v12617
      %v12754 = vpack.c.b16 %v12618, %v12618
      %v12755 = vpack.c.b16 %v12619, %v12619
      %v12756 = vpack.c.b16 %v12620, %v12620
      %v12757 = vpack.c.b16 %v12621, %v12621
      %v12758 = vpack.c.b16 %v12622, %v12622
      %v12759 = vpack.c.b16 %v12623, %v12623
      %v12760 = vpack.c.b16 %v12624, %v12624
      %v12761 = vpack.c.b16 %v12625, %v12625
      %v12762 = vpack.c.b16 %v12626, %v12626
      %v12763 = vpack.c.b16 %v12627, %v12627
      %v12764 = vpack.c.b16 %v12628, %v12628
      %v12765 = vpack.c.b16 %v12629, %v12629
      %v12766 = vpack.c.b16 %v12630, %v12630
      %v12767 = vpack.c.b16 %v12631, %v12631
      %v12768 = vpack.c.b16 %v12632, %v12632
      %v12769 = vpack.c.b16 %v12633, %v12633
      %v12770 = vpack.c.b16 %v12634, %v12634
      %v12771 = vpack.c.b16 %v12635, %v12635
      %v12772 = vpack.c.b16 %v12636, %v12636
      %v12773 = vpack.c.b16 %v12637, %v12637
      %v12774 = vpack.c.b16 %v12638, %v12638
      %v12775 = vpack.c.b16 %v12639, %v12639
      %v12776 = vpack.c.b16 %v12640, %v12640
      %v12777 = vpack.c.b16 %v12641, %v12641
      %v12778 = vpack.c.b16 %v12642, %v12642
      %v12779 = vpack.c.b16 %v12643, %v12643
      %v12780 = vpack.c.b16 %v12644, %v12644
      %v12781 = vpack.c.b16 %v12645, %v12645
      %v12782 = vpack.c.b16 %v12646, %v12646
      %v12783 = vpack.c.b16 %v12647, %v12647
      %v12784 = vpack.c.b16 %v12648, %v12648
      %v12785 = vpack.c.b16 %v12649, %v12649
      %v12786 = vpack.c.b16 %v12650, %v12650
      %v12787 = vpack.c.b16 %v12651, %v12651
      %v12788 = vpack.c.b16 %v12652, %v12652
      %v12789 = vpack.c.b16 %v12653, %v12653
      %v12790 = vpack.c.b16 %v12654, %v12654
      %v12791 = vpack.c.b16 %v12655, %v12655
      %v12792 = vpack.c.b16 %v12656, %v12656
      %v12793 = vpack.c.b16 %v12657, %v12657
      %v12794 = vpack.c.b16 %v12658, %v12658
      %v12795 = vpack.c.b16 %v12659, %v12659
      %v12796 = vpack.c.b16 %v12660, %v12660
      %v12797 = vpack.c.b16 %v12661, %v12661
      %v12798 = vpack.c.b16 %v12662, %v12662
      %v12799 = vpack.c.b16 %v12663, %v12663
      %v12800 = vpack.c.b16 %v12664, %v12664
      %v12801 = vpack.c.b16 %v12665, %v12665
      %v12802 = vpack.c.b16 %v12666, %v12666
      %v12803 = vpack.c.b16 %v12667, %v12667
      %v12804 = vpack.c.b16 %v12668, %v12668
      %v12805 = vpack.c.b16 %v12669, %v12669
      %v12806 = vpack.c.b16 %v12670, %v12670
      %v12807 = vpack.c.b16 %v12671, %v12671
      %vm12944 = vcmask 519168
      %12945 = vst.msk [vmem:[%s221] sm:$0xf] %vm12944, %v12672
      %12946 = vst.msk [vmem:[%s221 + $0x4] sm:$0xf] %vm12944, %v12673
      %12947 = vst.msk [vmem:[%s221 + $0x8] sm:$0xf] %vm12944, %v12674
      %12948 = vst.msk [vmem:[%s221 + $0xc] sm:$0xf] %vm12944, %v12675
      %12949 = vst.msk [vmem:[%s221 + $0x10] sm:$0xf] %vm12944, %v12676
      %12950 = vst.msk [vmem:[%s221 + $0x14] sm:$0xf] %vm12944, %v12677
      %12951 = vst.msk [vmem:[%s221 + $0x18] sm:$0xf] %vm12944, %v12678
      %12952 = vst.msk [vmem:[%s221 + $0x1c] sm:$0xf] %vm12944, %v12679
      %12953 = vst.msk [vmem:[%s221 + $0x20] sm:$0xf] %vm12944, %v12680
      %12954 = vst.msk [vmem:[%s221 + $0x24] sm:$0xf] %vm12944, %v12681
      %12955 = vst.msk [vmem:[%s221 + $0x28] sm:$0xf] %vm12944, %v12682
      %12956 = vst.msk [vmem:[%s221 + $0x2c] sm:$0xf] %vm12944, %v12683
      %12957 = vst.msk [vmem:[%s221 + $0x30] sm:$0xf] %vm12944, %v12684
      %12958 = vst.msk [vmem:[%s221 + $0x34] sm:$0xf] %vm12944, %v12685
      %12959 = vst.msk [vmem:[%s221 + $0x38] sm:$0xf] %vm12944, %v12686
      %12960 = vst.msk [vmem:[%s221 + $0x3c] sm:$0xf] %vm12944, %v12687
      %12961 = vst.msk [vmem:[%s221 + $0x40] sm:$0xf] %vm12944, %v12688
      %12962 = vst.msk [vmem:[%s221 + $0x44] sm:$0xf] %vm12944, %v12689
      %12963 = vst.msk [vmem:[%s221 + $0x48] sm:$0xf] %vm12944, %v12690
      %12964 = vst.msk [vmem:[%s221 + $0x4c] sm:$0xf] %vm12944, %v12691
      %12965 = vst.msk [vmem:[%s221 + $0x50] sm:$0xf] %vm12944, %v12692
      %12966 = vst.msk [vmem:[%s221 + $0x54] sm:$0xf] %vm12944, %v12693
      %12967 = vst.msk [vmem:[%s221 + $0x58] sm:$0xf] %vm12944, %v12694
      %12968 = vst.msk [vmem:[%s221 + $0x5c] sm:$0xf] %vm12944, %v12695
      %12969 = vst.msk [vmem:[%s221 + $0x60] sm:$0xf] %vm12944, %v12696
      %12970 = vst.msk [vmem:[%s221 + $0x64] sm:$0xf] %vm12944, %v12697
      %12971 = vst.msk [vmem:[%s221 + $0x68] sm:$0xf] %vm12944, %v12698
      %12972 = vst.msk [vmem:[%s221 + $0x6c] sm:$0xf] %vm12944, %v12699
      %12973 = vst.msk [vmem:[%s221 + $0x70] sm:$0xf] %vm12944, %v12700
      %12974 = vst.msk [vmem:[%s221 + $0x74] sm:$0xf] %vm12944, %v12701
      %12975 = vst.msk [vmem:[%s221 + $0x78] sm:$0xf] %vm12944, %v12702
      %12976 = vst.msk [vmem:[%s221 + $0x7c] sm:$0xf] %vm12944, %v12703
      %12977 = vst.msk [vmem:[%s221 + $0x80] sm:$0xf] %vm12944, %v12704
      %12978 = vst.msk [vmem:[%s221 + $0x84] sm:$0xf] %vm12944, %v12705
      %12979 = vst.msk [vmem:[%s221 + $0x88] sm:$0xf] %vm12944, %v12706
      %12980 = vst.msk [vmem:[%s221 + $0x8c] sm:$0xf] %vm12944, %v12707
      %12981 = vst.msk [vmem:[%s221 + $0x90] sm:$0xf] %vm12944, %v12708
      %12982 = vst.msk [vmem:[%s221 + $0x94] sm:$0xf] %vm12944, %v12709
      %12983 = vst.msk [vmem:[%s221 + $0x98] sm:$0xf] %vm12944, %v12710
      %12984 = vst.msk [vmem:[%s221 + $0x9c] sm:$0xf] %vm12944, %v12711
      %12985 = vst.msk [vmem:[%s221 + $0xa0] sm:$0xf] %vm12944, %v12712
      %12986 = vst.msk [vmem:[%s221 + $0xa4] sm:$0xf] %vm12944, %v12713
      %12987 = vst.msk [vmem:[%s221 + $0xa8] sm:$0xf] %vm12944, %v12714
      %12988 = vst.msk [vmem:[%s221 + $0xac] sm:$0xf] %vm12944, %v12715
      %12989 = vst.msk [vmem:[%s221 + $0xb0] sm:$0xf] %vm12944, %v12716
      %12990 = vst.msk [vmem:[%s221 + $0xb4] sm:$0xf] %vm12944, %v12717
      %12991 = vst.msk [vmem:[%s221 + $0xb8] sm:$0xf] %vm12944, %v12718
      %12992 = vst.msk [vmem:[%s221 + $0xbc] sm:$0xf] %vm12944, %v12719
      %12993 = vst.msk [vmem:[%s221 + $0xc0] sm:$0xf] %vm12944, %v12720
      %12994 = vst.msk [vmem:[%s221 + $0xc4] sm:$0xf] %vm12944, %v12721
      %12995 = vst.msk [vmem:[%s221 + $0xc8] sm:$0xf] %vm12944, %v12722
      %12996 = vst.msk [vmem:[%s221 + $0xcc] sm:$0xf] %vm12944, %v12723
      %12997 = vst.msk [vmem:[%s221 + $0xd0] sm:$0xf] %vm12944, %v12724
      %12998 = vst.msk [vmem:[%s221 + $0xd4] sm:$0xf] %vm12944, %v12725
      %12999 = vst.msk [vmem:[%s221 + $0xd8] sm:$0xf] %vm12944, %v12726
      %13000 = vst.msk [vmem:[%s221 + $0xdc] sm:$0xf] %vm12944, %v12727
      %13001 = vst.msk [vmem:[%s221 + $0xe0] sm:$0xf] %vm12944, %v12728
      %13002 = vst.msk [vmem:[%s221 + $0xe4] sm:$0xf] %vm12944, %v12729
      %13003 = vst.msk [vmem:[%s221 + $0xe8] sm:$0xf] %vm12944, %v12730
      %13004 = vst.msk [vmem:[%s221 + $0xec] sm:$0xf] %vm12944, %v12731
      %13005 = vst.msk [vmem:[%s221 + $0xf0] sm:$0xf] %vm12944, %v12732
      %13006 = vst.msk [vmem:[%s221 + $0xf4] sm:$0xf] %vm12944, %v12733
      %13007 = vst.msk [vmem:[%s221 + $0xf8] sm:$0xf] %vm12944, %v12734
      %13008 = vst.msk [vmem:[%s221 + $0xfc] sm:$0xf] %vm12944, %v12735
      %13009 = vst.msk [vmem:[%s221 + $0x100] sm:$0xf] %vm12944, %v12736
      %13010 = vst.msk [vmem:[%s221 + $0x104] sm:$0xf] %vm12944, %v12737
      %13011 = vst.msk [vmem:[%s221 + $0x108] sm:$0xf] %vm12944, %v12738
      %13012 = vst.msk [vmem:[%s221 + $0x10c] sm:$0xf] %vm12944, %v12739
      %13013 = vst.msk [vmem:[%s221 + $0x110] sm:$0xf] %vm12944, %v12740
      %13014 = vst.msk [vmem:[%s221 + $0x114] sm:$0xf] %vm12944, %v12741
      %13015 = vst.msk [vmem:[%s221 + $0x118] sm:$0xf] %vm12944, %v12742
      %13016 = vst.msk [vmem:[%s221 + $0x11c] sm:$0xf] %vm12944, %v12743
      %13017 = vst.msk [vmem:[%s221 + $0x120] sm:$0xf] %vm12944, %v12744
      %13018 = vst.msk [vmem:[%s221 + $0x124] sm:$0xf] %vm12944, %v12745
      %13019 = vst.msk [vmem:[%s221 + $0x128] sm:$0xf] %vm12944, %v12746
      %13020 = vst.msk [vmem:[%s221 + $0x12c] sm:$0xf] %vm12944, %v12747
      %13021 = vst.msk [vmem:[%s221 + $0x130] sm:$0xf] %vm12944, %v12748
      %13022 = vst.msk [vmem:[%s221 + $0x134] sm:$0xf] %vm12944, %v12749
      %13023 = vst.msk [vmem:[%s221 + $0x138] sm:$0xf] %vm12944, %v12750
      %13024 = vst.msk [vmem:[%s221 + $0x13c] sm:$0xf] %vm12944, %v12751
      %13025 = vst.msk [vmem:[%s221 + $0x140] sm:$0xf] %vm12944, %v12752
      %13026 = vst.msk [vmem:[%s221 + $0x144] sm:$0xf] %vm12944, %v12753
      %13027 = vst.msk [vmem:[%s221 + $0x148] sm:$0xf] %vm12944, %v12754
      %13028 = vst.msk [vmem:[%s221 + $0x14c] sm:$0xf] %vm12944, %v12755
      %13029 = vst.msk [vmem:[%s221 + $0x150] sm:$0xf] %vm12944, %v12756
      %13030 = vst.msk [vmem:[%s221 + $0x154] sm:$0xf] %vm12944, %v12757
      %13031 = vst.msk [vmem:[%s221 + $0x158] sm:$0xf] %vm12944, %v12758
      %13032 = vst.msk [vmem:[%s221 + $0x15c] sm:$0xf] %vm12944, %v12759
      %13033 = vst.msk [vmem:[%s221 + $0x160] sm:$0xf] %vm12944, %v12760
      %13034 = vst.msk [vmem:[%s221 + $0x164] sm:$0xf] %vm12944, %v12761
      %13035 = vst.msk [vmem:[%s221 + $0x168] sm:$0xf] %vm12944, %v12762
      %13036 = vst.msk [vmem:[%s221 + $0x16c] sm:$0xf] %vm12944, %v12763
      %13037 = vst.msk [vmem:[%s221 + $0x170] sm:$0xf] %vm12944, %v12764
      %13038 = vst.msk [vmem:[%s221 + $0x174] sm:$0xf] %vm12944, %v12765
      %13039 = vst.msk [vmem:[%s221 + $0x178] sm:$0xf] %vm12944, %v12766
      %13040 = vst.msk [vmem:[%s221 + $0x17c] sm:$0xf] %vm12944, %v12767
      %13041 = vst.msk [vmem:[%s221 + $0x180] sm:$0xf] %vm12944, %v12768
      %13042 = vst.msk [vmem:[%s221 + $0x184] sm:$0xf] %vm12944, %v12769
      %13043 = vst.msk [vmem:[%s221 + $0x188] sm:$0xf] %vm12944, %v12770
      %13044 = vst.msk [vmem:[%s221 + $0x18c] sm:$0xf] %vm12944, %v12771
      %13045 = vst.msk [vmem:[%s221 + $0x190] sm:$0xf] %vm12944, %v12772
      %13046 = vst.msk [vmem:[%s221 + $0x194] sm:$0xf] %vm12944, %v12773
      %13047 = vst.msk [vmem:[%s221 + $0x198] sm:$0xf] %vm12944, %v12774
      %13048 = vst.msk [vmem:[%s221 + $0x19c] sm:$0xf] %vm12944, %v12775
      %13049 = vst.msk [vmem:[%s221 + $0x1a0] sm:$0xf] %vm12944, %v12776
      %13050 = vst.msk [vmem:[%s221 + $0x1a4] sm:$0xf] %vm12944, %v12777
      %13051 = vst.msk [vmem:[%s221 + $0x1a8] sm:$0xf] %vm12944, %v12778
      %13052 = vst.msk [vmem:[%s221 + $0x1ac] sm:$0xf] %vm12944, %v12779
      %13053 = vst.msk [vmem:[%s221 + $0x1b0] sm:$0xf] %vm12944, %v12780
      %13054 = vst.msk [vmem:[%s221 + $0x1b4] sm:$0xf] %vm12944, %v12781
      %13055 = vst.msk [vmem:[%s221 + $0x1b8] sm:$0xf] %vm12944, %v12782
      %13056 = vst.msk [vmem:[%s221 + $0x1bc] sm:$0xf] %vm12944, %v12783
      %13057 = vst.msk [vmem:[%s221 + $0x1c0] sm:$0xf] %vm12944, %v12784
      %13058 = vst.msk [vmem:[%s221 + $0x1c4] sm:$0xf] %vm12944, %v12785
      %13059 = vst.msk [vmem:[%s221 + $0x1c8] sm:$0xf] %vm12944, %v12786
      %13060 = vst.msk [vmem:[%s221 + $0x1cc] sm:$0xf] %vm12944, %v12787
      %13061 = vst.msk [vmem:[%s221 + $0x1d0] sm:$0xf] %vm12944, %v12788
      %13062 = vst.msk [vmem:[%s221 + $0x1d4] sm:$0xf] %vm12944, %v12789
      %13063 = vst.msk [vmem:[%s221 + $0x1d8] sm:$0xf] %vm12944, %v12790
      %13064 = vst.msk [vmem:[%s221 + $0x1dc] sm:$0xf] %vm12944, %v12791
      %13065 = vst.msk [vmem:[%s221 + $0x1e0] sm:$0xf] %vm12944, %v12792
      %13066 = vst.msk [vmem:[%s221 + $0x1e4] sm:$0xf] %vm12944, %v12793
      %13067 = vst.msk [vmem:[%s221 + $0x1e8] sm:$0xf] %vm12944, %v12794
      %13068 = vst.msk [vmem:[%s221 + $0x1ec] sm:$0xf] %vm12944, %v12795
      %13069 = vst.msk [vmem:[%s221 + $0x1f0] sm:$0xf] %vm12944, %v12796
      %13070 = vst.msk [vmem:[%s221 + $0x1f4] sm:$0xf] %vm12944, %v12797
      %13071 = vst.msk [vmem:[%s221 + $0x1f8] sm:$0xf] %vm12944, %v12798
      %13072 = vst.msk [vmem:[%s221 + $0x1fc] sm:$0xf] %vm12944, %v12799
      %13073 = vst.msk [vmem:[%s221 + $0x200] sm:$0xf] %vm12944, %v12800
      %13074 = vst.msk [vmem:[%s221 + $0x204] sm:$0xf] %vm12944, %v12801
      %13075 = vst.msk [vmem:[%s221 + $0x208] sm:$0xf] %vm12944, %v12802
      %13076 = vst.msk [vmem:[%s221 + $0x20c] sm:$0xf] %vm12944, %v12803
      %13077 = vst.msk [vmem:[%s221 + $0x210] sm:$0xf] %vm12944, %v12804
      %13078 = vst.msk [vmem:[%s221 + $0x214] sm:$0xf] %vm12944, %v12805
      %13079 = vst.msk [vmem:[%s221 + $0x218] sm:$0xf] %vm12944, %v12806
      %13080 = vst.msk [vmem:[%s221 + $0x21c] sm:$0xf] %vm12944, %v12807
      %p13081 = scmp.lt.s32.totalorder %s19, 1
      %s13082 = scalar_select %p13081, %s19, 1
      %p13083 = scmp.lt.s32.totalorder %s18, 0
      %s13084 = scalar_select %p13083, %s18, 0
      %s13085 = smul.addr %s13082, 136
      %s13086 = sadd.s32 %s13084, %s13085
      %s13087 = smul.addr %s13086, 4
      %s13088 = scalar_lea.vmem %s3, %s13087
      // Predicated region
      $region33: #{tpu_custom_call.1} parent=31 // pred_check
        %p13089 = pneg %p124
      $region34: #{tpu_custom_call.1} parent=31 // pred_check_branch
        %13091 = sbr.rel (%p13089) target = $region36
      $region35: #{tpu_custom_call.1} parent=31 // pred_region
        _
      $region36: #{tpu_custom_call.1} parent=31 // pred_fallthru
        _
    $region32: #{tpu_custom_call.1} parent=5 // pred_fallthru
      _
    %p13092 = scmp.le.s32.totalorder 2, %s9
    // Predicated region
    $region37: #{tpu_custom_call.1} parent=5 // pred_check
      %p13093 = pneg %p13092
    $region38: #{tpu_custom_call.1} parent=5 // pred_check_branch
      %13095 = sbr.rel (%p13093) target = $region40
    $region39: #{tpu_custom_call.1} parent=5 // pred_region
      %s13096 = ssub.s32 %s9, 2
      // Predicated region
      $region41: #{tpu_custom_call.1} parent=39 // pred_check
        %p13097 = pneg %p130
      $region42: #{tpu_custom_call.1} parent=39 // pred_check_branch
        %13099 = sbr.rel (%p13097) target = $region44
      $region43: #{tpu_custom_call.1} parent=39 // pred_region
        %p13100 = scmp.lt.s32.totalorder %s21, 1
        %s13101 = scalar_select %p13100, %s21, 1
        %p13102 = scmp.lt.s32.totalorder %s20, 0
        %s13103 = scalar_select %p13102, %s20, 0
        %s13104 = smul.addr %s13101, 136
        %s13105 = sadd.s32 %s13103, %s13104
        %s13106 = smul.addr %s13105, 4
        %s13107 = scalar_lea.vmem %s3, %s13106
      $region44: #{tpu_custom_call.1} parent=39 // pred_fallthru
        _
    $region40: #{tpu_custom_call.1} parent=5 // pred_fallthru
      _
  $region6: #{tpu_custom_call.1} parent=0 // loop_footer
    %s13 = sadd.s32 1, %s9
  $region7: #{tpu_custom_call.1} parent=0 // loop_footer_branch
    %8 = sbr.rel target = $region3
  $region8: #{tpu_custom_call.1} parent=0 // loop_exit
    _

</llo_original>
